<compile_context>
chip_gen: v7x
topology: tpu7x:2x2x1
jax: 0.10.0
libtpu: 0.0.40
codegen_flags: <defaults>
</compile_context>

<pallas_src>
import math
import functools

import numpy as np
import jax
import jax.numpy as jnp
from jax import lax
from jax.experimental import pallas as pl
from jax.experimental.pallas import tpu as pltpu

NEG_SLOPE = 0.1     # LeakyReLU negative slope
BN_EPS = 1e-5       # BatchNorm2d / InstanceNorm2d default eps
GEM_EPS = 1e-6      # GeM clamp eps


# ---------------------------------------------------------------------------
# Convolution geometry (all static Python ints)
# ---------------------------------------------------------------------------
def _conv_geom(H, W, Cin, kh, kw, stride, pad):
    s = stride
    Ho = (H + 2 * pad - kh) // s + 1
    Wo = (W + 2 * pad - kw) // s + 1
    Hp, Wp = H + 2 * pad, W + 2 * pad
    Hp_e = ((Hp + s - 1) // s) * s          # round padded extents up to a multiple of s
    Wp_e = ((Wp + s - 1) // s) * s
    Hps, Wps = Hp_e // s, Wp_e // s          # per-phase image extents
    Mrows = Ho * Wps                         # accumulator rows (Wo valid + garbage cols)
    max_start = ((kh - 1) // s) * Wps + ((kw - 1) // s)
    Hflat = max(Hps * Wps, max_start + Mrows)
    Cin_pad = ((Cin + 7) // 8) * 8
    # 1x1 / stride-s / pad-0 shortcut conv expressed in this conv's padded phase layout
    ap, dp = pad % s, pad // s
    return dict(
        s=s, kh=kh, kw=kw, pad=pad, Ho=Ho, Wo=Wo, Hp_e=Hp_e, Wp_e=Wp_e,
        Hps=Hps, Wps=Wps, Mrows=Mrows, Hflat=Hflat, Cin=Cin, Cin_pad=Cin_pad,
        n_phase=s * s, sc_phase=ap * s + ap, sc_start=dp * Wps + dp,
    )


def _prep_conv_input(x, g):
    """(N,H,W,C) f32 -> (N, s*s, Hflat, Cin_pad) phase-decomposed, row-flattened, zero-padded."""
    N, H, W, C = x.shape
    s, pad = g["s"], g["pad"]
    xp = jnp.pad(
        x.astype(jnp.float32),
        ((0, 0),
         (pad, g["Hp_e"] - H - pad),
         (pad, g["Wp_e"] - W - pad),
         (0, g["Cin_pad"] - C)),
    )
    xph = xp.reshape(N, g["Hps"], s, g["Wps"], s, g["Cin_pad"])
    xph = xph.transpose(0, 2, 4, 1, 3, 5)                       # (N, s, s, Hps, Wps, Cp)
    xph = xph.reshape(N, s * s, g["Hps"] * g["Wps"], g["Cin_pad"])
    extra = g["Hflat"] - g["Hps"] * g["Wps"]
    if extra > 0:
        xph = jnp.pad(xph, ((0, 0), (0, 0), (0, extra), (0, 0)))
    return xph


def _prep_weight(w, g):
    """(kh,kw,Cin,Cout) -> (kh*kw, Cin_pad, Cout) bf16 (MXU-native operands)."""
    kh, kw, Cin, Cout = w.shape
    if g["Cin_pad"] > Cin:
        w = jnp.pad(w, ((0, 0), (0, 0), (0, g["Cin_pad"] - Cin), (0, 0)))
    return w.reshape(kh * kw, g["Cin_pad"], Cout).astype(jnp.bfloat16)


def _crop_valid(out_flat, g, N, Cout):
    """(N, Mrows, Cout) kernel output -> (N, Ho, Wo, Cout) (drop garbage columns)."""
    return out_flat.reshape(N, g["Ho"], g["Wps"], Cout)[:, :, : g["Wo"], :]


# ---------------------------------------------------------------------------
# In-kernel helpers
# ---------------------------------------------------------------------------
def _acc_taps(xf_ref, w_ref, g):
    """Unrolled kh*kw tap loop: static 2-D row-range slices of the VMEM-resident input,
    bf16 MXU dots, f32 accumulation in registers.  Single grid step — no pipeline bubbles."""
    kh, kw, s, Wps, M = g["kh"], g["kw"], g["s"], g["Wps"], g["Mrows"]
    acc = None
    t = 0
    for i in range(kh):
        for j in range(kw):
            p = (i % s) * s + (j % s)
            start = (i // s) * Wps + (j // s)
            tap = xf_ref[0, p, pl.ds(start, M), :].astype(jnp.bfloat16)
            d = jnp.dot(tap, w_ref[t], preferred_element_type=jnp.float32)
            acc = d if acc is None else acc + d
            t += 1
    return acc


def _apply_ibn_lrelu(acc, valid_ref, ga_ref, be_ref, mk_ref, bs_ref, bh_ref, g):
    """IBN (first half InstanceNorm, second half folded inference BN) + LeakyReLU on the
    f32 accumulator while it is still in VMEM/vregs.  `valid` masks the garbage columns
    out of the per-sample spatial statistics (biased variance, matching torch)."""
    v = valid_ref[...]                                   # (Mrows, 1) 1.0 / 0.0
    inv_cnt = 1.0 / float(g["Ho"] * g["Wo"])
    mu = jnp.sum(acc * v, axis=0, keepdims=True) * inv_cnt          # (1, Cout)
    d = acc - mu
    var = jnp.sum(d * d * v, axis=0, keepdims=True) * inv_cnt
    in_scale = ga_ref[...] * lax.rsqrt(var + BN_EPS)
    in_shift = be_ref[...] - mu * in_scale
    use_in = mk_ref[...] > 0
    scale = jnp.where(use_in, in_scale, bs_ref[...])
    shift = jnp.where(use_in, in_shift, bh_ref[...])
    y = acc * scale + shift
    return jnp.where(y > 0, y, NEG_SLOPE * y)


# ---------------------------------------------------------------------------
# Conv kernels (one grid step per batch sample; grid axis is "parallel")
# ---------------------------------------------------------------------------
def _conv_kernel(xf_ref, w_ref, o_ref, *, g):
    acc = _acc_taps(xf_ref, w_ref, g)
    o_ref[0] = acc.astype(o_ref.dtype)


def _conv_res_kernel(xf_ref, w_ref, r_ref, o_ref, *, g):
    acc = _acc_taps(xf_ref, w_ref, g) + r_ref[0]          # fused residual add epilogue
    o_ref[0] = acc.astype(o_ref.dtype)


def _conv_ibn_kernel(xf_ref, w_ref, valid_ref, ga_ref, be_ref, mk_ref, bs_ref, bh_ref,
                     o_ref, *, g):
    acc = _acc_taps(xf_ref, w_ref, g)
    y = _apply_ibn_lrelu(acc, valid_ref, ga_ref, be_ref, mk_ref, bs_ref, bh_ref, g)
    o_ref[0] = y.astype(o_ref.dtype)


def _conv_ibn_sc_kernel(xf_ref, w_ref, valid_ref, ga_ref, be_ref, mk_ref, bs_ref, bh_ref,
                        wsc_ref, o_ref, sc_ref, *, g):
    acc = _acc_taps(xf_ref, w_ref, g)
    y = _apply_ibn_lrelu(acc, valid_ref, ga_ref, be_ref, mk_ref, bs_ref, bh_ref, g)
    o_ref[0] = y.astype(o_ref.dtype)
    # 1x1 stride-s shortcut conv of the same input, computed while it is VMEM-resident.
    tap = xf_ref[0, g["sc_phase"], pl.ds(g["sc_start"], g["Mrows"]), :].astype(jnp.bfloat16)
    sc_ref[0] = jnp.dot(tap, wsc_ref[...], preferred_element_type=jnp.float32
                        ).astype(sc_ref.dtype)


def _conv_compiler_params():
    return pltpu.CompilerParams(dimension_semantics=("parallel",))


# ---------------------------------------------------------------------------
# Conv wrappers
# ---------------------------------------------------------------------------
def conv2d(x, w, *, stride=1, padding=1, residual=None):
    """3x3 (or kxk) conv; optional fused residual-add epilogue.
    x: (N,H,W,Cin) f32; w: (kh,kw,Cin,Cout); residual: (N,Ho,Wo,Cout)."""
    N, H, W, Cin = x.shape
    kh, kw, _, Cout = w.shape
    g = _conv_geom(H, W, Cin, kh, kw, stride, padding)
    xf = _prep_conv_input(x, g)
    wt = _prep_weight(w, g)
    nph, Hflat, Cp, M = g["n_phase"], g["Hflat"], g["Cin_pad"], g["Mrows"]

    in_specs = [
        pl.BlockSpec((1, nph, Hflat, Cp), lambda b: (b, 0, 0, 0)),
        pl.BlockSpec((kh * kw, Cp, Cout), lambda b: (0, 0, 0)),
    ]
    args = [xf, wt]
    if residual is not None:
        # Present the residual in the kernel's padded row layout (zero garbage columns).
        r = jnp.pad(residual.astype(jnp.float32),
                    ((0, 0), (0, 0), (0, g["Wps"] - g["Wo"]), (0, 0))).reshape(N, M, Cout)
        in_specs.append(pl.BlockSpec((1, M, Cout), lambda b: (b, 0, 0)))
        args.append(r)
        kernel = functools.partial(_conv_res_kernel, g=g)
    else:
        kernel = functools.partial(_conv_kernel, g=g)

    out = pl.pallas_call(
        kernel,
        out_shape=jax.ShapeDtypeStruct((N, M, Cout), jnp.float32),
        grid_spec=pltpu.PrefetchScalarGridSpec(
            num_scalar_prefetch=0,
            grid=(N,),
            in_specs=in_specs,
            out_specs=pl.BlockSpec((1, M, Cout), lambda b: (b, 0, 0)),
        ),
        compiler_params=_conv_compiler_params(),
    )(*args)
    return _crop_valid(out, g, N, Cout)


def conv2d_ibn(x, w, *, stride, padding, gamma, beta, in_mask, run_mean, run_var,
               shortcut_w=None):
    """conv -> IBN -> LeakyReLU, fused in one kernel.  If shortcut_w is given, the
    1x1-stride-s shortcut conv of the same input is computed in the same kernel and
    returned as a second array (the residual for conv2)."""
    N, H, W, Cin = x.shape
    kh, kw, _, Cout = w.shape
    g = _conv_geom(H, W, Cin, kh, kw, stride, padding)
    xf = _prep_conv_input(x, g)
    wt = _prep_weight(w, g)
    nph, Hflat, Cp, M = g["n_phase"], g["Hflat"], g["Cin_pad"], g["Mrows"]

    # Fold the BN half of IBN (inference running stats) into scale/shift.
    bscale = gamma / jnp.sqrt(run_var + BN_EPS)
    bshift = beta - run_mean * bscale
    valid = jnp.asarray(((np.arange(M) % g["Wps"]) < g["Wo"])
                        .astype(np.float32).reshape(M, 1))
    row = lambda v: v.reshape(1, Cout).astype(jnp.float32)

    in_specs = [
        pl.BlockSpec((1, nph, Hflat, Cp), lambda b: (b, 0, 0, 0)),
        pl.BlockSpec((kh * kw, Cp, Cout), lambda b: (0, 0, 0)),
        pl.BlockSpec((M, 1), lambda b: (0, 0)),
    ] + [pl.BlockSpec((1, Cout), lambda b: (0, 0))] * 5
    args = [xf, wt, valid, row(gamma), row(beta), row(in_mask), row(bscale), row(bshift)]

    out_block = pl.BlockSpec((1, M, Cout), lambda b: (b, 0, 0))
    if shortcut_w is not None:
        wsc = jnp.pad(shortcut_w[0, 0], ((0, Cp - Cin), (0, 0))).astype(jnp.bfloat16)
        in_specs.append(pl.BlockSpec((Cp, Cout), lambda b: (0, 0)))
        args.append(wsc)
        kernel = functools.partial(_conv_ibn_sc_kernel, g=g)
        out_shape = (jax.ShapeDtypeStruct((N, M, Cout), jnp.float32),
                     jax.ShapeDtypeStruct((N, M, Cout), jnp.float32))
        out_specs = (out_block, pl.BlockSpec((1, M, Cout), lambda b: (b, 0, 0)))
    else:
        kernel = functools.partial(_conv_ibn_kernel, g=g)
        out_shape = jax.ShapeDtypeStruct((N, M, Cout), jnp.float32)
        out_specs = out_block

    outs = pl.pallas_call(
        kernel,
        out_shape=out_shape,
        grid_spec=pltpu.PrefetchScalarGridSpec(
            num_scalar_prefetch=0,
            grid=(N,),
            in_specs=in_specs,
            out_specs=out_specs,
        ),
        compiler_params=_conv_compiler_params(),
    )(*args)

    if shortcut_w is not None:
        h, sc = outs
        return _crop_valid(h, g, N, Cout), _crop_valid(sc, g, N, Cout)
    return _crop_valid(outs, g, N, Cout)


# ---------------------------------------------------------------------------
# Fused tail: BN + LeakyReLU -> GeM (p=3, polynomial power) -> linear neck
# ---------------------------------------------------------------------------
def _tail_kernel(x_ref, scale_ref, shift_ref, w_ref, b_ref, o_ref, *, p, hw):
    x = x_ref[...]                                        # (N, HW, C) f32
    y = x * scale_ref[...] + shift_ref[...]               # folded inference BN
    y = jnp.where(y > 0, y, NEG_SLOPE * y)                # LeakyReLU
    y = jnp.maximum(y, GEM_EPS)                           # GeM clamp
    if p == 3.0:
        yp = y * y * y                                    # VPU polynomial power (p=3)
    else:
        yp = jnp.exp(p * jnp.log(y))                      # TODO(synk): general learnable p
    pooled = jnp.sum(yp, axis=1) * (1.0 / hw)             # (N, C)
    gem = jnp.exp(jnp.log(pooled) * (1.0 / p))            # one exp/log pair on (N,C) only
    emb = jnp.dot(gem.astype(jnp.bfloat16), w_ref[...],
                  preferred_element_type=jnp.float32) + b_ref[...]
    o_ref[...] = emb.astype(o_ref.dtype)


def tail_head(x, bn_g, bn_b, bn_m, bn_v, gem_p, neck_w, neck_b):
    N, H, W, C = x.shape
    HW = H * W
    E = neck_w.shape[1]
    bscale = bn_g / jnp.sqrt(bn_v + BN_EPS)
    bshift = bn_b - bn_m * bscale
    xr = x.reshape(N, HW, C)
    kernel = functools.partial(_tail_kernel, p=float(gem_p), hw=float(HW))
    return pl.pallas_call(
        kernel,
        out_shape=jax.ShapeDtypeStruct((N, E), jnp.float32),
        grid=(1,),
        in_specs=[
            pl.BlockSpec((N, HW, C), lambda i: (0, 0, 0)),
            pl.BlockSpec((1, 1, C), lambda i: (0, 0, 0)),
            pl.BlockSpec((1, 1, C), lambda i: (0, 0, 0)),
            pl.BlockSpec((C, E), lambda i: (0, 0)),
            pl.BlockSpec((1, E), lambda i: (0, 0)),
        ],
        out_specs=pl.BlockSpec((N, E), lambda i: (0, 0)),
    )(xr, bscale.reshape(1, 1, C), bshift.reshape(1, 1, C),
      neck_w.astype(jnp.bfloat16), neck_b.reshape(1, E))


# ---------------------------------------------------------------------------
# BN+LeakyReLU prologue (per-channel scale/shift; XLA fuses it into the conv input prep)
# ---------------------------------------------------------------------------
def bn_lrelu_host(x, gamma, beta, rmean, rvar):
    scale = gamma / jnp.sqrt(rvar + BN_EPS)
    shift = beta - rmean * scale
    y = x * scale + shift
    return jnp.where(y > 0, y, NEG_SLOPE * y)


# ---------------------------------------------------------------------------
# Parameter init (deterministic, matching the module's __init__)
# ---------------------------------------------------------------------------
def init_params(key, depth, embed_dim, num_blocks, widen_factor):
    nchan = [16] + [16 * widen_factor * (2 ** i) for i in range(num_blocks)]
    assert (depth - 4) % 6 == 0
    n = (depth - 4) // 6
    assert embed_dim == nchan[-1], "SimpleNeck requires embed_dim == nChannels[-1]"

    keys = iter(jax.random.split(key, 256))

    def conv_w(cin, cout, k):
        # kaiming_normal_(mode='fan_out', nonlinearity='leaky_relu'), HWIO layout
        fan_out = cout * k * k
        std = math.sqrt(2.0 / (1.0 + 0.01 ** 2)) / math.sqrt(fan_out)
        return std * jax.random.normal(next(keys), (k, k, cin, cout), jnp.float32)

    def bn_params(c):
        return (jnp.ones((c,), jnp.float32), jnp.zeros((c,), jnp.float32),
                jnp.zeros((c,), jnp.float32), jnp.ones((c,), jnp.float32))

    params = {"conv1_w": conv_w(1, nchan[0], 3)}
    blocks = []
    for i in range(num_blocks):
        abr = (i == 0)
        layers = []
        for j in range(n):
            in_p = nchan[i] if j == 0 else nchan[i + 1]
            out_p = nchan[i + 1]
            stride = 2 if j == 0 else 1
            half = out_p // 2
            layers.append({
                "equal": in_p == out_p,
                "stride": stride,
                "abr": abr,
                "bn1": bn_params(in_p),
                "conv1_w": conv_w(in_p, out_p, 3),
                "ibn_gamma": jnp.ones((out_p,), jnp.float32),
                "ibn_beta": jnp.zeros((out_p,), jnp.float32),
                "ibn_mask": (jnp.arange(out_p) < half).astype(jnp.float32),
                "ibn_rm": jnp.zeros((out_p,), jnp.float32),
                "ibn_rv": jnp.ones((out_p,), jnp.float32),
                "conv2_w": conv_w(out_p, out_p, 3),
                "sc_w": None if in_p == out_p else conv_w(in_p, out_p, 1),
            })
        blocks.append(layers)
    params["blocks"] = blocks
    (params["bn_g"], params["bn_b"], params["bn_m"], params["bn_v"]) = bn_params(nchan[-1])
    params["gem_p"] = 3.0                                   # GeM p (static here)
    C = nchan[-1]
    # SimpleNeck('linear'): Linear with xavier_normal_ weight, zero bias
    std = math.sqrt(2.0 / (C + embed_dim))
    params["neck_w"] = std * jax.random.normal(next(keys), (C, embed_dim), jnp.float32)
    params["neck_b"] = jnp.zeros((embed_dim,), jnp.float32)
    return params


# ---------------------------------------------------------------------------
# Forward pass
# ---------------------------------------------------------------------------
def basic_block_forward(x, p):
    equal, stride, abr = p["equal"], p["stride"], p["abr"]
    if (not equal) and abr:
        x = bn_lrelu_host(x, *p["bn1"])     # x is replaced; conv1 and shortcut see it
        conv_in = x
    elif equal:
        conv_in = bn_lrelu_host(x, *p["bn1"])
    else:
        # Reference quirk: bn1+relu1 output is computed then discarded; conv1 sees raw x.
        conv_in = x

    ibn_kw = dict(gamma=p["ibn_gamma"], beta=p["ibn_beta"], in_mask=p["ibn_mask"],
                  run_mean=p["ibn_rm"], run_var=p["ibn_rv"])
    if equal:
        h = conv2d_ibn(conv_in, p["conv1_w"], stride=stride, padding=1, **ibn_kw)
        res = x                              # identity residual (raw x)
    else:
        h, res = conv2d_ibn(conv_in, p["conv1_w"], stride=stride, padding=1,
                            shortcut_w=p["sc_w"], **ibn_kw)
    # dropout p=0.0 -> no-op
    return conv2d(h, p["conv2_w"], stride=1, padding=1, residual=res)


def lyracnet_forward(params, x_nchw):
    # PyTorch NCHW input -> NHWC for the kernels
    x = jnp.transpose(x_nchw, (0, 2, 3, 1)).astype(jnp.float32)
    x = conv2d(x, params["conv1_w"], stride=1, padding=1)
    for block in params["blocks"]:
        for layer in block:
            x = basic_block_forward(x, layer)
    emb = tail_head(x, params["bn_g"], params["bn_b"], params["bn_m"], params["bn_v"],
                    params["gem_p"], params["neck_w"], params["neck_b"])
    return emb, {"embedding": emb}


if __name__ == "__main__":
    key = jax.random.PRNGKey(0)
    pkey, xkey = jax.random.split(key)

    depth, embed_dim, num_blocks, widen_factor = 10, 64, 2, 2
    params = init_params(pkey, depth, embed_dim, num_blocks, widen_factor)

    # Single-channel image input, NCHW like PyTorch: (batch=2, 1, 16, 16)
    x = jax.random.normal(xkey, (2, 1, 16, 16), jnp.float32)

    fwd = jax.jit(lambda inp: lyracnet_forward(params, inp))
    emb, out_dict = fwd(x)
    jax.block_until_ready(emb)
    assert emb.shape == (2, embed_dim)
    assert bool(jnp.all(jnp.isfinite(emb)))
    print("KERNEL_OK")
</pallas_src>

<mosaic_0001>
module attributes {stable_mosaic.version = 11 : i64} {
  func.func @_conv_kernel(%arg0: i32, %arg1: memref<1x1x326x8xf32, #tpu.memory_space<vmem>>, %arg2: memref<9x8x16xbf16, #tpu.memory_space<vmem>>, %arg3: memref<1x288x16xf32, #tpu.memory_space<vmem>>) attributes {dimension_semantics = [#tpu.dimension_semantics<parallel>], iteration_bounds = array<i64: 2>, scalar_prefetch = 0 : i64, scratch_operands = 0 : i64, tpu.core_type = #tpu.core_type<tc>, window_params = [{transform_indices = @transform_0, window_bounds = array<i64: 1, 1, 326, 8>}, {pipeline_mode = #tpu.pipeline_mode<synchronous>, transform_indices = @transform_1, window_bounds = array<i64: 9, 8, 16>}, {transform_indices = @transform_2, window_bounds = array<i64: 1, 288, 16>}]} {
    %c0 = arith.constant 0 : index
    %c0_0 = arith.constant 0 : index
    %c0_1 = arith.constant 0 : index
    %c0_2 = arith.constant 0 : index
    %0 = vector.load %arg1[%c0, %c0_0, %c0_1, %c0_2] : memref<1x1x326x8xf32, #tpu.memory_space<vmem>>, vector<1x1x288x8xf32>
    %1 = vector.shape_cast %0 : vector<1x1x288x8xf32> to vector<288x8xf32>
    %2 = arith.truncf %1 : vector<288x8xf32> to vector<288x8xbf16>
    %c0_3 = arith.constant 0 : index
    %c0_4 = arith.constant 0 : index
    %c0_5 = arith.constant 0 : index
    %3 = vector.load %arg2[%c0_3, %c0_4, %c0_5] : memref<9x8x16xbf16, #tpu.memory_space<vmem>>, vector<1x8x16xbf16>
    %4 = vector.shape_cast %3 : vector<1x8x16xbf16> to vector<8x16xbf16>
    %cst = arith.constant dense<0.000000e+00> : vector<288x16xf32>
    %5 = tpu.matmul %2, %4, %cst {dimension_numbers = #tpu.dot_dimension_numbers<[1], [0], [0], [1], [0, 0, 1, 1], [], []>} : vector<288x8xbf16>, vector<8x16xbf16>, vector<288x16xf32> -> vector<288x16xf32>
    %c0_6 = arith.constant 0 : index
    %c0_7 = arith.constant 0 : index
    %c1 = arith.constant 1 : index
    %c0_8 = arith.constant 0 : index
    %6 = vector.load %arg1[%c0_6, %c0_7, %c1, %c0_8] : memref<1x1x326x8xf32, #tpu.memory_space<vmem>>, vector<1x1x288x8xf32>
    %7 = vector.shape_cast %6 : vector<1x1x288x8xf32> to vector<288x8xf32>
    %8 = arith.truncf %7 : vector<288x8xf32> to vector<288x8xbf16>
    %c1_9 = arith.constant 1 : index
    %c0_10 = arith.constant 0 : index
    %c0_11 = arith.constant 0 : index
    %9 = vector.load %arg2[%c1_9, %c0_10, %c0_11] : memref<9x8x16xbf16, #tpu.memory_space<vmem>>, vector<1x8x16xbf16>
    %10 = vector.shape_cast %9 : vector<1x8x16xbf16> to vector<8x16xbf16>
    %cst_12 = arith.constant dense<0.000000e+00> : vector<288x16xf32>
    %11 = tpu.matmul %8, %10, %cst_12 {dimension_numbers = #tpu.dot_dimension_numbers<[1], [0], [0], [1], [0, 0, 1, 1], [], []>} : vector<288x8xbf16>, vector<8x16xbf16>, vector<288x16xf32> -> vector<288x16xf32>
    %12 = arith.addf %5, %11 : vector<288x16xf32>
    %c0_13 = arith.constant 0 : index
    %c0_14 = arith.constant 0 : index
    %c2 = arith.constant 2 : index
    %c0_15 = arith.constant 0 : index
    %13 = vector.load %arg1[%c0_13, %c0_14, %c2, %c0_15] : memref<1x1x326x8xf32, #tpu.memory_space<vmem>>, vector<1x1x288x8xf32>
    %14 = vector.shape_cast %13 : vector<1x1x288x8xf32> to vector<288x8xf32>
    %15 = arith.truncf %14 : vector<288x8xf32> to vector<288x8xbf16>
    %c2_16 = arith.constant 2 : index
    %c0_17 = arith.constant 0 : index
    %c0_18 = arith.constant 0 : index
    %16 = vector.load %arg2[%c2_16, %c0_17, %c0_18] : memref<9x8x16xbf16, #tpu.memory_space<vmem>>, vector<1x8x16xbf16>
    %17 = vector.shape_cast %16 : vector<1x8x16xbf16> to vector<8x16xbf16>
    %cst_19 = arith.constant dense<0.000000e+00> : vector<288x16xf32>
    %18 = tpu.matmul %15, %17, %cst_19 {dimension_numbers = #tpu.dot_dimension_numbers<[1], [0], [0], [1], [0, 0, 1, 1], [], []>} : vector<288x8xbf16>, vector<8x16xbf16>, vector<288x16xf32> -> vector<288x16xf32>
    %19 = arith.addf %12, %18 : vector<288x16xf32>
    %c0_20 = arith.constant 0 : index
    %c0_21 = arith.constant 0 : index
    %c18 = arith.constant 18 : index
    %c0_22 = arith.constant 0 : index
    %20 = vector.load %arg1[%c0_20, %c0_21, %c18, %c0_22] : memref<1x1x326x8xf32, #tpu.memory_space<vmem>>, vector<1x1x288x8xf32>
    %21 = vector.shape_cast %20 : vector<1x1x288x8xf32> to vector<288x8xf32>
    %22 = arith.truncf %21 : vector<288x8xf32> to vector<288x8xbf16>
    %c3 = arith.constant 3 : index
    %c0_23 = arith.constant 0 : index
    %c0_24 = arith.constant 0 : index
    %23 = vector.load %arg2[%c3, %c0_23, %c0_24] : memref<9x8x16xbf16, #tpu.memory_space<vmem>>, vector<1x8x16xbf16>
    %24 = vector.shape_cast %23 : vector<1x8x16xbf16> to vector<8x16xbf16>
    %cst_25 = arith.constant dense<0.000000e+00> : vector<288x16xf32>
    %25 = tpu.matmul %22, %24, %cst_25 {dimension_numbers = #tpu.dot_dimension_numbers<[1], [0], [0], [1], [0, 0, 1, 1], [], []>} : vector<288x8xbf16>, vector<8x16xbf16>, vector<288x16xf32> -> vector<288x16xf32>
    %26 = arith.addf %19, %25 : vector<288x16xf32>
    %c0_26 = arith.constant 0 : index
    %c0_27 = arith.constant 0 : index
    %c19 = arith.constant 19 : index
    %c0_28 = arith.constant 0 : index
    %27 = vector.load %arg1[%c0_26, %c0_27, %c19, %c0_28] : memref<1x1x326x8xf32, #tpu.memory_space<vmem>>, vector<1x1x288x8xf32>
    %28 = vector.shape_cast %27 : vector<1x1x288x8xf32> to vector<288x8xf32>
    %29 = arith.truncf %28 : vector<288x8xf32> to vector<288x8xbf16>
    %c4 = arith.constant 4 : index
    %c0_29 = arith.constant 0 : index
    %c0_30 = arith.constant 0 : index
    %30 = vector.load %arg2[%c4, %c0_29, %c0_30] : memref<9x8x16xbf16, #tpu.memory_space<vmem>>, vector<1x8x16xbf16>
    %31 = vector.shape_cast %30 : vector<1x8x16xbf16> to vector<8x16xbf16>
    %cst_31 = arith.constant dense<0.000000e+00> : vector<288x16xf32>
    %32 = tpu.matmul %29, %31, %cst_31 {dimension_numbers = #tpu.dot_dimension_numbers<[1], [0], [0], [1], [0, 0, 1, 1], [], []>} : vector<288x8xbf16>, vector<8x16xbf16>, vector<288x16xf32> -> vector<288x16xf32>
    %33 = arith.addf %26, %32 : vector<288x16xf32>
    %c0_32 = arith.constant 0 : index
    %c0_33 = arith.constant 0 : index
    %c20 = arith.constant 20 : index
    %c0_34 = arith.constant 0 : index
    %34 = vector.load %arg1[%c0_32, %c0_33, %c20, %c0_34] : memref<1x1x326x8xf32, #tpu.memory_space<vmem>>, vector<1x1x288x8xf32>
    %35 = vector.shape_cast %34 : vector<1x1x288x8xf32> to vector<288x8xf32>
    %36 = arith.truncf %35 : vector<288x8xf32> to vector<288x8xbf16>
    %c5 = arith.constant 5 : index
    %c0_35 = arith.constant 0 : index
    %c0_36 = arith.constant 0 : index
    %37 = vector.load %arg2[%c5, %c0_35, %c0_36] : memref<9x8x16xbf16, #tpu.memory_space<vmem>>, vector<1x8x16xbf16>
    %38 = vector.shape_cast %37 : vector<1x8x16xbf16> to vector<8x16xbf16>
    %cst_37 = arith.constant dense<0.000000e+00> : vector<288x16xf32>
    %39 = tpu.matmul %36, %38, %cst_37 {dimension_numbers = #tpu.dot_dimension_numbers<[1], [0], [0], [1], [0, 0, 1, 1], [], []>} : vector<288x8xbf16>, vector<8x16xbf16>, vector<288x16xf32> -> vector<288x16xf32>
    %40 = arith.addf %33, %39 : vector<288x16xf32>
    %c0_38 = arith.constant 0 : index
    %c0_39 = arith.constant 0 : index
    %c36 = arith.constant 36 : index
    %c0_40 = arith.constant 0 : index
    %41 = vector.load %arg1[%c0_38, %c0_39, %c36, %c0_40] : memref<1x1x326x8xf32, #tpu.memory_space<vmem>>, vector<1x1x288x8xf32>
    %42 = vector.shape_cast %41 : vector<1x1x288x8xf32> to vector<288x8xf32>
    %43 = arith.truncf %42 : vector<288x8xf32> to vector<288x8xbf16>
    %c6 = arith.constant 6 : index
    %c0_41 = arith.constant 0 : index
    %c0_42 = arith.constant 0 : index
    %44 = vector.load %arg2[%c6, %c0_41, %c0_42] : memref<9x8x16xbf16, #tpu.memory_space<vmem>>, vector<1x8x16xbf16>
    %45 = vector.shape_cast %44 : vector<1x8x16xbf16> to vector<8x16xbf16>
    %cst_43 = arith.constant dense<0.000000e+00> : vector<288x16xf32>
    %46 = tpu.matmul %43, %45, %cst_43 {dimension_numbers = #tpu.dot_dimension_numbers<[1], [0], [0], [1], [0, 0, 1, 1], [], []>} : vector<288x8xbf16>, vector<8x16xbf16>, vector<288x16xf32> -> vector<288x16xf32>
    %47 = arith.addf %40, %46 : vector<288x16xf32>
    %c0_44 = arith.constant 0 : index
    %c0_45 = arith.constant 0 : index
    %c37 = arith.constant 37 : index
    %c0_46 = arith.constant 0 : index
    %48 = vector.load %arg1[%c0_44, %c0_45, %c37, %c0_46] : memref<1x1x326x8xf32, #tpu.memory_space<vmem>>, vector<1x1x288x8xf32>
    %49 = vector.shape_cast %48 : vector<1x1x288x8xf32> to vector<288x8xf32>
    %50 = arith.truncf %49 : vector<288x8xf32> to vector<288x8xbf16>
    %c7 = arith.constant 7 : index
    %c0_47 = arith.constant 0 : index
    %c0_48 = arith.constant 0 : index
    %51 = vector.load %arg2[%c7, %c0_47, %c0_48] : memref<9x8x16xbf16, #tpu.memory_space<vmem>>, vector<1x8x16xbf16>
    %52 = vector.shape_cast %51 : vector<1x8x16xbf16> to vector<8x16xbf16>
    %cst_49 = arith.constant dense<0.000000e+00> : vector<288x16xf32>
    %53 = tpu.matmul %50, %52, %cst_49 {dimension_numbers = #tpu.dot_dimension_numbers<[1], [0], [0], [1], [0, 0, 1, 1], [], []>} : vector<288x8xbf16>, vector<8x16xbf16>, vector<288x16xf32> -> vector<288x16xf32>
    %54 = arith.addf %47, %53 : vector<288x16xf32>
    %c0_50 = arith.constant 0 : index
    %c0_51 = arith.constant 0 : index
    %c38 = arith.constant 38 : index
    %c0_52 = arith.constant 0 : index
    %55 = vector.load %arg1[%c0_50, %c0_51, %c38, %c0_52] : memref<1x1x326x8xf32, #tpu.memory_space<vmem>>, vector<1x1x288x8xf32>
    %56 = vector.shape_cast %55 : vector<1x1x288x8xf32> to vector<288x8xf32>
    %57 = arith.truncf %56 : vector<288x8xf32> to vector<288x8xbf16>
    %c8 = arith.constant 8 : index
    %c0_53 = arith.constant 0 : index
    %c0_54 = arith.constant 0 : index
    %58 = vector.load %arg2[%c8, %c0_53, %c0_54] : memref<9x8x16xbf16, #tpu.memory_space<vmem>>, vector<1x8x16xbf16>
    %59 = vector.shape_cast %58 : vector<1x8x16xbf16> to vector<8x16xbf16>
    %cst_55 = arith.constant dense<0.000000e+00> : vector<288x16xf32>
    %60 = tpu.matmul %57, %59, %cst_55 {dimension_numbers = #tpu.dot_dimension_numbers<[1], [0], [0], [1], [0, 0, 1, 1], [], []>} : vector<288x8xbf16>, vector<8x16xbf16>, vector<288x16xf32> -> vector<288x16xf32>
    %61 = arith.addf %54, %60 : vector<288x16xf32>
    %c0_56 = arith.constant 0 : index
    %c0_57 = arith.constant 0 : index
    %c0_58 = arith.constant 0 : index
    %62 = vector.load %arg3[%c0_56, %c0_57, %c0_58] : memref<1x288x16xf32, #tpu.memory_space<vmem>>, vector<1x288x16xf32>
    %63 = vector.shape_cast %62 : vector<1x288x16xf32> to vector<288x16xf32>
    %64 = vector.shape_cast %61 : vector<288x16xf32> to vector<1x288x16xf32>
    tpu.vector_store %arg3[%c0_56, %c0_57, %c0_58], %64 {strides = array<i32>} : memref<1x288x16xf32, #tpu.memory_space<vmem>>, vector<1x288x16xf32>,
    return
  }
  func.func @transform_0(%arg0: i32) -> (i32, i32, i32, i32) {
    %c0_i32 = arith.constant 0 : i32
    %c0_i32_0 = arith.constant 0 : i32
    %c0_i32_1 = arith.constant 0 : i32
    %c0_i32_2 = arith.constant 0 : i32
    return %arg0, %c0_i32, %c0_i32_0, %c0_i32_1 : i32, i32, i32, i32
  }
  func.func @transform_1(%arg0: i32) -> (i32, i32, i32) {
    %c0_i32 = arith.constant 0 : i32
    %c0_i32_0 = arith.constant 0 : i32
    %c0_i32_1 = arith.constant 0 : i32
    %c0_i32_2 = arith.constant 0 : i32
    return %c0_i32, %c0_i32_0, %c0_i32_1 : i32, i32, i32
  }
  func.func @transform_2(%arg0: i32) -> (i32, i32, i32) {
    %c0_i32 = arith.constant 0 : i32
    %c0_i32_0 = arith.constant 0 : i32
    %c0_i32_1 = arith.constant 0 : i32
    return %arg0, %c0_i32, %c0_i32_0 : i32, i32, i32
  }
}

module attributes {stable_mosaic.version = 11 : i64} {
  func.func @_conv_ibn_sc_kernel(%arg0: i32, %arg1: memref<1x4x82x16xf32, #tpu.memory_space<vmem>>, %arg2: memref<9x16x32xbf16, #tpu.memory_space<vmem>>, %arg3: memref<72x1xf32, #tpu.memory_space<vmem>>, %arg4: memref<1x32xf32, #tpu.memory_space<vmem>>, %arg5: memref<1x32xf32, #tpu.memory_space<vmem>>, %arg6: memref<1x32xf32, #tpu.memory_space<vmem>>, %arg7: memref<1x32xf32, #tpu.memory_space<vmem>>, %arg8: memref<1x32xf32, #tpu.memory_space<vmem>>, %arg9: memref<16x32xbf16, #tpu.memory_space<vmem>>, %arg10: memref<1x72x32xf32, #tpu.memory_space<vmem>>, %arg11: memref<1x72x32xf32, #tpu.memory_space<vmem>>) attributes {dimension_semantics = [#tpu.dimension_semantics<parallel>], iteration_bounds = array<i64: 2>, scalar_prefetch = 0 : i64, scratch_operands = 0 : i64, tpu.core_type = #tpu.core_type<tc>, window_params = [{transform_indices = @transform_0, window_bounds = array<i64: 1, 4, 82, 16>}, {pipeline_mode = #tpu.pipeline_mode<synchronous>, transform_indices = @transform_1, window_bounds = array<i64: 9, 16, 32>}, {pipeline_mode = #tpu.pipeline_mode<synchronous>, transform_indices = @transform_2, window_bounds = array<i64: 72, 1>}, {pipeline_mode = #tpu.pipeline_mode<synchronous>, transform_indices = @transform_3, window_bounds = array<i64: 1, 32>}, {pipeline_mode = #tpu.pipeline_mode<synchronous>, transform_indices = @transform_4, window_bounds = array<i64: 1, 32>}, {pipeline_mode = #tpu.pipeline_mode<synchronous>, transform_indices = @transform_5, window_bounds = array<i64: 1, 32>}, {pipeline_mode = #tpu.pipeline_mode<synchronous>, transform_indices = @transform_6, window_bounds = array<i64: 1, 32>}, {pipeline_mode = #tpu.pipeline_mode<synchronous>, transform_indices = @transform_7, window_bounds = array<i64: 1, 32>}, {pipeline_mode = #tpu.pipeline_mode<synchronous>, transform_indices = @transform_8, window_bounds = array<i64: 16, 32>}, {transform_indices = @transform_9, window_bounds = array<i64: 1, 72, 32>}, {transform_indices = @transform_10, window_bounds = array<i64: 1, 72, 32>}]} {
    %c0 = arith.constant 0 : index
    %c0_0 = arith.constant 0 : index
    %c0_1 = arith.constant 0 : index
    %c0_2 = arith.constant 0 : index
    %0 = vector.load %arg1[%c0, %c0_0, %c0_1, %c0_2] : memref<1x4x82x16xf32, #tpu.memory_space<vmem>>, vector<1x1x72x16xf32>
    %1 = vector.shape_cast %0 : vector<1x1x72x16xf32> to vector<72x16xf32>
    %2 = arith.truncf %1 : vector<72x16xf32> to vector<72x16xbf16>
    %c0_3 = arith.constant 0 : index
    %c0_4 = arith.constant 0 : index
    %c0_5 = arith.constant 0 : index
    %3 = vector.load %arg2[%c0_3, %c0_4, %c0_5] : memref<9x16x32xbf16, #tpu.memory_space<vmem>>, vector<1x16x32xbf16>
    %4 = vector.shape_cast %3 : vector<1x16x32xbf16> to vector<16x32xbf16>
    %cst = arith.constant dense<0.000000e+00> : vector<72x32xf32>
    %5 = tpu.matmul %2, %4, %cst {dimension_numbers = #tpu.dot_dimension_numbers<[1], [0], [0], [1], [0, 0, 1, 1], [], []>} : vector<72x16xbf16>, vector<16x32xbf16>, vector<72x32xf32> -> vector<72x32xf32>
    %c0_6 = arith.constant 0 : index
    %c1 = arith.constant 1 : index
    %c0_7 = arith.constant 0 : index
    %c0_8 = arith.constant 0 : index
    %6 = vector.load %arg1[%c0_6, %c1, %c0_7, %c0_8] : memref<1x4x82x16xf32, #tpu.memory_space<vmem>>, vector<1x1x72x16xf32>
    %7 = vector.shape_cast %6 : vector<1x1x72x16xf32> to vector<72x16xf32>
    %8 = arith.truncf %7 : vector<72x16xf32> to vector<72x16xbf16>
    %c1_9 = arith.constant 1 : index
    %c0_10 = arith.constant 0 : index
    %c0_11 = arith.constant 0 : index
    %9 = vector.load %arg2[%c1_9, %c0_10, %c0_11] : memref<9x16x32xbf16, #tpu.memory_space<vmem>>, vector<1x16x32xbf16>
    %10 = vector.shape_cast %9 : vector<1x16x32xbf16> to vector<16x32xbf16>
    %cst_12 = arith.constant dense<0.000000e+00> : vector<72x32xf32>
    %11 = tpu.matmul %8, %10, %cst_12 {dimension_numbers = #tpu.dot_dimension_numbers<[1], [0], [0], [1], [0, 0, 1, 1], [], []>} : vector<72x16xbf16>, vector<16x32xbf16>, vector<72x32xf32> -> vector<72x32xf32>
    %12 = arith.addf %5, %11 : vector<72x32xf32>
    %c0_13 = arith.constant 0 : index
    %c0_14 = arith.constant 0 : index
    %c1_15 = arith.constant 1 : index
    %c0_16 = arith.constant 0 : index
    %13 = vector.load %arg1[%c0_13, %c0_14, %c1_15, %c0_16] : memref<1x4x82x16xf32, #tpu.memory_space<vmem>>, vector<1x1x72x16xf32>
    %14 = vector.shape_cast %13 : vector<1x1x72x16xf32> to vector<72x16xf32>
    %15 = arith.truncf %14 : vector<72x16xf32> to vector<72x16xbf16>
    %c2 = arith.constant 2 : index
    %c0_17 = arith.constant 0 : index
    %c0_18 = arith.constant 0 : index
    %16 = vector.load %arg2[%c2, %c0_17, %c0_18] : memref<9x16x32xbf16, #tpu.memory_space<vmem>>, vector<1x16x32xbf16>
    %17 = vector.shape_cast %16 : vector<1x16x32xbf16> to vector<16x32xbf16>
    %cst_19 = arith.constant dense<0.000000e+00> : vector<72x32xf32>
    %18 = tpu.matmul %15, %17, %cst_19 {dimension_numbers = #tpu.dot_dimension_numbers<[1], [0], [0], [1], [0, 0, 1, 1], [], []>} : vector<72x16xbf16>, vector<16x32xbf16>, vector<72x32xf32> -> vector<72x32xf32>
    %19 = arith.addf %12, %18 : vector<72x32xf32>
    %c0_20 = arith.constant 0 : index
    %c2_21 = arith.constant 2 : index
    %c0_22 = arith.constant 0 : index
    %c0_23 = arith.constant 0 : index
    %20 = vector.load %arg1[%c0_20, %c2_21, %c0_22, %c0_23] : memref<1x4x82x16xf32, #tpu.memory_space<vmem>>, vector<1x1x72x16xf32>
    %21 = vector.shape_cast %20 : vector<1x1x72x16xf32> to vector<72x16xf32>
    %22 = arith.truncf %21 : vector<72x16xf32> to vector<72x16xbf16>
    %c3 = arith.constant 3 : index
    %c0_24 = arith.constant 0 : index
    %c0_25 = arith.constant 0 : index
    %23 = vector.load %arg2[%c3, %c0_24, %c0_25] : memref<9x16x32xbf16, #tpu.memory_space<vmem>>, vector<1x16x32xbf16>
    %24 = vector.shape_cast %23 : vector<1x16x32xbf16> to vector<16x32xbf16>
    %cst_26 = arith.constant dense<0.000000e+00> : vector<72x32xf32>
    %25 = tpu.matmul %22, %24, %cst_26 {dimension_numbers = #tpu.dot_dimension_numbers<[1], [0], [0], [1], [0, 0, 1, 1], [], []>} : vector<72x16xbf16>, vector<16x32xbf16>, vector<72x32xf32> -> vector<72x32xf32>
    %26 = arith.addf %19, %25 : vector<72x32xf32>
    %c0_27 = arith.constant 0 : index
    %c3_28 = arith.constant 3 : index
    %c0_29 = arith.constant 0 : index
    %c0_30 = arith.constant 0 : index
    %27 = vector.load %arg1[%c0_27, %c3_28, %c0_29, %c0_30] : memref<1x4x82x16xf32, #tpu.memory_space<vmem>>, vector<1x1x72x16xf32>
    %28 = vector.shape_cast %27 : vector<1x1x72x16xf32> to vector<72x16xf32>
    %29 = arith.truncf %28 : vector<72x16xf32> to vector<72x16xbf16>
    %c4 = arith.constant 4 : index
    %c0_31 = arith.constant 0 : index
    %c0_32 = arith.constant 0 : index
    %30 = vector.load %arg2[%c4, %c0_31, %c0_32] : memref<9x16x32xbf16, #tpu.memory_space<vmem>>, vector<1x16x32xbf16>
    %31 = vector.shape_cast %30 : vector<1x16x32xbf16> to vector<16x32xbf16>
    %cst_33 = arith.constant dense<0.000000e+00> : vector<72x32xf32>
    %32 = tpu.matmul %29, %31, %cst_33 {dimension_numbers = #tpu.dot_dimension_numbers<[1], [0], [0], [1], [0, 0, 1, 1], [], []>} : vector<72x16xbf16>, vector<16x32xbf16>, vector<72x32xf32> -> vector<72x32xf32>
    %33 = arith.addf %26, %32 : vector<72x32xf32>
    %c0_34 = arith.constant 0 : index
    %c2_35 = arith.constant 2 : index
    %c1_36 = arith.constant 1 : index
    %c0_37 = arith.constant 0 : index
    %34 = vector.load %arg1[%c0_34, %c2_35, %c1_36, %c0_37] : memref<1x4x82x16xf32, #tpu.memory_space<vmem>>, vector<1x1x72x16xf32>
    %35 = vector.shape_cast %34 : vector<1x1x72x16xf32> to vector<72x16xf32>
    %36 = arith.truncf %35 : vector<72x16xf32> to vector<72x16xbf16>
    %c5 = arith.constant 5 : index
    %c0_38 = arith.constant 0 : index
    %c0_39 = arith.constant 0 : index
    %37 = vector.load %arg2[%c5, %c0_38, %c0_39] : memref<9x16x32xbf16, #tpu.memory_space<vmem>>, vector<1x16x32xbf16>
    %38 = vector.shape_cast %37 : vector<1x16x32xbf16> to vector<16x32xbf16>
    %cst_40 = arith.constant dense<0.000000e+00> : vector<72x32xf32>
    %39 = tpu.matmul %36, %38, %cst_40 {dimension_numbers = #tpu.dot_dimension_numbers<[1], [0], [0], [1], [0, 0, 1, 1], [], []>} : vector<72x16xbf16>, vector<16x32xbf16>, vector<72x32xf32> -> vector<72x32xf32>
    %40 = arith.addf %33, %39 : vector<72x32xf32>
    %c0_41 = arith.constant 0 : index
    %c0_42 = arith.constant 0 : index
    %c9 = arith.constant 9 : index
    %c0_43 = arith.constant 0 : index
    %41 = vector.load %arg1[%c0_41, %c0_42, %c9, %c0_43] : memref<1x4x82x16xf32, #tpu.memory_space<vmem>>, vector<1x1x72x16xf32>
    %42 = vector.shape_cast %41 : vector<1x1x72x16xf32> to vector<72x16xf32>
    %43 = arith.truncf %42 : vector<72x16xf32> to vector<72x16xbf16>
    %c6 = arith.constant 6 : index
    %c0_44 = arith.constant 0 : index
    %c0_45 = arith.constant 0 : index
    %44 = vector.load %arg2[%c6, %c0_44, %c0_45] : memref<9x16x32xbf16, #tpu.memory_space<vmem>>, vector<1x16x32xbf16>
    %45 = vector.shape_cast %44 : vector<1x16x32xbf16> to vector<16x32xbf16>
    %cst_46 = arith.constant dense<0.000000e+00> : vector<72x32xf32>
    %46 = tpu.matmul %43, %45, %cst_46 {dimension_numbers = #tpu.dot_dimension_numbers<[1], [0], [0], [1], [0, 0, 1, 1], [], []>} : vector<72x16xbf16>, vector<16x32xbf16>, vector<72x32xf32> -> vector<72x32xf32>
    %47 = arith.addf %40, %46 : vector<72x32xf32>
    %c0_47 = arith.constant 0 : index
    %c1_48 = arith.constant 1 : index
    %c9_49 = arith.constant 9 : index
    %c0_50 = arith.constant 0 : index
    %48 = vector.load %arg1[%c0_47, %c1_48, %c9_49, %c0_50] : memref<1x4x82x16xf32, #tpu.memory_space<vmem>>, vector<1x1x72x16xf32>
    %49 = vector.shape_cast %48 : vector<1x1x72x16xf32> to vector<72x16xf32>
    %50 = arith.truncf %49 : vector<72x16xf32> to vector<72x16xbf16>
    %c7 = arith.constant 7 : index
    %c0_51 = arith.constant 0 : index
    %c0_52 = arith.constant 0 : index
    %51 = vector.load %arg2[%c7, %c0_51, %c0_52] : memref<9x16x32xbf16, #tpu.memory_space<vmem>>, vector<1x16x32xbf16>
    %52 = vector.shape_cast %51 : vector<1x16x32xbf16> to vector<16x32xbf16>
    %cst_53 = arith.constant dense<0.000000e+00> : vector<72x32xf32>
    %53 = tpu.matmul %50, %52, %cst_53 {dimension_numbers = #tpu.dot_dimension_numbers<[1], [0], [0], [1], [0, 0, 1, 1], [], []>} : vector<72x16xbf16>, vector<16x32xbf16>, vector<72x32xf32> -> vector<72x32xf32>
    %54 = arith.addf %47, %53 : vector<72x32xf32>
    %c0_54 = arith.constant 0 : index
    %c0_55 = arith.constant 0 : index
    %c10 = arith.constant 10 : index
    %c0_56 = arith.constant 0 : index
    %55 = vector.load %arg1[%c0_54, %c0_55, %c10, %c0_56] : memref<1x4x82x16xf32, #tpu.memory_space<vmem>>, vector<1x1x72x16xf32>
    %56 = vector.shape_cast %55 : vector<1x1x72x16xf32> to vector<72x16xf32>
    %57 = arith.truncf %56 : vector<72x16xf32> to vector<72x16xbf16>
    %c8 = arith.constant 8 : index
    %c0_57 = arith.constant 0 : index
    %c0_58 = arith.constant 0 : index
    %58 = vector.load %arg2[%c8, %c0_57, %c0_58] : memref<9x16x32xbf16, #tpu.memory_space<vmem>>, vector<1x16x32xbf16>
    %59 = vector.shape_cast %58 : vector<1x16x32xbf16> to vector<16x32xbf16>
    %cst_59 = arith.constant dense<0.000000e+00> : vector<72x32xf32>
    %60 = tpu.matmul %57, %59, %cst_59 {dimension_numbers = #tpu.dot_dimension_numbers<[1], [0], [0], [1], [0, 0, 1, 1], [], []>} : vector<72x16xbf16>, vector<16x32xbf16>, vector<72x32xf32> -> vector<72x32xf32>
    %61 = arith.addf %54, %60 : vector<72x32xf32>
    %c0_60 = arith.constant 0 : index
    %c0_61 = arith.constant 0 : index
    %62 = vector.load %arg3[%c0_60, %c0_61] : memref<72x1xf32, #tpu.memory_space<vmem>>, vector<72x1xf32>
    %63 = vector.broadcast %62 : vector<72x1xf32> to vector<72x32xf32>
    %64 = arith.mulf %61, %63 : vector<72x32xf32>
    %cst_62 = arith.constant dense<0.000000e+00> : vector<32xf32>
    %65 = vector.multi_reduction <add>, %64, %cst_62 [0] : vector<72x32xf32> to vector<32xf32>
    %66 = vector.shape_cast %65 : vector<32xf32> to vector<1x32xf32>
    %cst_63 = arith.constant 1.562500e-02 : f32
    %67 = vector.broadcast %cst_63 : f32 to vector<1x32xf32>
    %68 = arith.mulf %66, %67 : vector<1x32xf32>
    %69 = vector.broadcast %68 : vector<1x32xf32> to vector<72x32xf32>
    %70 = arith.subf %61, %69 : vector<72x32xf32>
    %71 = arith.mulf %70, %70 : vector<72x32xf32>
    %72 = vector.broadcast %62 : vector<72x1xf32> to vector<72x32xf32>
    %73 = arith.mulf %71, %72 : vector<72x32xf32>
    %cst_64 = arith.constant dense<0.000000e+00> : vector<32xf32>
    %74 = vector.multi_reduction <add>, %73, %cst_64 [0] : vector<72x32xf32> to vector<32xf32>
    %75 = vector.shape_cast %74 : vector<32xf32> to vector<1x32xf32>
    %cst_65 = arith.constant 1.562500e-02 : f32
    %76 = vector.broadcast %cst_65 : f32 to vector<1x32xf32>
    %77 = arith.mulf %75, %76 : vector<1x32xf32>
    %c0_66 = arith.constant 0 : index
    %c0_67 = arith.constant 0 : index
    %78 = vector.load %arg4[%c0_66, %c0_67] : memref<1x32xf32, #tpu.memory_space<vmem>>, vector<1x32xf32>
    %cst_68 = arith.constant 9.99999974E-6 : f32
    %79 = vector.broadcast %cst_68 : f32 to vector<1x32xf32>
    %80 = arith.addf %77, %79 : vector<1x32xf32>
    %81 = math.rsqrt %80 : vector<1x32xf32>
    %82 = arith.mulf %78, %81 : vector<1x32xf32>
    %c0_69 = arith.constant 0 : index
    %c0_70 = arith.constant 0 : index
    %83 = vector.load %arg5[%c0_69, %c0_70] : memref<1x32xf32, #tpu.memory_space<vmem>>, vector<1x32xf32>
    %84 = arith.mulf %68, %82 : vector<1x32xf32>
    %85 = arith.subf %83, %84 : vector<1x32xf32>
    %c0_71 = arith.constant 0 : index
    %c0_72 = arith.constant 0 : index
    %86 = vector.load %arg6[%c0_71, %c0_72] : memref<1x32xf32, #tpu.memory_space<vmem>>, vector<1x32xf32>
    %cst_73 = arith.constant 0.000000e+00 : f32
    %87 = vector.broadcast %cst_73 : f32 to vector<1x32xf32>
    %88 = arith.cmpf ogt, %86, %87 : vector<1x32xf32>
    %c0_74 = arith.constant 0 : index
    %c0_75 = arith.constant 0 : index
    %89 = vector.load %arg7[%c0_74, %c0_75] : memref<1x32xf32, #tpu.memory_space<vmem>>, vector<1x32xf32>
    %90 = arith.select %88, %82, %89 : vector<1x32xi1>, vector<1x32xf32>
    %c0_76 = arith.constant 0 : index
    %c0_77 = arith.constant 0 : index
    %91 = vector.load %arg8[%c0_76, %c0_77] : memref<1x32xf32, #tpu.memory_space<vmem>>, vector<1x32xf32>
    %92 = arith.select %88, %85, %91 : vector<1x32xi1>, vector<1x32xf32>
    %93 = vector.broadcast %90 : vector<1x32xf32> to vector<72x32xf32>
    %94 = arith.mulf %61, %93 : vector<72x32xf32>
    %95 = vector.broadcast %92 : vector<1x32xf32> to vector<72x32xf32>
    %96 = arith.addf %94, %95 : vector<72x32xf32>
    %cst_78 = arith.constant 0.000000e+00 : f32
    %97 = vector.broadcast %cst_78 : f32 to vector<72x32xf32>
    %98 = arith.cmpf ogt, %96, %97 : vector<72x32xf32>
    %cst_79 = arith.constant 1.000000e-01 : f32
    %99 = vector.broadcast %cst_79 : f32 to vector<72x32xf32>
    %100 = arith.mulf %99, %96 : vector<72x32xf32>
    %101 = arith.select %98, %96, %100 : vector<72x32xi1>, vector<72x32xf32>
    %c0_80 = arith.constant 0 : index
    %c0_81 = arith.constant 0 : index
    %c0_82 = arith.constant 0 : index
    %102 = vector.load %arg10[%c0_80, %c0_81, %c0_82] : memref<1x72x32xf32, #tpu.memory_space<vmem>>, vector<1x72x32xf32>
    %103 = vector.shape_cast %102 : vector<1x72x32xf32> to vector<72x32xf32>
    %104 = vector.shape_cast %101 : vector<72x32xf32> to vector<1x72x32xf32>
    tpu.vector_store %arg10[%c0_80, %c0_81, %c0_82], %104 {strides = array<i32>} : memref<1x72x32xf32, #tpu.memory_space<vmem>>, vector<1x72x32xf32>,
    %c0_83 = arith.constant 0 : index
    %c3_84 = arith.constant 3 : index
    %c0_85 = arith.constant 0 : index
    %c0_86 = arith.constant 0 : index
    %105 = vector.load %arg1[%c0_83, %c3_84, %c0_85, %c0_86] : memref<1x4x82x16xf32, #tpu.memory_space<vmem>>, vector<1x1x72x16xf32>
    %106 = vector.shape_cast %105 : vector<1x1x72x16xf32> to vector<72x16xf32>
    %107 = arith.truncf %106 : vector<72x16xf32> to vector<72x16xbf16>
    %c0_87 = arith.constant 0 : index
    %c0_88 = arith.constant 0 : index
    %108 = vector.load %arg9[%c0_87, %c0_88] : memref<16x32xbf16, #tpu.memory_space<vmem>>, vector<16x32xbf16>
    %cst_89 = arith.constant dense<0.000000e+00> : vector<72x32xf32>
    %109 = tpu.matmul %107, %108, %cst_89 {dimension_numbers = #tpu.dot_dimension_numbers<[1], [0], [0], [1], [0, 0, 1, 1], [], []>} : vector<72x16xbf16>, vector<16x32xbf16>, vector<72x32xf32> -> vector<72x32xf32>
    %c0_90 = arith.constant 0 : index
    %c0_91 = arith.constant 0 : index
    %c0_92 = arith.constant 0 : index
    %110 = vector.load %arg11[%c0_90, %c0_91, %c0_92] : memref<1x72x32xf32, #tpu.memory_space<vmem>>, vector<1x72x32xf32>
    %111 = vector.shape_cast %110 : vector<1x72x32xf32> to vector<72x32xf32>
    %112 = vector.shape_cast %109 : vector<72x32xf32> to vector<1x72x32xf32>
    tpu.vector_store %arg11[%c0_90, %c0_91, %c0_92], %112 {strides = array<i32>} : memref<1x72x32xf32, #tpu.memory_space<vmem>>, vector<1x72x32xf32>,
    return
  }
  func.func @transform_0(%arg0: i32) -> (i32, i32, i32, i32) {
    %c0_i32 = arith.constant 0 : i32
    %c0_i32_0 = arith.constant 0 : i32
    %c0_i32_1 = arith.constant 0 : i32
    %c0_i32_2 = arith.constant 0 : i32
    return %arg0, %c0_i32, %c0_i32_0, %c0_i32_1 : i32, i32, i32, i32
  }
  func.func @transform_1(%arg0: i32) -> (i32, i32, i32) {
    %c0_i32 = arith.constant 0 : i32
    %c0_i32_0 = arith.constant 0 : i32
    %c0_i32_1 = arith.constant 0 : i32
    %c0_i32_2 = arith.constant 0 : i32
    return %c0_i32, %c0_i32_0, %c0_i32_1 : i32, i32, i32
  }
  func.func @transform_2(%arg0: i32) -> (i32, i32) {
    %c0_i32 = arith.constant 0 : i32
    %c0_i32_0 = arith.constant 0 : i32
    %c0_i32_1 = arith.constant 0 : i32
    return %c0_i32, %c0_i32_0 : i32, i32
  }
  func.func @transform_3(%arg0: i32) -> (i32, i32) {
    %c0_i32 = arith.constant 0 : i32
    %c0_i32_0 = arith.constant 0 : i32
    %c0_i32_1 = arith.constant 0 : i32
    return %c0_i32, %c0_i32_0 : i32, i32
  }
  func.func @transform_4(%arg0: i32) -> (i32, i32) {
    %c0_i32 = arith.constant 0 : i32
    %c0_i32_0 = arith.constant 0 : i32
    %c0_i32_1 = arith.constant 0 : i32
    return %c0_i32, %c0_i32_0 : i32, i32
  }
  func.func @transform_5(%arg0: i32) -> (i32, i32) {
    %c0_i32 = arith.constant 0 : i32
    %c0_i32_0 = arith.constant 0 : i32
    %c0_i32_1 = arith.constant 0 : i32
    return %c0_i32, %c0_i32_0 : i32, i32
  }
  func.func @transform_6(%arg0: i32) -> (i32, i32) {
    %c0_i32 = arith.constant 0 : i32
    %c0_i32_0 = arith.constant 0 : i32
    %c0_i32_1 = arith.constant 0 : i32
    return %c0_i32, %c0_i32_0 : i32, i32
  }
  func.func @transform_7(%arg0: i32) -> (i32, i32) {
    %c0_i32 = arith.constant 0 : i32
    %c0_i32_0 = arith.constant 0 : i32
    %c0_i32_1 = arith.constant 0 : i32
    return %c0_i32, %c0_i32_0 : i32, i32
  }
  func.func @transform_8(%arg0: i32) -> (i32, i32) {
    %c0_i32 = arith.constant 0 : i32
    %c0_i32_0 = arith.constant 0 : i32
    %c0_i32_1 = arith.constant 0 : i32
    return %c0_i32, %c0_i32_0 : i32, i32
  }
  func.func @transform_9(%arg0: i32) -> (i32, i32, i32) {
    %c0_i32 = arith.constant 0 : i32
    %c0_i32_0 = arith.constant 0 : i32
    %c0_i32_1 = arith.constant 0 : i32
    return %arg0, %c0_i32, %c0_i32_0 : i32, i32, i32
  }
  func.func @transform_10(%arg0: i32) -> (i32, i32, i32) {
    %c0_i32 = arith.constant 0 : i32
    %c0_i32_0 = arith.constant 0 : i32
    %c0_i32_1 = arith.constant 0 : i32
    return %arg0, %c0_i32, %c0_i32_0 : i32, i32, i32
  }
}

module attributes {stable_mosaic.version = 11 : i64} {
  func.func @_conv_res_kernel(%arg0: i32, %arg1: memref<1x1x102x32xf32, #tpu.memory_space<vmem>>, %arg2: memref<9x32x32xbf16, #tpu.memory_space<vmem>>, %arg3: memref<1x80x32xf32, #tpu.memory_space<vmem>>, %arg4: memref<1x80x32xf32, #tpu.memory_space<vmem>>) attributes {dimension_semantics = [#tpu.dimension_semantics<parallel>], iteration_bounds = array<i64: 2>, scalar_prefetch = 0 : i64, scratch_operands = 0 : i64, tpu.core_type = #tpu.core_type<tc>, window_params = [{transform_indices = @transform_0, window_bounds = array<i64: 1, 1, 102, 32>}, {pipeline_mode = #tpu.pipeline_mode<synchronous>, transform_indices = @transform_1, window_bounds = array<i64: 9, 32, 32>}, {transform_indices = @transform_2, window_bounds = array<i64: 1, 80, 32>}, {transform_indices = @transform_3, window_bounds = array<i64: 1, 80, 32>}]} {
    %c0 = arith.constant 0 : index
    %c0_0 = arith.constant 0 : index
    %c0_1 = arith.constant 0 : index
    %c0_2 = arith.constant 0 : index
    %0 = vector.load %arg1[%c0, %c0_0, %c0_1, %c0_2] : memref<1x1x102x32xf32, #tpu.memory_space<vmem>>, vector<1x1x80x32xf32>
    %1 = vector.shape_cast %0 : vector<1x1x80x32xf32> to vector<80x32xf32>
    %2 = arith.truncf %1 : vector<80x32xf32> to vector<80x32xbf16>
    %c0_3 = arith.constant 0 : index
    %c0_4 = arith.constant 0 : index
    %c0_5 = arith.constant 0 : index
    %3 = vector.load %arg2[%c0_3, %c0_4, %c0_5] : memref<9x32x32xbf16, #tpu.memory_space<vmem>>, vector<1x32x32xbf16>
    %4 = vector.shape_cast %3 : vector<1x32x32xbf16> to vector<32x32xbf16>
    %cst = arith.constant dense<0.000000e+00> : vector<80x32xf32>
    %5 = tpu.matmul %2, %4, %cst {dimension_numbers = #tpu.dot_dimension_numbers<[1], [0], [0], [1], [0, 0, 1, 1], [], []>} : vector<80x32xbf16>, vector<32x32xbf16>, vector<80x32xf32> -> vector<80x32xf32>
    %c0_6 = arith.constant 0 : index
    %c0_7 = arith.constant 0 : index
    %c1 = arith.constant 1 : index
    %c0_8 = arith.constant 0 : index
    %6 = vector.load %arg1[%c0_6, %c0_7, %c1, %c0_8] : memref<1x1x102x32xf32, #tpu.memory_space<vmem>>, vector<1x1x80x32xf32>
    %7 = vector.shape_cast %6 : vector<1x1x80x32xf32> to vector<80x32xf32>
    %8 = arith.truncf %7 : vector<80x32xf32> to vector<80x32xbf16>
    %c1_9 = arith.constant 1 : index
    %c0_10 = arith.constant 0 : index
    %c0_11 = arith.constant 0 : index
    %9 = vector.load %arg2[%c1_9, %c0_10, %c0_11] : memref<9x32x32xbf16, #tpu.memory_space<vmem>>, vector<1x32x32xbf16>
    %10 = vector.shape_cast %9 : vector<1x32x32xbf16> to vector<32x32xbf16>
    %cst_12 = arith.constant dense<0.000000e+00> : vector<80x32xf32>
    %11 = tpu.matmul %8, %10, %cst_12 {dimension_numbers = #tpu.dot_dimension_numbers<[1], [0], [0], [1], [0, 0, 1, 1], [], []>} : vector<80x32xbf16>, vector<32x32xbf16>, vector<80x32xf32> -> vector<80x32xf32>
    %12 = arith.addf %5, %11 : vector<80x32xf32>
    %c0_13 = arith.constant 0 : index
    %c0_14 = arith.constant 0 : index
    %c2 = arith.constant 2 : index
    %c0_15 = arith.constant 0 : index
    %13 = vector.load %arg1[%c0_13, %c0_14, %c2, %c0_15] : memref<1x1x102x32xf32, #tpu.memory_space<vmem>>, vector<1x1x80x32xf32>
    %14 = vector.shape_cast %13 : vector<1x1x80x32xf32> to vector<80x32xf32>
    %15 = arith.truncf %14 : vector<80x32xf32> to vector<80x32xbf16>
    %c2_16 = arith.constant 2 : index
    %c0_17 = arith.constant 0 : index
    %c0_18 = arith.constant 0 : index
    %16 = vector.load %arg2[%c2_16, %c0_17, %c0_18] : memref<9x32x32xbf16, #tpu.memory_space<vmem>>, vector<1x32x32xbf16>
    %17 = vector.shape_cast %16 : vector<1x32x32xbf16> to vector<32x32xbf16>
    %cst_19 = arith.constant dense<0.000000e+00> : vector<80x32xf32>
    %18 = tpu.matmul %15, %17, %cst_19 {dimension_numbers = #tpu.dot_dimension_numbers<[1], [0], [0], [1], [0, 0, 1, 1], [], []>} : vector<80x32xbf16>, vector<32x32xbf16>, vector<80x32xf32> -> vector<80x32xf32>
    %19 = arith.addf %12, %18 : vector<80x32xf32>
    %c0_20 = arith.constant 0 : index
    %c0_21 = arith.constant 0 : index
    %c10 = arith.constant 10 : index
    %c0_22 = arith.constant 0 : index
    %20 = vector.load %arg1[%c0_20, %c0_21, %c10, %c0_22] : memref<1x1x102x32xf32, #tpu.memory_space<vmem>>, vector<1x1x80x32xf32>
    %21 = vector.shape_cast %20 : vector<1x1x80x32xf32> to vector<80x32xf32>
    %22 = arith.truncf %21 : vector<80x32xf32> to vector<80x32xbf16>
    %c3 = arith.constant 3 : index
    %c0_23 = arith.constant 0 : index
    %c0_24 = arith.constant 0 : index
    %23 = vector.load %arg2[%c3, %c0_23, %c0_24] : memref<9x32x32xbf16, #tpu.memory_space<vmem>>, vector<1x32x32xbf16>
    %24 = vector.shape_cast %23 : vector<1x32x32xbf16> to vector<32x32xbf16>
    %cst_25 = arith.constant dense<0.000000e+00> : vector<80x32xf32>
    %25 = tpu.matmul %22, %24, %cst_25 {dimension_numbers = #tpu.dot_dimension_numbers<[1], [0], [0], [1], [0, 0, 1, 1], [], []>} : vector<80x32xbf16>, vector<32x32xbf16>, vector<80x32xf32> -> vector<80x32xf32>
    %26 = arith.addf %19, %25 : vector<80x32xf32>
    %c0_26 = arith.constant 0 : index
    %c0_27 = arith.constant 0 : index
    %c11 = arith.constant 11 : index
    %c0_28 = arith.constant 0 : index
    %27 = vector.load %arg1[%c0_26, %c0_27, %c11, %c0_28] : memref<1x1x102x32xf32, #tpu.memory_space<vmem>>, vector<1x1x80x32xf32>
    %28 = vector.shape_cast %27 : vector<1x1x80x32xf32> to vector<80x32xf32>
    %29 = arith.truncf %28 : vector<80x32xf32> to vector<80x32xbf16>
    %c4 = arith.constant 4 : index
    %c0_29 = arith.constant 0 : index
    %c0_30 = arith.constant 0 : index
    %30 = vector.load %arg2[%c4, %c0_29, %c0_30] : memref<9x32x32xbf16, #tpu.memory_space<vmem>>, vector<1x32x32xbf16>
    %31 = vector.shape_cast %30 : vector<1x32x32xbf16> to vector<32x32xbf16>
    %cst_31 = arith.constant dense<0.000000e+00> : vector<80x32xf32>
    %32 = tpu.matmul %29, %31, %cst_31 {dimension_numbers = #tpu.dot_dimension_numbers<[1], [0], [0], [1], [0, 0, 1, 1], [], []>} : vector<80x32xbf16>, vector<32x32xbf16>, vector<80x32xf32> -> vector<80x32xf32>
    %33 = arith.addf %26, %32 : vector<80x32xf32>
    %c0_32 = arith.constant 0 : index
    %c0_33 = arith.constant 0 : index
    %c12 = arith.constant 12 : index
    %c0_34 = arith.constant 0 : index
    %34 = vector.load %arg1[%c0_32, %c0_33, %c12, %c0_34] : memref<1x1x102x32xf32, #tpu.memory_space<vmem>>, vector<1x1x80x32xf32>
    %35 = vector.shape_cast %34 : vector<1x1x80x32xf32> to vector<80x32xf32>
    %36 = arith.truncf %35 : vector<80x32xf32> to vector<80x32xbf16>
    %c5 = arith.constant 5 : index
    %c0_35 = arith.constant 0 : index
    %c0_36 = arith.constant 0 : index
    %37 = vector.load %arg2[%c5, %c0_35, %c0_36] : memref<9x32x32xbf16, #tpu.memory_space<vmem>>, vector<1x32x32xbf16>
    %38 = vector.shape_cast %37 : vector<1x32x32xbf16> to vector<32x32xbf16>
    %cst_37 = arith.constant dense<0.000000e+00> : vector<80x32xf32>
    %39 = tpu.matmul %36, %38, %cst_37 {dimension_numbers = #tpu.dot_dimension_numbers<[1], [0], [0], [1], [0, 0, 1, 1], [], []>} : vector<80x32xbf16>, vector<32x32xbf16>, vector<80x32xf32> -> vector<80x32xf32>
    %40 = arith.addf %33, %39 : vector<80x32xf32>
    %c0_38 = arith.constant 0 : index
    %c0_39 = arith.constant 0 : index
    %c20 = arith.constant 20 : index
    %c0_40 = arith.constant 0 : index
    %41 = vector.load %arg1[%c0_38, %c0_39, %c20, %c0_40] : memref<1x1x102x32xf32, #tpu.memory_space<vmem>>, vector<1x1x80x32xf32>
    %42 = vector.shape_cast %41 : vector<1x1x80x32xf32> to vector<80x32xf32>
    %43 = arith.truncf %42 : vector<80x32xf32> to vector<80x32xbf16>
    %c6 = arith.constant 6 : index
    %c0_41 = arith.constant 0 : index
    %c0_42 = arith.constant 0 : index
    %44 = vector.load %arg2[%c6, %c0_41, %c0_42] : memref<9x32x32xbf16, #tpu.memory_space<vmem>>, vector<1x32x32xbf16>
    %45 = vector.shape_cast %44 : vector<1x32x32xbf16> to vector<32x32xbf16>
    %cst_43 = arith.constant dense<0.000000e+00> : vector<80x32xf32>
    %46 = tpu.matmul %43, %45, %cst_43 {dimension_numbers = #tpu.dot_dimension_numbers<[1], [0], [0], [1], [0, 0, 1, 1], [], []>} : vector<80x32xbf16>, vector<32x32xbf16>, vector<80x32xf32> -> vector<80x32xf32>
    %47 = arith.addf %40, %46 : vector<80x32xf32>
    %c0_44 = arith.constant 0 : index
    %c0_45 = arith.constant 0 : index
    %c21 = arith.constant 21 : index
    %c0_46 = arith.constant 0 : index
    %48 = vector.load %arg1[%c0_44, %c0_45, %c21, %c0_46] : memref<1x1x102x32xf32, #tpu.memory_space<vmem>>, vector<1x1x80x32xf32>
    %49 = vector.shape_cast %48 : vector<1x1x80x32xf32> to vector<80x32xf32>
    %50 = arith.truncf %49 : vector<80x32xf32> to vector<80x32xbf16>
    %c7 = arith.constant 7 : index
    %c0_47 = arith.constant 0 : index
    %c0_48 = arith.constant 0 : index
    %51 = vector.load %arg2[%c7, %c0_47, %c0_48] : memref<9x32x32xbf16, #tpu.memory_space<vmem>>, vector<1x32x32xbf16>
    %52 = vector.shape_cast %51 : vector<1x32x32xbf16> to vector<32x32xbf16>
    %cst_49 = arith.constant dense<0.000000e+00> : vector<80x32xf32>
    %53 = tpu.matmul %50, %52, %cst_49 {dimension_numbers = #tpu.dot_dimension_numbers<[1], [0], [0], [1], [0, 0, 1, 1], [], []>} : vector<80x32xbf16>, vector<32x32xbf16>, vector<80x32xf32> -> vector<80x32xf32>
    %54 = arith.addf %47, %53 : vector<80x32xf32>
    %c0_50 = arith.constant 0 : index
    %c0_51 = arith.constant 0 : index
    %c22 = arith.constant 22 : index
    %c0_52 = arith.constant 0 : index
    %55 = vector.load %arg1[%c0_50, %c0_51, %c22, %c0_52] : memref<1x1x102x32xf32, #tpu.memory_space<vmem>>, vector<1x1x80x32xf32>
    %56 = vector.shape_cast %55 : vector<1x1x80x32xf32> to vector<80x32xf32>
    %57 = arith.truncf %56 : vector<80x32xf32> to vector<80x32xbf16>
    %c8 = arith.constant 8 : index
    %c0_53 = arith.constant 0 : index
    %c0_54 = arith.constant 0 : index
    %58 = vector.load %arg2[%c8, %c0_53, %c0_54] : memref<9x32x32xbf16, #tpu.memory_space<vmem>>, vector<1x32x32xbf16>
    %59 = vector.shape_cast %58 : vector<1x32x32xbf16> to vector<32x32xbf16>
    %cst_55 = arith.constant dense<0.000000e+00> : vector<80x32xf32>
    %60 = tpu.matmul %57, %59, %cst_55 {dimension_numbers = #tpu.dot_dimension_numbers<[1], [0], [0], [1], [0, 0, 1, 1], [], []>} : vector<80x32xbf16>, vector<32x32xbf16>, vector<80x32xf32> -> vector<80x32xf32>
    %61 = arith.addf %54, %60 : vector<80x32xf32>
    %c0_56 = arith.constant 0 : index
    %c0_57 = arith.constant 0 : index
    %c0_58 = arith.constant 0 : index
    %62 = vector.load %arg3[%c0_56, %c0_57, %c0_58] : memref<1x80x32xf32, #tpu.memory_space<vmem>>, vector<1x80x32xf32>
    %63 = vector.shape_cast %62 : vector<1x80x32xf32> to vector<80x32xf32>
    %64 = arith.addf %61, %63 : vector<80x32xf32>
    %c0_59 = arith.constant 0 : index
    %c0_60 = arith.constant 0 : index
    %c0_61 = arith.constant 0 : index
    %65 = vector.load %arg4[%c0_59, %c0_60, %c0_61] : memref<1x80x32xf32, #tpu.memory_space<vmem>>, vector<1x80x32xf32>
    %66 = vector.shape_cast %65 : vector<1x80x32xf32> to vector<80x32xf32>
    %67 = vector.shape_cast %64 : vector<80x32xf32> to vector<1x80x32xf32>
    tpu.vector_store %arg4[%c0_59, %c0_60, %c0_61], %67 {strides = array<i32>} : memref<1x80x32xf32, #tpu.memory_space<vmem>>, vector<1x80x32xf32>,
    return
  }
  func.func @transform_0(%arg0: i32) -> (i32, i32, i32, i32) {
    %c0_i32 = arith.constant 0 : i32
    %c0_i32_0 = arith.constant 0 : i32
    %c0_i32_1 = arith.constant 0 : i32
    %c0_i32_2 = arith.constant 0 : i32
    return %arg0, %c0_i32, %c0_i32_0, %c0_i32_1 : i32, i32, i32, i32
  }
  func.func @transform_1(%arg0: i32) -> (i32, i32, i32) {
    %c0_i32 = arith.constant 0 : i32
    %c0_i32_0 = arith.constant 0 : i32
    %c0_i32_1 = arith.constant 0 : i32
    %c0_i32_2 = arith.constant 0 : i32
    return %c0_i32, %c0_i32_0, %c0_i32_1 : i32, i32, i32
  }
  func.func @transform_2(%arg0: i32) -> (i32, i32, i32) {
    %c0_i32 = arith.constant 0 : i32
    %c0_i32_0 = arith.constant 0 : i32
    %c0_i32_1 = arith.constant 0 : i32
    return %arg0, %c0_i32, %c0_i32_0 : i32, i32, i32
  }
  func.func @transform_3(%arg0: i32) -> (i32, i32, i32) {
    %c0_i32 = arith.constant 0 : i32
    %c0_i32_0 = arith.constant 0 : i32
    %c0_i32_1 = arith.constant 0 : i32
    return %arg0, %c0_i32, %c0_i32_0 : i32, i32, i32
  }
}

module attributes {stable_mosaic.version = 11 : i64} {
  func.func @_conv_res_kernel(%arg0: i32, %arg1: memref<1x1x38x64xf32, #tpu.memory_space<vmem>>, %arg2: memref<9x64x64xbf16, #tpu.memory_space<vmem>>, %arg3: memref<1x24x64xf32, #tpu.memory_space<vmem>>, %arg4: memref<1x24x64xf32, #tpu.memory_space<vmem>>) attributes {dimension_semantics = [#tpu.dimension_semantics<parallel>], iteration_bounds = array<i64: 2>, scalar_prefetch = 0 : i64, scratch_operands = 0 : i64, tpu.core_type = #tpu.core_type<tc>, window_params = [{transform_indices = @transform_0, window_bounds = array<i64: 1, 1, 38, 64>}, {pipeline_mode = #tpu.pipeline_mode<synchronous>, transform_indices = @transform_1, window_bounds = array<i64: 9, 64, 64>}, {transform_indices = @transform_2, window_bounds = array<i64: 1, 24, 64>}, {transform_indices = @transform_3, window_bounds = array<i64: 1, 24, 64>}]} {
    %c0 = arith.constant 0 : index
    %c0_0 = arith.constant 0 : index
    %c0_1 = arith.constant 0 : index
    %c0_2 = arith.constant 0 : index
    %0 = vector.load %arg1[%c0, %c0_0, %c0_1, %c0_2] : memref<1x1x38x64xf32, #tpu.memory_space<vmem>>, vector<1x1x24x64xf32>
    %1 = vector.shape_cast %0 : vector<1x1x24x64xf32> to vector<24x64xf32>
    %2 = arith.truncf %1 : vector<24x64xf32> to vector<24x64xbf16>
    %c0_3 = arith.constant 0 : index
    %c0_4 = arith.constant 0 : index
    %c0_5 = arith.constant 0 : index
    %3 = vector.load %arg2[%c0_3, %c0_4, %c0_5] : memref<9x64x64xbf16, #tpu.memory_space<vmem>>, vector<1x64x64xbf16>
    %4 = vector.shape_cast %3 : vector<1x64x64xbf16> to vector<64x64xbf16>
    %cst = arith.constant dense<0.000000e+00> : vector<24x64xf32>
    %5 = tpu.matmul %2, %4, %cst {dimension_numbers = #tpu.dot_dimension_numbers<[1], [0], [0], [1], [0, 0, 1, 1], [], []>} : vector<24x64xbf16>, vector<64x64xbf16>, vector<24x64xf32> -> vector<24x64xf32>
    %c0_6 = arith.constant 0 : index
    %c0_7 = arith.constant 0 : index
    %c1 = arith.constant 1 : index
    %c0_8 = arith.constant 0 : index
    %6 = vector.load %arg1[%c0_6, %c0_7, %c1, %c0_8] : memref<1x1x38x64xf32, #tpu.memory_space<vmem>>, vector<1x1x24x64xf32>
    %7 = vector.shape_cast %6 : vector<1x1x24x64xf32> to vector<24x64xf32>
    %8 = arith.truncf %7 : vector<24x64xf32> to vector<24x64xbf16>
    %c1_9 = arith.constant 1 : index
    %c0_10 = arith.constant 0 : index
    %c0_11 = arith.constant 0 : index
    %9 = vector.load %arg2[%c1_9, %c0_10, %c0_11] : memref<9x64x64xbf16, #tpu.memory_space<vmem>>, vector<1x64x64xbf16>
    %10 = vector.shape_cast %9 : vector<1x64x64xbf16> to vector<64x64xbf16>
    %cst_12 = arith.constant dense<0.000000e+00> : vector<24x64xf32>
    %11 = tpu.matmul %8, %10, %cst_12 {dimension_numbers = #tpu.dot_dimension_numbers<[1], [0], [0], [1], [0, 0, 1, 1], [], []>} : vector<24x64xbf16>, vector<64x64xbf16>, vector<24x64xf32> -> vector<24x64xf32>
    %12 = arith.addf %5, %11 : vector<24x64xf32>
    %c0_13 = arith.constant 0 : index
    %c0_14 = arith.constant 0 : index
    %c2 = arith.constant 2 : index
    %c0_15 = arith.constant 0 : index
    %13 = vector.load %arg1[%c0_13, %c0_14, %c2, %c0_15] : memref<1x1x38x64xf32, #tpu.memory_space<vmem>>, vector<1x1x24x64xf32>
    %14 = vector.shape_cast %13 : vector<1x1x24x64xf32> to vector<24x64xf32>
    %15 = arith.truncf %14 : vector<24x64xf32> to vector<24x64xbf16>
    %c2_16 = arith.constant 2 : index
    %c0_17 = arith.constant 0 : index
    %c0_18 = arith.constant 0 : index
    %16 = vector.load %arg2[%c2_16, %c0_17, %c0_18] : memref<9x64x64xbf16, #tpu.memory_space<vmem>>, vector<1x64x64xbf16>
    %17 = vector.shape_cast %16 : vector<1x64x64xbf16> to vector<64x64xbf16>
    %cst_19 = arith.constant dense<0.000000e+00> : vector<24x64xf32>
    %18 = tpu.matmul %15, %17, %cst_19 {dimension_numbers = #tpu.dot_dimension_numbers<[1], [0], [0], [1], [0, 0, 1, 1], [], []>} : vector<24x64xbf16>, vector<64x64xbf16>, vector<24x64xf32> -> vector<24x64xf32>
    %19 = arith.addf %12, %18 : vector<24x64xf32>
    %c0_20 = arith.constant 0 : index
    %c0_21 = arith.constant 0 : index
    %c6 = arith.constant 6 : index
    %c0_22 = arith.constant 0 : index
    %20 = vector.load %arg1[%c0_20, %c0_21, %c6, %c0_22] : memref<1x1x38x64xf32, #tpu.memory_space<vmem>>, vector<1x1x24x64xf32>
    %21 = vector.shape_cast %20 : vector<1x1x24x64xf32> to vector<24x64xf32>
    %22 = arith.truncf %21 : vector<24x64xf32> to vector<24x64xbf16>
    %c3 = arith.constant 3 : index
    %c0_23 = arith.constant 0 : index
    %c0_24 = arith.constant 0 : index
    %23 = vector.load %arg2[%c3, %c0_23, %c0_24] : memref<9x64x64xbf16, #tpu.memory_space<vmem>>, vector<1x64x64xbf16>
    %24 = vector.shape_cast %23 : vector<1x64x64xbf16> to vector<64x64xbf16>
    %cst_25 = arith.constant dense<0.000000e+00> : vector<24x64xf32>
    %25 = tpu.matmul %22, %24, %cst_25 {dimension_numbers = #tpu.dot_dimension_numbers<[1], [0], [0], [1], [0, 0, 1, 1], [], []>} : vector<24x64xbf16>, vector<64x64xbf16>, vector<24x64xf32> -> vector<24x64xf32>
    %26 = arith.addf %19, %25 : vector<24x64xf32>
    %c0_26 = arith.constant 0 : index
    %c0_27 = arith.constant 0 : index
    %c7 = arith.constant 7 : index
    %c0_28 = arith.constant 0 : index
    %27 = vector.load %arg1[%c0_26, %c0_27, %c7, %c0_28] : memref<1x1x38x64xf32, #tpu.memory_space<vmem>>, vector<1x1x24x64xf32>
    %28 = vector.shape_cast %27 : vector<1x1x24x64xf32> to vector<24x64xf32>
    %29 = arith.truncf %28 : vector<24x64xf32> to vector<24x64xbf16>
    %c4 = arith.constant 4 : index
    %c0_29 = arith.constant 0 : index
    %c0_30 = arith.constant 0 : index
    %30 = vector.load %arg2[%c4, %c0_29, %c0_30] : memref<9x64x64xbf16, #tpu.memory_space<vmem>>, vector<1x64x64xbf16>
    %31 = vector.shape_cast %30 : vector<1x64x64xbf16> to vector<64x64xbf16>
    %cst_31 = arith.constant dense<0.000000e+00> : vector<24x64xf32>
    %32 = tpu.matmul %29, %31, %cst_31 {dimension_numbers = #tpu.dot_dimension_numbers<[1], [0], [0], [1], [0, 0, 1, 1], [], []>} : vector<24x64xbf16>, vector<64x64xbf16>, vector<24x64xf32> -> vector<24x64xf32>
    %33 = arith.addf %26, %32 : vector<24x64xf32>
    %c0_32 = arith.constant 0 : index
    %c0_33 = arith.constant 0 : index
    %c8 = arith.constant 8 : index
    %c0_34 = arith.constant 0 : index
    %34 = vector.load %arg1[%c0_32, %c0_33, %c8, %c0_34] : memref<1x1x38x64xf32, #tpu.memory_space<vmem>>, vector<1x1x24x64xf32>
    %35 = vector.shape_cast %34 : vector<1x1x24x64xf32> to vector<24x64xf32>
    %36 = arith.truncf %35 : vector<24x64xf32> to vector<24x64xbf16>
    %c5 = arith.constant 5 : index
    %c0_35 = arith.constant 0 : index
    %c0_36 = arith.constant 0 : index
    %37 = vector.load %arg2[%c5, %c0_35, %c0_36] : memref<9x64x64xbf16, #tpu.memory_space<vmem>>, vector<1x64x64xbf16>
    %38 = vector.shape_cast %37 : vector<1x64x64xbf16> to vector<64x64xbf16>
    %cst_37 = arith.constant dense<0.000000e+00> : vector<24x64xf32>
    %39 = tpu.matmul %36, %38, %cst_37 {dimension_numbers = #tpu.dot_dimension_numbers<[1], [0], [0], [1], [0, 0, 1, 1], [], []>} : vector<24x64xbf16>, vector<64x64xbf16>, vector<24x64xf32> -> vector<24x64xf32>
    %40 = arith.addf %33, %39 : vector<24x64xf32>
    %c0_38 = arith.constant 0 : index
    %c0_39 = arith.constant 0 : index
    %c12 = arith.constant 12 : index
    %c0_40 = arith.constant 0 : index
    %41 = vector.load %arg1[%c0_38, %c0_39, %c12, %c0_40] : memref<1x1x38x64xf32, #tpu.memory_space<vmem>>, vector<1x1x24x64xf32>
    %42 = vector.shape_cast %41 : vector<1x1x24x64xf32> to vector<24x64xf32>
    %43 = arith.truncf %42 : vector<24x64xf32> to vector<24x64xbf16>
    %c6_41 = arith.constant 6 : index
    %c0_42 = arith.constant 0 : index
    %c0_43 = arith.constant 0 : index
    %44 = vector.load %arg2[%c6_41, %c0_42, %c0_43] : memref<9x64x64xbf16, #tpu.memory_space<vmem>>, vector<1x64x64xbf16>
    %45 = vector.shape_cast %44 : vector<1x64x64xbf16> to vector<64x64xbf16>
    %cst_44 = arith.constant dense<0.000000e+00> : vector<24x64xf32>
    %46 = tpu.matmul %43, %45, %cst_44 {dimension_numbers = #tpu.dot_dimension_numbers<[1], [0], [0], [1], [0, 0, 1, 1], [], []>} : vector<24x64xbf16>, vector<64x64xbf16>, vector<24x64xf32> -> vector<24x64xf32>
    %47 = arith.addf %40, %46 : vector<24x64xf32>
    %c0_45 = arith.constant 0 : index
    %c0_46 = arith.constant 0 : index
    %c13 = arith.constant 13 : index
    %c0_47 = arith.constant 0 : index
    %48 = vector.load %arg1[%c0_45, %c0_46, %c13, %c0_47] : memref<1x1x38x64xf32, #tpu.memory_space<vmem>>, vector<1x1x24x64xf32>
    %49 = vector.shape_cast %48 : vector<1x1x24x64xf32> to vector<24x64xf32>
    %50 = arith.truncf %49 : vector<24x64xf32> to vector<24x64xbf16>
    %c7_48 = arith.constant 7 : index
    %c0_49 = arith.constant 0 : index
    %c0_50 = arith.constant 0 : index
    %51 = vector.load %arg2[%c7_48, %c0_49, %c0_50] : memref<9x64x64xbf16, #tpu.memory_space<vmem>>, vector<1x64x64xbf16>
    %52 = vector.shape_cast %51 : vector<1x64x64xbf16> to vector<64x64xbf16>
    %cst_51 = arith.constant dense<0.000000e+00> : vector<24x64xf32>
    %53 = tpu.matmul %50, %52, %cst_51 {dimension_numbers = #tpu.dot_dimension_numbers<[1], [0], [0], [1], [0, 0, 1, 1], [], []>} : vector<24x64xbf16>, vector<64x64xbf16>, vector<24x64xf32> -> vector<24x64xf32>
    %54 = arith.addf %47, %53 : vector<24x64xf32>
    %c0_52 = arith.constant 0 : index
    %c0_53 = arith.constant 0 : index
    %c14 = arith.constant 14 : index
    %c0_54 = arith.constant 0 : index
    %55 = vector.load %arg1[%c0_52, %c0_53, %c14, %c0_54] : memref<1x1x38x64xf32, #tpu.memory_space<vmem>>, vector<1x1x24x64xf32>
    %56 = vector.shape_cast %55 : vector<1x1x24x64xf32> to vector<24x64xf32>
    %57 = arith.truncf %56 : vector<24x64xf32> to vector<24x64xbf16>
    %c8_55 = arith.constant 8 : index
    %c0_56 = arith.constant 0 : index
    %c0_57 = arith.constant 0 : index
    %58 = vector.load %arg2[%c8_55, %c0_56, %c0_57] : memref<9x64x64xbf16, #tpu.memory_space<vmem>>, vector<1x64x64xbf16>
    %59 = vector.shape_cast %58 : vector<1x64x64xbf16> to vector<64x64xbf16>
    %cst_58 = arith.constant dense<0.000000e+00> : vector<24x64xf32>
    %60 = tpu.matmul %57, %59, %cst_58 {dimension_numbers = #tpu.dot_dimension_numbers<[1], [0], [0], [1], [0, 0, 1, 1], [], []>} : vector<24x64xbf16>, vector<64x64xbf16>, vector<24x64xf32> -> vector<24x64xf32>
    %61 = arith.addf %54, %60 : vector<24x64xf32>
    %c0_59 = arith.constant 0 : index
    %c0_60 = arith.constant 0 : index
    %c0_61 = arith.constant 0 : index
    %62 = vector.load %arg3[%c0_59, %c0_60, %c0_61] : memref<1x24x64xf32, #tpu.memory_space<vmem>>, vector<1x24x64xf32>
    %63 = vector.shape_cast %62 : vector<1x24x64xf32> to vector<24x64xf32>
    %64 = arith.addf %61, %63 : vector<24x64xf32>
    %c0_62 = arith.constant 0 : index
    %c0_63 = arith.constant 0 : index
    %c0_64 = arith.constant 0 : index
    %65 = vector.load %arg4[%c0_62, %c0_63, %c0_64] : memref<1x24x64xf32, #tpu.memory_space<vmem>>, vector<1x24x64xf32>
    %66 = vector.shape_cast %65 : vector<1x24x64xf32> to vector<24x64xf32>
    %67 = vector.shape_cast %64 : vector<24x64xf32> to vector<1x24x64xf32>
    tpu.vector_store %arg4[%c0_62, %c0_63, %c0_64], %67 {strides = array<i32>} : memref<1x24x64xf32, #tpu.memory_space<vmem>>, vector<1x24x64xf32>,
    return
  }
  func.func @transform_0(%arg0: i32) -> (i32, i32, i32, i32) {
    %c0_i32 = arith.constant 0 : i32
    %c0_i32_0 = arith.constant 0 : i32
    %c0_i32_1 = arith.constant 0 : i32
    %c0_i32_2 = arith.constant 0 : i32
    return %arg0, %c0_i32, %c0_i32_0, %c0_i32_1 : i32, i32, i32, i32
  }
  func.func @transform_1(%arg0: i32) -> (i32, i32, i32) {
    %c0_i32 = arith.constant 0 : i32
    %c0_i32_0 = arith.constant 0 : i32
    %c0_i32_1 = arith.constant 0 : i32
    %c0_i32_2 = arith.constant 0 : i32
    return %c0_i32, %c0_i32_0, %c0_i32_1 : i32, i32, i32
  }
  func.func @transform_2(%arg0: i32) -> (i32, i32, i32) {
    %c0_i32 = arith.constant 0 : i32
    %c0_i32_0 = arith.constant 0 : i32
    %c0_i32_1 = arith.constant 0 : i32
    return %arg0, %c0_i32, %c0_i32_0 : i32, i32, i32
  }
  func.func @transform_3(%arg0: i32) -> (i32, i32, i32) {
    %c0_i32 = arith.constant 0 : i32
    %c0_i32_0 = arith.constant 0 : i32
    %c0_i32_1 = arith.constant 0 : i32
    return %arg0, %c0_i32, %c0_i32_0 : i32, i32, i32
  }
}

module attributes {stable_mosaic.version = 11 : i64} {
  func.func @_conv_ibn_sc_kernel(%arg0: i32, %arg1: memref<1x4x26x32xf32, #tpu.memory_space<vmem>>, %arg2: memref<9x32x64xbf16, #tpu.memory_space<vmem>>, %arg3: memref<20x1xf32, #tpu.memory_space<vmem>>, %arg4: memref<1x64xf32, #tpu.memory_space<vmem>>, %arg5: memref<1x64xf32, #tpu.memory_space<vmem>>, %arg6: memref<1x64xf32, #tpu.memory_space<vmem>>, %arg7: memref<1x64xf32, #tpu.memory_space<vmem>>, %arg8: memref<1x64xf32, #tpu.memory_space<vmem>>, %arg9: memref<32x64xbf16, #tpu.memory_space<vmem>>, %arg10: memref<1x20x64xf32, #tpu.memory_space<vmem>>, %arg11: memref<1x20x64xf32, #tpu.memory_space<vmem>>) attributes {dimension_semantics = [#tpu.dimension_semantics<parallel>], iteration_bounds = array<i64: 2>, scalar_prefetch = 0 : i64, scratch_operands = 0 : i64, tpu.core_type = #tpu.core_type<tc>, window_params = [{transform_indices = @transform_0, window_bounds = array<i64: 1, 4, 26, 32>}, {pipeline_mode = #tpu.pipeline_mode<synchronous>, transform_indices = @transform_1, window_bounds = array<i64: 9, 32, 64>}, {pipeline_mode = #tpu.pipeline_mode<synchronous>, transform_indices = @transform_2, window_bounds = array<i64: 20, 1>}, {pipeline_mode = #tpu.pipeline_mode<synchronous>, transform_indices = @transform_3, window_bounds = array<i64: 1, 64>}, {pipeline_mode = #tpu.pipeline_mode<synchronous>, transform_indices = @transform_4, window_bounds = array<i64: 1, 64>}, {pipeline_mode = #tpu.pipeline_mode<synchronous>, transform_indices = @transform_5, window_bounds = array<i64: 1, 64>}, {pipeline_mode = #tpu.pipeline_mode<synchronous>, transform_indices = @transform_6, window_bounds = array<i64: 1, 64>}, {pipeline_mode = #tpu.pipeline_mode<synchronous>, transform_indices = @transform_7, window_bounds = array<i64: 1, 64>}, {pipeline_mode = #tpu.pipeline_mode<synchronous>, transform_indices = @transform_8, window_bounds = array<i64: 32, 64>}, {transform_indices = @transform_9, window_bounds = array<i64: 1, 20, 64>}, {transform_indices = @transform_10, window_bounds = array<i64: 1, 20, 64>}]} {
    %c0 = arith.constant 0 : index
    %c0_0 = arith.constant 0 : index
    %c0_1 = arith.constant 0 : index
    %c0_2 = arith.constant 0 : index
    %0 = vector.load %arg1[%c0, %c0_0, %c0_1, %c0_2] : memref<1x4x26x32xf32, #tpu.memory_space<vmem>>, vector<1x1x20x32xf32>
    %1 = vector.shape_cast %0 : vector<1x1x20x32xf32> to vector<20x32xf32>
    %2 = arith.truncf %1 : vector<20x32xf32> to vector<20x32xbf16>
    %c0_3 = arith.constant 0 : index
    %c0_4 = arith.constant 0 : index
    %c0_5 = arith.constant 0 : index
    %3 = vector.load %arg2[%c0_3, %c0_4, %c0_5] : memref<9x32x64xbf16, #tpu.memory_space<vmem>>, vector<1x32x64xbf16>
    %4 = vector.shape_cast %3 : vector<1x32x64xbf16> to vector<32x64xbf16>
    %cst = arith.constant dense<0.000000e+00> : vector<20x64xf32>
    %5 = tpu.matmul %2, %4, %cst {dimension_numbers = #tpu.dot_dimension_numbers<[1], [0], [0], [1], [0, 0, 1, 1], [], []>} : vector<20x32xbf16>, vector<32x64xbf16>, vector<20x64xf32> -> vector<20x64xf32>
    %c0_6 = arith.constant 0 : index
    %c1 = arith.constant 1 : index
    %c0_7 = arith.constant 0 : index
    %c0_8 = arith.constant 0 : index
    %6 = vector.load %arg1[%c0_6, %c1, %c0_7, %c0_8] : memref<1x4x26x32xf32, #tpu.memory_space<vmem>>, vector<1x1x20x32xf32>
    %7 = vector.shape_cast %6 : vector<1x1x20x32xf32> to vector<20x32xf32>
    %8 = arith.truncf %7 : vector<20x32xf32> to vector<20x32xbf16>
    %c1_9 = arith.constant 1 : index
    %c0_10 = arith.constant 0 : index
    %c0_11 = arith.constant 0 : index
    %9 = vector.load %arg2[%c1_9, %c0_10, %c0_11] : memref<9x32x64xbf16, #tpu.memory_space<vmem>>, vector<1x32x64xbf16>
    %10 = vector.shape_cast %9 : vector<1x32x64xbf16> to vector<32x64xbf16>
    %cst_12 = arith.constant dense<0.000000e+00> : vector<20x64xf32>
    %11 = tpu.matmul %8, %10, %cst_12 {dimension_numbers = #tpu.dot_dimension_numbers<[1], [0], [0], [1], [0, 0, 1, 1], [], []>} : vector<20x32xbf16>, vector<32x64xbf16>, vector<20x64xf32> -> vector<20x64xf32>
    %12 = arith.addf %5, %11 : vector<20x64xf32>
    %c0_13 = arith.constant 0 : index
    %c0_14 = arith.constant 0 : index
    %c1_15 = arith.constant 1 : index
    %c0_16 = arith.constant 0 : index
    %13 = vector.load %arg1[%c0_13, %c0_14, %c1_15, %c0_16] : memref<1x4x26x32xf32, #tpu.memory_space<vmem>>, vector<1x1x20x32xf32>
    %14 = vector.shape_cast %13 : vector<1x1x20x32xf32> to vector<20x32xf32>
    %15 = arith.truncf %14 : vector<20x32xf32> to vector<20x32xbf16>
    %c2 = arith.constant 2 : index
    %c0_17 = arith.constant 0 : index
    %c0_18 = arith.constant 0 : index
    %16 = vector.load %arg2[%c2, %c0_17, %c0_18] : memref<9x32x64xbf16, #tpu.memory_space<vmem>>, vector<1x32x64xbf16>
    %17 = vector.shape_cast %16 : vector<1x32x64xbf16> to vector<32x64xbf16>
    %cst_19 = arith.constant dense<0.000000e+00> : vector<20x64xf32>
    %18 = tpu.matmul %15, %17, %cst_19 {dimension_numbers = #tpu.dot_dimension_numbers<[1], [0], [0], [1], [0, 0, 1, 1], [], []>} : vector<20x32xbf16>, vector<32x64xbf16>, vector<20x64xf32> -> vector<20x64xf32>
    %19 = arith.addf %12, %18 : vector<20x64xf32>
    %c0_20 = arith.constant 0 : index
    %c2_21 = arith.constant 2 : index
    %c0_22 = arith.constant 0 : index
    %c0_23 = arith.constant 0 : index
    %20 = vector.load %arg1[%c0_20, %c2_21, %c0_22, %c0_23] : memref<1x4x26x32xf32, #tpu.memory_space<vmem>>, vector<1x1x20x32xf32>
    %21 = vector.shape_cast %20 : vector<1x1x20x32xf32> to vector<20x32xf32>
    %22 = arith.truncf %21 : vector<20x32xf32> to vector<20x32xbf16>
    %c3 = arith.constant 3 : index
    %c0_24 = arith.constant 0 : index
    %c0_25 = arith.constant 0 : index
    %23 = vector.load %arg2[%c3, %c0_24, %c0_25] : memref<9x32x64xbf16, #tpu.memory_space<vmem>>, vector<1x32x64xbf16>
    %24 = vector.shape_cast %23 : vector<1x32x64xbf16> to vector<32x64xbf16>
    %cst_26 = arith.constant dense<0.000000e+00> : vector<20x64xf32>
    %25 = tpu.matmul %22, %24, %cst_26 {dimension_numbers = #tpu.dot_dimension_numbers<[1], [0], [0], [1], [0, 0, 1, 1], [], []>} : vector<20x32xbf16>, vector<32x64xbf16>, vector<20x64xf32> -> vector<20x64xf32>
    %26 = arith.addf %19, %25 : vector<20x64xf32>
    %c0_27 = arith.constant 0 : index
    %c3_28 = arith.constant 3 : index
    %c0_29 = arith.constant 0 : index
    %c0_30 = arith.constant 0 : index
    %27 = vector.load %arg1[%c0_27, %c3_28, %c0_29, %c0_30] : memref<1x4x26x32xf32, #tpu.memory_space<vmem>>, vector<1x1x20x32xf32>
    %28 = vector.shape_cast %27 : vector<1x1x20x32xf32> to vector<20x32xf32>
    %29 = arith.truncf %28 : vector<20x32xf32> to vector<20x32xbf16>
    %c4 = arith.constant 4 : index
    %c0_31 = arith.constant 0 : index
    %c0_32 = arith.constant 0 : index
    %30 = vector.load %arg2[%c4, %c0_31, %c0_32] : memref<9x32x64xbf16, #tpu.memory_space<vmem>>, vector<1x32x64xbf16>
    %31 = vector.shape_cast %30 : vector<1x32x64xbf16> to vector<32x64xbf16>
    %cst_33 = arith.constant dense<0.000000e+00> : vector<20x64xf32>
    %32 = tpu.matmul %29, %31, %cst_33 {dimension_numbers = #tpu.dot_dimension_numbers<[1], [0], [0], [1], [0, 0, 1, 1], [], []>} : vector<20x32xbf16>, vector<32x64xbf16>, vector<20x64xf32> -> vector<20x64xf32>
    %33 = arith.addf %26, %32 : vector<20x64xf32>
    %c0_34 = arith.constant 0 : index
    %c2_35 = arith.constant 2 : index
    %c1_36 = arith.constant 1 : index
    %c0_37 = arith.constant 0 : index
    %34 = vector.load %arg1[%c0_34, %c2_35, %c1_36, %c0_37] : memref<1x4x26x32xf32, #tpu.memory_space<vmem>>, vector<1x1x20x32xf32>
    %35 = vector.shape_cast %34 : vector<1x1x20x32xf32> to vector<20x32xf32>
    %36 = arith.truncf %35 : vector<20x32xf32> to vector<20x32xbf16>
    %c5 = arith.constant 5 : index
    %c0_38 = arith.constant 0 : index
    %c0_39 = arith.constant 0 : index
    %37 = vector.load %arg2[%c5, %c0_38, %c0_39] : memref<9x32x64xbf16, #tpu.memory_space<vmem>>, vector<1x32x64xbf16>
    %38 = vector.shape_cast %37 : vector<1x32x64xbf16> to vector<32x64xbf16>
    %cst_40 = arith.constant dense<0.000000e+00> : vector<20x64xf32>
    %39 = tpu.matmul %36, %38, %cst_40 {dimension_numbers = #tpu.dot_dimension_numbers<[1], [0], [0], [1], [0, 0, 1, 1], [], []>} : vector<20x32xbf16>, vector<32x64xbf16>, vector<20x64xf32> -> vector<20x64xf32>
    %40 = arith.addf %33, %39 : vector<20x64xf32>
    %c0_41 = arith.constant 0 : index
    %c0_42 = arith.constant 0 : index
    %c5_43 = arith.constant 5 : index
    %c0_44 = arith.constant 0 : index
    %41 = vector.load %arg1[%c0_41, %c0_42, %c5_43, %c0_44] : memref<1x4x26x32xf32, #tpu.memory_space<vmem>>, vector<1x1x20x32xf32>
    %42 = vector.shape_cast %41 : vector<1x1x20x32xf32> to vector<20x32xf32>
    %43 = arith.truncf %42 : vector<20x32xf32> to vector<20x32xbf16>
    %c6 = arith.constant 6 : index
    %c0_45 = arith.constant 0 : index
    %c0_46 = arith.constant 0 : index
    %44 = vector.load %arg2[%c6, %c0_45, %c0_46] : memref<9x32x64xbf16, #tpu.memory_space<vmem>>, vector<1x32x64xbf16>
    %45 = vector.shape_cast %44 : vector<1x32x64xbf16> to vector<32x64xbf16>
    %cst_47 = arith.constant dense<0.000000e+00> : vector<20x64xf32>
    %46 = tpu.matmul %43, %45, %cst_47 {dimension_numbers = #tpu.dot_dimension_numbers<[1], [0], [0], [1], [0, 0, 1, 1], [], []>} : vector<20x32xbf16>, vector<32x64xbf16>, vector<20x64xf32> -> vector<20x64xf32>
    %47 = arith.addf %40, %46 : vector<20x64xf32>
    %c0_48 = arith.constant 0 : index
    %c1_49 = arith.constant 1 : index
    %c5_50 = arith.constant 5 : index
    %c0_51 = arith.constant 0 : index
    %48 = vector.load %arg1[%c0_48, %c1_49, %c5_50, %c0_51] : memref<1x4x26x32xf32, #tpu.memory_space<vmem>>, vector<1x1x20x32xf32>
    %49 = vector.shape_cast %48 : vector<1x1x20x32xf32> to vector<20x32xf32>
    %50 = arith.truncf %49 : vector<20x32xf32> to vector<20x32xbf16>
    %c7 = arith.constant 7 : index
    %c0_52 = arith.constant 0 : index
    %c0_53 = arith.constant 0 : index
    %51 = vector.load %arg2[%c7, %c0_52, %c0_53] : memref<9x32x64xbf16, #tpu.memory_space<vmem>>, vector<1x32x64xbf16>
    %52 = vector.shape_cast %51 : vector<1x32x64xbf16> to vector<32x64xbf16>
    %cst_54 = arith.constant dense<0.000000e+00> : vector<20x64xf32>
    %53 = tpu.matmul %50, %52, %cst_54 {dimension_numbers = #tpu.dot_dimension_numbers<[1], [0], [0], [1], [0, 0, 1, 1], [], []>} : vector<20x32xbf16>, vector<32x64xbf16>, vector<20x64xf32> -> vector<20x64xf32>
    %54 = arith.addf %47, %53 : vector<20x64xf32>
    %c0_55 = arith.constant 0 : index
    %c0_56 = arith.constant 0 : index
    %c6_57 = arith.constant 6 : index
    %c0_58 = arith.constant 0 : index
    %55 = vector.load %arg1[%c0_55, %c0_56, %c6_57, %c0_58] : memref<1x4x26x32xf32, #tpu.memory_space<vmem>>, vector<1x1x20x32xf32>
    %56 = vector.shape_cast %55 : vector<1x1x20x32xf32> to vector<20x32xf32>
    %57 = arith.truncf %56 : vector<20x32xf32> to vector<20x32xbf16>
    %c8 = arith.constant 8 : index
    %c0_59 = arith.constant 0 : index
    %c0_60 = arith.constant 0 : index
    %58 = vector.load %arg2[%c8, %c0_59, %c0_60] : memref<9x32x64xbf16, #tpu.memory_space<vmem>>, vector<1x32x64xbf16>
    %59 = vector.shape_cast %58 : vector<1x32x64xbf16> to vector<32x64xbf16>
    %cst_61 = arith.constant dense<0.000000e+00> : vector<20x64xf32>
    %60 = tpu.matmul %57, %59, %cst_61 {dimension_numbers = #tpu.dot_dimension_numbers<[1], [0], [0], [1], [0, 0, 1, 1], [], []>} : vector<20x32xbf16>, vector<32x64xbf16>, vector<20x64xf32> -> vector<20x64xf32>
    %61 = arith.addf %54, %60 : vector<20x64xf32>
    %c0_62 = arith.constant 0 : index
    %c0_63 = arith.constant 0 : index
    %62 = vector.load %arg3[%c0_62, %c0_63] : memref<20x1xf32, #tpu.memory_space<vmem>>, vector<20x1xf32>
    %63 = vector.broadcast %62 : vector<20x1xf32> to vector<20x64xf32>
    %64 = arith.mulf %61, %63 : vector<20x64xf32>
    %cst_64 = arith.constant dense<0.000000e+00> : vector<64xf32>
    %65 = vector.multi_reduction <add>, %64, %cst_64 [0] : vector<20x64xf32> to vector<64xf32>
    %66 = vector.shape_cast %65 : vector<64xf32> to vector<1x64xf32>
    %cst_65 = arith.constant 6.250000e-02 : f32
    %67 = vector.broadcast %cst_65 : f32 to vector<1x64xf32>
    %68 = arith.mulf %66, %67 : vector<1x64xf32>
    %69 = vector.broadcast %68 : vector<1x64xf32> to vector<20x64xf32>
    %70 = arith.subf %61, %69 : vector<20x64xf32>
    %71 = arith.mulf %70, %70 : vector<20x64xf32>
    %72 = vector.broadcast %62 : vector<20x1xf32> to vector<20x64xf32>
    %73 = arith.mulf %71, %72 : vector<20x64xf32>
    %cst_66 = arith.constant dense<0.000000e+00> : vector<64xf32>
    %74 = vector.multi_reduction <add>, %73, %cst_66 [0] : vector<20x64xf32> to vector<64xf32>
    %75 = vector.shape_cast %74 : vector<64xf32> to vector<1x64xf32>
    %cst_67 = arith.constant 6.250000e-02 : f32
    %76 = vector.broadcast %cst_67 : f32 to vector<1x64xf32>
    %77 = arith.mulf %75, %76 : vector<1x64xf32>
    %c0_68 = arith.constant 0 : index
    %c0_69 = arith.constant 0 : index
    %78 = vector.load %arg4[%c0_68, %c0_69] : memref<1x64xf32, #tpu.memory_space<vmem>>, vector<1x64xf32>
    %cst_70 = arith.constant 9.99999974E-6 : f32
    %79 = vector.broadcast %cst_70 : f32 to vector<1x64xf32>
    %80 = arith.addf %77, %79 : vector<1x64xf32>
    %81 = math.rsqrt %80 : vector<1x64xf32>
    %82 = arith.mulf %78, %81 : vector<1x64xf32>
    %c0_71 = arith.constant 0 : index
    %c0_72 = arith.constant 0 : index
    %83 = vector.load %arg5[%c0_71, %c0_72] : memref<1x64xf32, #tpu.memory_space<vmem>>, vector<1x64xf32>
    %84 = arith.mulf %68, %82 : vector<1x64xf32>
    %85 = arith.subf %83, %84 : vector<1x64xf32>
    %c0_73 = arith.constant 0 : index
    %c0_74 = arith.constant 0 : index
    %86 = vector.load %arg6[%c0_73, %c0_74] : memref<1x64xf32, #tpu.memory_space<vmem>>, vector<1x64xf32>
    %cst_75 = arith.constant 0.000000e+00 : f32
    %87 = vector.broadcast %cst_75 : f32 to vector<1x64xf32>
    %88 = arith.cmpf ogt, %86, %87 : vector<1x64xf32>
    %c0_76 = arith.constant 0 : index
    %c0_77 = arith.constant 0 : index
    %89 = vector.load %arg7[%c0_76, %c0_77] : memref<1x64xf32, #tpu.memory_space<vmem>>, vector<1x64xf32>
    %90 = arith.select %88, %82, %89 : vector<1x64xi1>, vector<1x64xf32>
    %c0_78 = arith.constant 0 : index
    %c0_79 = arith.constant 0 : index
    %91 = vector.load %arg8[%c0_78, %c0_79] : memref<1x64xf32, #tpu.memory_space<vmem>>, vector<1x64xf32>
    %92 = arith.select %88, %85, %91 : vector<1x64xi1>, vector<1x64xf32>
    %93 = vector.broadcast %90 : vector<1x64xf32> to vector<20x64xf32>
    %94 = arith.mulf %61, %93 : vector<20x64xf32>
    %95 = vector.broadcast %92 : vector<1x64xf32> to vector<20x64xf32>
    %96 = arith.addf %94, %95 : vector<20x64xf32>
    %cst_80 = arith.constant 0.000000e+00 : f32
    %97 = vector.broadcast %cst_80 : f32 to vector<20x64xf32>
    %98 = arith.cmpf ogt, %96, %97 : vector<20x64xf32>
    %cst_81 = arith.constant 1.000000e-01 : f32
    %99 = vector.broadcast %cst_81 : f32 to vector<20x64xf32>
    %100 = arith.mulf %99, %96 : vector<20x64xf32>
    %101 = arith.select %98, %96, %100 : vector<20x64xi1>, vector<20x64xf32>
    %c0_82 = arith.constant 0 : index
    %c0_83 = arith.constant 0 : index
    %c0_84 = arith.constant 0 : index
    %102 = vector.load %arg10[%c0_82, %c0_83, %c0_84] : memref<1x20x64xf32, #tpu.memory_space<vmem>>, vector<1x20x64xf32>
    %103 = vector.shape_cast %102 : vector<1x20x64xf32> to vector<20x64xf32>
    %104 = vector.shape_cast %101 : vector<20x64xf32> to vector<1x20x64xf32>
    tpu.vector_store %arg10[%c0_82, %c0_83, %c0_84], %104 {strides = array<i32>} : memref<1x20x64xf32, #tpu.memory_space<vmem>>, vector<1x20x64xf32>,
    %c0_85 = arith.constant 0 : index
    %c3_86 = arith.constant 3 : index
    %c0_87 = arith.constant 0 : index
    %c0_88 = arith.constant 0 : index
    %105 = vector.load %arg1[%c0_85, %c3_86, %c0_87, %c0_88] : memref<1x4x26x32xf32, #tpu.memory_space<vmem>>, vector<1x1x20x32xf32>
    %106 = vector.shape_cast %105 : vector<1x1x20x32xf32> to vector<20x32xf32>
    %107 = arith.truncf %106 : vector<20x32xf32> to vector<20x32xbf16>
    %c0_89 = arith.constant 0 : index
    %c0_90 = arith.constant 0 : index
    %108 = vector.load %arg9[%c0_89, %c0_90] : memref<32x64xbf16, #tpu.memory_space<vmem>>, vector<32x64xbf16>
    %cst_91 = arith.constant dense<0.000000e+00> : vector<20x64xf32>
    %109 = tpu.matmul %107, %108, %cst_91 {dimension_numbers = #tpu.dot_dimension_numbers<[1], [0], [0], [1], [0, 0, 1, 1], [], []>} : vector<20x32xbf16>, vector<32x64xbf16>, vector<20x64xf32> -> vector<20x64xf32>
    %c0_92 = arith.constant 0 : index
    %c0_93 = arith.constant 0 : index
    %c0_94 = arith.constant 0 : index
    %110 = vector.load %arg11[%c0_92, %c0_93, %c0_94] : memref<1x20x64xf32, #tpu.memory_space<vmem>>, vector<1x20x64xf32>
    %111 = vector.shape_cast %110 : vector<1x20x64xf32> to vector<20x64xf32>
    %112 = vector.shape_cast %109 : vector<20x64xf32> to vector<1x20x64xf32>
    tpu.vector_store %arg11[%c0_92, %c0_93, %c0_94], %112 {strides = array<i32>} : memref<1x20x64xf32, #tpu.memory_space<vmem>>, vector<1x20x64xf32>,
    return
  }
  func.func @transform_0(%arg0: i32) -> (i32, i32, i32, i32) {
    %c0_i32 = arith.constant 0 : i32
    %c0_i32_0 = arith.constant 0 : i32
    %c0_i32_1 = arith.constant 0 : i32
    %c0_i32_2 = arith.constant 0 : i32
    return %arg0, %c0_i32, %c0_i32_0, %c0_i32_1 : i32, i32, i32, i32
  }
  func.func @transform_1(%arg0: i32) -> (i32, i32, i32) {
    %c0_i32 = arith.constant 0 : i32
    %c0_i32_0 = arith.constant 0 : i32
    %c0_i32_1 = arith.constant 0 : i32
    %c0_i32_2 = arith.constant 0 : i32
    return %c0_i32, %c0_i32_0, %c0_i32_1 : i32, i32, i32
  }
  func.func @transform_2(%arg0: i32) -> (i32, i32) {
    %c0_i32 = arith.constant 0 : i32
    %c0_i32_0 = arith.constant 0 : i32
    %c0_i32_1 = arith.constant 0 : i32
    return %c0_i32, %c0_i32_0 : i32, i32
  }
  func.func @transform_3(%arg0: i32) -> (i32, i32) {
    %c0_i32 = arith.constant 0 : i32
    %c0_i32_0 = arith.constant 0 : i32
    %c0_i32_1 = arith.constant 0 : i32
    return %c0_i32, %c0_i32_0 : i32, i32
  }
  func.func @transform_4(%arg0: i32) -> (i32, i32) {
    %c0_i32 = arith.constant 0 : i32
    %c0_i32_0 = arith.constant 0 : i32
    %c0_i32_1 = arith.constant 0 : i32
    return %c0_i32, %c0_i32_0 : i32, i32
  }
  func.func @transform_5(%arg0: i32) -> (i32, i32) {
    %c0_i32 = arith.constant 0 : i32
    %c0_i32_0 = arith.constant 0 : i32
    %c0_i32_1 = arith.constant 0 : i32
    return %c0_i32, %c0_i32_0 : i32, i32
  }
  func.func @transform_6(%arg0: i32) -> (i32, i32) {
    %c0_i32 = arith.constant 0 : i32
    %c0_i32_0 = arith.constant 0 : i32
    %c0_i32_1 = arith.constant 0 : i32
    return %c0_i32, %c0_i32_0 : i32, i32
  }
  func.func @transform_7(%arg0: i32) -> (i32, i32) {
    %c0_i32 = arith.constant 0 : i32
    %c0_i32_0 = arith.constant 0 : i32
    %c0_i32_1 = arith.constant 0 : i32
    return %c0_i32, %c0_i32_0 : i32, i32
  }
  func.func @transform_8(%arg0: i32) -> (i32, i32) {
    %c0_i32 = arith.constant 0 : i32
    %c0_i32_0 = arith.constant 0 : i32
    %c0_i32_1 = arith.constant 0 : i32
    return %c0_i32, %c0_i32_0 : i32, i32
  }
  func.func @transform_9(%arg0: i32) -> (i32, i32, i32) {
    %c0_i32 = arith.constant 0 : i32
    %c0_i32_0 = arith.constant 0 : i32
    %c0_i32_1 = arith.constant 0 : i32
    return %arg0, %c0_i32, %c0_i32_0 : i32, i32, i32
  }
  func.func @transform_10(%arg0: i32) -> (i32, i32, i32) {
    %c0_i32 = arith.constant 0 : i32
    %c0_i32_0 = arith.constant 0 : i32
    %c0_i32_1 = arith.constant 0 : i32
    return %arg0, %c0_i32, %c0_i32_0 : i32, i32, i32
  }
}

module attributes {stable_mosaic.version = 11 : i64} {
  func.func @_tail_kernel(%arg0: i32, %arg1: memref<2x16x64xf32, #tpu.memory_space<vmem>>, %arg2: memref<1x1x64xf32, #tpu.memory_space<vmem>>, %arg3: memref<1x1x64xf32, #tpu.memory_space<vmem>>, %arg4: memref<64x64xbf16, #tpu.memory_space<vmem>>, %arg5: memref<1x64xf32, #tpu.memory_space<vmem>>, %arg6: memref<2x64xf32, #tpu.memory_space<vmem>>) attributes {dimension_semantics = [#tpu.dimension_semantics<arbitrary>], iteration_bounds = array<i64: 1>, scalar_prefetch = 0 : i64, scratch_operands = 0 : i64, tpu.core_type = #tpu.core_type<tc>, window_params = [{pipeline_mode = #tpu.pipeline_mode<synchronous>, transform_indices = @transform_0, window_bounds = array<i64: 2, 16, 64>}, {pipeline_mode = #tpu.pipeline_mode<synchronous>, transform_indices = @transform_1, window_bounds = array<i64: 1, 1, 64>}, {pipeline_mode = #tpu.pipeline_mode<synchronous>, transform_indices = @transform_2, window_bounds = array<i64: 1, 1, 64>}, {pipeline_mode = #tpu.pipeline_mode<synchronous>, transform_indices = @transform_3, window_bounds = array<i64: 64, 64>}, {pipeline_mode = #tpu.pipeline_mode<synchronous>, transform_indices = @transform_4, window_bounds = array<i64: 1, 64>}, {pipeline_mode = #tpu.pipeline_mode<synchronous>, transform_indices = @transform_5, window_bounds = array<i64: 2, 64>}]} {
    %c0 = arith.constant 0 : index
    %c0_0 = arith.constant 0 : index
    %c0_1 = arith.constant 0 : index
    %0 = vector.load %arg1[%c0, %c0_0, %c0_1] : memref<2x16x64xf32, #tpu.memory_space<vmem>>, vector<2x16x64xf32>
    %c0_2 = arith.constant 0 : index
    %c0_3 = arith.constant 0 : index
    %c0_4 = arith.constant 0 : index
    %1 = vector.load %arg2[%c0_2, %c0_3, %c0_4] : memref<1x1x64xf32, #tpu.memory_space<vmem>>, vector<1x1x64xf32>
    %2 = vector.broadcast %1 : vector<1x1x64xf32> to vector<2x16x64xf32>
    %3 = arith.mulf %0, %2 : vector<2x16x64xf32>
    %c0_5 = arith.constant 0 : index
    %c0_6 = arith.constant 0 : index
    %c0_7 = arith.constant 0 : index
    %4 = vector.load %arg3[%c0_5, %c0_6, %c0_7] : memref<1x1x64xf32, #tpu.memory_space<vmem>>, vector<1x1x64xf32>
    %5 = vector.broadcast %4 : vector<1x1x64xf32> to vector<2x16x64xf32>
    %6 = arith.addf %3, %5 : vector<2x16x64xf32>
    %cst = arith.constant 0.000000e+00 : f32
    %7 = vector.broadcast %cst : f32 to vector<2x16x64xf32>
    %8 = arith.cmpf ogt, %6, %7 : vector<2x16x64xf32>
    %cst_8 = arith.constant 1.000000e-01 : f32
    %9 = vector.broadcast %cst_8 : f32 to vector<2x16x64xf32>
    %10 = arith.mulf %9, %6 : vector<2x16x64xf32>
    %11 = arith.select %8, %6, %10 : vector<2x16x64xi1>, vector<2x16x64xf32>
    %cst_9 = arith.constant 9.99999997E-7 : f32
    %12 = vector.broadcast %cst_9 : f32 to vector<2x16x64xf32>
    %13 = arith.maximumf %11, %12 : vector<2x16x64xf32>
    %14 = arith.mulf %13, %13 : vector<2x16x64xf32>
    %15 = arith.mulf %14, %13 : vector<2x16x64xf32>
    %cst_10 = arith.constant dense<0.000000e+00> : vector<2x64xf32>
    %16 = vector.multi_reduction <add>, %15, %cst_10 [1] : vector<2x16x64xf32> to vector<2x64xf32>
    %cst_11 = arith.constant 6.250000e-02 : f32
    %17 = vector.broadcast %cst_11 : f32 to vector<2x64xf32>
    %18 = arith.mulf %16, %17 : vector<2x64xf32>
    %19 = math.log %18 : vector<2x64xf32>
    %cst_12 = arith.constant 0.333333343 : f32
    %20 = vector.broadcast %cst_12 : f32 to vector<2x64xf32>
    %21 = arith.mulf %19, %20 : vector<2x64xf32>
    %22 = math.exp %21 : vector<2x64xf32>
    %23 = arith.truncf %22 : vector<2x64xf32> to vector<2x64xbf16>
    %c0_13 = arith.constant 0 : index
    %c0_14 = arith.constant 0 : index
    %24 = vector.load %arg4[%c0_13, %c0_14] : memref<64x64xbf16, #tpu.memory_space<vmem>>, vector<64x64xbf16>
    %cst_15 = arith.constant dense<0.000000e+00> : vector<2x64xf32>
    %25 = tpu.matmul %23, %24, %cst_15 {dimension_numbers = #tpu.dot_dimension_numbers<[1], [0], [0], [1], [0, 0, 1, 1], [], []>} : vector<2x64xbf16>, vector<64x64xbf16>, vector<2x64xf32> -> vector<2x64xf32>
    %c0_16 = arith.constant 0 : index
    %c0_17 = arith.constant 0 : index
    %26 = vector.load %arg5[%c0_16, %c0_17] : memref<1x64xf32, #tpu.memory_space<vmem>>, vector<1x64xf32>
    %27 = vector.broadcast %26 : vector<1x64xf32> to vector<2x64xf32>
    %28 = arith.addf %25, %27 : vector<2x64xf32>
    %c0_18 = arith.constant 0 : index
    %c0_19 = arith.constant 0 : index
    %29 = vector.load %arg6[%c0_18, %c0_19] : memref<2x64xf32, #tpu.memory_space<vmem>>, vector<2x64xf32>
    tpu.vector_store %arg6[%c0_18, %c0_19], %28 {strides = array<i32>} : memref<2x64xf32, #tpu.memory_space<vmem>>, vector<2x64xf32>,
    return
  }
  func.func @transform_0(%arg0: i32) -> (i32, i32, i32) {
    %c0_i32 = arith.constant 0 : i32
    %c0_i32_0 = arith.constant 0 : i32
    %c0_i32_1 = arith.constant 0 : i32
    %c0_i32_2 = arith.constant 0 : i32
    return %c0_i32, %c0_i32_0, %c0_i32_1 : i32, i32, i32
  }
  func.func @transform_1(%arg0: i32) -> (i32, i32, i32) {
    %c0_i32 = arith.constant 0 : i32
    %c0_i32_0 = arith.constant 0 : i32
    %c0_i32_1 = arith.constant 0 : i32
    %c0_i32_2 = arith.constant 0 : i32
    return %c0_i32, %c0_i32_0, %c0_i32_1 : i32, i32, i32
  }
  func.func @transform_2(%arg0: i32) -> (i32, i32, i32) {
    %c0_i32 = arith.constant 0 : i32
    %c0_i32_0 = arith.constant 0 : i32
    %c0_i32_1 = arith.constant 0 : i32
    %c0_i32_2 = arith.constant 0 : i32
    return %c0_i32, %c0_i32_0, %c0_i32_1 : i32, i32, i32
  }
  func.func @transform_3(%arg0: i32) -> (i32, i32) {
    %c0_i32 = arith.constant 0 : i32
    %c0_i32_0 = arith.constant 0 : i32
    %c0_i32_1 = arith.constant 0 : i32
    return %c0_i32, %c0_i32_0 : i32, i32
  }
  func.func @transform_4(%arg0: i32) -> (i32, i32) {
    %c0_i32 = arith.constant 0 : i32
    %c0_i32_0 = arith.constant 0 : i32
    %c0_i32_1 = arith.constant 0 : i32
    return %c0_i32, %c0_i32_0 : i32, i32
  }
  func.func @transform_5(%arg0: i32) -> (i32, i32) {
    %c0_i32 = arith.constant 0 : i32
    %c0_i32_0 = arith.constant 0 : i32
    %c0_i32_1 = arith.constant 0 : i32
    return %c0_i32, %c0_i32_0 : i32, i32
  }
}

</mosaic_0001>

<llo_original>
// kernel: _lambda_.6
$region0: #{_lambda_.6}
  #allocation0 [shape = 'u32[]', space=smem, size = 0x4, offset = 0x4, fixed_abs, tag = 'smem constant byte address 0x4 - core index']
  #allocation1 [shape = 'u32[144,128]{1,0:T(1,128)}', space=vmem, size = 0x12000, scoped, tag = 'internal scratch']
  %s0 = inlined_call_operand.vmem [shape: f32[2,1,326,8], index: 0, kind: input, shape index: {}]
  %s1 = inlined_call_operand.vmem [shape: bf16[9,8,16], index: 1, kind: input, shape index: {}]
  %s2 = inlined_call_operand.vmem [shape: f32[2,288,16], index: 2, kind: output, shape index: {}]
  %s3 = sld [smem:[#allocation0]]
  $region41: #{_lambda_.6} parent=0
    _
  %s5 = ssub.s32 1, %s3
  %s6 = scalar_select 0, %s5, %s3
  loop: start=0, step=1, limit=4
  $region2: #{_lambda_.6} parent=0 // loop_pre_header
    _
  $region3: #{_lambda_.6} parent=0 // loop_header
    %s8 = sphi 0, %s12
    %p9 = scmp.ge.s32.totalorder %s8, 4
    %s18 = sphi 0, %s20
    %s21 = sphi 0, %s18
    %s22 = sphi 0, %s21
    %s38 = sphi 0, %s22
    %s42 = sphi 0, %s42
    %s44 = sphi 0, %s42
    %s45 = sphi 0, %s44
    %s59 = sphi 0, %s45
    %s65 = sphi 0, %s67
    %s68 = sphi 0, %s65
    %s69 = sphi 0, %s68
    %s85 = sphi 0, %s69
  $region4: #{_lambda_.6} parent=0 // loop_header_branch
    %11 = sbr.rel (%p9) target = $region8
  $region5: #{_lambda_.6} parent=0 // loop_body
    %s13 = ssub.s32 %s8, 1
    %s14 = ssub.s32 %s8, 2
    %s15 = sadd.s32 %s8, 1
    %s16 = ssub.s32 %s8, %s15
    %p17 = scmp.eq.s32.totalorder %s16, 0
    %s19 = sadd.s32 %s18, 1
    %s20 = scalar_select %p17, %s18, %s19
    %p23 = pneg %p17
    %p24 = scmp.eq.s32.totalorder %s8, 1
    %p25 = por %p23, %p24
    %p26 = scmp.ne.s32.totalorder %s18, %s21
    %p27 = scmp.eq.s32.totalorder %s8, 0
    %p28 = por %p26, %p27
    %p29 = scmp.ne.s32.totalorder %s18, %s21
    %p30 = scmp.eq.s32.totalorder %s13, 1
    %p31 = por %p29, %p30
    %p32 = scmp.ne.s32.totalorder %s21, %s22
    %p33 = scmp.eq.s32.totalorder %s13, 0
    %p34 = por %p32, %p33
    %p35 = scmp.ne.s32.totalorder %s21, %s22
    %p36 = scmp.eq.s32.totalorder %s14, 1
    %p37 = por %p35, %p36
    %p39 = scmp.ne.s32.totalorder %s22, %s38
    %p40 = scmp.eq.s32.totalorder %s14, 0
    %p41 = por %p39, %p40
    %s43 = sadd.s32 %s42, 1
    %p46 = scmp.eq.s32.totalorder %s8, 1
    %p47 = scmp.ne.s32.totalorder %s42, %s44
    %p48 = scmp.eq.s32.totalorder %s8, 0
    %p49 = por %p47, %p48
    %p50 = scmp.ne.s32.totalorder %s42, %s44
    %p51 = scmp.eq.s32.totalorder %s13, 1
    %p52 = por %p50, %p51
    %p53 = scmp.ne.s32.totalorder %s44, %s45
    %p54 = scmp.eq.s32.totalorder %s13, 0
    %p55 = por %p53, %p54
    %p56 = scmp.ne.s32.totalorder %s44, %s45
    %p57 = scmp.eq.s32.totalorder %s14, 1
    %p58 = por %p56, %p57
    %p60 = scmp.ne.s32.totalorder %s45, %s59
    %p61 = scmp.eq.s32.totalorder %s14, 0
    %p62 = por %p60, %p61
    %s63 = ssub.s32 %s8, %s15
    %p64 = scmp.eq.s32.totalorder %s63, 0
    %s66 = sadd.s32 %s65, 1
    %s67 = scalar_select %p64, %s65, %s66
    %p70 = pneg %p64
    %p71 = scmp.eq.s32.totalorder %s8, 1
    %p72 = por %p70, %p71
    %p73 = scmp.ne.s32.totalorder %s65, %s68
    %p74 = scmp.eq.s32.totalorder %s8, 0
    %p75 = por %p73, %p74
    %p76 = scmp.ne.s32.totalorder %s65, %s68
    %p77 = scmp.eq.s32.totalorder %s13, 1
    %p78 = por %p76, %p77
    %p79 = scmp.ne.s32.totalorder %s68, %s69
    %p80 = scmp.eq.s32.totalorder %s13, 0
    %p81 = por %p79, %p80
    %p82 = scmp.ne.s32.totalorder %s68, %s69
    %p83 = scmp.eq.s32.totalorder %s14, 1
    %p84 = por %p82, %p83
    %p86 = scmp.ne.s32.totalorder %s69, %s85
    %p87 = scmp.eq.s32.totalorder %s14, 0
    %p88 = por %p86, %p87
    %p89 = scmp.le.s32.totalorder 1, %s8
    %p90 = scmp.lt.s32.totalorder %s8, 3
    %p91 = pnand %p89, %p90
    %p92 = pneg %p91
    // Predicated region
    $region9: #{_lambda_.6} parent=5 // pred_check
      _
    $region10: #{_lambda_.6} parent=5 // pred_check_branch
      %94 = sbr.rel (%p91) target = $region12
    $region11: #{_lambda_.6} parent=5 // pred_region
      %s95 = ssub.s32 %s8, 1
      // Predicated region
      $region13: #{_lambda_.6} parent=11 // pred_check
        %p96 = pneg %p55
      $region14: #{_lambda_.6} parent=11 // pred_check_branch
        %98 = sbr.rel (%p96) target = $region16
      $region15: #{_lambda_.6} parent=11 // pred_region
        _
      $region16: #{_lambda_.6} parent=11 // pred_fallthru
        _
    $region12: #{_lambda_.6} parent=5 // pred_fallthru
      _
    %p99 = scmp.lt.s32.totalorder %s8, 2
    // Predicated region
    $region17: #{_lambda_.6} parent=5 // pred_check
      %p100 = pneg %p99
    $region18: #{_lambda_.6} parent=5 // pred_check_branch
      %102 = sbr.rel (%p100) target = $region20
    $region19: #{_lambda_.6} parent=5 // pred_region
      // Predicated region
      $region21: #{_lambda_.6} parent=19 // pred_check
        %p103 = pneg %p28
      $region22: #{_lambda_.6} parent=19 // pred_check_branch
        %105 = sbr.rel (%p103) target = $region24
      $region23: #{_lambda_.6} parent=19 // pred_region
        %p106 = scmp.lt.s32.totalorder %s8, 1
        %s107 = scalar_select %p106, %s8, 1
        %s108 = smul.addr %s107, 41
        %s109 = smul.addr %s108, 8
        %s110 = scalar_lea.vmem %s0, %s109
      $region24: #{_lambda_.6} parent=19 // pred_fallthru
        _
    $region20: #{_lambda_.6} parent=5 // pred_fallthru
      _
    %p111 = scmp.le.s32.totalorder 1, %s8
    %p112 = scmp.lt.s32.totalorder %s8, 3
    %p113 = pnand %p111, %p112
    %p114 = pneg %p113
    // Predicated region
    $region25: #{_lambda_.6} parent=5 // pred_check
      _
    $region26: #{_lambda_.6} parent=5 // pred_check_branch
      %116 = sbr.rel (%p113) target = $region28
    $region27: #{_lambda_.6} parent=5 // pred_region
      %s117 = ssub.s32 %s8, 1
      %p118 = scmp.lt.s32.totalorder %s13, 1
      %s119 = scalar_select %p118, %s13, 1
      %s120 = smul.addr %s119, 41
      %s121 = smul.addr %s120, 8
      %s122 = scalar_lea.vmem %s0, %s121
      %p123 = pneg %p34
      %p124 = pneg %p31
      %p125 = pneg %p55
      %p126 = pneg %p52
      %p127 = pneg %p81
      %p128 = pneg %p78
      %p129 = scmp.lt.s32.totalorder %s13, 1
      %s130 = scalar_select %p129, %s13, 1
      %s131 = smul.addr %s130, 36
      %s132 = smul.addr %s131, 8
      %s133 = scalar_lea.vmem %s2, %s132
      %p134 = scmp.lt.s32.totalorder %s13, 1
      %s135 = scalar_select %p134, %s13, 1
      %s136 = smul.addr %s135, 41
      %s137 = smul.addr %s136, 8
      %s138 = scalar_lea.vmem %s0, %s137
      %p139 = scmp.lt.s32.totalorder %s13, 1
      %s140 = scalar_select %p139, %s13, 1
      %s141 = smul.addr %s140, 36
      %s142 = smul.addr %s141, 8
      %s143 = scalar_lea.vmem %s2, %s142
      %v145 = vld [vmem:[%s138] sm:$0xff]
      %v146 = vld [vmem:[%s138 + $0x8] sm:$0xff]
      %v147 = vld [vmem:[%s138 + $0x10] sm:$0xff]
      %v148 = vld [vmem:[%s138 + $0x18] sm:$0xff]
      %v149 = vld [vmem:[%s138 + $0x20] sm:$0xff]
      %v150 = vld [vmem:[%s138 + $0x28] sm:$0xff]
      %v151 = vld [vmem:[%s138 + $0x30] sm:$0xff]
      %v152 = vld [vmem:[%s138 + $0x38] sm:$0xff]
      %v153 = vld [vmem:[%s138 + $0x40] sm:$0xff]
      %v154 = vld [vmem:[%s138 + $0x48] sm:$0xff]
      %v155 = vld [vmem:[%s138 + $0x50] sm:$0xff]
      %v156 = vld [vmem:[%s138 + $0x58] sm:$0xff]
      %v157 = vld [vmem:[%s138 + $0x60] sm:$0xff]
      %v158 = vld [vmem:[%s138 + $0x68] sm:$0xff]
      %v159 = vld [vmem:[%s138 + $0x70] sm:$0xff]
      %v160 = vld [vmem:[%s138 + $0x78] sm:$0xff]
      %v161 = vld [vmem:[%s138 + $0x80] sm:$0xff]
      %v162 = vld [vmem:[%s138 + $0x88] sm:$0xff]
      %v163 = vld [vmem:[%s138 + $0x90] sm:$0xff]
      %v164 = vld [vmem:[%s138 + $0x98] sm:$0xff]
      %v165 = vld [vmem:[%s138 + $0xa0] sm:$0xff]
      %v166 = vld [vmem:[%s138 + $0xa8] sm:$0xff]
      %v167 = vld [vmem:[%s138 + $0xb0] sm:$0xff]
      %v168 = vld [vmem:[%s138 + $0xb8] sm:$0xff]
      %v169 = vld [vmem:[%s138 + $0xc0] sm:$0xff]
      %v170 = vld [vmem:[%s138 + $0xc8] sm:$0xff]
      %v171 = vld [vmem:[%s138 + $0xd0] sm:$0xff]
      %v172 = vld [vmem:[%s138 + $0xd8] sm:$0xff]
      %v173 = vld [vmem:[%s138 + $0xe0] sm:$0xff]
      %v174 = vld [vmem:[%s138 + $0xe8] sm:$0xff]
      %v175 = vld [vmem:[%s138 + $0xf0] sm:$0xff]
      %v176 = vld [vmem:[%s138 + $0xf8] sm:$0xff]
      %v177 = vld [vmem:[%s138 + $0x100] sm:$0xff]
      %v178 = vld [vmem:[%s138 + $0x108] sm:$0xff]
      %v179 = vld [vmem:[%s138 + $0x110] sm:$0xff]
      %v180 = vld [vmem:[%s138 + $0x118] sm:$0xff]
      %v181 = vpack.c.bf16 %v146, %v145
      %v182 = vpack.c.bf16 %v148, %v147
      %v183 = vpack.c.bf16 %v150, %v149
      %v184 = vpack.c.bf16 %v152, %v151
      %v185 = vpack.c.bf16 %v154, %v153
      %v186 = vpack.c.bf16 %v156, %v155
      %v187 = vpack.c.bf16 %v158, %v157
      %v188 = vpack.c.bf16 %v160, %v159
      %v189 = vpack.c.bf16 %v162, %v161
      %v190 = vpack.c.bf16 %v164, %v163
      %v191 = vpack.c.bf16 %v166, %v165
      %v192 = vpack.c.bf16 %v168, %v167
      %v193 = vpack.c.bf16 %v170, %v169
      %v194 = vpack.c.bf16 %v172, %v171
      %v195 = vpack.c.bf16 %v174, %v173
      %v196 = vpack.c.bf16 %v176, %v175
      %v197 = vpack.c.bf16 %v178, %v177
      %v198 = vpack.c.bf16 %v180, %v179
      %v199 = vld [vmem:[%s1] sm:$0xf]
      %v200 = vld [vmem:[%s138 + $0x1] sm:$0xff]
      %v201 = vld [vmem:[%s138 + $0x9] sm:$0xff]
      %v202 = vld [vmem:[%s138 + $0x11] sm:$0xff]
      %v203 = vld [vmem:[%s138 + $0x19] sm:$0xff]
      %v204 = vld [vmem:[%s138 + $0x21] sm:$0xff]
      %v205 = vld [vmem:[%s138 + $0x29] sm:$0xff]
      %v206 = vld [vmem:[%s138 + $0x31] sm:$0xff]
      %v207 = vld [vmem:[%s138 + $0x39] sm:$0xff]
      %v208 = vld [vmem:[%s138 + $0x41] sm:$0xff]
      %v209 = vld [vmem:[%s138 + $0x49] sm:$0xff]
      %v210 = vld [vmem:[%s138 + $0x51] sm:$0xff]
      %v211 = vld [vmem:[%s138 + $0x59] sm:$0xff]
      %v212 = vld [vmem:[%s138 + $0x61] sm:$0xff]
      %v213 = vld [vmem:[%s138 + $0x69] sm:$0xff]
      %v214 = vld [vmem:[%s138 + $0x71] sm:$0xff]
      %v215 = vld [vmem:[%s138 + $0x79] sm:$0xff]
      %v216 = vld [vmem:[%s138 + $0x81] sm:$0xff]
      %v217 = vld [vmem:[%s138 + $0x89] sm:$0xff]
      %v218 = vld [vmem:[%s138 + $0x91] sm:$0xff]
      %v219 = vld [vmem:[%s138 + $0x99] sm:$0xff]
      %v220 = vld [vmem:[%s138 + $0xa1] sm:$0xff]
      %v221 = vld [vmem:[%s138 + $0xa9] sm:$0xff]
      %v222 = vld [vmem:[%s138 + $0xb1] sm:$0xff]
      %v223 = vld [vmem:[%s138 + $0xb9] sm:$0xff]
      %v224 = vld [vmem:[%s138 + $0xc1] sm:$0xff]
      %v225 = vld [vmem:[%s138 + $0xc9] sm:$0xff]
      %v226 = vld [vmem:[%s138 + $0xd1] sm:$0xff]
      %v227 = vld [vmem:[%s138 + $0xd9] sm:$0xff]
      %v228 = vld [vmem:[%s138 + $0xe1] sm:$0xff]
      %v229 = vld [vmem:[%s138 + $0xe9] sm:$0xff]
      %v230 = vld [vmem:[%s138 + $0xf1] sm:$0xff]
      %v231 = vld [vmem:[%s138 + $0xf9] sm:$0xff]
      %v232 = vld [vmem:[%s138 + $0x101] sm:$0xff]
      %v233 = vld [vmem:[%s138 + $0x109] sm:$0xff]
      %v234 = vld [vmem:[%s138 + $0x111] sm:$0xff]
      %v235 = vld [vmem:[%s138 + $0x119] sm:$0xff]
      %v236 = vpack.c.bf16 %v201, %v200
      %v237 = vpack.c.bf16 %v203, %v202
      %v238 = vpack.c.bf16 %v205, %v204
      %v239 = vpack.c.bf16 %v207, %v206
      %v240 = vpack.c.bf16 %v209, %v208
      %v241 = vpack.c.bf16 %v211, %v210
      %v242 = vpack.c.bf16 %v213, %v212
      %v243 = vpack.c.bf16 %v215, %v214
      %v244 = vpack.c.bf16 %v217, %v216
      %v245 = vpack.c.bf16 %v219, %v218
      %v246 = vpack.c.bf16 %v221, %v220
      %v247 = vpack.c.bf16 %v223, %v222
      %v248 = vpack.c.bf16 %v225, %v224
      %v249 = vpack.c.bf16 %v227, %v226
      %v250 = vpack.c.bf16 %v229, %v228
      %v251 = vpack.c.bf16 %v231, %v230
      %v252 = vpack.c.bf16 %v233, %v232
      %v253 = vpack.c.bf16 %v235, %v234
      %s254 = scalar_lea.vmem %s1, 4
      %v255 = vld [vmem:[%s254] sm:$0xf]
      %vm256 = vcmask 64512
      %v258 = vsel %vm256, %v236, 0
      %v261 = vsel %vm256, %v237, 0
      %v264 = vsel %vm256, %v238, 0
      %v267 = vsel %vm256, %v239, 0
      %v270 = vsel %vm256, %v240, 0
      %v273 = vsel %vm256, %v241, 0
      %v276 = vsel %vm256, %v242, 0
      %v279 = vsel %vm256, %v243, 0
      %v282 = vsel %vm256, %v244, 0
      %v285 = vsel %vm256, %v245, 0
      %v288 = vsel %vm256, %v246, 0
      %v291 = vsel %vm256, %v247, 0
      %v294 = vsel %vm256, %v248, 0
      %v297 = vsel %vm256, %v249, 0
      %v300 = vsel %vm256, %v250, 0
      %v303 = vsel %vm256, %v251, 0
      %v306 = vsel %vm256, %v252, 0
      %v309 = vsel %vm256, %v253, 0
      %vm311 = vcmask 1043456
      %v313 = vsel %vm311, %v255, 0
      %315 = vmatprep.subr.bf16.mxu0 0
      %316 = vmatpush1.bf16.msra.mxu0 %v313
      %317 = vmatprep.subr.bf16.mxu0 0
      %318 = vmatpush1.bf16.msra.mxu0 0
      %319 = vmatprep.subr.bf16.mxu0 0
      %320 = vmatpush1.bf16.msra.mxu0 0
      %321 = vmatprep.subr.bf16.mxu0 0
      %322 = vmatpush1.bf16.msra.mxu0 0
      %323 = vmatprep.subr.bf16.mxu0 0
      %324 = vmatpush1.bf16.msra.mxu0 0
      %325 = vmatprep.subr.bf16.mxu0 0
      %326 = vmatpush1.bf16.msra.mxu0 0
      %327 = vmatprep.subr.bf16.mxu0 0
      %328 = vmatpush1.bf16.msra.mxu0 0
      %329 = vmatprep.subr.bf16.mxu0 0
      %330 = vmatpush1.bf16.msra.mxu0 0
      %331 = vmatprep.subr.bf16.mxu0 0
      %332 = vmatpush1.bf16.msra.mxu0 0
      %333 = vmatprep.subr.bf16.mxu0 0
      %334 = vmatpush1.bf16.msra.mxu0 0
      %335 = vmatprep.subr.bf16.mxu0 0
      %336 = vmatpush1.bf16.msra.mxu0 0
      %337 = vmatprep.subr.bf16.mxu0 0
      %338 = vmatpush1.bf16.msra.mxu0 0
      %339 = vmatprep.subr.bf16.mxu0 0
      %340 = vmatpush1.bf16.msra.mxu0 0
      %341 = vmatprep.subr.bf16.mxu0 0
      %342 = vmatpush1.bf16.msra.mxu0 0
      %343 = vmatprep.subr.bf16.mxu0 0
      %344 = vmatpush1.bf16.msra.mxu0 0
      %345 = vmatprep.subr.bf16.mxu0 0
      %346 = vmatpush1.bf16.msra.mxu0 0
      %347 = vmatprep.mubr.bf16.mxu0 0
      %348 = vmatmul.mubr.bf16.gmra.mrb[0].mxu0 %v258
      %v349 = vpop.f32.mrb[0].mxu0
      %v350 = vadd.f32 0.0, %v349
      %v351 = vpop.f32.mrb[0].mxu0
      %v352 = vpop.f32.mrb[0].mxu0
      %v353 = vadd.f32 0.0, %v352
      %v354 = vpop.f32.mrb[0].mxu0
      %355 = vmatprep.mubr.bf16.mxu0 0
      %356 = vmatmul.mubr.bf16.gmra.mrb[0].mxu0 %v261
      %v357 = vpop.f32.mrb[0].mxu0
      %v358 = vadd.f32 0.0, %v357
      %v359 = vpop.f32.mrb[0].mxu0
      %v360 = vpop.f32.mrb[0].mxu0
      %v361 = vadd.f32 0.0, %v360
      %v362 = vpop.f32.mrb[0].mxu0
      %363 = vmatprep.mubr.bf16.mxu0 0
      %364 = vmatmul.mubr.bf16.gmra.mrb[0].mxu0 %v264
      %v365 = vpop.f32.mrb[0].mxu0
      %v366 = vadd.f32 0.0, %v365
      %v367 = vpop.f32.mrb[0].mxu0
      %v368 = vpop.f32.mrb[0].mxu0
      %v369 = vadd.f32 0.0, %v368
      %v370 = vpop.f32.mrb[0].mxu0
      %371 = vmatprep.mubr.bf16.mxu0 0
      %372 = vmatmul.mubr.bf16.gmra.mrb[0].mxu0 %v267
      %v373 = vpop.f32.mrb[0].mxu0
      %v374 = vadd.f32 0.0, %v373
      %v375 = vpop.f32.mrb[0].mxu0
      %v376 = vpop.f32.mrb[0].mxu0
      %v377 = vadd.f32 0.0, %v376
      %v378 = vpop.f32.mrb[0].mxu0
      %379 = vmatprep.mubr.bf16.mxu0 0
      %380 = vmatmul.mubr.bf16.gmra.mrb[0].mxu0 %v270
      %v381 = vpop.f32.mrb[0].mxu0
      %v382 = vadd.f32 0.0, %v381
      %v383 = vpop.f32.mrb[0].mxu0
      %v384 = vpop.f32.mrb[0].mxu0
      %v385 = vadd.f32 0.0, %v384
      %v386 = vpop.f32.mrb[0].mxu0
      %387 = vmatprep.mubr.bf16.mxu0 0
      %388 = vmatmul.mubr.bf16.gmra.mrb[0].mxu0 %v273
      %v389 = vpop.f32.mrb[0].mxu0
      %v390 = vadd.f32 0.0, %v389
      %v391 = vpop.f32.mrb[0].mxu0
      %v392 = vpop.f32.mrb[0].mxu0
      %v393 = vadd.f32 0.0, %v392
      %v394 = vpop.f32.mrb[0].mxu0
      %395 = vmatprep.mubr.bf16.mxu0 0
      %396 = vmatmul.mubr.bf16.gmra.mrb[0].mxu0 %v276
      %v397 = vpop.f32.mrb[0].mxu0
      %v398 = vadd.f32 0.0, %v397
      %v399 = vpop.f32.mrb[0].mxu0
      %v400 = vpop.f32.mrb[0].mxu0
      %v401 = vadd.f32 0.0, %v400
      %v402 = vpop.f32.mrb[0].mxu0
      %403 = vmatprep.mubr.bf16.mxu0 0
      %404 = vmatmul.mubr.bf16.gmra.mrb[0].mxu0 %v279
      %v405 = vpop.f32.mrb[0].mxu0
      %v406 = vadd.f32 0.0, %v405
      %v407 = vpop.f32.mrb[0].mxu0
      %v408 = vpop.f32.mrb[0].mxu0
      %v409 = vadd.f32 0.0, %v408
      %v410 = vpop.f32.mrb[0].mxu0
      %411 = vmatprep.mubr.bf16.mxu0 0
      %412 = vmatmul.mubr.bf16.gmra.mrb[0].mxu0 %v282
      %v413 = vpop.f32.mrb[0].mxu0
      %v414 = vadd.f32 0.0, %v413
      %v415 = vpop.f32.mrb[0].mxu0
      %v416 = vpop.f32.mrb[0].mxu0
      %v417 = vadd.f32 0.0, %v416
      %v418 = vpop.f32.mrb[0].mxu0
      %419 = vmatprep.mubr.bf16.mxu0 0
      %420 = vmatmul.mubr.bf16.gmra.mrb[0].mxu0 %v285
      %v421 = vpop.f32.mrb[0].mxu0
      %v422 = vadd.f32 0.0, %v421
      %v423 = vpop.f32.mrb[0].mxu0
      %v424 = vpop.f32.mrb[0].mxu0
      %v425 = vadd.f32 0.0, %v424
      %v426 = vpop.f32.mrb[0].mxu0
      %427 = vmatprep.mubr.bf16.mxu0 0
      %428 = vmatmul.mubr.bf16.gmra.mrb[0].mxu0 %v288
      %v429 = vpop.f32.mrb[0].mxu0
      %v430 = vadd.f32 0.0, %v429
      %v431 = vpop.f32.mrb[0].mxu0
      %v432 = vpop.f32.mrb[0].mxu0
      %v433 = vadd.f32 0.0, %v432
      %v434 = vpop.f32.mrb[0].mxu0
      %435 = vmatprep.mubr.bf16.mxu0 0
      %436 = vmatmul.mubr.bf16.gmra.mrb[0].mxu0 %v291
      %v437 = vpop.f32.mrb[0].mxu0
      %v438 = vadd.f32 0.0, %v437
      %v439 = vpop.f32.mrb[0].mxu0
      %v440 = vpop.f32.mrb[0].mxu0
      %v441 = vadd.f32 0.0, %v440
      %v442 = vpop.f32.mrb[0].mxu0
      %443 = vmatprep.mubr.bf16.mxu0 0
      %444 = vmatmul.mubr.bf16.gmra.mrb[0].mxu0 %v294
      %v445 = vpop.f32.mrb[0].mxu0
      %v446 = vadd.f32 0.0, %v445
      %v447 = vpop.f32.mrb[0].mxu0
      %v448 = vpop.f32.mrb[0].mxu0
      %v449 = vadd.f32 0.0, %v448
      %v450 = vpop.f32.mrb[0].mxu0
      %451 = vmatprep.mubr.bf16.mxu0 0
      %452 = vmatmul.mubr.bf16.gmra.mrb[0].mxu0 %v297
      %v453 = vpop.f32.mrb[0].mxu0
      %v454 = vadd.f32 0.0, %v453
      %v455 = vpop.f32.mrb[0].mxu0
      %v456 = vpop.f32.mrb[0].mxu0
      %v457 = vadd.f32 0.0, %v456
      %v458 = vpop.f32.mrb[0].mxu0
      %459 = vmatprep.mubr.bf16.mxu0 0
      %460 = vmatmul.mubr.bf16.gmra.mrb[0].mxu0 %v300
      %v461 = vpop.f32.mrb[0].mxu0
      %v462 = vadd.f32 0.0, %v461
      %v463 = vpop.f32.mrb[0].mxu0
      %v464 = vpop.f32.mrb[0].mxu0
      %v465 = vadd.f32 0.0, %v464
      %v466 = vpop.f32.mrb[0].mxu0
      %467 = vmatprep.mubr.bf16.mxu0 0
      %468 = vmatmul.mubr.bf16.gmra.mrb[0].mxu0 %v303
      %v469 = vpop.f32.mrb[0].mxu0
      %v470 = vadd.f32 0.0, %v469
      %v471 = vpop.f32.mrb[0].mxu0
      %v472 = vpop.f32.mrb[0].mxu0
      %v473 = vadd.f32 0.0, %v472
      %v474 = vpop.f32.mrb[0].mxu0
      %475 = vmatprep.mubr.bf16.mxu0 0
      %476 = vmatmul.mubr.bf16.gmra.mrb[0].mxu0 %v306
      %v477 = vpop.f32.mrb[0].mxu0
      %v478 = vadd.f32 0.0, %v477
      %v479 = vpop.f32.mrb[0].mxu0
      %v480 = vpop.f32.mrb[0].mxu0
      %v481 = vadd.f32 0.0, %v480
      %v482 = vpop.f32.mrb[0].mxu0
      %483 = vmatprep.mubr.bf16.mxu0 0
      %484 = vmatmul.mubr.bf16.gmra.mrb[0].mxu0 %v309
      %v485 = vpop.f32.mrb[0].mxu0
      %v486 = vadd.f32 0.0, %v485
      %v487 = vpop.f32.mrb[0].mxu0
      %v488 = vpop.f32.mrb[0].mxu0
      %v489 = vadd.f32 0.0, %v488
      %v490 = vpop.f32.mrb[0].mxu0
      %491 = vdwg.mxu0
      %v493 = vsel %vm256, %v181, 0
      %v496 = vsel %vm256, %v182, 0
      %v499 = vsel %vm256, %v183, 0
      %v502 = vsel %vm256, %v184, 0
      %v505 = vsel %vm256, %v185, 0
      %v508 = vsel %vm256, %v186, 0
      %v511 = vsel %vm256, %v187, 0
      %v514 = vsel %vm256, %v188, 0
      %v517 = vsel %vm256, %v189, 0
      %v520 = vsel %vm256, %v190, 0
      %v523 = vsel %vm256, %v191, 0
      %v526 = vsel %vm256, %v192, 0
      %v529 = vsel %vm256, %v193, 0
      %v532 = vsel %vm256, %v194, 0
      %v535 = vsel %vm256, %v195, 0
      %v538 = vsel %vm256, %v196, 0
      %v541 = vsel %vm256, %v197, 0
      %v544 = vsel %vm256, %v198, 0
      %v547 = vsel %vm311, %v199, 0
      %549 = vmatprep.subr.bf16.mxu0 0
      %550 = vmatpush1.bf16.msra.mxu0 %v547
      %551 = vmatprep.subr.bf16.mxu0 0
      %552 = vmatpush1.bf16.msra.mxu0 0
      %553 = vmatprep.subr.bf16.mxu0 0
      %554 = vmatpush1.bf16.msra.mxu0 0
      %555 = vmatprep.subr.bf16.mxu0 0
      %556 = vmatpush1.bf16.msra.mxu0 0
      %557 = vmatprep.subr.bf16.mxu0 0
      %558 = vmatpush1.bf16.msra.mxu0 0
      %559 = vmatprep.subr.bf16.mxu0 0
      %560 = vmatpush1.bf16.msra.mxu0 0
      %561 = vmatprep.subr.bf16.mxu0 0
      %562 = vmatpush1.bf16.msra.mxu0 0
      %563 = vmatprep.subr.bf16.mxu0 0
      %564 = vmatpush1.bf16.msra.mxu0 0
      %565 = vmatprep.subr.bf16.mxu0 0
      %566 = vmatpush1.bf16.msra.mxu0 0
      %567 = vmatprep.subr.bf16.mxu0 0
      %568 = vmatpush1.bf16.msra.mxu0 0
      %569 = vmatprep.subr.bf16.mxu0 0
      %570 = vmatpush1.bf16.msra.mxu0 0
      %571 = vmatprep.subr.bf16.mxu0 0
      %572 = vmatpush1.bf16.msra.mxu0 0
      %573 = vmatprep.subr.bf16.mxu0 0
      %574 = vmatpush1.bf16.msra.mxu0 0
      %575 = vmatprep.subr.bf16.mxu0 0
      %576 = vmatpush1.bf16.msra.mxu0 0
      %577 = vmatprep.subr.bf16.mxu0 0
      %578 = vmatpush1.bf16.msra.mxu0 0
      %579 = vmatprep.subr.bf16.mxu0 0
      %580 = vmatpush1.bf16.msra.mxu0 0
      %581 = vmatprep.mubr.bf16.mxu0 0
      %582 = vmatmul.mubr.bf16.gmra.mrb[0].mxu0 %v493
      %v583 = vpop.f32.mrb[0].mxu0
      %v584 = vadd.f32 %v350, %v583
      %v585 = vpop.f32.mrb[0].mxu0
      %v586 = vpop.f32.mrb[0].mxu0
      %v587 = vadd.f32 %v353, %v586
      %v588 = vpop.f32.mrb[0].mxu0
      %589 = vmatprep.mubr.bf16.mxu0 0
      %590 = vmatmul.mubr.bf16.gmra.mrb[0].mxu0 %v496
      %v591 = vpop.f32.mrb[0].mxu0
      %v592 = vadd.f32 %v358, %v591
      %v593 = vpop.f32.mrb[0].mxu0
      %v594 = vpop.f32.mrb[0].mxu0
      %v595 = vadd.f32 %v361, %v594
      %v596 = vpop.f32.mrb[0].mxu0
      %597 = vmatprep.mubr.bf16.mxu0 0
      %598 = vmatmul.mubr.bf16.gmra.mrb[0].mxu0 %v499
      %v599 = vpop.f32.mrb[0].mxu0
      %v600 = vadd.f32 %v366, %v599
      %v601 = vpop.f32.mrb[0].mxu0
      %v602 = vpop.f32.mrb[0].mxu0
      %v603 = vadd.f32 %v369, %v602
      %v604 = vpop.f32.mrb[0].mxu0
      %605 = vmatprep.mubr.bf16.mxu0 0
      %606 = vmatmul.mubr.bf16.gmra.mrb[0].mxu0 %v502
      %v607 = vpop.f32.mrb[0].mxu0
      %v608 = vadd.f32 %v374, %v607
      %v609 = vpop.f32.mrb[0].mxu0
      %v610 = vpop.f32.mrb[0].mxu0
      %v611 = vadd.f32 %v377, %v610
      %v612 = vpop.f32.mrb[0].mxu0
      %613 = vmatprep.mubr.bf16.mxu0 0
      %614 = vmatmul.mubr.bf16.gmra.mrb[0].mxu0 %v505
      %v615 = vpop.f32.mrb[0].mxu0
      %v616 = vadd.f32 %v382, %v615
      %v617 = vpop.f32.mrb[0].mxu0
      %v618 = vpop.f32.mrb[0].mxu0
      %v619 = vadd.f32 %v385, %v618
      %v620 = vpop.f32.mrb[0].mxu0
      %621 = vmatprep.mubr.bf16.mxu0 0
      %622 = vmatmul.mubr.bf16.gmra.mrb[0].mxu0 %v508
      %v623 = vpop.f32.mrb[0].mxu0
      %v624 = vadd.f32 %v390, %v623
      %v625 = vpop.f32.mrb[0].mxu0
      %v626 = vpop.f32.mrb[0].mxu0
      %v627 = vadd.f32 %v393, %v626
      %v628 = vpop.f32.mrb[0].mxu0
      %629 = vmatprep.mubr.bf16.mxu0 0
      %630 = vmatmul.mubr.bf16.gmra.mrb[0].mxu0 %v511
      %v631 = vpop.f32.mrb[0].mxu0
      %v632 = vadd.f32 %v398, %v631
      %v633 = vpop.f32.mrb[0].mxu0
      %v634 = vpop.f32.mrb[0].mxu0
      %v635 = vadd.f32 %v401, %v634
      %v636 = vpop.f32.mrb[0].mxu0
      %637 = vmatprep.mubr.bf16.mxu0 0
      %638 = vmatmul.mubr.bf16.gmra.mrb[0].mxu0 %v514
      %v639 = vpop.f32.mrb[0].mxu0
      %v640 = vadd.f32 %v406, %v639
      %v641 = vpop.f32.mrb[0].mxu0
      %v642 = vpop.f32.mrb[0].mxu0
      %v643 = vadd.f32 %v409, %v642
      %v644 = vpop.f32.mrb[0].mxu0
      %645 = vmatprep.mubr.bf16.mxu0 0
      %646 = vmatmul.mubr.bf16.gmra.mrb[0].mxu0 %v517
      %v647 = vpop.f32.mrb[0].mxu0
      %v648 = vadd.f32 %v414, %v647
      %v649 = vpop.f32.mrb[0].mxu0
      %v650 = vpop.f32.mrb[0].mxu0
      %v651 = vadd.f32 %v417, %v650
      %v652 = vpop.f32.mrb[0].mxu0
      %653 = vmatprep.mubr.bf16.mxu0 0
      %654 = vmatmul.mubr.bf16.gmra.mrb[0].mxu0 %v520
      %v655 = vpop.f32.mrb[0].mxu0
      %v656 = vadd.f32 %v422, %v655
      %v657 = vpop.f32.mrb[0].mxu0
      %v658 = vpop.f32.mrb[0].mxu0
      %v659 = vadd.f32 %v425, %v658
      %v660 = vpop.f32.mrb[0].mxu0
      %661 = vmatprep.mubr.bf16.mxu0 0
      %662 = vmatmul.mubr.bf16.gmra.mrb[0].mxu0 %v523
      %v663 = vpop.f32.mrb[0].mxu0
      %v664 = vadd.f32 %v430, %v663
      %v665 = vpop.f32.mrb[0].mxu0
      %v666 = vpop.f32.mrb[0].mxu0
      %v667 = vadd.f32 %v433, %v666
      %v668 = vpop.f32.mrb[0].mxu0
      %669 = vmatprep.mubr.bf16.mxu0 0
      %670 = vmatmul.mubr.bf16.gmra.mrb[0].mxu0 %v526
      %v671 = vpop.f32.mrb[0].mxu0
      %v672 = vadd.f32 %v438, %v671
      %v673 = vpop.f32.mrb[0].mxu0
      %v674 = vpop.f32.mrb[0].mxu0
      %v675 = vadd.f32 %v441, %v674
      %v676 = vpop.f32.mrb[0].mxu0
      %677 = vmatprep.mubr.bf16.mxu0 0
      %678 = vmatmul.mubr.bf16.gmra.mrb[0].mxu0 %v529
      %v679 = vpop.f32.mrb[0].mxu0
      %v680 = vadd.f32 %v446, %v679
      %v681 = vpop.f32.mrb[0].mxu0
      %v682 = vpop.f32.mrb[0].mxu0
      %v683 = vadd.f32 %v449, %v682
      %v684 = vpop.f32.mrb[0].mxu0
      %685 = vmatprep.mubr.bf16.mxu0 0
      %686 = vmatmul.mubr.bf16.gmra.mrb[0].mxu0 %v532
      %v687 = vpop.f32.mrb[0].mxu0
      %v688 = vadd.f32 %v454, %v687
      %v689 = vpop.f32.mrb[0].mxu0
      %v690 = vpop.f32.mrb[0].mxu0
      %v691 = vadd.f32 %v457, %v690
      %v692 = vpop.f32.mrb[0].mxu0
      %693 = vmatprep.mubr.bf16.mxu0 0
      %694 = vmatmul.mubr.bf16.gmra.mrb[0].mxu0 %v535
      %v695 = vpop.f32.mrb[0].mxu0
      %v696 = vadd.f32 %v462, %v695
      %v697 = vpop.f32.mrb[0].mxu0
      %v698 = vpop.f32.mrb[0].mxu0
      %v699 = vadd.f32 %v465, %v698
      %v700 = vpop.f32.mrb[0].mxu0
      %701 = vmatprep.mubr.bf16.mxu0 0
      %702 = vmatmul.mubr.bf16.gmra.mrb[0].mxu0 %v538
      %v703 = vpop.f32.mrb[0].mxu0
      %v704 = vadd.f32 %v470, %v703
      %v705 = vpop.f32.mrb[0].mxu0
      %v706 = vpop.f32.mrb[0].mxu0
      %v707 = vadd.f32 %v473, %v706
      %v708 = vpop.f32.mrb[0].mxu0
      %709 = vmatprep.mubr.bf16.mxu0 0
      %710 = vmatmul.mubr.bf16.gmra.mrb[0].mxu0 %v541
      %v711 = vpop.f32.mrb[0].mxu0
      %v712 = vadd.f32 %v478, %v711
      %v713 = vpop.f32.mrb[0].mxu0
      %v714 = vpop.f32.mrb[0].mxu0
      %v715 = vadd.f32 %v481, %v714
      %v716 = vpop.f32.mrb[0].mxu0
      %717 = vmatprep.mubr.bf16.mxu0 0
      %718 = vmatmul.mubr.bf16.gmra.mrb[0].mxu0 %v544
      %v719 = vpop.f32.mrb[0].mxu0
      %v720 = vadd.f32 %v486, %v719
      %v721 = vpop.f32.mrb[0].mxu0
      %v722 = vpop.f32.mrb[0].mxu0
      %v723 = vadd.f32 %v489, %v722
      %v724 = vpop.f32.mrb[0].mxu0
      %725 = vdwg.mxu0
      %v726 = vld [vmem:[%s138 + $0x2] sm:$0xff]
      %v727 = vld [vmem:[%s138 + $0xa] sm:$0xff]
      %v728 = vld [vmem:[%s138 + $0x12] sm:$0xff]
      %v729 = vld [vmem:[%s138 + $0x1a] sm:$0xff]
      %v730 = vld [vmem:[%s138 + $0x22] sm:$0xff]
      %v731 = vld [vmem:[%s138 + $0x2a] sm:$0xff]
      %v732 = vld [vmem:[%s138 + $0x32] sm:$0xff]
      %v733 = vld [vmem:[%s138 + $0x3a] sm:$0xff]
      %v734 = vld [vmem:[%s138 + $0x42] sm:$0xff]
      %v735 = vld [vmem:[%s138 + $0x4a] sm:$0xff]
      %v736 = vld [vmem:[%s138 + $0x52] sm:$0xff]
      %v737 = vld [vmem:[%s138 + $0x5a] sm:$0xff]
      %v738 = vld [vmem:[%s138 + $0x62] sm:$0xff]
      %v739 = vld [vmem:[%s138 + $0x6a] sm:$0xff]
      %v740 = vld [vmem:[%s138 + $0x72] sm:$0xff]
      %v741 = vld [vmem:[%s138 + $0x7a] sm:$0xff]
      %v742 = vld [vmem:[%s138 + $0x82] sm:$0xff]
      %v743 = vld [vmem:[%s138 + $0x8a] sm:$0xff]
      %v744 = vld [vmem:[%s138 + $0x92] sm:$0xff]
      %v745 = vld [vmem:[%s138 + $0x9a] sm:$0xff]
      %v746 = vld [vmem:[%s138 + $0xa2] sm:$0xff]
      %v747 = vld [vmem:[%s138 + $0xaa] sm:$0xff]
      %v748 = vld [vmem:[%s138 + $0xb2] sm:$0xff]
      %v749 = vld [vmem:[%s138 + $0xba] sm:$0xff]
      %v750 = vld [vmem:[%s138 + $0xc2] sm:$0xff]
      %v751 = vld [vmem:[%s138 + $0xca] sm:$0xff]
      %v752 = vld [vmem:[%s138 + $0xd2] sm:$0xff]
      %v753 = vld [vmem:[%s138 + $0xda] sm:$0xff]
      %v754 = vld [vmem:[%s138 + $0xe2] sm:$0xff]
      %v755 = vld [vmem:[%s138 + $0xea] sm:$0xff]
      %v756 = vld [vmem:[%s138 + $0xf2] sm:$0xff]
      %v757 = vld [vmem:[%s138 + $0xfa] sm:$0xff]
      %v758 = vld [vmem:[%s138 + $0x102] sm:$0xff]
      %v759 = vld [vmem:[%s138 + $0x10a] sm:$0xff]
      %v760 = vld [vmem:[%s138 + $0x112] sm:$0xff]
      %v761 = vld [vmem:[%s138 + $0x11a] sm:$0xff]
      %v762 = vpack.c.bf16 %v727, %v726
      %v763 = vpack.c.bf16 %v729, %v728
      %v764 = vpack.c.bf16 %v731, %v730
      %v765 = vpack.c.bf16 %v733, %v732
      %v766 = vpack.c.bf16 %v735, %v734
      %v767 = vpack.c.bf16 %v737, %v736
      %v768 = vpack.c.bf16 %v739, %v738
      %v769 = vpack.c.bf16 %v741, %v740
      %v770 = vpack.c.bf16 %v743, %v742
      %v771 = vpack.c.bf16 %v745, %v744
      %v772 = vpack.c.bf16 %v747, %v746
      %v773 = vpack.c.bf16 %v749, %v748
      %v774 = vpack.c.bf16 %v751, %v750
      %v775 = vpack.c.bf16 %v753, %v752
      %v776 = vpack.c.bf16 %v755, %v754
      %v777 = vpack.c.bf16 %v757, %v756
      %v778 = vpack.c.bf16 %v759, %v758
      %v779 = vpack.c.bf16 %v761, %v760
      %s780 = scalar_lea.vmem %s1, 8
      %v781 = vld [vmem:[%s780] sm:$0xf]
      %v783 = vsel %vm256, %v762, 0
      %v786 = vsel %vm256, %v763, 0
      %v789 = vsel %vm256, %v764, 0
      %v792 = vsel %vm256, %v765, 0
      %v795 = vsel %vm256, %v766, 0
      %v798 = vsel %vm256, %v767, 0
      %v801 = vsel %vm256, %v768, 0
      %v804 = vsel %vm256, %v769, 0
      %v807 = vsel %vm256, %v770, 0
      %v810 = vsel %vm256, %v771, 0
      %v813 = vsel %vm256, %v772, 0
      %v816 = vsel %vm256, %v773, 0
      %v819 = vsel %vm256, %v774, 0
      %v822 = vsel %vm256, %v775, 0
      %v825 = vsel %vm256, %v776, 0
      %v828 = vsel %vm256, %v777, 0
      %v831 = vsel %vm256, %v778, 0
      %v834 = vsel %vm256, %v779, 0
      %v837 = vsel %vm311, %v781, 0
      %839 = vmatprep.subr.bf16.mxu0 0
      %840 = vmatpush1.bf16.msra.mxu0 %v837
      %841 = vmatprep.subr.bf16.mxu0 0
      %842 = vmatpush1.bf16.msra.mxu0 0
      %843 = vmatprep.subr.bf16.mxu0 0
      %844 = vmatpush1.bf16.msra.mxu0 0
      %845 = vmatprep.subr.bf16.mxu0 0
      %846 = vmatpush1.bf16.msra.mxu0 0
      %847 = vmatprep.subr.bf16.mxu0 0
      %848 = vmatpush1.bf16.msra.mxu0 0
      %849 = vmatprep.subr.bf16.mxu0 0
      %850 = vmatpush1.bf16.msra.mxu0 0
      %851 = vmatprep.subr.bf16.mxu0 0
      %852 = vmatpush1.bf16.msra.mxu0 0
      %853 = vmatprep.subr.bf16.mxu0 0
      %854 = vmatpush1.bf16.msra.mxu0 0
      %855 = vmatprep.subr.bf16.mxu0 0
      %856 = vmatpush1.bf16.msra.mxu0 0
      %857 = vmatprep.subr.bf16.mxu0 0
      %858 = vmatpush1.bf16.msra.mxu0 0
      %859 = vmatprep.subr.bf16.mxu0 0
      %860 = vmatpush1.bf16.msra.mxu0 0
      %861 = vmatprep.subr.bf16.mxu0 0
      %862 = vmatpush1.bf16.msra.mxu0 0
      %863 = vmatprep.subr.bf16.mxu0 0
      %864 = vmatpush1.bf16.msra.mxu0 0
      %865 = vmatprep.subr.bf16.mxu0 0
      %866 = vmatpush1.bf16.msra.mxu0 0
      %867 = vmatprep.subr.bf16.mxu0 0
      %868 = vmatpush1.bf16.msra.mxu0 0
      %869 = vmatprep.subr.bf16.mxu0 0
      %870 = vmatpush1.bf16.msra.mxu0 0
      %871 = vmatprep.mubr.bf16.mxu0 0
      %872 = vmatmul.mubr.bf16.gmra.mrb[0].mxu0 %v783
      %v873 = vpop.f32.mrb[0].mxu0
      %v874 = vadd.f32 0.0, %v873
      %v875 = vpop.f32.mrb[0].mxu0
      %v876 = vpop.f32.mrb[0].mxu0
      %v877 = vadd.f32 0.0, %v876
      %v878 = vpop.f32.mrb[0].mxu0
      %879 = vmatprep.mubr.bf16.mxu0 0
      %880 = vmatmul.mubr.bf16.gmra.mrb[0].mxu0 %v786
      %v881 = vpop.f32.mrb[0].mxu0
      %v882 = vadd.f32 0.0, %v881
      %v883 = vpop.f32.mrb[0].mxu0
      %v884 = vpop.f32.mrb[0].mxu0
      %v885 = vadd.f32 0.0, %v884
      %v886 = vpop.f32.mrb[0].mxu0
      %887 = vmatprep.mubr.bf16.mxu0 0
      %888 = vmatmul.mubr.bf16.gmra.mrb[0].mxu0 %v789
      %v889 = vpop.f32.mrb[0].mxu0
      %v890 = vadd.f32 0.0, %v889
      %v891 = vpop.f32.mrb[0].mxu0
      %v892 = vpop.f32.mrb[0].mxu0
      %v893 = vadd.f32 0.0, %v892
      %v894 = vpop.f32.mrb[0].mxu0
      %895 = vmatprep.mubr.bf16.mxu0 0
      %896 = vmatmul.mubr.bf16.gmra.mrb[0].mxu0 %v792
      %v897 = vpop.f32.mrb[0].mxu0
      %v898 = vadd.f32 0.0, %v897
      %v899 = vpop.f32.mrb[0].mxu0
      %v900 = vpop.f32.mrb[0].mxu0
      %v901 = vadd.f32 0.0, %v900
      %v902 = vpop.f32.mrb[0].mxu0
      %903 = vmatprep.mubr.bf16.mxu0 0
      %904 = vmatmul.mubr.bf16.gmra.mrb[0].mxu0 %v795
      %v905 = vpop.f32.mrb[0].mxu0
      %v906 = vadd.f32 0.0, %v905
      %v907 = vpop.f32.mrb[0].mxu0
      %v908 = vpop.f32.mrb[0].mxu0
      %v909 = vadd.f32 0.0, %v908
      %v910 = vpop.f32.mrb[0].mxu0
      %911 = vmatprep.mubr.bf16.mxu0 0
      %912 = vmatmul.mubr.bf16.gmra.mrb[0].mxu0 %v798
      %v913 = vpop.f32.mrb[0].mxu0
      %v914 = vadd.f32 0.0, %v913
      %v915 = vpop.f32.mrb[0].mxu0
      %v916 = vpop.f32.mrb[0].mxu0
      %v917 = vadd.f32 0.0, %v916
      %v918 = vpop.f32.mrb[0].mxu0
      %919 = vmatprep.mubr.bf16.mxu0 0
      %920 = vmatmul.mubr.bf16.gmra.mrb[0].mxu0 %v801
      %v921 = vpop.f32.mrb[0].mxu0
      %v922 = vadd.f32 0.0, %v921
      %v923 = vpop.f32.mrb[0].mxu0
      %v924 = vpop.f32.mrb[0].mxu0
      %v925 = vadd.f32 0.0, %v924
      %v926 = vpop.f32.mrb[0].mxu0
      %927 = vmatprep.mubr.bf16.mxu0 0
      %928 = vmatmul.mubr.bf16.gmra.mrb[0].mxu0 %v804
      %v929 = vpop.f32.mrb[0].mxu0
      %v930 = vadd.f32 0.0, %v929
      %v931 = vpop.f32.mrb[0].mxu0
      %v932 = vpop.f32.mrb[0].mxu0
      %v933 = vadd.f32 0.0, %v932
      %v934 = vpop.f32.mrb[0].mxu0
      %935 = vmatprep.mubr.bf16.mxu0 0
      %936 = vmatmul.mubr.bf16.gmra.mrb[0].mxu0 %v807
      %v937 = vpop.f32.mrb[0].mxu0
      %v938 = vadd.f32 0.0, %v937
      %v939 = vpop.f32.mrb[0].mxu0
      %v940 = vpop.f32.mrb[0].mxu0
      %v941 = vadd.f32 0.0, %v940
      %v942 = vpop.f32.mrb[0].mxu0
      %943 = vmatprep.mubr.bf16.mxu0 0
      %944 = vmatmul.mubr.bf16.gmra.mrb[0].mxu0 %v810
      %v945 = vpop.f32.mrb[0].mxu0
      %v946 = vadd.f32 0.0, %v945
      %v947 = vpop.f32.mrb[0].mxu0
      %v948 = vpop.f32.mrb[0].mxu0
      %v949 = vadd.f32 0.0, %v948
      %v950 = vpop.f32.mrb[0].mxu0
      %951 = vmatprep.mubr.bf16.mxu0 0
      %952 = vmatmul.mubr.bf16.gmra.mrb[0].mxu0 %v813
      %v953 = vpop.f32.mrb[0].mxu0
      %v954 = vadd.f32 0.0, %v953
      %v955 = vpop.f32.mrb[0].mxu0
      %v956 = vpop.f32.mrb[0].mxu0
      %v957 = vadd.f32 0.0, %v956
      %v958 = vpop.f32.mrb[0].mxu0
      %959 = vmatprep.mubr.bf16.mxu0 0
      %960 = vmatmul.mubr.bf16.gmra.mrb[0].mxu0 %v816
      %v961 = vpop.f32.mrb[0].mxu0
      %v962 = vadd.f32 0.0, %v961
      %v963 = vpop.f32.mrb[0].mxu0
      %v964 = vpop.f32.mrb[0].mxu0
      %v965 = vadd.f32 0.0, %v964
      %v966 = vpop.f32.mrb[0].mxu0
      %967 = vmatprep.mubr.bf16.mxu0 0
      %968 = vmatmul.mubr.bf16.gmra.mrb[0].mxu0 %v819
      %v969 = vpop.f32.mrb[0].mxu0
      %v970 = vadd.f32 0.0, %v969
      %v971 = vpop.f32.mrb[0].mxu0
      %v972 = vpop.f32.mrb[0].mxu0
      %v973 = vadd.f32 0.0, %v972
      %v974 = vpop.f32.mrb[0].mxu0
      %975 = vmatprep.mubr.bf16.mxu0 0
      %976 = vmatmul.mubr.bf16.gmra.mrb[0].mxu0 %v822
      %v977 = vpop.f32.mrb[0].mxu0
      %v978 = vadd.f32 0.0, %v977
      %v979 = vpop.f32.mrb[0].mxu0
      %v980 = vpop.f32.mrb[0].mxu0
      %v981 = vadd.f32 0.0, %v980
      %v982 = vpop.f32.mrb[0].mxu0
      %983 = vmatprep.mubr.bf16.mxu0 0
      %984 = vmatmul.mubr.bf16.gmra.mrb[0].mxu0 %v825
      %v985 = vpop.f32.mrb[0].mxu0
      %v986 = vadd.f32 0.0, %v985
      %v987 = vpop.f32.mrb[0].mxu0
      %v988 = vpop.f32.mrb[0].mxu0
      %v989 = vadd.f32 0.0, %v988
      %v990 = vpop.f32.mrb[0].mxu0
      %991 = vmatprep.mubr.bf16.mxu0 0
      %992 = vmatmul.mubr.bf16.gmra.mrb[0].mxu0 %v828
      %v993 = vpop.f32.mrb[0].mxu0
      %v994 = vadd.f32 0.0, %v993
      %v995 = vpop.f32.mrb[0].mxu0
      %v996 = vpop.f32.mrb[0].mxu0
      %v997 = vadd.f32 0.0, %v996
      %v998 = vpop.f32.mrb[0].mxu0
      %999 = vmatprep.mubr.bf16.mxu0 0
      %1000 = vmatmul.mubr.bf16.gmra.mrb[0].mxu0 %v831
      %v1001 = vpop.f32.mrb[0].mxu0
      %v1002 = vadd.f32 0.0, %v1001
      %v1003 = vpop.f32.mrb[0].mxu0
      %v1004 = vpop.f32.mrb[0].mxu0
      %v1005 = vadd.f32 0.0, %v1004
      %v1006 = vpop.f32.mrb[0].mxu0
      %1007 = vmatprep.mubr.bf16.mxu0 0
      %1008 = vmatmul.mubr.bf16.gmra.mrb[0].mxu0 %v834
      %v1009 = vpop.f32.mrb[0].mxu0
      %v1010 = vadd.f32 0.0, %v1009
      %v1011 = vpop.f32.mrb[0].mxu0
      %v1012 = vpop.f32.mrb[0].mxu0
      %v1013 = vadd.f32 0.0, %v1012
      %v1014 = vpop.f32.mrb[0].mxu0
      %1015 = vdwg.mxu0
      %v1016 = vadd.f32 %v584, %v874
      %v1017 = vadd.f32 %v587, %v877
      %v1018 = vadd.f32 %v592, %v882
      %v1019 = vadd.f32 %v595, %v885
      %v1020 = vadd.f32 %v600, %v890
      %v1021 = vadd.f32 %v603, %v893
      %v1022 = vadd.f32 %v608, %v898
      %v1023 = vadd.f32 %v611, %v901
      %v1024 = vadd.f32 %v616, %v906
      %v1025 = vadd.f32 %v619, %v909
      %v1026 = vadd.f32 %v624, %v914
      %v1027 = vadd.f32 %v627, %v917
      %v1028 = vadd.f32 %v632, %v922
      %v1029 = vadd.f32 %v635, %v925
      %v1030 = vadd.f32 %v640, %v930
      %v1031 = vadd.f32 %v643, %v933
      %v1032 = vadd.f32 %v648, %v938
      %v1033 = vadd.f32 %v651, %v941
      %v1034 = vadd.f32 %v656, %v946
      %v1035 = vadd.f32 %v659, %v949
      %v1036 = vadd.f32 %v664, %v954
      %v1037 = vadd.f32 %v667, %v957
      %v1038 = vadd.f32 %v672, %v962
      %v1039 = vadd.f32 %v675, %v965
      %v1040 = vadd.f32 %v680, %v970
      %v1041 = vadd.f32 %v683, %v973
      %v1042 = vadd.f32 %v688, %v978
      %v1043 = vadd.f32 %v691, %v981
      %v1044 = vadd.f32 %v696, %v986
      %v1045 = vadd.f32 %v699, %v989
      %v1046 = vadd.f32 %v704, %v994
      %v1047 = vadd.f32 %v707, %v997
      %v1048 = vadd.f32 %v712, %v1002
      %v1049 = vadd.f32 %v715, %v1005
      %v1050 = vadd.f32 %v720, %v1010
      %v1051 = vadd.f32 %v723, %v1013
      %v1052 = vld [vmem:[%s138 + $0x12] sm:$0xff]
      %v1053 = vld [vmem:[%s138 + $0x1a] sm:$0xff]
      %v1054 = vld [vmem:[%s138 + $0x22] sm:$0xff]
      %v1055 = vld [vmem:[%s138 + $0x2a] sm:$0xff]
      %v1056 = vld [vmem:[%s138 + $0x32] sm:$0xff]
      %v1057 = vld [vmem:[%s138 + $0x3a] sm:$0xff]
      %v1058 = vld [vmem:[%s138 + $0x42] sm:$0xff]
      %v1059 = vld [vmem:[%s138 + $0x4a] sm:$0xff]
      %v1060 = vld [vmem:[%s138 + $0x52] sm:$0xff]
      %v1061 = vld [vmem:[%s138 + $0x5a] sm:$0xff]
      %v1062 = vld [vmem:[%s138 + $0x62] sm:$0xff]
      %v1063 = vld [vmem:[%s138 + $0x6a] sm:$0xff]
      %v1064 = vld [vmem:[%s138 + $0x72] sm:$0xff]
      %v1065 = vld [vmem:[%s138 + $0x7a] sm:$0xff]
      %v1066 = vld [vmem:[%s138 + $0x82] sm:$0xff]
      %v1067 = vld [vmem:[%s138 + $0x8a] sm:$0xff]
      %v1068 = vld [vmem:[%s138 + $0x92] sm:$0xff]
      %v1069 = vld [vmem:[%s138 + $0x9a] sm:$0xff]
      %v1070 = vld [vmem:[%s138 + $0xa2] sm:$0xff]
      %v1071 = vld [vmem:[%s138 + $0xaa] sm:$0xff]
      %v1072 = vld [vmem:[%s138 + $0xb2] sm:$0xff]
      %v1073 = vld [vmem:[%s138 + $0xba] sm:$0xff]
      %v1074 = vld [vmem:[%s138 + $0xc2] sm:$0xff]
      %v1075 = vld [vmem:[%s138 + $0xca] sm:$0xff]
      %v1076 = vld [vmem:[%s138 + $0xd2] sm:$0xff]
      %v1077 = vld [vmem:[%s138 + $0xda] sm:$0xff]
      %v1078 = vld [vmem:[%s138 + $0xe2] sm:$0xff]
      %v1079 = vld [vmem:[%s138 + $0xea] sm:$0xff]
      %v1080 = vld [vmem:[%s138 + $0xf2] sm:$0xff]
      %v1081 = vld [vmem:[%s138 + $0xfa] sm:$0xff]
      %v1082 = vld [vmem:[%s138 + $0x102] sm:$0xff]
      %v1083 = vld [vmem:[%s138 + $0x10a] sm:$0xff]
      %v1084 = vld [vmem:[%s138 + $0x112] sm:$0xff]
      %v1085 = vld [vmem:[%s138 + $0x11a] sm:$0xff]
      %v1086 = vld [vmem:[%s138 + $0x122] sm:$0xff]
      %v1087 = vld [vmem:[%s138 + $0x12a] sm:$0xff]
      %v1088 = vpack.c.bf16 %v1053, %v1052
      %v1089 = vpack.c.bf16 %v1055, %v1054
      %v1090 = vpack.c.bf16 %v1057, %v1056
      %v1091 = vpack.c.bf16 %v1059, %v1058
      %v1092 = vpack.c.bf16 %v1061, %v1060
      %v1093 = vpack.c.bf16 %v1063, %v1062
      %v1094 = vpack.c.bf16 %v1065, %v1064
      %v1095 = vpack.c.bf16 %v1067, %v1066
      %v1096 = vpack.c.bf16 %v1069, %v1068
      %v1097 = vpack.c.bf16 %v1071, %v1070
      %v1098 = vpack.c.bf16 %v1073, %v1072
      %v1099 = vpack.c.bf16 %v1075, %v1074
      %v1100 = vpack.c.bf16 %v1077, %v1076
      %v1101 = vpack.c.bf16 %v1079, %v1078
      %v1102 = vpack.c.bf16 %v1081, %v1080
      %v1103 = vpack.c.bf16 %v1083, %v1082
      %v1104 = vpack.c.bf16 %v1085, %v1084
      %v1105 = vpack.c.bf16 %v1087, %v1086
      %s1106 = scalar_lea.vmem %s1, 12
      %v1107 = vld [vmem:[%s1106] sm:$0xf]
      %v1109 = vsel %vm256, %v1088, 0
      %v1112 = vsel %vm256, %v1089, 0
      %v1115 = vsel %vm256, %v1090, 0
      %v1118 = vsel %vm256, %v1091, 0
      %v1121 = vsel %vm256, %v1092, 0
      %v1124 = vsel %vm256, %v1093, 0
      %v1127 = vsel %vm256, %v1094, 0
      %v1130 = vsel %vm256, %v1095, 0
      %v1133 = vsel %vm256, %v1096, 0
      %v1136 = vsel %vm256, %v1097, 0
      %v1139 = vsel %vm256, %v1098, 0
      %v1142 = vsel %vm256, %v1099, 0
      %v1145 = vsel %vm256, %v1100, 0
      %v1148 = vsel %vm256, %v1101, 0
      %v1151 = vsel %vm256, %v1102, 0
      %v1154 = vsel %vm256, %v1103, 0
      %v1157 = vsel %vm256, %v1104, 0
      %v1160 = vsel %vm256, %v1105, 0
      %v1163 = vsel %vm311, %v1107, 0
      %1165 = vmatprep.subr.bf16.mxu0 0
      %1166 = vmatpush1.bf16.msra.mxu0 %v1163
      %1167 = vmatprep.subr.bf16.mxu0 0
      %1168 = vmatpush1.bf16.msra.mxu0 0
      %1169 = vmatprep.subr.bf16.mxu0 0
      %1170 = vmatpush1.bf16.msra.mxu0 0
      %1171 = vmatprep.subr.bf16.mxu0 0
      %1172 = vmatpush1.bf16.msra.mxu0 0
      %1173 = vmatprep.subr.bf16.mxu0 0
      %1174 = vmatpush1.bf16.msra.mxu0 0
      %1175 = vmatprep.subr.bf16.mxu0 0
      %1176 = vmatpush1.bf16.msra.mxu0 0
      %1177 = vmatprep.subr.bf16.mxu0 0
      %1178 = vmatpush1.bf16.msra.mxu0 0
      %1179 = vmatprep.subr.bf16.mxu0 0
      %1180 = vmatpush1.bf16.msra.mxu0 0
      %1181 = vmatprep.subr.bf16.mxu0 0
      %1182 = vmatpush1.bf16.msra.mxu0 0
      %1183 = vmatprep.subr.bf16.mxu0 0
      %1184 = vmatpush1.bf16.msra.mxu0 0
      %1185 = vmatprep.subr.bf16.mxu0 0
      %1186 = vmatpush1.bf16.msra.mxu0 0
      %1187 = vmatprep.subr.bf16.mxu0 0
      %1188 = vmatpush1.bf16.msra.mxu0 0
      %1189 = vmatprep.subr.bf16.mxu0 0
      %1190 = vmatpush1.bf16.msra.mxu0 0
      %1191 = vmatprep.subr.bf16.mxu0 0
      %1192 = vmatpush1.bf16.msra.mxu0 0
      %1193 = vmatprep.subr.bf16.mxu0 0
      %1194 = vmatpush1.bf16.msra.mxu0 0
      %1195 = vmatprep.subr.bf16.mxu0 0
      %1196 = vmatpush1.bf16.msra.mxu0 0
      %1197 = vmatprep.mubr.bf16.mxu0 0
      %1198 = vmatmul.mubr.bf16.gmra.mrb[0].mxu0 %v1109
      %v1199 = vpop.f32.mrb[0].mxu0
      %v1200 = vadd.f32 0.0, %v1199
      %v1201 = vpop.f32.mrb[0].mxu0
      %v1202 = vpop.f32.mrb[0].mxu0
      %v1203 = vadd.f32 0.0, %v1202
      %v1204 = vpop.f32.mrb[0].mxu0
      %1205 = vmatprep.mubr.bf16.mxu0 0
      %1206 = vmatmul.mubr.bf16.gmra.mrb[0].mxu0 %v1112
      %v1207 = vpop.f32.mrb[0].mxu0
      %v1208 = vadd.f32 0.0, %v1207
      %v1209 = vpop.f32.mrb[0].mxu0
      %v1210 = vpop.f32.mrb[0].mxu0
      %v1211 = vadd.f32 0.0, %v1210
      %v1212 = vpop.f32.mrb[0].mxu0
      %1213 = vmatprep.mubr.bf16.mxu0 0
      %1214 = vmatmul.mubr.bf16.gmra.mrb[0].mxu0 %v1115
      %v1215 = vpop.f32.mrb[0].mxu0
      %v1216 = vadd.f32 0.0, %v1215
      %v1217 = vpop.f32.mrb[0].mxu0
      %v1218 = vpop.f32.mrb[0].mxu0
      %v1219 = vadd.f32 0.0, %v1218
      %v1220 = vpop.f32.mrb[0].mxu0
      %1221 = vmatprep.mubr.bf16.mxu0 0
      %1222 = vmatmul.mubr.bf16.gmra.mrb[0].mxu0 %v1118
      %v1223 = vpop.f32.mrb[0].mxu0
      %v1224 = vadd.f32 0.0, %v1223
      %v1225 = vpop.f32.mrb[0].mxu0
      %v1226 = vpop.f32.mrb[0].mxu0
      %v1227 = vadd.f32 0.0, %v1226
      %v1228 = vpop.f32.mrb[0].mxu0
      %1229 = vmatprep.mubr.bf16.mxu0 0
      %1230 = vmatmul.mubr.bf16.gmra.mrb[0].mxu0 %v1121
      %v1231 = vpop.f32.mrb[0].mxu0
      %v1232 = vadd.f32 0.0, %v1231
      %v1233 = vpop.f32.mrb[0].mxu0
      %v1234 = vpop.f32.mrb[0].mxu0
      %v1235 = vadd.f32 0.0, %v1234
      %v1236 = vpop.f32.mrb[0].mxu0
      %1237 = vmatprep.mubr.bf16.mxu0 0
      %1238 = vmatmul.mubr.bf16.gmra.mrb[0].mxu0 %v1124
      %v1239 = vpop.f32.mrb[0].mxu0
      %v1240 = vadd.f32 0.0, %v1239
      %v1241 = vpop.f32.mrb[0].mxu0
      %v1242 = vpop.f32.mrb[0].mxu0
      %v1243 = vadd.f32 0.0, %v1242
      %v1244 = vpop.f32.mrb[0].mxu0
      %1245 = vmatprep.mubr.bf16.mxu0 0
      %1246 = vmatmul.mubr.bf16.gmra.mrb[0].mxu0 %v1127
      %v1247 = vpop.f32.mrb[0].mxu0
      %v1248 = vadd.f32 0.0, %v1247
      %v1249 = vpop.f32.mrb[0].mxu0
      %v1250 = vpop.f32.mrb[0].mxu0
      %v1251 = vadd.f32 0.0, %v1250
      %v1252 = vpop.f32.mrb[0].mxu0
      %1253 = vmatprep.mubr.bf16.mxu0 0
      %1254 = vmatmul.mubr.bf16.gmra.mrb[0].mxu0 %v1130
      %v1255 = vpop.f32.mrb[0].mxu0
      %v1256 = vadd.f32 0.0, %v1255
      %v1257 = vpop.f32.mrb[0].mxu0
      %v1258 = vpop.f32.mrb[0].mxu0
      %v1259 = vadd.f32 0.0, %v1258
      %v1260 = vpop.f32.mrb[0].mxu0
      %1261 = vmatprep.mubr.bf16.mxu0 0
      %1262 = vmatmul.mubr.bf16.gmra.mrb[0].mxu0 %v1133
      %v1263 = vpop.f32.mrb[0].mxu0
      %v1264 = vadd.f32 0.0, %v1263
      %v1265 = vpop.f32.mrb[0].mxu0
      %v1266 = vpop.f32.mrb[0].mxu0
      %v1267 = vadd.f32 0.0, %v1266
      %v1268 = vpop.f32.mrb[0].mxu0
      %1269 = vmatprep.mubr.bf16.mxu0 0
      %1270 = vmatmul.mubr.bf16.gmra.mrb[0].mxu0 %v1136
      %v1271 = vpop.f32.mrb[0].mxu0
      %v1272 = vadd.f32 0.0, %v1271
      %v1273 = vpop.f32.mrb[0].mxu0
      %v1274 = vpop.f32.mrb[0].mxu0
      %v1275 = vadd.f32 0.0, %v1274
      %v1276 = vpop.f32.mrb[0].mxu0
      %1277 = vmatprep.mubr.bf16.mxu0 0
      %1278 = vmatmul.mubr.bf16.gmra.mrb[0].mxu0 %v1139
      %v1279 = vpop.f32.mrb[0].mxu0
      %v1280 = vadd.f32 0.0, %v1279
      %v1281 = vpop.f32.mrb[0].mxu0
      %v1282 = vpop.f32.mrb[0].mxu0
      %v1283 = vadd.f32 0.0, %v1282
      %v1284 = vpop.f32.mrb[0].mxu0
      %1285 = vmatprep.mubr.bf16.mxu0 0
      %1286 = vmatmul.mubr.bf16.gmra.mrb[0].mxu0 %v1142
      %v1287 = vpop.f32.mrb[0].mxu0
      %v1288 = vadd.f32 0.0, %v1287
      %v1289 = vpop.f32.mrb[0].mxu0
      %v1290 = vpop.f32.mrb[0].mxu0
      %v1291 = vadd.f32 0.0, %v1290
      %v1292 = vpop.f32.mrb[0].mxu0
      %1293 = vmatprep.mubr.bf16.mxu0 0
      %1294 = vmatmul.mubr.bf16.gmra.mrb[0].mxu0 %v1145
      %v1295 = vpop.f32.mrb[0].mxu0
      %v1296 = vadd.f32 0.0, %v1295
      %v1297 = vpop.f32.mrb[0].mxu0
      %v1298 = vpop.f32.mrb[0].mxu0
      %v1299 = vadd.f32 0.0, %v1298
      %v1300 = vpop.f32.mrb[0].mxu0
      %1301 = vmatprep.mubr.bf16.mxu0 0
      %1302 = vmatmul.mubr.bf16.gmra.mrb[0].mxu0 %v1148
      %v1303 = vpop.f32.mrb[0].mxu0
      %v1304 = vadd.f32 0.0, %v1303
      %v1305 = vpop.f32.mrb[0].mxu0
      %v1306 = vpop.f32.mrb[0].mxu0
      %v1307 = vadd.f32 0.0, %v1306
      %v1308 = vpop.f32.mrb[0].mxu0
      %1309 = vmatprep.mubr.bf16.mxu0 0
      %1310 = vmatmul.mubr.bf16.gmra.mrb[0].mxu0 %v1151
      %v1311 = vpop.f32.mrb[0].mxu0
      %v1312 = vadd.f32 0.0, %v1311
      %v1313 = vpop.f32.mrb[0].mxu0
      %v1314 = vpop.f32.mrb[0].mxu0
      %v1315 = vadd.f32 0.0, %v1314
      %v1316 = vpop.f32.mrb[0].mxu0
      %1317 = vmatprep.mubr.bf16.mxu0 0
      %1318 = vmatmul.mubr.bf16.gmra.mrb[0].mxu0 %v1154
      %v1319 = vpop.f32.mrb[0].mxu0
      %v1320 = vadd.f32 0.0, %v1319
      %v1321 = vpop.f32.mrb[0].mxu0
      %v1322 = vpop.f32.mrb[0].mxu0
      %v1323 = vadd.f32 0.0, %v1322
      %v1324 = vpop.f32.mrb[0].mxu0
      %1325 = vmatprep.mubr.bf16.mxu0 0
      %1326 = vmatmul.mubr.bf16.gmra.mrb[0].mxu0 %v1157
      %v1327 = vpop.f32.mrb[0].mxu0
      %v1328 = vadd.f32 0.0, %v1327
      %v1329 = vpop.f32.mrb[0].mxu0
      %v1330 = vpop.f32.mrb[0].mxu0
      %v1331 = vadd.f32 0.0, %v1330
      %v1332 = vpop.f32.mrb[0].mxu0
      %1333 = vmatprep.mubr.bf16.mxu0 0
      %1334 = vmatmul.mubr.bf16.gmra.mrb[0].mxu0 %v1160
      %v1335 = vpop.f32.mrb[0].mxu0
      %v1336 = vadd.f32 0.0, %v1335
      %v1337 = vpop.f32.mrb[0].mxu0
      %v1338 = vpop.f32.mrb[0].mxu0
      %v1339 = vadd.f32 0.0, %v1338
      %v1340 = vpop.f32.mrb[0].mxu0
      %1341 = vdwg.mxu0
      %v1342 = vadd.f32 %v1016, %v1200
      %v1343 = vadd.f32 %v1017, %v1203
      %v1344 = vadd.f32 %v1018, %v1208
      %v1345 = vadd.f32 %v1019, %v1211
      %v1346 = vadd.f32 %v1020, %v1216
      %v1347 = vadd.f32 %v1021, %v1219
      %v1348 = vadd.f32 %v1022, %v1224
      %v1349 = vadd.f32 %v1023, %v1227
      %v1350 = vadd.f32 %v1024, %v1232
      %v1351 = vadd.f32 %v1025, %v1235
      %v1352 = vadd.f32 %v1026, %v1240
      %v1353 = vadd.f32 %v1027, %v1243
      %v1354 = vadd.f32 %v1028, %v1248
      %v1355 = vadd.f32 %v1029, %v1251
      %v1356 = vadd.f32 %v1030, %v1256
      %v1357 = vadd.f32 %v1031, %v1259
      %v1358 = vadd.f32 %v1032, %v1264
      %v1359 = vadd.f32 %v1033, %v1267
      %v1360 = vadd.f32 %v1034, %v1272
      %v1361 = vadd.f32 %v1035, %v1275
      %v1362 = vadd.f32 %v1036, %v1280
      %v1363 = vadd.f32 %v1037, %v1283
      %v1364 = vadd.f32 %v1038, %v1288
      %v1365 = vadd.f32 %v1039, %v1291
      %v1366 = vadd.f32 %v1040, %v1296
      %v1367 = vadd.f32 %v1041, %v1299
      %v1368 = vadd.f32 %v1042, %v1304
      %v1369 = vadd.f32 %v1043, %v1307
      %v1370 = vadd.f32 %v1044, %v1312
      %v1371 = vadd.f32 %v1045, %v1315
      %v1372 = vadd.f32 %v1046, %v1320
      %v1373 = vadd.f32 %v1047, %v1323
      %v1374 = vadd.f32 %v1048, %v1328
      %v1375 = vadd.f32 %v1049, %v1331
      %v1376 = vadd.f32 %v1050, %v1336
      %v1377 = vadd.f32 %v1051, %v1339
      %v1378 = vld [vmem:[%s138 + $0x13] sm:$0xff]
      %v1379 = vld [vmem:[%s138 + $0x1b] sm:$0xff]
      %v1380 = vld [vmem:[%s138 + $0x23] sm:$0xff]
      %v1381 = vld [vmem:[%s138 + $0x2b] sm:$0xff]
      %v1382 = vld [vmem:[%s138 + $0x33] sm:$0xff]
      %v1383 = vld [vmem:[%s138 + $0x3b] sm:$0xff]
      %v1384 = vld [vmem:[%s138 + $0x43] sm:$0xff]
      %v1385 = vld [vmem:[%s138 + $0x4b] sm:$0xff]
      %v1386 = vld [vmem:[%s138 + $0x53] sm:$0xff]
      %v1387 = vld [vmem:[%s138 + $0x5b] sm:$0xff]
      %v1388 = vld [vmem:[%s138 + $0x63] sm:$0xff]
      %v1389 = vld [vmem:[%s138 + $0x6b] sm:$0xff]
      %v1390 = vld [vmem:[%s138 + $0x73] sm:$0xff]
      %v1391 = vld [vmem:[%s138 + $0x7b] sm:$0xff]
      %v1392 = vld [vmem:[%s138 + $0x83] sm:$0xff]
      %v1393 = vld [vmem:[%s138 + $0x8b] sm:$0xff]
      %v1394 = vld [vmem:[%s138 + $0x93] sm:$0xff]
      %v1395 = vld [vmem:[%s138 + $0x9b] sm:$0xff]
      %v1396 = vld [vmem:[%s138 + $0xa3] sm:$0xff]
      %v1397 = vld [vmem:[%s138 + $0xab] sm:$0xff]
      %v1398 = vld [vmem:[%s138 + $0xb3] sm:$0xff]
      %v1399 = vld [vmem:[%s138 + $0xbb] sm:$0xff]
      %v1400 = vld [vmem:[%s138 + $0xc3] sm:$0xff]
      %v1401 = vld [vmem:[%s138 + $0xcb] sm:$0xff]
      %v1402 = vld [vmem:[%s138 + $0xd3] sm:$0xff]
      %v1403 = vld [vmem:[%s138 + $0xdb] sm:$0xff]
      %v1404 = vld [vmem:[%s138 + $0xe3] sm:$0xff]
      %v1405 = vld [vmem:[%s138 + $0xeb] sm:$0xff]
      %v1406 = vld [vmem:[%s138 + $0xf3] sm:$0xff]
      %v1407 = vld [vmem:[%s138 + $0xfb] sm:$0xff]
      %v1408 = vld [vmem:[%s138 + $0x103] sm:$0xff]
      %v1409 = vld [vmem:[%s138 + $0x10b] sm:$0xff]
      %v1410 = vld [vmem:[%s138 + $0x113] sm:$0xff]
      %v1411 = vld [vmem:[%s138 + $0x11b] sm:$0xff]
      %v1412 = vld [vmem:[%s138 + $0x123] sm:$0xff]
      %v1413 = vld [vmem:[%s138 + $0x12b] sm:$0xff]
      %v1414 = vpack.c.bf16 %v1379, %v1378
      %v1415 = vpack.c.bf16 %v1381, %v1380
      %v1416 = vpack.c.bf16 %v1383, %v1382
      %v1417 = vpack.c.bf16 %v1385, %v1384
      %v1418 = vpack.c.bf16 %v1387, %v1386
      %v1419 = vpack.c.bf16 %v1389, %v1388
      %v1420 = vpack.c.bf16 %v1391, %v1390
      %v1421 = vpack.c.bf16 %v1393, %v1392
      %v1422 = vpack.c.bf16 %v1395, %v1394
      %v1423 = vpack.c.bf16 %v1397, %v1396
      %v1424 = vpack.c.bf16 %v1399, %v1398
      %v1425 = vpack.c.bf16 %v1401, %v1400
      %v1426 = vpack.c.bf16 %v1403, %v1402
      %v1427 = vpack.c.bf16 %v1405, %v1404
      %v1428 = vpack.c.bf16 %v1407, %v1406
      %v1429 = vpack.c.bf16 %v1409, %v1408
      %v1430 = vpack.c.bf16 %v1411, %v1410
      %v1431 = vpack.c.bf16 %v1413, %v1412
      %s1432 = scalar_lea.vmem %s1, 16
      %v1433 = vld [vmem:[%s1432] sm:$0xf]
      %v1435 = vsel %vm256, %v1414, 0
      %v1438 = vsel %vm256, %v1415, 0
      %v1441 = vsel %vm256, %v1416, 0
      %v1444 = vsel %vm256, %v1417, 0
      %v1447 = vsel %vm256, %v1418, 0
      %v1450 = vsel %vm256, %v1419, 0
      %v1453 = vsel %vm256, %v1420, 0
      %v1456 = vsel %vm256, %v1421, 0
      %v1459 = vsel %vm256, %v1422, 0
      %v1462 = vsel %vm256, %v1423, 0
      %v1465 = vsel %vm256, %v1424, 0
      %v1468 = vsel %vm256, %v1425, 0
      %v1471 = vsel %vm256, %v1426, 0
      %v1474 = vsel %vm256, %v1427, 0
      %v1477 = vsel %vm256, %v1428, 0
      %v1480 = vsel %vm256, %v1429, 0
      %v1483 = vsel %vm256, %v1430, 0
      %v1486 = vsel %vm256, %v1431, 0
      %v1489 = vsel %vm311, %v1433, 0
      %1491 = vmatprep.subr.bf16.mxu0 0
      %1492 = vmatpush1.bf16.msra.mxu0 %v1489
      %1493 = vmatprep.subr.bf16.mxu0 0
      %1494 = vmatpush1.bf16.msra.mxu0 0
      %1495 = vmatprep.subr.bf16.mxu0 0
      %1496 = vmatpush1.bf16.msra.mxu0 0
      %1497 = vmatprep.subr.bf16.mxu0 0
      %1498 = vmatpush1.bf16.msra.mxu0 0
      %1499 = vmatprep.subr.bf16.mxu0 0
      %1500 = vmatpush1.bf16.msra.mxu0 0
      %1501 = vmatprep.subr.bf16.mxu0 0
      %1502 = vmatpush1.bf16.msra.mxu0 0
      %1503 = vmatprep.subr.bf16.mxu0 0
      %1504 = vmatpush1.bf16.msra.mxu0 0
      %1505 = vmatprep.subr.bf16.mxu0 0
      %1506 = vmatpush1.bf16.msra.mxu0 0
      %1507 = vmatprep.subr.bf16.mxu0 0
      %1508 = vmatpush1.bf16.msra.mxu0 0
      %1509 = vmatprep.subr.bf16.mxu0 0
      %1510 = vmatpush1.bf16.msra.mxu0 0
      %1511 = vmatprep.subr.bf16.mxu0 0
      %1512 = vmatpush1.bf16.msra.mxu0 0
      %1513 = vmatprep.subr.bf16.mxu0 0
      %1514 = vmatpush1.bf16.msra.mxu0 0
      %1515 = vmatprep.subr.bf16.mxu0 0
      %1516 = vmatpush1.bf16.msra.mxu0 0
      %1517 = vmatprep.subr.bf16.mxu0 0
      %1518 = vmatpush1.bf16.msra.mxu0 0
      %1519 = vmatprep.subr.bf16.mxu0 0
      %1520 = vmatpush1.bf16.msra.mxu0 0
      %1521 = vmatprep.subr.bf16.mxu0 0
      %1522 = vmatpush1.bf16.msra.mxu0 0
      %1523 = vmatprep.mubr.bf16.mxu0 0
      %1524 = vmatmul.mubr.bf16.gmra.mrb[0].mxu0 %v1435
      %v1525 = vpop.f32.mrb[0].mxu0
      %v1526 = vadd.f32 0.0, %v1525
      %v1527 = vpop.f32.mrb[0].mxu0
      %v1528 = vpop.f32.mrb[0].mxu0
      %v1529 = vadd.f32 0.0, %v1528
      %v1530 = vpop.f32.mrb[0].mxu0
      %1531 = vmatprep.mubr.bf16.mxu0 0
      %1532 = vmatmul.mubr.bf16.gmra.mrb[0].mxu0 %v1438
      %v1533 = vpop.f32.mrb[0].mxu0
      %v1534 = vadd.f32 0.0, %v1533
      %v1535 = vpop.f32.mrb[0].mxu0
      %v1536 = vpop.f32.mrb[0].mxu0
      %v1537 = vadd.f32 0.0, %v1536
      %v1538 = vpop.f32.mrb[0].mxu0
      %1539 = vmatprep.mubr.bf16.mxu0 0
      %1540 = vmatmul.mubr.bf16.gmra.mrb[0].mxu0 %v1441
      %v1541 = vpop.f32.mrb[0].mxu0
      %v1542 = vadd.f32 0.0, %v1541
      %v1543 = vpop.f32.mrb[0].mxu0
      %v1544 = vpop.f32.mrb[0].mxu0
      %v1545 = vadd.f32 0.0, %v1544
      %v1546 = vpop.f32.mrb[0].mxu0
      %1547 = vmatprep.mubr.bf16.mxu0 0
      %1548 = vmatmul.mubr.bf16.gmra.mrb[0].mxu0 %v1444
      %v1549 = vpop.f32.mrb[0].mxu0
      %v1550 = vadd.f32 0.0, %v1549
      %v1551 = vpop.f32.mrb[0].mxu0
      %v1552 = vpop.f32.mrb[0].mxu0
      %v1553 = vadd.f32 0.0, %v1552
      %v1554 = vpop.f32.mrb[0].mxu0
      %1555 = vmatprep.mubr.bf16.mxu0 0
      %1556 = vmatmul.mubr.bf16.gmra.mrb[0].mxu0 %v1447
      %v1557 = vpop.f32.mrb[0].mxu0
      %v1558 = vadd.f32 0.0, %v1557
      %v1559 = vpop.f32.mrb[0].mxu0
      %v1560 = vpop.f32.mrb[0].mxu0
      %v1561 = vadd.f32 0.0, %v1560
      %v1562 = vpop.f32.mrb[0].mxu0
      %1563 = vmatprep.mubr.bf16.mxu0 0
      %1564 = vmatmul.mubr.bf16.gmra.mrb[0].mxu0 %v1450
      %v1565 = vpop.f32.mrb[0].mxu0
      %v1566 = vadd.f32 0.0, %v1565
      %v1567 = vpop.f32.mrb[0].mxu0
      %v1568 = vpop.f32.mrb[0].mxu0
      %v1569 = vadd.f32 0.0, %v1568
      %v1570 = vpop.f32.mrb[0].mxu0
      %1571 = vmatprep.mubr.bf16.mxu0 0
      %1572 = vmatmul.mubr.bf16.gmra.mrb[0].mxu0 %v1453
      %v1573 = vpop.f32.mrb[0].mxu0
      %v1574 = vadd.f32 0.0, %v1573
      %v1575 = vpop.f32.mrb[0].mxu0
      %v1576 = vpop.f32.mrb[0].mxu0
      %v1577 = vadd.f32 0.0, %v1576
      %v1578 = vpop.f32.mrb[0].mxu0
      %1579 = vmatprep.mubr.bf16.mxu0 0
      %1580 = vmatmul.mubr.bf16.gmra.mrb[0].mxu0 %v1456
      %v1581 = vpop.f32.mrb[0].mxu0
      %v1582 = vadd.f32 0.0, %v1581
      %v1583 = vpop.f32.mrb[0].mxu0
      %v1584 = vpop.f32.mrb[0].mxu0
      %v1585 = vadd.f32 0.0, %v1584
      %v1586 = vpop.f32.mrb[0].mxu0
      %1587 = vmatprep.mubr.bf16.mxu0 0
      %1588 = vmatmul.mubr.bf16.gmra.mrb[0].mxu0 %v1459
      %v1589 = vpop.f32.mrb[0].mxu0
      %v1590 = vadd.f32 0.0, %v1589
      %v1591 = vpop.f32.mrb[0].mxu0
      %v1592 = vpop.f32.mrb[0].mxu0
      %v1593 = vadd.f32 0.0, %v1592
      %v1594 = vpop.f32.mrb[0].mxu0
      %1595 = vmatprep.mubr.bf16.mxu0 0
      %1596 = vmatmul.mubr.bf16.gmra.mrb[0].mxu0 %v1462
      %v1597 = vpop.f32.mrb[0].mxu0
      %v1598 = vadd.f32 0.0, %v1597
      %v1599 = vpop.f32.mrb[0].mxu0
      %v1600 = vpop.f32.mrb[0].mxu0
      %v1601 = vadd.f32 0.0, %v1600
      %v1602 = vpop.f32.mrb[0].mxu0
      %1603 = vmatprep.mubr.bf16.mxu0 0
      %1604 = vmatmul.mubr.bf16.gmra.mrb[0].mxu0 %v1465
      %v1605 = vpop.f32.mrb[0].mxu0
      %v1606 = vadd.f32 0.0, %v1605
      %v1607 = vpop.f32.mrb[0].mxu0
      %v1608 = vpop.f32.mrb[0].mxu0
      %v1609 = vadd.f32 0.0, %v1608
      %v1610 = vpop.f32.mrb[0].mxu0
      %1611 = vmatprep.mubr.bf16.mxu0 0
      %1612 = vmatmul.mubr.bf16.gmra.mrb[0].mxu0 %v1468
      %v1613 = vpop.f32.mrb[0].mxu0
      %v1614 = vadd.f32 0.0, %v1613
      %v1615 = vpop.f32.mrb[0].mxu0
      %v1616 = vpop.f32.mrb[0].mxu0
      %v1617 = vadd.f32 0.0, %v1616
      %v1618 = vpop.f32.mrb[0].mxu0
      %1619 = vmatprep.mubr.bf16.mxu0 0
      %1620 = vmatmul.mubr.bf16.gmra.mrb[0].mxu0 %v1471
      %v1621 = vpop.f32.mrb[0].mxu0
      %v1622 = vadd.f32 0.0, %v1621
      %v1623 = vpop.f32.mrb[0].mxu0
      %v1624 = vpop.f32.mrb[0].mxu0
      %v1625 = vadd.f32 0.0, %v1624
      %v1626 = vpop.f32.mrb[0].mxu0
      %1627 = vmatprep.mubr.bf16.mxu0 0
      %1628 = vmatmul.mubr.bf16.gmra.mrb[0].mxu0 %v1474
      %v1629 = vpop.f32.mrb[0].mxu0
      %v1630 = vadd.f32 0.0, %v1629
      %v1631 = vpop.f32.mrb[0].mxu0
      %v1632 = vpop.f32.mrb[0].mxu0
      %v1633 = vadd.f32 0.0, %v1632
      %v1634 = vpop.f32.mrb[0].mxu0
      %1635 = vmatprep.mubr.bf16.mxu0 0
      %1636 = vmatmul.mubr.bf16.gmra.mrb[0].mxu0 %v1477
      %v1637 = vpop.f32.mrb[0].mxu0
      %v1638 = vadd.f32 0.0, %v1637
      %v1639 = vpop.f32.mrb[0].mxu0
      %v1640 = vpop.f32.mrb[0].mxu0
      %v1641 = vadd.f32 0.0, %v1640
      %v1642 = vpop.f32.mrb[0].mxu0
      %1643 = vmatprep.mubr.bf16.mxu0 0
      %1644 = vmatmul.mubr.bf16.gmra.mrb[0].mxu0 %v1480
      %v1645 = vpop.f32.mrb[0].mxu0
      %v1646 = vadd.f32 0.0, %v1645
      %v1647 = vpop.f32.mrb[0].mxu0
      %v1648 = vpop.f32.mrb[0].mxu0
      %v1649 = vadd.f32 0.0, %v1648
      %v1650 = vpop.f32.mrb[0].mxu0
      %1651 = vmatprep.mubr.bf16.mxu0 0
      %1652 = vmatmul.mubr.bf16.gmra.mrb[0].mxu0 %v1483
      %v1653 = vpop.f32.mrb[0].mxu0
      %v1654 = vadd.f32 0.0, %v1653
      %v1655 = vpop.f32.mrb[0].mxu0
      %v1656 = vpop.f32.mrb[0].mxu0
      %v1657 = vadd.f32 0.0, %v1656
      %v1658 = vpop.f32.mrb[0].mxu0
      %1659 = vmatprep.mubr.bf16.mxu0 0
      %1660 = vmatmul.mubr.bf16.gmra.mrb[0].mxu0 %v1486
      %v1661 = vpop.f32.mrb[0].mxu0
      %v1662 = vadd.f32 0.0, %v1661
      %v1663 = vpop.f32.mrb[0].mxu0
      %v1664 = vpop.f32.mrb[0].mxu0
      %v1665 = vadd.f32 0.0, %v1664
      %v1666 = vpop.f32.mrb[0].mxu0
      %1667 = vdwg.mxu0
      %v1668 = vadd.f32 %v1342, %v1526
      %v1669 = vadd.f32 %v1343, %v1529
      %v1670 = vadd.f32 %v1344, %v1534
      %v1671 = vadd.f32 %v1345, %v1537
      %v1672 = vadd.f32 %v1346, %v1542
      %v1673 = vadd.f32 %v1347, %v1545
      %v1674 = vadd.f32 %v1348, %v1550
      %v1675 = vadd.f32 %v1349, %v1553
      %v1676 = vadd.f32 %v1350, %v1558
      %v1677 = vadd.f32 %v1351, %v1561
      %v1678 = vadd.f32 %v1352, %v1566
      %v1679 = vadd.f32 %v1353, %v1569
      %v1680 = vadd.f32 %v1354, %v1574
      %v1681 = vadd.f32 %v1355, %v1577
      %v1682 = vadd.f32 %v1356, %v1582
      %v1683 = vadd.f32 %v1357, %v1585
      %v1684 = vadd.f32 %v1358, %v1590
      %v1685 = vadd.f32 %v1359, %v1593
      %v1686 = vadd.f32 %v1360, %v1598
      %v1687 = vadd.f32 %v1361, %v1601
      %v1688 = vadd.f32 %v1362, %v1606
      %v1689 = vadd.f32 %v1363, %v1609
      %v1690 = vadd.f32 %v1364, %v1614
      %v1691 = vadd.f32 %v1365, %v1617
      %v1692 = vadd.f32 %v1366, %v1622
      %v1693 = vadd.f32 %v1367, %v1625
      %v1694 = vadd.f32 %v1368, %v1630
      %v1695 = vadd.f32 %v1369, %v1633
      %v1696 = vadd.f32 %v1370, %v1638
      %v1697 = vadd.f32 %v1371, %v1641
      %v1698 = vadd.f32 %v1372, %v1646
      %v1699 = vadd.f32 %v1373, %v1649
      %v1700 = vadd.f32 %v1374, %v1654
      %v1701 = vadd.f32 %v1375, %v1657
      %v1702 = vadd.f32 %v1376, %v1662
      %v1703 = vadd.f32 %v1377, %v1665
      %v1704 = vld [vmem:[%s138 + $0x14] sm:$0xff]
      %v1705 = vld [vmem:[%s138 + $0x1c] sm:$0xff]
      %v1706 = vld [vmem:[%s138 + $0x24] sm:$0xff]
      %v1707 = vld [vmem:[%s138 + $0x2c] sm:$0xff]
      %v1708 = vld [vmem:[%s138 + $0x34] sm:$0xff]
      %v1709 = vld [vmem:[%s138 + $0x3c] sm:$0xff]
      %v1710 = vld [vmem:[%s138 + $0x44] sm:$0xff]
      %v1711 = vld [vmem:[%s138 + $0x4c] sm:$0xff]
      %v1712 = vld [vmem:[%s138 + $0x54] sm:$0xff]
      %v1713 = vld [vmem:[%s138 + $0x5c] sm:$0xff]
      %v1714 = vld [vmem:[%s138 + $0x64] sm:$0xff]
      %v1715 = vld [vmem:[%s138 + $0x6c] sm:$0xff]
      %v1716 = vld [vmem:[%s138 + $0x74] sm:$0xff]
      %v1717 = vld [vmem:[%s138 + $0x7c] sm:$0xff]
      %v1718 = vld [vmem:[%s138 + $0x84] sm:$0xff]
      %v1719 = vld [vmem:[%s138 + $0x8c] sm:$0xff]
      %v1720 = vld [vmem:[%s138 + $0x94] sm:$0xff]
      %v1721 = vld [vmem:[%s138 + $0x9c] sm:$0xff]
      %v1722 = vld [vmem:[%s138 + $0xa4] sm:$0xff]
      %v1723 = vld [vmem:[%s138 + $0xac] sm:$0xff]
      %v1724 = vld [vmem:[%s138 + $0xb4] sm:$0xff]
      %v1725 = vld [vmem:[%s138 + $0xbc] sm:$0xff]
      %v1726 = vld [vmem:[%s138 + $0xc4] sm:$0xff]
      %v1727 = vld [vmem:[%s138 + $0xcc] sm:$0xff]
      %v1728 = vld [vmem:[%s138 + $0xd4] sm:$0xff]
      %v1729 = vld [vmem:[%s138 + $0xdc] sm:$0xff]
      %v1730 = vld [vmem:[%s138 + $0xe4] sm:$0xff]
      %v1731 = vld [vmem:[%s138 + $0xec] sm:$0xff]
      %v1732 = vld [vmem:[%s138 + $0xf4] sm:$0xff]
      %v1733 = vld [vmem:[%s138 + $0xfc] sm:$0xff]
      %v1734 = vld [vmem:[%s138 + $0x104] sm:$0xff]
      %v1735 = vld [vmem:[%s138 + $0x10c] sm:$0xff]
      %v1736 = vld [vmem:[%s138 + $0x114] sm:$0xff]
      %v1737 = vld [vmem:[%s138 + $0x11c] sm:$0xff]
      %v1738 = vld [vmem:[%s138 + $0x124] sm:$0xff]
      %v1739 = vld [vmem:[%s138 + $0x12c] sm:$0xff]
      %v1740 = vpack.c.bf16 %v1705, %v1704
      %v1741 = vpack.c.bf16 %v1707, %v1706
      %v1742 = vpack.c.bf16 %v1709, %v1708
      %v1743 = vpack.c.bf16 %v1711, %v1710
      %v1744 = vpack.c.bf16 %v1713, %v1712
      %v1745 = vpack.c.bf16 %v1715, %v1714
      %v1746 = vpack.c.bf16 %v1717, %v1716
      %v1747 = vpack.c.bf16 %v1719, %v1718
      %v1748 = vpack.c.bf16 %v1721, %v1720
      %v1749 = vpack.c.bf16 %v1723, %v1722
      %v1750 = vpack.c.bf16 %v1725, %v1724
      %v1751 = vpack.c.bf16 %v1727, %v1726
      %v1752 = vpack.c.bf16 %v1729, %v1728
      %v1753 = vpack.c.bf16 %v1731, %v1730
      %v1754 = vpack.c.bf16 %v1733, %v1732
      %v1755 = vpack.c.bf16 %v1735, %v1734
      %v1756 = vpack.c.bf16 %v1737, %v1736
      %v1757 = vpack.c.bf16 %v1739, %v1738
      %s1758 = scalar_lea.vmem %s1, 20
      %v1759 = vld [vmem:[%s1758] sm:$0xf]
      %v1761 = vsel %vm256, %v1740, 0
      %v1764 = vsel %vm256, %v1741, 0
      %v1767 = vsel %vm256, %v1742, 0
      %v1770 = vsel %vm256, %v1743, 0
      %v1773 = vsel %vm256, %v1744, 0
      %v1776 = vsel %vm256, %v1745, 0
      %v1779 = vsel %vm256, %v1746, 0
      %v1782 = vsel %vm256, %v1747, 0
      %v1785 = vsel %vm256, %v1748, 0
      %v1788 = vsel %vm256, %v1749, 0
      %v1791 = vsel %vm256, %v1750, 0
      %v1794 = vsel %vm256, %v1751, 0
      %v1797 = vsel %vm256, %v1752, 0
      %v1800 = vsel %vm256, %v1753, 0
      %v1803 = vsel %vm256, %v1754, 0
      %v1806 = vsel %vm256, %v1755, 0
      %v1809 = vsel %vm256, %v1756, 0
      %v1812 = vsel %vm256, %v1757, 0
      %v1815 = vsel %vm311, %v1759, 0
      %1817 = vmatprep.subr.bf16.mxu0 0
      %1818 = vmatpush1.bf16.msra.mxu0 %v1815
      %1819 = vmatprep.subr.bf16.mxu0 0
      %1820 = vmatpush1.bf16.msra.mxu0 0
      %1821 = vmatprep.subr.bf16.mxu0 0
      %1822 = vmatpush1.bf16.msra.mxu0 0
      %1823 = vmatprep.subr.bf16.mxu0 0
      %1824 = vmatpush1.bf16.msra.mxu0 0
      %1825 = vmatprep.subr.bf16.mxu0 0
      %1826 = vmatpush1.bf16.msra.mxu0 0
      %1827 = vmatprep.subr.bf16.mxu0 0
      %1828 = vmatpush1.bf16.msra.mxu0 0
      %1829 = vmatprep.subr.bf16.mxu0 0
      %1830 = vmatpush1.bf16.msra.mxu0 0
      %1831 = vmatprep.subr.bf16.mxu0 0
      %1832 = vmatpush1.bf16.msra.mxu0 0
      %1833 = vmatprep.subr.bf16.mxu0 0
      %1834 = vmatpush1.bf16.msra.mxu0 0
      %1835 = vmatprep.subr.bf16.mxu0 0
      %1836 = vmatpush1.bf16.msra.mxu0 0
      %1837 = vmatprep.subr.bf16.mxu0 0
      %1838 = vmatpush1.bf16.msra.mxu0 0
      %1839 = vmatprep.subr.bf16.mxu0 0
      %1840 = vmatpush1.bf16.msra.mxu0 0
      %1841 = vmatprep.subr.bf16.mxu0 0
      %1842 = vmatpush1.bf16.msra.mxu0 0
      %1843 = vmatprep.subr.bf16.mxu0 0
      %1844 = vmatpush1.bf16.msra.mxu0 0
      %1845 = vmatprep.subr.bf16.mxu0 0
      %1846 = vmatpush1.bf16.msra.mxu0 0
      %1847 = vmatprep.subr.bf16.mxu0 0
      %1848 = vmatpush1.bf16.msra.mxu0 0
      %1849 = vmatprep.mubr.bf16.mxu0 0
      %1850 = vmatmul.mubr.bf16.gmra.mrb[0].mxu0 %v1761
      %v1851 = vpop.f32.mrb[0].mxu0
      %v1852 = vadd.f32 0.0, %v1851
      %v1853 = vpop.f32.mrb[0].mxu0
      %v1854 = vpop.f32.mrb[0].mxu0
      %v1855 = vadd.f32 0.0, %v1854
      %v1856 = vpop.f32.mrb[0].mxu0
      %1857 = vmatprep.mubr.bf16.mxu0 0
      %1858 = vmatmul.mubr.bf16.gmra.mrb[0].mxu0 %v1764
      %v1859 = vpop.f32.mrb[0].mxu0
      %v1860 = vadd.f32 0.0, %v1859
      %v1861 = vpop.f32.mrb[0].mxu0
      %v1862 = vpop.f32.mrb[0].mxu0
      %v1863 = vadd.f32 0.0, %v1862
      %v1864 = vpop.f32.mrb[0].mxu0
      %1865 = vmatprep.mubr.bf16.mxu0 0
      %1866 = vmatmul.mubr.bf16.gmra.mrb[0].mxu0 %v1767
      %v1867 = vpop.f32.mrb[0].mxu0
      %v1868 = vadd.f32 0.0, %v1867
      %v1869 = vpop.f32.mrb[0].mxu0
      %v1870 = vpop.f32.mrb[0].mxu0
      %v1871 = vadd.f32 0.0, %v1870
      %v1872 = vpop.f32.mrb[0].mxu0
      %1873 = vmatprep.mubr.bf16.mxu0 0
      %1874 = vmatmul.mubr.bf16.gmra.mrb[0].mxu0 %v1770
      %v1875 = vpop.f32.mrb[0].mxu0
      %v1876 = vadd.f32 0.0, %v1875
      %v1877 = vpop.f32.mrb[0].mxu0
      %v1878 = vpop.f32.mrb[0].mxu0
      %v1879 = vadd.f32 0.0, %v1878
      %v1880 = vpop.f32.mrb[0].mxu0
      %1881 = vmatprep.mubr.bf16.mxu0 0
      %1882 = vmatmul.mubr.bf16.gmra.mrb[0].mxu0 %v1773
      %v1883 = vpop.f32.mrb[0].mxu0
      %v1884 = vadd.f32 0.0, %v1883
      %v1885 = vpop.f32.mrb[0].mxu0
      %v1886 = vpop.f32.mrb[0].mxu0
      %v1887 = vadd.f32 0.0, %v1886
      %v1888 = vpop.f32.mrb[0].mxu0
      %1889 = vmatprep.mubr.bf16.mxu0 0
      %1890 = vmatmul.mubr.bf16.gmra.mrb[0].mxu0 %v1776
      %v1891 = vpop.f32.mrb[0].mxu0
      %v1892 = vadd.f32 0.0, %v1891
      %v1893 = vpop.f32.mrb[0].mxu0
      %v1894 = vpop.f32.mrb[0].mxu0
      %v1895 = vadd.f32 0.0, %v1894
      %v1896 = vpop.f32.mrb[0].mxu0
      %1897 = vmatprep.mubr.bf16.mxu0 0
      %1898 = vmatmul.mubr.bf16.gmra.mrb[0].mxu0 %v1779
      %v1899 = vpop.f32.mrb[0].mxu0
      %v1900 = vadd.f32 0.0, %v1899
      %v1901 = vpop.f32.mrb[0].mxu0
      %v1902 = vpop.f32.mrb[0].mxu0
      %v1903 = vadd.f32 0.0, %v1902
      %v1904 = vpop.f32.mrb[0].mxu0
      %1905 = vmatprep.mubr.bf16.mxu0 0
      %1906 = vmatmul.mubr.bf16.gmra.mrb[0].mxu0 %v1782
      %v1907 = vpop.f32.mrb[0].mxu0
      %v1908 = vadd.f32 0.0, %v1907
      %v1909 = vpop.f32.mrb[0].mxu0
      %v1910 = vpop.f32.mrb[0].mxu0
      %v1911 = vadd.f32 0.0, %v1910
      %v1912 = vpop.f32.mrb[0].mxu0
      %1913 = vmatprep.mubr.bf16.mxu0 0
      %1914 = vmatmul.mubr.bf16.gmra.mrb[0].mxu0 %v1785
      %v1915 = vpop.f32.mrb[0].mxu0
      %v1916 = vadd.f32 0.0, %v1915
      %v1917 = vpop.f32.mrb[0].mxu0
      %v1918 = vpop.f32.mrb[0].mxu0
      %v1919 = vadd.f32 0.0, %v1918
      %v1920 = vpop.f32.mrb[0].mxu0
      %1921 = vmatprep.mubr.bf16.mxu0 0
      %1922 = vmatmul.mubr.bf16.gmra.mrb[0].mxu0 %v1788
      %v1923 = vpop.f32.mrb[0].mxu0
      %v1924 = vadd.f32 0.0, %v1923
      %v1925 = vpop.f32.mrb[0].mxu0
      %v1926 = vpop.f32.mrb[0].mxu0
      %v1927 = vadd.f32 0.0, %v1926
      %v1928 = vpop.f32.mrb[0].mxu0
      %1929 = vmatprep.mubr.bf16.mxu0 0
      %1930 = vmatmul.mubr.bf16.gmra.mrb[0].mxu0 %v1791
      %v1931 = vpop.f32.mrb[0].mxu0
      %v1932 = vadd.f32 0.0, %v1931
      %v1933 = vpop.f32.mrb[0].mxu0
      %v1934 = vpop.f32.mrb[0].mxu0
      %v1935 = vadd.f32 0.0, %v1934
      %v1936 = vpop.f32.mrb[0].mxu0
      %1937 = vmatprep.mubr.bf16.mxu0 0
      %1938 = vmatmul.mubr.bf16.gmra.mrb[0].mxu0 %v1794
      %v1939 = vpop.f32.mrb[0].mxu0
      %v1940 = vadd.f32 0.0, %v1939
      %v1941 = vpop.f32.mrb[0].mxu0
      %v1942 = vpop.f32.mrb[0].mxu0
      %v1943 = vadd.f32 0.0, %v1942
      %v1944 = vpop.f32.mrb[0].mxu0
      %1945 = vmatprep.mubr.bf16.mxu0 0
      %1946 = vmatmul.mubr.bf16.gmra.mrb[0].mxu0 %v1797
      %v1947 = vpop.f32.mrb[0].mxu0
      %v1948 = vadd.f32 0.0, %v1947
      %v1949 = vpop.f32.mrb[0].mxu0
      %v1950 = vpop.f32.mrb[0].mxu0
      %v1951 = vadd.f32 0.0, %v1950
      %v1952 = vpop.f32.mrb[0].mxu0
      %1953 = vmatprep.mubr.bf16.mxu0 0
      %1954 = vmatmul.mubr.bf16.gmra.mrb[0].mxu0 %v1800
      %v1955 = vpop.f32.mrb[0].mxu0
      %v1956 = vadd.f32 0.0, %v1955
      %v1957 = vpop.f32.mrb[0].mxu0
      %v1958 = vpop.f32.mrb[0].mxu0
      %v1959 = vadd.f32 0.0, %v1958
      %v1960 = vpop.f32.mrb[0].mxu0
      %1961 = vmatprep.mubr.bf16.mxu0 0
      %1962 = vmatmul.mubr.bf16.gmra.mrb[0].mxu0 %v1803
      %v1963 = vpop.f32.mrb[0].mxu0
      %v1964 = vadd.f32 0.0, %v1963
      %v1965 = vpop.f32.mrb[0].mxu0
      %v1966 = vpop.f32.mrb[0].mxu0
      %v1967 = vadd.f32 0.0, %v1966
      %v1968 = vpop.f32.mrb[0].mxu0
      %1969 = vmatprep.mubr.bf16.mxu0 0
      %1970 = vmatmul.mubr.bf16.gmra.mrb[0].mxu0 %v1806
      %v1971 = vpop.f32.mrb[0].mxu0
      %v1972 = vadd.f32 0.0, %v1971
      %v1973 = vpop.f32.mrb[0].mxu0
      %v1974 = vpop.f32.mrb[0].mxu0
      %v1975 = vadd.f32 0.0, %v1974
      %v1976 = vpop.f32.mrb[0].mxu0
      %1977 = vmatprep.mubr.bf16.mxu0 0
      %1978 = vmatmul.mubr.bf16.gmra.mrb[0].mxu0 %v1809
      %v1979 = vpop.f32.mrb[0].mxu0
      %v1980 = vadd.f32 0.0, %v1979
      %v1981 = vpop.f32.mrb[0].mxu0
      %v1982 = vpop.f32.mrb[0].mxu0
      %v1983 = vadd.f32 0.0, %v1982
      %v1984 = vpop.f32.mrb[0].mxu0
      %1985 = vmatprep.mubr.bf16.mxu0 0
      %1986 = vmatmul.mubr.bf16.gmra.mrb[0].mxu0 %v1812
      %v1987 = vpop.f32.mrb[0].mxu0
      %v1988 = vadd.f32 0.0, %v1987
      %v1989 = vpop.f32.mrb[0].mxu0
      %v1990 = vpop.f32.mrb[0].mxu0
      %v1991 = vadd.f32 0.0, %v1990
      %v1992 = vpop.f32.mrb[0].mxu0
      %1993 = vdwg.mxu0
      %v1994 = vadd.f32 %v1668, %v1852
      %v1995 = vadd.f32 %v1669, %v1855
      %v1996 = vadd.f32 %v1670, %v1860
      %v1997 = vadd.f32 %v1671, %v1863
      %v1998 = vadd.f32 %v1672, %v1868
      %v1999 = vadd.f32 %v1673, %v1871
      %v2000 = vadd.f32 %v1674, %v1876
      %v2001 = vadd.f32 %v1675, %v1879
      %v2002 = vadd.f32 %v1676, %v1884
      %v2003 = vadd.f32 %v1677, %v1887
      %v2004 = vadd.f32 %v1678, %v1892
      %v2005 = vadd.f32 %v1679, %v1895
      %v2006 = vadd.f32 %v1680, %v1900
      %v2007 = vadd.f32 %v1681, %v1903
      %v2008 = vadd.f32 %v1682, %v1908
      %v2009 = vadd.f32 %v1683, %v1911
      %v2010 = vadd.f32 %v1684, %v1916
      %v2011 = vadd.f32 %v1685, %v1919
      %v2012 = vadd.f32 %v1686, %v1924
      %v2013 = vadd.f32 %v1687, %v1927
      %v2014 = vadd.f32 %v1688, %v1932
      %v2015 = vadd.f32 %v1689, %v1935
      %v2016 = vadd.f32 %v1690, %v1940
      %v2017 = vadd.f32 %v1691, %v1943
      %v2018 = vadd.f32 %v1692, %v1948
      %v2019 = vadd.f32 %v1693, %v1951
      %v2020 = vadd.f32 %v1694, %v1956
      %v2021 = vadd.f32 %v1695, %v1959
      %v2022 = vadd.f32 %v1696, %v1964
      %v2023 = vadd.f32 %v1697, %v1967
      %v2024 = vadd.f32 %v1698, %v1972
      %v2025 = vadd.f32 %v1699, %v1975
      %v2026 = vadd.f32 %v1700, %v1980
      %v2027 = vadd.f32 %v1701, %v1983
      %v2028 = vadd.f32 %v1702, %v1988
      %v2029 = vadd.f32 %v1703, %v1991
      %v2030 = vld [vmem:[%s138 + $0x24] sm:$0xff]
      %v2031 = vld [vmem:[%s138 + $0x2c] sm:$0xff]
      %v2032 = vld [vmem:[%s138 + $0x34] sm:$0xff]
      %v2033 = vld [vmem:[%s138 + $0x3c] sm:$0xff]
      %v2034 = vld [vmem:[%s138 + $0x44] sm:$0xff]
      %v2035 = vld [vmem:[%s138 + $0x4c] sm:$0xff]
      %v2036 = vld [vmem:[%s138 + $0x54] sm:$0xff]
      %v2037 = vld [vmem:[%s138 + $0x5c] sm:$0xff]
      %v2038 = vld [vmem:[%s138 + $0x64] sm:$0xff]
      %v2039 = vld [vmem:[%s138 + $0x6c] sm:$0xff]
      %v2040 = vld [vmem:[%s138 + $0x74] sm:$0xff]
      %v2041 = vld [vmem:[%s138 + $0x7c] sm:$0xff]
      %v2042 = vld [vmem:[%s138 + $0x84] sm:$0xff]
      %v2043 = vld [vmem:[%s138 + $0x8c] sm:$0xff]
      %v2044 = vld [vmem:[%s138 + $0x94] sm:$0xff]
      %v2045 = vld [vmem:[%s138 + $0x9c] sm:$0xff]
      %v2046 = vld [vmem:[%s138 + $0xa4] sm:$0xff]
      %v2047 = vld [vmem:[%s138 + $0xac] sm:$0xff]
      %v2048 = vld [vmem:[%s138 + $0xb4] sm:$0xff]
      %v2049 = vld [vmem:[%s138 + $0xbc] sm:$0xff]
      %v2050 = vld [vmem:[%s138 + $0xc4] sm:$0xff]
      %v2051 = vld [vmem:[%s138 + $0xcc] sm:$0xff]
      %v2052 = vld [vmem:[%s138 + $0xd4] sm:$0xff]
      %v2053 = vld [vmem:[%s138 + $0xdc] sm:$0xff]
      %v2054 = vld [vmem:[%s138 + $0xe4] sm:$0xff]
      %v2055 = vld [vmem:[%s138 + $0xec] sm:$0xff]
      %v2056 = vld [vmem:[%s138 + $0xf4] sm:$0xff]
      %v2057 = vld [vmem:[%s138 + $0xfc] sm:$0xff]
      %v2058 = vld [vmem:[%s138 + $0x104] sm:$0xff]
      %v2059 = vld [vmem:[%s138 + $0x10c] sm:$0xff]
      %v2060 = vld [vmem:[%s138 + $0x114] sm:$0xff]
      %v2061 = vld [vmem:[%s138 + $0x11c] sm:$0xff]
      %v2062 = vld [vmem:[%s138 + $0x124] sm:$0xff]
      %v2063 = vld [vmem:[%s138 + $0x12c] sm:$0xff]
      %v2064 = vld [vmem:[%s138 + $0x134] sm:$0xff]
      %v2065 = vld [vmem:[%s138 + $0x13c] sm:$0xff]
      %v2066 = vpack.c.bf16 %v2031, %v2030
      %v2067 = vpack.c.bf16 %v2033, %v2032
      %v2068 = vpack.c.bf16 %v2035, %v2034
      %v2069 = vpack.c.bf16 %v2037, %v2036
      %v2070 = vpack.c.bf16 %v2039, %v2038
      %v2071 = vpack.c.bf16 %v2041, %v2040
      %v2072 = vpack.c.bf16 %v2043, %v2042
      %v2073 = vpack.c.bf16 %v2045, %v2044
      %v2074 = vpack.c.bf16 %v2047, %v2046
      %v2075 = vpack.c.bf16 %v2049, %v2048
      %v2076 = vpack.c.bf16 %v2051, %v2050
      %v2077 = vpack.c.bf16 %v2053, %v2052
      %v2078 = vpack.c.bf16 %v2055, %v2054
      %v2079 = vpack.c.bf16 %v2057, %v2056
      %v2080 = vpack.c.bf16 %v2059, %v2058
      %v2081 = vpack.c.bf16 %v2061, %v2060
      %v2082 = vpack.c.bf16 %v2063, %v2062
      %v2083 = vpack.c.bf16 %v2065, %v2064
      %s2084 = scalar_lea.vmem %s1, 24
      %v2085 = vld [vmem:[%s2084] sm:$0xf]
      %v2087 = vsel %vm256, %v2066, 0
      %v2090 = vsel %vm256, %v2067, 0
      %v2093 = vsel %vm256, %v2068, 0
      %v2096 = vsel %vm256, %v2069, 0
      %v2099 = vsel %vm256, %v2070, 0
      %v2102 = vsel %vm256, %v2071, 0
      %v2105 = vsel %vm256, %v2072, 0
      %v2108 = vsel %vm256, %v2073, 0
      %v2111 = vsel %vm256, %v2074, 0
      %v2114 = vsel %vm256, %v2075, 0
      %v2117 = vsel %vm256, %v2076, 0
      %v2120 = vsel %vm256, %v2077, 0
      %v2123 = vsel %vm256, %v2078, 0
      %v2126 = vsel %vm256, %v2079, 0
      %v2129 = vsel %vm256, %v2080, 0
      %v2132 = vsel %vm256, %v2081, 0
      %v2135 = vsel %vm256, %v2082, 0
      %v2138 = vsel %vm256, %v2083, 0
      %v2141 = vsel %vm311, %v2085, 0
      %2143 = vmatprep.subr.bf16.mxu0 0
      %2144 = vmatpush1.bf16.msra.mxu0 %v2141
      %2145 = vmatprep.subr.bf16.mxu0 0
      %2146 = vmatpush1.bf16.msra.mxu0 0
      %2147 = vmatprep.subr.bf16.mxu0 0
      %2148 = vmatpush1.bf16.msra.mxu0 0
      %2149 = vmatprep.subr.bf16.mxu0 0
      %2150 = vmatpush1.bf16.msra.mxu0 0
      %2151 = vmatprep.subr.bf16.mxu0 0
      %2152 = vmatpush1.bf16.msra.mxu0 0
      %2153 = vmatprep.subr.bf16.mxu0 0
      %2154 = vmatpush1.bf16.msra.mxu0 0
      %2155 = vmatprep.subr.bf16.mxu0 0
      %2156 = vmatpush1.bf16.msra.mxu0 0
      %2157 = vmatprep.subr.bf16.mxu0 0
      %2158 = vmatpush1.bf16.msra.mxu0 0
      %2159 = vmatprep.subr.bf16.mxu0 0
      %2160 = vmatpush1.bf16.msra.mxu0 0
      %2161 = vmatprep.subr.bf16.mxu0 0
      %2162 = vmatpush1.bf16.msra.mxu0 0
      %2163 = vmatprep.subr.bf16.mxu0 0
      %2164 = vmatpush1.bf16.msra.mxu0 0
      %2165 = vmatprep.subr.bf16.mxu0 0
      %2166 = vmatpush1.bf16.msra.mxu0 0
      %2167 = vmatprep.subr.bf16.mxu0 0
      %2168 = vmatpush1.bf16.msra.mxu0 0
      %2169 = vmatprep.subr.bf16.mxu0 0
      %2170 = vmatpush1.bf16.msra.mxu0 0
      %2171 = vmatprep.subr.bf16.mxu0 0
      %2172 = vmatpush1.bf16.msra.mxu0 0
      %2173 = vmatprep.subr.bf16.mxu0 0
      %2174 = vmatpush1.bf16.msra.mxu0 0
      %2175 = vmatprep.mubr.bf16.mxu0 0
      %2176 = vmatmul.mubr.bf16.gmra.mrb[0].mxu0 %v2087
      %v2177 = vpop.f32.mrb[0].mxu0
      %v2178 = vadd.f32 0.0, %v2177
      %v2179 = vpop.f32.mrb[0].mxu0
      %v2180 = vpop.f32.mrb[0].mxu0
      %v2181 = vadd.f32 0.0, %v2180
      %v2182 = vpop.f32.mrb[0].mxu0
      %2183 = vmatprep.mubr.bf16.mxu0 0
      %2184 = vmatmul.mubr.bf16.gmra.mrb[0].mxu0 %v2090
      %v2185 = vpop.f32.mrb[0].mxu0
      %v2186 = vadd.f32 0.0, %v2185
      %v2187 = vpop.f32.mrb[0].mxu0
      %v2188 = vpop.f32.mrb[0].mxu0
      %v2189 = vadd.f32 0.0, %v2188
      %v2190 = vpop.f32.mrb[0].mxu0
      %2191 = vmatprep.mubr.bf16.mxu0 0
      %2192 = vmatmul.mubr.bf16.gmra.mrb[0].mxu0 %v2093
      %v2193 = vpop.f32.mrb[0].mxu0
      %v2194 = vadd.f32 0.0, %v2193
      %v2195 = vpop.f32.mrb[0].mxu0
      %v2196 = vpop.f32.mrb[0].mxu0
      %v2197 = vadd.f32 0.0, %v2196
      %v2198 = vpop.f32.mrb[0].mxu0
      %2199 = vmatprep.mubr.bf16.mxu0 0
      %2200 = vmatmul.mubr.bf16.gmra.mrb[0].mxu0 %v2096
      %v2201 = vpop.f32.mrb[0].mxu0
      %v2202 = vadd.f32 0.0, %v2201
      %v2203 = vpop.f32.mrb[0].mxu0
      %v2204 = vpop.f32.mrb[0].mxu0
      %v2205 = vadd.f32 0.0, %v2204
      %v2206 = vpop.f32.mrb[0].mxu0
      %2207 = vmatprep.mubr.bf16.mxu0 0
      %2208 = vmatmul.mubr.bf16.gmra.mrb[0].mxu0 %v2099
      %v2209 = vpop.f32.mrb[0].mxu0
      %v2210 = vadd.f32 0.0, %v2209
      %v2211 = vpop.f32.mrb[0].mxu0
      %v2212 = vpop.f32.mrb[0].mxu0
      %v2213 = vadd.f32 0.0, %v2212
      %v2214 = vpop.f32.mrb[0].mxu0
      %2215 = vmatprep.mubr.bf16.mxu0 0
      %2216 = vmatmul.mubr.bf16.gmra.mrb[0].mxu0 %v2102
      %v2217 = vpop.f32.mrb[0].mxu0
      %v2218 = vadd.f32 0.0, %v2217
      %v2219 = vpop.f32.mrb[0].mxu0
      %v2220 = vpop.f32.mrb[0].mxu0
      %v2221 = vadd.f32 0.0, %v2220
      %v2222 = vpop.f32.mrb[0].mxu0
      %2223 = vmatprep.mubr.bf16.mxu0 0
      %2224 = vmatmul.mubr.bf16.gmra.mrb[0].mxu0 %v2105
      %v2225 = vpop.f32.mrb[0].mxu0
      %v2226 = vadd.f32 0.0, %v2225
      %v2227 = vpop.f32.mrb[0].mxu0
      %v2228 = vpop.f32.mrb[0].mxu0
      %v2229 = vadd.f32 0.0, %v2228
      %v2230 = vpop.f32.mrb[0].mxu0
      %2231 = vmatprep.mubr.bf16.mxu0 0
      %2232 = vmatmul.mubr.bf16.gmra.mrb[0].mxu0 %v2108
      %v2233 = vpop.f32.mrb[0].mxu0
      %v2234 = vadd.f32 0.0, %v2233
      %v2235 = vpop.f32.mrb[0].mxu0
      %v2236 = vpop.f32.mrb[0].mxu0
      %v2237 = vadd.f32 0.0, %v2236
      %v2238 = vpop.f32.mrb[0].mxu0
      %2239 = vmatprep.mubr.bf16.mxu0 0
      %2240 = vmatmul.mubr.bf16.gmra.mrb[0].mxu0 %v2111
      %v2241 = vpop.f32.mrb[0].mxu0
      %v2242 = vadd.f32 0.0, %v2241
      %v2243 = vpop.f32.mrb[0].mxu0
      %v2244 = vpop.f32.mrb[0].mxu0
      %v2245 = vadd.f32 0.0, %v2244
      %v2246 = vpop.f32.mrb[0].mxu0
      %2247 = vmatprep.mubr.bf16.mxu0 0
      %2248 = vmatmul.mubr.bf16.gmra.mrb[0].mxu0 %v2114
      %v2249 = vpop.f32.mrb[0].mxu0
      %v2250 = vadd.f32 0.0, %v2249
      %v2251 = vpop.f32.mrb[0].mxu0
      %v2252 = vpop.f32.mrb[0].mxu0
      %v2253 = vadd.f32 0.0, %v2252
      %v2254 = vpop.f32.mrb[0].mxu0
      %2255 = vmatprep.mubr.bf16.mxu0 0
      %2256 = vmatmul.mubr.bf16.gmra.mrb[0].mxu0 %v2117
      %v2257 = vpop.f32.mrb[0].mxu0
      %v2258 = vadd.f32 0.0, %v2257
      %v2259 = vpop.f32.mrb[0].mxu0
      %v2260 = vpop.f32.mrb[0].mxu0
      %v2261 = vadd.f32 0.0, %v2260
      %v2262 = vpop.f32.mrb[0].mxu0
      %2263 = vmatprep.mubr.bf16.mxu0 0
      %2264 = vmatmul.mubr.bf16.gmra.mrb[0].mxu0 %v2120
      %v2265 = vpop.f32.mrb[0].mxu0
      %v2266 = vadd.f32 0.0, %v2265
      %v2267 = vpop.f32.mrb[0].mxu0
      %v2268 = vpop.f32.mrb[0].mxu0
      %v2269 = vadd.f32 0.0, %v2268
      %v2270 = vpop.f32.mrb[0].mxu0
      %2271 = vmatprep.mubr.bf16.mxu0 0
      %2272 = vmatmul.mubr.bf16.gmra.mrb[0].mxu0 %v2123
      %v2273 = vpop.f32.mrb[0].mxu0
      %v2274 = vadd.f32 0.0, %v2273
      %v2275 = vpop.f32.mrb[0].mxu0
      %v2276 = vpop.f32.mrb[0].mxu0
      %v2277 = vadd.f32 0.0, %v2276
      %v2278 = vpop.f32.mrb[0].mxu0
      %2279 = vmatprep.mubr.bf16.mxu0 0
      %2280 = vmatmul.mubr.bf16.gmra.mrb[0].mxu0 %v2126
      %v2281 = vpop.f32.mrb[0].mxu0
      %v2282 = vadd.f32 0.0, %v2281
      %v2283 = vpop.f32.mrb[0].mxu0
      %v2284 = vpop.f32.mrb[0].mxu0
      %v2285 = vadd.f32 0.0, %v2284
      %v2286 = vpop.f32.mrb[0].mxu0
      %2287 = vmatprep.mubr.bf16.mxu0 0
      %2288 = vmatmul.mubr.bf16.gmra.mrb[0].mxu0 %v2129
      %v2289 = vpop.f32.mrb[0].mxu0
      %v2290 = vadd.f32 0.0, %v2289
      %v2291 = vpop.f32.mrb[0].mxu0
      %v2292 = vpop.f32.mrb[0].mxu0
      %v2293 = vadd.f32 0.0, %v2292
      %v2294 = vpop.f32.mrb[0].mxu0
      %2295 = vmatprep.mubr.bf16.mxu0 0
      %2296 = vmatmul.mubr.bf16.gmra.mrb[0].mxu0 %v2132
      %v2297 = vpop.f32.mrb[0].mxu0
      %v2298 = vadd.f32 0.0, %v2297
      %v2299 = vpop.f32.mrb[0].mxu0
      %v2300 = vpop.f32.mrb[0].mxu0
      %v2301 = vadd.f32 0.0, %v2300
      %v2302 = vpop.f32.mrb[0].mxu0
      %2303 = vmatprep.mubr.bf16.mxu0 0
      %2304 = vmatmul.mubr.bf16.gmra.mrb[0].mxu0 %v2135
      %v2305 = vpop.f32.mrb[0].mxu0
      %v2306 = vadd.f32 0.0, %v2305
      %v2307 = vpop.f32.mrb[0].mxu0
      %v2308 = vpop.f32.mrb[0].mxu0
      %v2309 = vadd.f32 0.0, %v2308
      %v2310 = vpop.f32.mrb[0].mxu0
      %2311 = vmatprep.mubr.bf16.mxu0 0
      %2312 = vmatmul.mubr.bf16.gmra.mrb[0].mxu0 %v2138
      %v2313 = vpop.f32.mrb[0].mxu0
      %v2314 = vadd.f32 0.0, %v2313
      %v2315 = vpop.f32.mrb[0].mxu0
      %v2316 = vpop.f32.mrb[0].mxu0
      %v2317 = vadd.f32 0.0, %v2316
      %v2318 = vpop.f32.mrb[0].mxu0
      %2319 = vdwg.mxu0
      %v2320 = vadd.f32 %v1994, %v2178
      %v2321 = vadd.f32 %v1995, %v2181
      %v2322 = vadd.f32 %v1996, %v2186
      %v2323 = vadd.f32 %v1997, %v2189
      %v2324 = vadd.f32 %v1998, %v2194
      %v2325 = vadd.f32 %v1999, %v2197
      %v2326 = vadd.f32 %v2000, %v2202
      %v2327 = vadd.f32 %v2001, %v2205
      %v2328 = vadd.f32 %v2002, %v2210
      %v2329 = vadd.f32 %v2003, %v2213
      %v2330 = vadd.f32 %v2004, %v2218
      %v2331 = vadd.f32 %v2005, %v2221
      %v2332 = vadd.f32 %v2006, %v2226
      %v2333 = vadd.f32 %v2007, %v2229
      %v2334 = vadd.f32 %v2008, %v2234
      %v2335 = vadd.f32 %v2009, %v2237
      %v2336 = vadd.f32 %v2010, %v2242
      %v2337 = vadd.f32 %v2011, %v2245
      %v2338 = vadd.f32 %v2012, %v2250
      %v2339 = vadd.f32 %v2013, %v2253
      %v2340 = vadd.f32 %v2014, %v2258
      %v2341 = vadd.f32 %v2015, %v2261
      %v2342 = vadd.f32 %v2016, %v2266
      %v2343 = vadd.f32 %v2017, %v2269
      %v2344 = vadd.f32 %v2018, %v2274
      %v2345 = vadd.f32 %v2019, %v2277
      %v2346 = vadd.f32 %v2020, %v2282
      %v2347 = vadd.f32 %v2021, %v2285
      %v2348 = vadd.f32 %v2022, %v2290
      %v2349 = vadd.f32 %v2023, %v2293
      %v2350 = vadd.f32 %v2024, %v2298
      %v2351 = vadd.f32 %v2025, %v2301
      %v2352 = vadd.f32 %v2026, %v2306
      %v2353 = vadd.f32 %v2027, %v2309
      %v2354 = vadd.f32 %v2028, %v2314
      %v2355 = vadd.f32 %v2029, %v2317
      %v2356 = vld [vmem:[%s138 + $0x25] sm:$0xff]
      %v2357 = vld [vmem:[%s138 + $0x2d] sm:$0xff]
      %v2358 = vld [vmem:[%s138 + $0x35] sm:$0xff]
      %v2359 = vld [vmem:[%s138 + $0x3d] sm:$0xff]
      %v2360 = vld [vmem:[%s138 + $0x45] sm:$0xff]
      %v2361 = vld [vmem:[%s138 + $0x4d] sm:$0xff]
      %v2362 = vld [vmem:[%s138 + $0x55] sm:$0xff]
      %v2363 = vld [vmem:[%s138 + $0x5d] sm:$0xff]
      %v2364 = vld [vmem:[%s138 + $0x65] sm:$0xff]
      %v2365 = vld [vmem:[%s138 + $0x6d] sm:$0xff]
      %v2366 = vld [vmem:[%s138 + $0x75] sm:$0xff]
      %v2367 = vld [vmem:[%s138 + $0x7d] sm:$0xff]
      %v2368 = vld [vmem:[%s138 + $0x85] sm:$0xff]
      %v2369 = vld [vmem:[%s138 + $0x8d] sm:$0xff]
      %v2370 = vld [vmem:[%s138 + $0x95] sm:$0xff]
      %v2371 = vld [vmem:[%s138 + $0x9d] sm:$0xff]
      %v2372 = vld [vmem:[%s138 + $0xa5] sm:$0xff]
      %v2373 = vld [vmem:[%s138 + $0xad] sm:$0xff]
      %v2374 = vld [vmem:[%s138 + $0xb5] sm:$0xff]
      %v2375 = vld [vmem:[%s138 + $0xbd] sm:$0xff]
      %v2376 = vld [vmem:[%s138 + $0xc5] sm:$0xff]
      %v2377 = vld [vmem:[%s138 + $0xcd] sm:$0xff]
      %v2378 = vld [vmem:[%s138 + $0xd5] sm:$0xff]
      %v2379 = vld [vmem:[%s138 + $0xdd] sm:$0xff]
      %v2380 = vld [vmem:[%s138 + $0xe5] sm:$0xff]
      %v2381 = vld [vmem:[%s138 + $0xed] sm:$0xff]
      %v2382 = vld [vmem:[%s138 + $0xf5] sm:$0xff]
      %v2383 = vld [vmem:[%s138 + $0xfd] sm:$0xff]
      %v2384 = vld [vmem:[%s138 + $0x105] sm:$0xff]
      %v2385 = vld [vmem:[%s138 + $0x10d] sm:$0xff]
      %v2386 = vld [vmem:[%s138 + $0x115] sm:$0xff]
      %v2387 = vld [vmem:[%s138 + $0x11d] sm:$0xff]
      %v2388 = vld [vmem:[%s138 + $0x125] sm:$0xff]
      %v2389 = vld [vmem:[%s138 + $0x12d] sm:$0xff]
      %v2390 = vld [vmem:[%s138 + $0x135] sm:$0xff]
      %v2391 = vld [vmem:[%s138 + $0x13d] sm:$0xff]
      %v2392 = vpack.c.bf16 %v2357, %v2356
      %v2393 = vpack.c.bf16 %v2359, %v2358
      %v2394 = vpack.c.bf16 %v2361, %v2360
      %v2395 = vpack.c.bf16 %v2363, %v2362
      %v2396 = vpack.c.bf16 %v2365, %v2364
      %v2397 = vpack.c.bf16 %v2367, %v2366
      %v2398 = vpack.c.bf16 %v2369, %v2368
      %v2399 = vpack.c.bf16 %v2371, %v2370
      %v2400 = vpack.c.bf16 %v2373, %v2372
      %v2401 = vpack.c.bf16 %v2375, %v2374
      %v2402 = vpack.c.bf16 %v2377, %v2376
      %v2403 = vpack.c.bf16 %v2379, %v2378
      %v2404 = vpack.c.bf16 %v2381, %v2380
      %v2405 = vpack.c.bf16 %v2383, %v2382
      %v2406 = vpack.c.bf16 %v2385, %v2384
      %v2407 = vpack.c.bf16 %v2387, %v2386
      %v2408 = vpack.c.bf16 %v2389, %v2388
      %v2409 = vpack.c.bf16 %v2391, %v2390
      %s2410 = scalar_lea.vmem %s1, 28
      %v2411 = vld [vmem:[%s2410] sm:$0xf]
      %v2413 = vsel %vm256, %v2392, 0
      %v2416 = vsel %vm256, %v2393, 0
      %v2419 = vsel %vm256, %v2394, 0
      %v2422 = vsel %vm256, %v2395, 0
      %v2425 = vsel %vm256, %v2396, 0
      %v2428 = vsel %vm256, %v2397, 0
      %v2431 = vsel %vm256, %v2398, 0
      %v2434 = vsel %vm256, %v2399, 0
      %v2437 = vsel %vm256, %v2400, 0
      %v2440 = vsel %vm256, %v2401, 0
      %v2443 = vsel %vm256, %v2402, 0
      %v2446 = vsel %vm256, %v2403, 0
      %v2449 = vsel %vm256, %v2404, 0
      %v2452 = vsel %vm256, %v2405, 0
      %v2455 = vsel %vm256, %v2406, 0
      %v2458 = vsel %vm256, %v2407, 0
      %v2461 = vsel %vm256, %v2408, 0
      %v2464 = vsel %vm256, %v2409, 0
      %v2467 = vsel %vm311, %v2411, 0
      %2469 = vmatprep.subr.bf16.mxu0 0
      %2470 = vmatpush1.bf16.msra.mxu0 %v2467
      %2471 = vmatprep.subr.bf16.mxu0 0
      %2472 = vmatpush1.bf16.msra.mxu0 0
      %2473 = vmatprep.subr.bf16.mxu0 0
      %2474 = vmatpush1.bf16.msra.mxu0 0
      %2475 = vmatprep.subr.bf16.mxu0 0
      %2476 = vmatpush1.bf16.msra.mxu0 0
      %2477 = vmatprep.subr.bf16.mxu0 0
      %2478 = vmatpush1.bf16.msra.mxu0 0
      %2479 = vmatprep.subr.bf16.mxu0 0
      %2480 = vmatpush1.bf16.msra.mxu0 0
      %2481 = vmatprep.subr.bf16.mxu0 0
      %2482 = vmatpush1.bf16.msra.mxu0 0
      %2483 = vmatprep.subr.bf16.mxu0 0
      %2484 = vmatpush1.bf16.msra.mxu0 0
      %2485 = vmatprep.subr.bf16.mxu0 0
      %2486 = vmatpush1.bf16.msra.mxu0 0
      %2487 = vmatprep.subr.bf16.mxu0 0
      %2488 = vmatpush1.bf16.msra.mxu0 0
      %2489 = vmatprep.subr.bf16.mxu0 0
      %2490 = vmatpush1.bf16.msra.mxu0 0
      %2491 = vmatprep.subr.bf16.mxu0 0
      %2492 = vmatpush1.bf16.msra.mxu0 0
      %2493 = vmatprep.subr.bf16.mxu0 0
      %2494 = vmatpush1.bf16.msra.mxu0 0
      %2495 = vmatprep.subr.bf16.mxu0 0
      %2496 = vmatpush1.bf16.msra.mxu0 0
      %2497 = vmatprep.subr.bf16.mxu0 0
      %2498 = vmatpush1.bf16.msra.mxu0 0
      %2499 = vmatprep.subr.bf16.mxu0 0
      %2500 = vmatpush1.bf16.msra.mxu0 0
      %2501 = vmatprep.mubr.bf16.mxu0 0
      %2502 = vmatmul.mubr.bf16.gmra.mrb[0].mxu0 %v2413
      %v2503 = vpop.f32.mrb[0].mxu0
      %v2504 = vadd.f32 0.0, %v2503
      %v2505 = vpop.f32.mrb[0].mxu0
      %v2506 = vpop.f32.mrb[0].mxu0
      %v2507 = vadd.f32 0.0, %v2506
      %v2508 = vpop.f32.mrb[0].mxu0
      %2509 = vmatprep.mubr.bf16.mxu0 0
      %2510 = vmatmul.mubr.bf16.gmra.mrb[0].mxu0 %v2416
      %v2511 = vpop.f32.mrb[0].mxu0
      %v2512 = vadd.f32 0.0, %v2511
      %v2513 = vpop.f32.mrb[0].mxu0
      %v2514 = vpop.f32.mrb[0].mxu0
      %v2515 = vadd.f32 0.0, %v2514
      %v2516 = vpop.f32.mrb[0].mxu0
      %2517 = vmatprep.mubr.bf16.mxu0 0
      %2518 = vmatmul.mubr.bf16.gmra.mrb[0].mxu0 %v2419
      %v2519 = vpop.f32.mrb[0].mxu0
      %v2520 = vadd.f32 0.0, %v2519
      %v2521 = vpop.f32.mrb[0].mxu0
      %v2522 = vpop.f32.mrb[0].mxu0
      %v2523 = vadd.f32 0.0, %v2522
      %v2524 = vpop.f32.mrb[0].mxu0
      %2525 = vmatprep.mubr.bf16.mxu0 0
      %2526 = vmatmul.mubr.bf16.gmra.mrb[0].mxu0 %v2422
      %v2527 = vpop.f32.mrb[0].mxu0
      %v2528 = vadd.f32 0.0, %v2527
      %v2529 = vpop.f32.mrb[0].mxu0
      %v2530 = vpop.f32.mrb[0].mxu0
      %v2531 = vadd.f32 0.0, %v2530
      %v2532 = vpop.f32.mrb[0].mxu0
      %2533 = vmatprep.mubr.bf16.mxu0 0
      %2534 = vmatmul.mubr.bf16.gmra.mrb[0].mxu0 %v2425
      %v2535 = vpop.f32.mrb[0].mxu0
      %v2536 = vadd.f32 0.0, %v2535
      %v2537 = vpop.f32.mrb[0].mxu0
      %v2538 = vpop.f32.mrb[0].mxu0
      %v2539 = vadd.f32 0.0, %v2538
      %v2540 = vpop.f32.mrb[0].mxu0
      %2541 = vmatprep.mubr.bf16.mxu0 0
      %2542 = vmatmul.mubr.bf16.gmra.mrb[0].mxu0 %v2428
      %v2543 = vpop.f32.mrb[0].mxu0
      %v2544 = vadd.f32 0.0, %v2543
      %v2545 = vpop.f32.mrb[0].mxu0
      %v2546 = vpop.f32.mrb[0].mxu0
      %v2547 = vadd.f32 0.0, %v2546
      %v2548 = vpop.f32.mrb[0].mxu0
      %2549 = vmatprep.mubr.bf16.mxu0 0
      %2550 = vmatmul.mubr.bf16.gmra.mrb[0].mxu0 %v2431
      %v2551 = vpop.f32.mrb[0].mxu0
      %v2552 = vadd.f32 0.0, %v2551
      %v2553 = vpop.f32.mrb[0].mxu0
      %v2554 = vpop.f32.mrb[0].mxu0
      %v2555 = vadd.f32 0.0, %v2554
      %v2556 = vpop.f32.mrb[0].mxu0
      %2557 = vmatprep.mubr.bf16.mxu0 0
      %2558 = vmatmul.mubr.bf16.gmra.mrb[0].mxu0 %v2434
      %v2559 = vpop.f32.mrb[0].mxu0
      %v2560 = vadd.f32 0.0, %v2559
      %v2561 = vpop.f32.mrb[0].mxu0
      %v2562 = vpop.f32.mrb[0].mxu0
      %v2563 = vadd.f32 0.0, %v2562
      %v2564 = vpop.f32.mrb[0].mxu0
      %2565 = vmatprep.mubr.bf16.mxu0 0
      %2566 = vmatmul.mubr.bf16.gmra.mrb[0].mxu0 %v2437
      %v2567 = vpop.f32.mrb[0].mxu0
      %v2568 = vadd.f32 0.0, %v2567
      %v2569 = vpop.f32.mrb[0].mxu0
      %v2570 = vpop.f32.mrb[0].mxu0
      %v2571 = vadd.f32 0.0, %v2570
      %v2572 = vpop.f32.mrb[0].mxu0
      %2573 = vmatprep.mubr.bf16.mxu0 0
      %2574 = vmatmul.mubr.bf16.gmra.mrb[0].mxu0 %v2440
      %v2575 = vpop.f32.mrb[0].mxu0
      %v2576 = vadd.f32 0.0, %v2575
      %v2577 = vpop.f32.mrb[0].mxu0
      %v2578 = vpop.f32.mrb[0].mxu0
      %v2579 = vadd.f32 0.0, %v2578
      %v2580 = vpop.f32.mrb[0].mxu0
      %2581 = vmatprep.mubr.bf16.mxu0 0
      %2582 = vmatmul.mubr.bf16.gmra.mrb[0].mxu0 %v2443
      %v2583 = vpop.f32.mrb[0].mxu0
      %v2584 = vadd.f32 0.0, %v2583
      %v2585 = vpop.f32.mrb[0].mxu0
      %v2586 = vpop.f32.mrb[0].mxu0
      %v2587 = vadd.f32 0.0, %v2586
      %v2588 = vpop.f32.mrb[0].mxu0
      %2589 = vmatprep.mubr.bf16.mxu0 0
      %2590 = vmatmul.mubr.bf16.gmra.mrb[0].mxu0 %v2446
      %v2591 = vpop.f32.mrb[0].mxu0
      %v2592 = vadd.f32 0.0, %v2591
      %v2593 = vpop.f32.mrb[0].mxu0
      %v2594 = vpop.f32.mrb[0].mxu0
      %v2595 = vadd.f32 0.0, %v2594
      %v2596 = vpop.f32.mrb[0].mxu0
      %2597 = vmatprep.mubr.bf16.mxu0 0
      %2598 = vmatmul.mubr.bf16.gmra.mrb[0].mxu0 %v2449
      %v2599 = vpop.f32.mrb[0].mxu0
      %v2600 = vadd.f32 0.0, %v2599
      %v2601 = vpop.f32.mrb[0].mxu0
      %v2602 = vpop.f32.mrb[0].mxu0
      %v2603 = vadd.f32 0.0, %v2602
      %v2604 = vpop.f32.mrb[0].mxu0
      %2605 = vmatprep.mubr.bf16.mxu0 0
      %2606 = vmatmul.mubr.bf16.gmra.mrb[0].mxu0 %v2452
      %v2607 = vpop.f32.mrb[0].mxu0
      %v2608 = vadd.f32 0.0, %v2607
      %v2609 = vpop.f32.mrb[0].mxu0
      %v2610 = vpop.f32.mrb[0].mxu0
      %v2611 = vadd.f32 0.0, %v2610
      %v2612 = vpop.f32.mrb[0].mxu0
      %2613 = vmatprep.mubr.bf16.mxu0 0
      %2614 = vmatmul.mubr.bf16.gmra.mrb[0].mxu0 %v2455
      %v2615 = vpop.f32.mrb[0].mxu0
      %v2616 = vadd.f32 0.0, %v2615
      %v2617 = vpop.f32.mrb[0].mxu0
      %v2618 = vpop.f32.mrb[0].mxu0
      %v2619 = vadd.f32 0.0, %v2618
      %v2620 = vpop.f32.mrb[0].mxu0
      %2621 = vmatprep.mubr.bf16.mxu0 0
      %2622 = vmatmul.mubr.bf16.gmra.mrb[0].mxu0 %v2458
      %v2623 = vpop.f32.mrb[0].mxu0
      %v2624 = vadd.f32 0.0, %v2623
      %v2625 = vpop.f32.mrb[0].mxu0
      %v2626 = vpop.f32.mrb[0].mxu0
      %v2627 = vadd.f32 0.0, %v2626
      %v2628 = vpop.f32.mrb[0].mxu0
      %2629 = vmatprep.mubr.bf16.mxu0 0
      %2630 = vmatmul.mubr.bf16.gmra.mrb[0].mxu0 %v2461
      %v2631 = vpop.f32.mrb[0].mxu0
      %v2632 = vadd.f32 0.0, %v2631
      %v2633 = vpop.f32.mrb[0].mxu0
      %v2634 = vpop.f32.mrb[0].mxu0
      %v2635 = vadd.f32 0.0, %v2634
      %v2636 = vpop.f32.mrb[0].mxu0
      %2637 = vmatprep.mubr.bf16.mxu0 0
      %2638 = vmatmul.mubr.bf16.gmra.mrb[0].mxu0 %v2464
      %v2639 = vpop.f32.mrb[0].mxu0
      %v2640 = vadd.f32 0.0, %v2639
      %v2641 = vpop.f32.mrb[0].mxu0
      %v2642 = vpop.f32.mrb[0].mxu0
      %v2643 = vadd.f32 0.0, %v2642
      %v2644 = vpop.f32.mrb[0].mxu0
      %2645 = vdwg.mxu0
      %v2646 = vadd.f32 %v2320, %v2504
      %v2647 = vadd.f32 %v2321, %v2507
      %v2648 = vadd.f32 %v2322, %v2512
      %v2649 = vadd.f32 %v2323, %v2515
      %v2650 = vadd.f32 %v2324, %v2520
      %v2651 = vadd.f32 %v2325, %v2523
      %v2652 = vadd.f32 %v2326, %v2528
      %v2653 = vadd.f32 %v2327, %v2531
      %v2654 = vadd.f32 %v2328, %v2536
      %v2655 = vadd.f32 %v2329, %v2539
      %v2656 = vadd.f32 %v2330, %v2544
      %v2657 = vadd.f32 %v2331, %v2547
      %v2658 = vadd.f32 %v2332, %v2552
      %v2659 = vadd.f32 %v2333, %v2555
      %v2660 = vadd.f32 %v2334, %v2560
      %v2661 = vadd.f32 %v2335, %v2563
      %v2662 = vadd.f32 %v2336, %v2568
      %v2663 = vadd.f32 %v2337, %v2571
      %v2664 = vadd.f32 %v2338, %v2576
      %v2665 = vadd.f32 %v2339, %v2579
      %v2666 = vadd.f32 %v2340, %v2584
      %v2667 = vadd.f32 %v2341, %v2587
      %v2668 = vadd.f32 %v2342, %v2592
      %v2669 = vadd.f32 %v2343, %v2595
      %v2670 = vadd.f32 %v2344, %v2600
      %v2671 = vadd.f32 %v2345, %v2603
      %v2672 = vadd.f32 %v2346, %v2608
      %v2673 = vadd.f32 %v2347, %v2611
      %v2674 = vadd.f32 %v2348, %v2616
      %v2675 = vadd.f32 %v2349, %v2619
      %v2676 = vadd.f32 %v2350, %v2624
      %v2677 = vadd.f32 %v2351, %v2627
      %v2678 = vadd.f32 %v2352, %v2632
      %v2679 = vadd.f32 %v2353, %v2635
      %v2680 = vadd.f32 %v2354, %v2640
      %v2681 = vadd.f32 %v2355, %v2643
      %v2682 = vld [vmem:[%s138 + $0x26] sm:$0xff]
      %v2683 = vld [vmem:[%s138 + $0x2e] sm:$0xff]
      %v2684 = vld [vmem:[%s138 + $0x36] sm:$0xff]
      %v2685 = vld [vmem:[%s138 + $0x3e] sm:$0xff]
      %v2686 = vld [vmem:[%s138 + $0x46] sm:$0xff]
      %v2687 = vld [vmem:[%s138 + $0x4e] sm:$0xff]
      %v2688 = vld [vmem:[%s138 + $0x56] sm:$0xff]
      %v2689 = vld [vmem:[%s138 + $0x5e] sm:$0xff]
      %v2690 = vld [vmem:[%s138 + $0x66] sm:$0xff]
      %v2691 = vld [vmem:[%s138 + $0x6e] sm:$0xff]
      %v2692 = vld [vmem:[%s138 + $0x76] sm:$0xff]
      %v2693 = vld [vmem:[%s138 + $0x7e] sm:$0xff]
      %v2694 = vld [vmem:[%s138 + $0x86] sm:$0xff]
      %v2695 = vld [vmem:[%s138 + $0x8e] sm:$0xff]
      %v2696 = vld [vmem:[%s138 + $0x96] sm:$0xff]
      %v2697 = vld [vmem:[%s138 + $0x9e] sm:$0xff]
      %v2698 = vld [vmem:[%s138 + $0xa6] sm:$0xff]
      %v2699 = vld [vmem:[%s138 + $0xae] sm:$0xff]
      %v2700 = vld [vmem:[%s138 + $0xb6] sm:$0xff]
      %v2701 = vld [vmem:[%s138 + $0xbe] sm:$0xff]
      %v2702 = vld [vmem:[%s138 + $0xc6] sm:$0xff]
      %v2703 = vld [vmem:[%s138 + $0xce] sm:$0xff]
      %v2704 = vld [vmem:[%s138 + $0xd6] sm:$0xff]
      %v2705 = vld [vmem:[%s138 + $0xde] sm:$0xff]
      %v2706 = vld [vmem:[%s138 + $0xe6] sm:$0xff]
      %v2707 = vld [vmem:[%s138 + $0xee] sm:$0xff]
      %v2708 = vld [vmem:[%s138 + $0xf6] sm:$0xff]
      %v2709 = vld [vmem:[%s138 + $0xfe] sm:$0xff]
      %v2710 = vld [vmem:[%s138 + $0x106] sm:$0xff]
      %v2711 = vld [vmem:[%s138 + $0x10e] sm:$0xff]
      %v2712 = vld [vmem:[%s138 + $0x116] sm:$0xff]
      %v2713 = vld [vmem:[%s138 + $0x11e] sm:$0xff]
      %v2714 = vld [vmem:[%s138 + $0x126] sm:$0xff]
      %v2715 = vld [vmem:[%s138 + $0x12e] sm:$0xff]
      %v2716 = vld [vmem:[%s138 + $0x136] sm:$0xff]
      %v2717 = vld [vmem:[%s138 + $0x13e] sm:$0xff]
      %v2718 = vpack.c.bf16 %v2683, %v2682
      %v2719 = vpack.c.bf16 %v2685, %v2684
      %v2720 = vpack.c.bf16 %v2687, %v2686
      %v2721 = vpack.c.bf16 %v2689, %v2688
      %v2722 = vpack.c.bf16 %v2691, %v2690
      %v2723 = vpack.c.bf16 %v2693, %v2692
      %v2724 = vpack.c.bf16 %v2695, %v2694
      %v2725 = vpack.c.bf16 %v2697, %v2696
      %v2726 = vpack.c.bf16 %v2699, %v2698
      %v2727 = vpack.c.bf16 %v2701, %v2700
      %v2728 = vpack.c.bf16 %v2703, %v2702
      %v2729 = vpack.c.bf16 %v2705, %v2704
      %v2730 = vpack.c.bf16 %v2707, %v2706
      %v2731 = vpack.c.bf16 %v2709, %v2708
      %v2732 = vpack.c.bf16 %v2711, %v2710
      %v2733 = vpack.c.bf16 %v2713, %v2712
      %v2734 = vpack.c.bf16 %v2715, %v2714
      %v2735 = vpack.c.bf16 %v2717, %v2716
      %s2736 = scalar_lea.vmem %s1, 32
      %v2737 = vld [vmem:[%s2736] sm:$0xf]
      %v2739 = vsel %vm256, %v2718, 0
      %v2742 = vsel %vm256, %v2719, 0
      %v2745 = vsel %vm256, %v2720, 0
      %v2748 = vsel %vm256, %v2721, 0
      %v2751 = vsel %vm256, %v2722, 0
      %v2754 = vsel %vm256, %v2723, 0
      %v2757 = vsel %vm256, %v2724, 0
      %v2760 = vsel %vm256, %v2725, 0
      %v2763 = vsel %vm256, %v2726, 0
      %v2766 = vsel %vm256, %v2727, 0
      %v2769 = vsel %vm256, %v2728, 0
      %v2772 = vsel %vm256, %v2729, 0
      %v2775 = vsel %vm256, %v2730, 0
      %v2778 = vsel %vm256, %v2731, 0
      %v2781 = vsel %vm256, %v2732, 0
      %v2784 = vsel %vm256, %v2733, 0
      %v2787 = vsel %vm256, %v2734, 0
      %v2790 = vsel %vm256, %v2735, 0
      %v2793 = vsel %vm311, %v2737, 0
      %2795 = vmatprep.subr.bf16.mxu0 0
      %2796 = vmatpush1.bf16.msra.mxu0 %v2793
      %2797 = vmatprep.subr.bf16.mxu0 0
      %2798 = vmatpush1.bf16.msra.mxu0 0
      %2799 = vmatprep.subr.bf16.mxu0 0
      %2800 = vmatpush1.bf16.msra.mxu0 0
      %2801 = vmatprep.subr.bf16.mxu0 0
      %2802 = vmatpush1.bf16.msra.mxu0 0
      %2803 = vmatprep.subr.bf16.mxu0 0
      %2804 = vmatpush1.bf16.msra.mxu0 0
      %2805 = vmatprep.subr.bf16.mxu0 0
      %2806 = vmatpush1.bf16.msra.mxu0 0
      %2807 = vmatprep.subr.bf16.mxu0 0
      %2808 = vmatpush1.bf16.msra.mxu0 0
      %2809 = vmatprep.subr.bf16.mxu0 0
      %2810 = vmatpush1.bf16.msra.mxu0 0
      %2811 = vmatprep.subr.bf16.mxu0 0
      %2812 = vmatpush1.bf16.msra.mxu0 0
      %2813 = vmatprep.subr.bf16.mxu0 0
      %2814 = vmatpush1.bf16.msra.mxu0 0
      %2815 = vmatprep.subr.bf16.mxu0 0
      %2816 = vmatpush1.bf16.msra.mxu0 0
      %2817 = vmatprep.subr.bf16.mxu0 0
      %2818 = vmatpush1.bf16.msra.mxu0 0
      %2819 = vmatprep.subr.bf16.mxu0 0
      %2820 = vmatpush1.bf16.msra.mxu0 0
      %2821 = vmatprep.subr.bf16.mxu0 0
      %2822 = vmatpush1.bf16.msra.mxu0 0
      %2823 = vmatprep.subr.bf16.mxu0 0
      %2824 = vmatpush1.bf16.msra.mxu0 0
      %2825 = vmatprep.subr.bf16.mxu0 0
      %2826 = vmatpush1.bf16.msra.mxu0 0
      %2827 = vmatprep.mubr.bf16.mxu0 0
      %2828 = vmatmul.mubr.bf16.gmra.mrb[0].mxu0 %v2739
      %v2829 = vpop.f32.mrb[0].mxu0
      %v2830 = vadd.f32 0.0, %v2829
      %v2831 = vpop.f32.mrb[0].mxu0
      %v2832 = vpop.f32.mrb[0].mxu0
      %v2833 = vadd.f32 0.0, %v2832
      %v2834 = vpop.f32.mrb[0].mxu0
      %2835 = vmatprep.mubr.bf16.mxu0 0
      %2836 = vmatmul.mubr.bf16.gmra.mrb[0].mxu0 %v2742
      %v2837 = vpop.f32.mrb[0].mxu0
      %v2838 = vadd.f32 0.0, %v2837
      %v2839 = vpop.f32.mrb[0].mxu0
      %v2840 = vpop.f32.mrb[0].mxu0
      %v2841 = vadd.f32 0.0, %v2840
      %v2842 = vpop.f32.mrb[0].mxu0
      %2843 = vmatprep.mubr.bf16.mxu0 0
      %2844 = vmatmul.mubr.bf16.gmra.mrb[0].mxu0 %v2745
      %v2845 = vpop.f32.mrb[0].mxu0
      %v2846 = vadd.f32 0.0, %v2845
      %v2847 = vpop.f32.mrb[0].mxu0
      %v2848 = vpop.f32.mrb[0].mxu0
      %v2849 = vadd.f32 0.0, %v2848
      %v2850 = vpop.f32.mrb[0].mxu0
      %2851 = vmatprep.mubr.bf16.mxu0 0
      %2852 = vmatmul.mubr.bf16.gmra.mrb[0].mxu0 %v2748
      %v2853 = vpop.f32.mrb[0].mxu0
      %v2854 = vadd.f32 0.0, %v2853
      %v2855 = vpop.f32.mrb[0].mxu0
      %v2856 = vpop.f32.mrb[0].mxu0
      %v2857 = vadd.f32 0.0, %v2856
      %v2858 = vpop.f32.mrb[0].mxu0
      %2859 = vmatprep.mubr.bf16.mxu0 0
      %2860 = vmatmul.mubr.bf16.gmra.mrb[0].mxu0 %v2751
      %v2861 = vpop.f32.mrb[0].mxu0
      %v2862 = vadd.f32 0.0, %v2861
      %v2863 = vpop.f32.mrb[0].mxu0
      %v2864 = vpop.f32.mrb[0].mxu0
      %v2865 = vadd.f32 0.0, %v2864
      %v2866 = vpop.f32.mrb[0].mxu0
      %2867 = vmatprep.mubr.bf16.mxu0 0
      %2868 = vmatmul.mubr.bf16.gmra.mrb[0].mxu0 %v2754
      %v2869 = vpop.f32.mrb[0].mxu0
      %v2870 = vadd.f32 0.0, %v2869
      %v2871 = vpop.f32.mrb[0].mxu0
      %v2872 = vpop.f32.mrb[0].mxu0
      %v2873 = vadd.f32 0.0, %v2872
      %v2874 = vpop.f32.mrb[0].mxu0
      %2875 = vmatprep.mubr.bf16.mxu0 0
      %2876 = vmatmul.mubr.bf16.gmra.mrb[0].mxu0 %v2757
      %v2877 = vpop.f32.mrb[0].mxu0
      %v2878 = vadd.f32 0.0, %v2877
      %v2879 = vpop.f32.mrb[0].mxu0
      %v2880 = vpop.f32.mrb[0].mxu0
      %v2881 = vadd.f32 0.0, %v2880
      %v2882 = vpop.f32.mrb[0].mxu0
      %2883 = vmatprep.mubr.bf16.mxu0 0
      %2884 = vmatmul.mubr.bf16.gmra.mrb[0].mxu0 %v2760
      %v2885 = vpop.f32.mrb[0].mxu0
      %v2886 = vadd.f32 0.0, %v2885
      %v2887 = vpop.f32.mrb[0].mxu0
      %v2888 = vpop.f32.mrb[0].mxu0
      %v2889 = vadd.f32 0.0, %v2888
      %v2890 = vpop.f32.mrb[0].mxu0
      %2891 = vmatprep.mubr.bf16.mxu0 0
      %2892 = vmatmul.mubr.bf16.gmra.mrb[0].mxu0 %v2763
      %v2893 = vpop.f32.mrb[0].mxu0
      %v2894 = vadd.f32 0.0, %v2893
      %v2895 = vpop.f32.mrb[0].mxu0
      %v2896 = vpop.f32.mrb[0].mxu0
      %v2897 = vadd.f32 0.0, %v2896
      %v2898 = vpop.f32.mrb[0].mxu0
      %2899 = vmatprep.mubr.bf16.mxu0 0
      %2900 = vmatmul.mubr.bf16.gmra.mrb[0].mxu0 %v2766
      %v2901 = vpop.f32.mrb[0].mxu0
      %v2902 = vadd.f32 0.0, %v2901
      %v2903 = vpop.f32.mrb[0].mxu0
      %v2904 = vpop.f32.mrb[0].mxu0
      %v2905 = vadd.f32 0.0, %v2904
      %v2906 = vpop.f32.mrb[0].mxu0
      %2907 = vmatprep.mubr.bf16.mxu0 0
      %2908 = vmatmul.mubr.bf16.gmra.mrb[0].mxu0 %v2769
      %v2909 = vpop.f32.mrb[0].mxu0
      %v2910 = vadd.f32 0.0, %v2909
      %v2911 = vpop.f32.mrb[0].mxu0
      %v2912 = vpop.f32.mrb[0].mxu0
      %v2913 = vadd.f32 0.0, %v2912
      %v2914 = vpop.f32.mrb[0].mxu0
      %2915 = vmatprep.mubr.bf16.mxu0 0
      %2916 = vmatmul.mubr.bf16.gmra.mrb[0].mxu0 %v2772
      %v2917 = vpop.f32.mrb[0].mxu0
      %v2918 = vadd.f32 0.0, %v2917
      %v2919 = vpop.f32.mrb[0].mxu0
      %v2920 = vpop.f32.mrb[0].mxu0
      %v2921 = vadd.f32 0.0, %v2920
      %v2922 = vpop.f32.mrb[0].mxu0
      %2923 = vmatprep.mubr.bf16.mxu0 0
      %2924 = vmatmul.mubr.bf16.gmra.mrb[0].mxu0 %v2775
      %v2925 = vpop.f32.mrb[0].mxu0
      %v2926 = vadd.f32 0.0, %v2925
      %v2927 = vpop.f32.mrb[0].mxu0
      %v2928 = vpop.f32.mrb[0].mxu0
      %v2929 = vadd.f32 0.0, %v2928
      %v2930 = vpop.f32.mrb[0].mxu0
      %2931 = vmatprep.mubr.bf16.mxu0 0
      %2932 = vmatmul.mubr.bf16.gmra.mrb[0].mxu0 %v2778
      %v2933 = vpop.f32.mrb[0].mxu0
      %v2934 = vadd.f32 0.0, %v2933
      %v2935 = vpop.f32.mrb[0].mxu0
      %v2936 = vpop.f32.mrb[0].mxu0
      %v2937 = vadd.f32 0.0, %v2936
      %v2938 = vpop.f32.mrb[0].mxu0
      %2939 = vmatprep.mubr.bf16.mxu0 0
      %2940 = vmatmul.mubr.bf16.gmra.mrb[0].mxu0 %v2781
      %v2941 = vpop.f32.mrb[0].mxu0
      %v2942 = vadd.f32 0.0, %v2941
      %v2943 = vpop.f32.mrb[0].mxu0
      %v2944 = vpop.f32.mrb[0].mxu0
      %v2945 = vadd.f32 0.0, %v2944
      %v2946 = vpop.f32.mrb[0].mxu0
      %2947 = vmatprep.mubr.bf16.mxu0 0
      %2948 = vmatmul.mubr.bf16.gmra.mrb[0].mxu0 %v2784
      %v2949 = vpop.f32.mrb[0].mxu0
      %v2950 = vadd.f32 0.0, %v2949
      %v2951 = vpop.f32.mrb[0].mxu0
      %v2952 = vpop.f32.mrb[0].mxu0
      %v2953 = vadd.f32 0.0, %v2952
      %v2954 = vpop.f32.mrb[0].mxu0
      %2955 = vmatprep.mubr.bf16.mxu0 0
      %2956 = vmatmul.mubr.bf16.gmra.mrb[0].mxu0 %v2787
      %v2957 = vpop.f32.mrb[0].mxu0
      %v2958 = vadd.f32 0.0, %v2957
      %v2959 = vpop.f32.mrb[0].mxu0
      %v2960 = vpop.f32.mrb[0].mxu0
      %v2961 = vadd.f32 0.0, %v2960
      %v2962 = vpop.f32.mrb[0].mxu0
      %2963 = vmatprep.mubr.bf16.mxu0 0
      %2964 = vmatmul.mubr.bf16.gmra.mrb[0].mxu0 %v2790
      %v2965 = vpop.f32.mrb[0].mxu0
      %v2966 = vadd.f32 0.0, %v2965
      %v2967 = vpop.f32.mrb[0].mxu0
      %v2968 = vpop.f32.mrb[0].mxu0
      %v2969 = vadd.f32 0.0, %v2968
      %v2970 = vpop.f32.mrb[0].mxu0
      %2971 = vdwg.mxu0
      %v2972 = vadd.f32 %v2646, %v2830
      %v2973 = vadd.f32 %v2647, %v2833
      %v2974 = vadd.f32 %v2648, %v2838
      %v2975 = vadd.f32 %v2649, %v2841
      %v2976 = vadd.f32 %v2650, %v2846
      %v2977 = vadd.f32 %v2651, %v2849
      %v2978 = vadd.f32 %v2652, %v2854
      %v2979 = vadd.f32 %v2653, %v2857
      %v2980 = vadd.f32 %v2654, %v2862
      %v2981 = vadd.f32 %v2655, %v2865
      %v2982 = vadd.f32 %v2656, %v2870
      %v2983 = vadd.f32 %v2657, %v2873
      %v2984 = vadd.f32 %v2658, %v2878
      %v2985 = vadd.f32 %v2659, %v2881
      %v2986 = vadd.f32 %v2660, %v2886
      %v2987 = vadd.f32 %v2661, %v2889
      %v2988 = vadd.f32 %v2662, %v2894
      %v2989 = vadd.f32 %v2663, %v2897
      %v2990 = vadd.f32 %v2664, %v2902
      %v2991 = vadd.f32 %v2665, %v2905
      %v2992 = vadd.f32 %v2666, %v2910
      %v2993 = vadd.f32 %v2667, %v2913
      %v2994 = vadd.f32 %v2668, %v2918
      %v2995 = vadd.f32 %v2669, %v2921
      %v2996 = vadd.f32 %v2670, %v2926
      %v2997 = vadd.f32 %v2671, %v2929
      %v2998 = vadd.f32 %v2672, %v2934
      %v2999 = vadd.f32 %v2673, %v2937
      %v3000 = vadd.f32 %v2674, %v2942
      %v3001 = vadd.f32 %v2675, %v2945
      %v3002 = vadd.f32 %v2676, %v2950
      %v3003 = vadd.f32 %v2677, %v2953
      %v3004 = vadd.f32 %v2678, %v2958
      %v3005 = vadd.f32 %v2679, %v2961
      %v3006 = vadd.f32 %v2680, %v2966
      %v3007 = vadd.f32 %v2681, %v2969
      %vm3008 = vcmask 130048
      %3009 = vst.msk [vmem:[%s143] sm:$0xff] %vm3008, %v2972
      %3010 = vst.msk [vmem:[%s143 + $0x8] sm:$0xff] %vm3008, %v2973
      %3011 = vst.msk [vmem:[%s143 + $0x10] sm:$0xff] %vm3008, %v2974
      %3012 = vst.msk [vmem:[%s143 + $0x18] sm:$0xff] %vm3008, %v2975
      %3013 = vst.msk [vmem:[%s143 + $0x20] sm:$0xff] %vm3008, %v2976
      %3014 = vst.msk [vmem:[%s143 + $0x28] sm:$0xff] %vm3008, %v2977
      %3015 = vst.msk [vmem:[%s143 + $0x30] sm:$0xff] %vm3008, %v2978
      %3016 = vst.msk [vmem:[%s143 + $0x38] sm:$0xff] %vm3008, %v2979
      %3017 = vst.msk [vmem:[%s143 + $0x40] sm:$0xff] %vm3008, %v2980
      %3018 = vst.msk [vmem:[%s143 + $0x48] sm:$0xff] %vm3008, %v2981
      %3019 = vst.msk [vmem:[%s143 + $0x50] sm:$0xff] %vm3008, %v2982
      %3020 = vst.msk [vmem:[%s143 + $0x58] sm:$0xff] %vm3008, %v2983
      %3021 = vst.msk [vmem:[%s143 + $0x60] sm:$0xff] %vm3008, %v2984
      %3022 = vst.msk [vmem:[%s143 + $0x68] sm:$0xff] %vm3008, %v2985
      %3023 = vst.msk [vmem:[%s143 + $0x70] sm:$0xff] %vm3008, %v2986
      %3024 = vst.msk [vmem:[%s143 + $0x78] sm:$0xff] %vm3008, %v2987
      %3025 = vst.msk [vmem:[%s143 + $0x80] sm:$0xff] %vm3008, %v2988
      %3026 = vst.msk [vmem:[%s143 + $0x88] sm:$0xff] %vm3008, %v2989
      %3027 = vst.msk [vmem:[%s143 + $0x90] sm:$0xff] %vm3008, %v2990
      %3028 = vst.msk [vmem:[%s143 + $0x98] sm:$0xff] %vm3008, %v2991
      %3029 = vst.msk [vmem:[%s143 + $0xa0] sm:$0xff] %vm3008, %v2992
      %3030 = vst.msk [vmem:[%s143 + $0xa8] sm:$0xff] %vm3008, %v2993
      %3031 = vst.msk [vmem:[%s143 + $0xb0] sm:$0xff] %vm3008, %v2994
      %3032 = vst.msk [vmem:[%s143 + $0xb8] sm:$0xff] %vm3008, %v2995
      %3033 = vst.msk [vmem:[%s143 + $0xc0] sm:$0xff] %vm3008, %v2996
      %3034 = vst.msk [vmem:[%s143 + $0xc8] sm:$0xff] %vm3008, %v2997
      %3035 = vst.msk [vmem:[%s143 + $0xd0] sm:$0xff] %vm3008, %v2998
      %3036 = vst.msk [vmem:[%s143 + $0xd8] sm:$0xff] %vm3008, %v2999
      %3037 = vst.msk [vmem:[%s143 + $0xe0] sm:$0xff] %vm3008, %v3000
      %3038 = vst.msk [vmem:[%s143 + $0xe8] sm:$0xff] %vm3008, %v3001
      %3039 = vst.msk [vmem:[%s143 + $0xf0] sm:$0xff] %vm3008, %v3002
      %3040 = vst.msk [vmem:[%s143 + $0xf8] sm:$0xff] %vm3008, %v3003
      %3041 = vst.msk [vmem:[%s143 + $0x100] sm:$0xff] %vm3008, %v3004
      %3042 = vst.msk [vmem:[%s143 + $0x108] sm:$0xff] %vm3008, %v3005
      %3043 = vst.msk [vmem:[%s143 + $0x110] sm:$0xff] %vm3008, %v3006
      %3044 = vst.msk [vmem:[%s143 + $0x118] sm:$0xff] %vm3008, %v3007
      %p3045 = scmp.lt.s32.totalorder %s13, 1
      %s3046 = scalar_select %p3045, %s13, 1
      %s3047 = smul.addr %s3046, 36
      %s3048 = smul.addr %s3047, 8
      %s3049 = scalar_lea.vmem %s2, %s3048
      // Predicated region
      $region29: #{_lambda_.6} parent=27 // pred_check
        %p3050 = pneg %p78
      $region30: #{_lambda_.6} parent=27 // pred_check_branch
        %3052 = sbr.rel (%p3050) target = $region32
      $region31: #{_lambda_.6} parent=27 // pred_region
        _
      $region32: #{_lambda_.6} parent=27 // pred_fallthru
        _
    $region28: #{_lambda_.6} parent=5 // pred_fallthru
      _
    %p3053 = scmp.le.s32.totalorder 2, %s8
    // Predicated region
    $region33: #{_lambda_.6} parent=5 // pred_check
      %p3054 = pneg %p3053
    $region34: #{_lambda_.6} parent=5 // pred_check_branch
      %3056 = sbr.rel (%p3054) target = $region36
    $region35: #{_lambda_.6} parent=5 // pred_region
      %s3057 = ssub.s32 %s8, 2
      // Predicated region
      $region37: #{_lambda_.6} parent=35 // pred_check
        %p3058 = pneg %p84
      $region38: #{_lambda_.6} parent=35 // pred_check_branch
        %3060 = sbr.rel (%p3058) target = $region40
      $region39: #{_lambda_.6} parent=35 // pred_region
        %p3061 = scmp.lt.s32.totalorder %s14, 1
        %s3062 = scalar_select %p3061, %s14, 1
        %s3063 = smul.addr %s3062, 36
        %s3064 = smul.addr %s3063, 8
        %s3065 = scalar_lea.vmem %s2, %s3064
      $region40: #{_lambda_.6} parent=35 // pred_fallthru
        _
    $region36: #{_lambda_.6} parent=5 // pred_fallthru
      _
  $region6: #{_lambda_.6} parent=0 // loop_footer
    %s12 = sadd.s32 1, %s8
  $region7: #{_lambda_.6} parent=0 // loop_footer_branch
    %7 = sbr.rel target = $region3
  $region8: #{_lambda_.6} parent=0 // loop_exit
    _

// kernel: _lambda_.7
$region0: #{_lambda_.7}
  #allocation0 [shape = 'u32[]', space=smem, size = 0x4, offset = 0x4, fixed_abs, tag = 'smem constant byte address 0x4 - core index']
  #allocation1 [shape = 'u32[144,128]{1,0:T(1,128)}', space=vmem, size = 0x12000, scoped, tag = 'internal scratch']
  %s0 = inlined_call_operand.vmem [shape: f32[2,4,82,16], index: 0, kind: input, shape index: {}]
  %s1 = inlined_call_operand.vmem [shape: bf16[9,16,32], index: 1, kind: input, shape index: {}]
  %s2 = inlined_call_operand.vmem [shape: f32[72,1], index: 2, kind: input, shape index: {}]
  %s3 = inlined_call_operand.vmem [shape: f32[1,32], index: 3, kind: input, shape index: {}]
  %s4 = inlined_call_operand.vmem [shape: f32[1,32], index: 4, kind: input, shape index: {}, may-alias: {4,7}]
  %s5 = inlined_call_operand.vmem [shape: f32[1,32], index: 5, kind: input, shape index: {}]
  %s6 = inlined_call_operand.vmem [shape: f32[1,32], index: 6, kind: input, shape index: {}]
  %s7 = inlined_call_operand.vmem [shape: f32[1,32], index: 7, kind: input, shape index: {}, may-alias: {4,7}]
  %s8 = inlined_call_operand.vmem [shape: bf16[16,32], index: 8, kind: input, shape index: {}]
  %s9 = inlined_call_operand.vmem [shape: f32[2,72,32], index: 9, kind: output, shape index: {0}]
  %s10 = inlined_call_operand.vmem [shape: f32[2,72,32], index: 10, kind: output, shape index: {1}]
  %11 = xla_tuple %s9, %s10
  %s12 = sld [smem:[#allocation0]]
  $region77: #{_lambda_.7} parent=0
    _
  %s14 = ssub.s32 1, %s12
  %s15 = scalar_select 0, %s14, %s12
  loop: start=0, step=1, limit=4
  $region2: #{_lambda_.7} parent=0 // loop_pre_header
    _
  $region3: #{_lambda_.7} parent=0 // loop_header
    %s17 = sphi 0, %s21
    %p18 = scmp.ge.s32.totalorder %s17, 4
    %s27 = sphi 0, %s29
    %s30 = sphi 0, %s27
    %s31 = sphi 0, %s30
    %s47 = sphi 0, %s31
    %s51 = sphi 0, %s51
    %s53 = sphi 0, %s51
    %s54 = sphi 0, %s53
    %s68 = sphi 0, %s54
    %s72 = sphi 0, %s72
    %s74 = sphi 0, %s72
    %s75 = sphi 0, %s74
    %s89 = sphi 0, %s75
    %s93 = sphi 0, %s93
    %s95 = sphi 0, %s93
    %s96 = sphi 0, %s95
    %s110 = sphi 0, %s96
    %s114 = sphi 0, %s114
    %s116 = sphi 0, %s114
    %s117 = sphi 0, %s116
    %s131 = sphi 0, %s117
    %s135 = sphi 0, %s135
    %s137 = sphi 0, %s135
    %s138 = sphi 0, %s137
    %s152 = sphi 0, %s138
    %s156 = sphi 0, %s156
    %s158 = sphi 0, %s156
    %s159 = sphi 0, %s158
    %s173 = sphi 0, %s159
    %s177 = sphi 0, %s177
    %s179 = sphi 0, %s177
    %s180 = sphi 0, %s179
    %s194 = sphi 0, %s180
    %s198 = sphi 0, %s198
    %s200 = sphi 0, %s198
    %s201 = sphi 0, %s200
    %s215 = sphi 0, %s201
    %s221 = sphi 0, %s223
    %s224 = sphi 0, %s221
    %s225 = sphi 0, %s224
    %s241 = sphi 0, %s225
    %s247 = sphi 0, %s249
    %s250 = sphi 0, %s247
    %s251 = sphi 0, %s250
    %s267 = sphi 0, %s251
  $region4: #{_lambda_.7} parent=0 // loop_header_branch
    %20 = sbr.rel (%p18) target = $region8
  $region5: #{_lambda_.7} parent=0 // loop_body
    %s22 = ssub.s32 %s17, 1
    %s23 = ssub.s32 %s17, 2
    %s24 = sadd.s32 %s17, 1
    %s25 = ssub.s32 %s17, %s24
    %p26 = scmp.eq.s32.totalorder %s25, 0
    %s28 = sadd.s32 %s27, 1
    %s29 = scalar_select %p26, %s27, %s28
    %p32 = pneg %p26
    %p33 = scmp.eq.s32.totalorder %s17, 1
    %p34 = por %p32, %p33
    %p35 = scmp.ne.s32.totalorder %s27, %s30
    %p36 = scmp.eq.s32.totalorder %s17, 0
    %p37 = por %p35, %p36
    %p38 = scmp.ne.s32.totalorder %s27, %s30
    %p39 = scmp.eq.s32.totalorder %s22, 1
    %p40 = por %p38, %p39
    %p41 = scmp.ne.s32.totalorder %s30, %s31
    %p42 = scmp.eq.s32.totalorder %s22, 0
    %p43 = por %p41, %p42
    %p44 = scmp.ne.s32.totalorder %s30, %s31
    %p45 = scmp.eq.s32.totalorder %s23, 1
    %p46 = por %p44, %p45
    %p48 = scmp.ne.s32.totalorder %s31, %s47
    %p49 = scmp.eq.s32.totalorder %s23, 0
    %p50 = por %p48, %p49
    %s52 = sadd.s32 %s51, 1
    %p55 = scmp.eq.s32.totalorder %s17, 1
    %p56 = scmp.ne.s32.totalorder %s51, %s53
    %p57 = scmp.eq.s32.totalorder %s17, 0
    %p58 = por %p56, %p57
    %p59 = scmp.ne.s32.totalorder %s51, %s53
    %p60 = scmp.eq.s32.totalorder %s22, 1
    %p61 = por %p59, %p60
    %p62 = scmp.ne.s32.totalorder %s53, %s54
    %p63 = scmp.eq.s32.totalorder %s22, 0
    %p64 = por %p62, %p63
    %p65 = scmp.ne.s32.totalorder %s53, %s54
    %p66 = scmp.eq.s32.totalorder %s23, 1
    %p67 = por %p65, %p66
    %p69 = scmp.ne.s32.totalorder %s54, %s68
    %p70 = scmp.eq.s32.totalorder %s23, 0
    %p71 = por %p69, %p70
    %s73 = sadd.s32 %s72, 1
    %p76 = scmp.eq.s32.totalorder %s17, 1
    %p77 = scmp.ne.s32.totalorder %s72, %s74
    %p78 = scmp.eq.s32.totalorder %s17, 0
    %p79 = por %p77, %p78
    %p80 = scmp.ne.s32.totalorder %s72, %s74
    %p81 = scmp.eq.s32.totalorder %s22, 1
    %p82 = por %p80, %p81
    %p83 = scmp.ne.s32.totalorder %s74, %s75
    %p84 = scmp.eq.s32.totalorder %s22, 0
    %p85 = por %p83, %p84
    %p86 = scmp.ne.s32.totalorder %s74, %s75
    %p87 = scmp.eq.s32.totalorder %s23, 1
    %p88 = por %p86, %p87
    %p90 = scmp.ne.s32.totalorder %s75, %s89
    %p91 = scmp.eq.s32.totalorder %s23, 0
    %p92 = por %p90, %p91
    %s94 = sadd.s32 %s93, 1
    %p97 = scmp.eq.s32.totalorder %s17, 1
    %p98 = scmp.ne.s32.totalorder %s93, %s95
    %p99 = scmp.eq.s32.totalorder %s17, 0
    %p100 = por %p98, %p99
    %p101 = scmp.ne.s32.totalorder %s93, %s95
    %p102 = scmp.eq.s32.totalorder %s22, 1
    %p103 = por %p101, %p102
    %p104 = scmp.ne.s32.totalorder %s95, %s96
    %p105 = scmp.eq.s32.totalorder %s22, 0
    %p106 = por %p104, %p105
    %p107 = scmp.ne.s32.totalorder %s95, %s96
    %p108 = scmp.eq.s32.totalorder %s23, 1
    %p109 = por %p107, %p108
    %p111 = scmp.ne.s32.totalorder %s96, %s110
    %p112 = scmp.eq.s32.totalorder %s23, 0
    %p113 = por %p111, %p112
    %s115 = sadd.s32 %s114, 1
    %p118 = scmp.eq.s32.totalorder %s17, 1
    %p119 = scmp.ne.s32.totalorder %s114, %s116
    %p120 = scmp.eq.s32.totalorder %s17, 0
    %p121 = por %p119, %p120
    %p122 = scmp.ne.s32.totalorder %s114, %s116
    %p123 = scmp.eq.s32.totalorder %s22, 1
    %p124 = por %p122, %p123
    %p125 = scmp.ne.s32.totalorder %s116, %s117
    %p126 = scmp.eq.s32.totalorder %s22, 0
    %p127 = por %p125, %p126
    %p128 = scmp.ne.s32.totalorder %s116, %s117
    %p129 = scmp.eq.s32.totalorder %s23, 1
    %p130 = por %p128, %p129
    %p132 = scmp.ne.s32.totalorder %s117, %s131
    %p133 = scmp.eq.s32.totalorder %s23, 0
    %p134 = por %p132, %p133
    %s136 = sadd.s32 %s135, 1
    %p139 = scmp.eq.s32.totalorder %s17, 1
    %p140 = scmp.ne.s32.totalorder %s135, %s137
    %p141 = scmp.eq.s32.totalorder %s17, 0
    %p142 = por %p140, %p141
    %p143 = scmp.ne.s32.totalorder %s135, %s137
    %p144 = scmp.eq.s32.totalorder %s22, 1
    %p145 = por %p143, %p144
    %p146 = scmp.ne.s32.totalorder %s137, %s138
    %p147 = scmp.eq.s32.totalorder %s22, 0
    %p148 = por %p146, %p147
    %p149 = scmp.ne.s32.totalorder %s137, %s138
    %p150 = scmp.eq.s32.totalorder %s23, 1
    %p151 = por %p149, %p150
    %p153 = scmp.ne.s32.totalorder %s138, %s152
    %p154 = scmp.eq.s32.totalorder %s23, 0
    %p155 = por %p153, %p154
    %s157 = sadd.s32 %s156, 1
    %p160 = scmp.eq.s32.totalorder %s17, 1
    %p161 = scmp.ne.s32.totalorder %s156, %s158
    %p162 = scmp.eq.s32.totalorder %s17, 0
    %p163 = por %p161, %p162
    %p164 = scmp.ne.s32.totalorder %s156, %s158
    %p165 = scmp.eq.s32.totalorder %s22, 1
    %p166 = por %p164, %p165
    %p167 = scmp.ne.s32.totalorder %s158, %s159
    %p168 = scmp.eq.s32.totalorder %s22, 0
    %p169 = por %p167, %p168
    %p170 = scmp.ne.s32.totalorder %s158, %s159
    %p171 = scmp.eq.s32.totalorder %s23, 1
    %p172 = por %p170, %p171
    %p174 = scmp.ne.s32.totalorder %s159, %s173
    %p175 = scmp.eq.s32.totalorder %s23, 0
    %p176 = por %p174, %p175
    %s178 = sadd.s32 %s177, 1
    %p181 = scmp.eq.s32.totalorder %s17, 1
    %p182 = scmp.ne.s32.totalorder %s177, %s179
    %p183 = scmp.eq.s32.totalorder %s17, 0
    %p184 = por %p182, %p183
    %p185 = scmp.ne.s32.totalorder %s177, %s179
    %p186 = scmp.eq.s32.totalorder %s22, 1
    %p187 = por %p185, %p186
    %p188 = scmp.ne.s32.totalorder %s179, %s180
    %p189 = scmp.eq.s32.totalorder %s22, 0
    %p190 = por %p188, %p189
    %p191 = scmp.ne.s32.totalorder %s179, %s180
    %p192 = scmp.eq.s32.totalorder %s23, 1
    %p193 = por %p191, %p192
    %p195 = scmp.ne.s32.totalorder %s180, %s194
    %p196 = scmp.eq.s32.totalorder %s23, 0
    %p197 = por %p195, %p196
    %s199 = sadd.s32 %s198, 1
    %p202 = scmp.eq.s32.totalorder %s17, 1
    %p203 = scmp.ne.s32.totalorder %s198, %s200
    %p204 = scmp.eq.s32.totalorder %s17, 0
    %p205 = por %p203, %p204
    %p206 = scmp.ne.s32.totalorder %s198, %s200
    %p207 = scmp.eq.s32.totalorder %s22, 1
    %p208 = por %p206, %p207
    %p209 = scmp.ne.s32.totalorder %s200, %s201
    %p210 = scmp.eq.s32.totalorder %s22, 0
    %p211 = por %p209, %p210
    %p212 = scmp.ne.s32.totalorder %s200, %s201
    %p213 = scmp.eq.s32.totalorder %s23, 1
    %p214 = por %p212, %p213
    %p216 = scmp.ne.s32.totalorder %s201, %s215
    %p217 = scmp.eq.s32.totalorder %s23, 0
    %p218 = por %p216, %p217
    %s219 = ssub.s32 %s17, %s24
    %p220 = scmp.eq.s32.totalorder %s219, 0
    %s222 = sadd.s32 %s221, 1
    %s223 = scalar_select %p220, %s221, %s222
    %p226 = pneg %p220
    %p227 = scmp.eq.s32.totalorder %s17, 1
    %p228 = por %p226, %p227
    %p229 = scmp.ne.s32.totalorder %s221, %s224
    %p230 = scmp.eq.s32.totalorder %s17, 0
    %p231 = por %p229, %p230
    %p232 = scmp.ne.s32.totalorder %s221, %s224
    %p233 = scmp.eq.s32.totalorder %s22, 1
    %p234 = por %p232, %p233
    %p235 = scmp.ne.s32.totalorder %s224, %s225
    %p236 = scmp.eq.s32.totalorder %s22, 0
    %p237 = por %p235, %p236
    %p238 = scmp.ne.s32.totalorder %s224, %s225
    %p239 = scmp.eq.s32.totalorder %s23, 1
    %p240 = por %p238, %p239
    %p242 = scmp.ne.s32.totalorder %s225, %s241
    %p243 = scmp.eq.s32.totalorder %s23, 0
    %p244 = por %p242, %p243
    %s245 = ssub.s32 %s17, %s24
    %p246 = scmp.eq.s32.totalorder %s245, 0
    %s248 = sadd.s32 %s247, 1
    %s249 = scalar_select %p246, %s247, %s248
    %p252 = pneg %p246
    %p253 = scmp.eq.s32.totalorder %s17, 1
    %p254 = por %p252, %p253
    %p255 = scmp.ne.s32.totalorder %s247, %s250
    %p256 = scmp.eq.s32.totalorder %s17, 0
    %p257 = por %p255, %p256
    %p258 = scmp.ne.s32.totalorder %s247, %s250
    %p259 = scmp.eq.s32.totalorder %s22, 1
    %p260 = por %p258, %p259
    %p261 = scmp.ne.s32.totalorder %s250, %s251
    %p262 = scmp.eq.s32.totalorder %s22, 0
    %p263 = por %p261, %p262
    %p264 = scmp.ne.s32.totalorder %s250, %s251
    %p265 = scmp.eq.s32.totalorder %s23, 1
    %p266 = por %p264, %p265
    %p268 = scmp.ne.s32.totalorder %s251, %s267
    %p269 = scmp.eq.s32.totalorder %s23, 0
    %p270 = por %p268, %p269
    %p271 = scmp.le.s32.totalorder 1, %s17
    %p272 = scmp.lt.s32.totalorder %s17, 3
    %p273 = pnand %p271, %p272
    %p274 = pneg %p273
    // Predicated region
    $region9: #{_lambda_.7} parent=5 // pred_check
      _
    $region10: #{_lambda_.7} parent=5 // pred_check_branch
      %276 = sbr.rel (%p273) target = $region12
    $region11: #{_lambda_.7} parent=5 // pred_region
      %s277 = ssub.s32 %s17, 1
      // Predicated region
      $region13: #{_lambda_.7} parent=11 // pred_check
        %p278 = pneg %p64
      $region14: #{_lambda_.7} parent=11 // pred_check_branch
        %280 = sbr.rel (%p278) target = $region16
      $region15: #{_lambda_.7} parent=11 // pred_region
        _
      $region16: #{_lambda_.7} parent=11 // pred_fallthru
        _
      // Predicated region
      $region17: #{_lambda_.7} parent=11 // pred_check
        %p281 = pneg %p85
      $region18: #{_lambda_.7} parent=11 // pred_check_branch
        %283 = sbr.rel (%p281) target = $region20
      $region19: #{_lambda_.7} parent=11 // pred_region
        _
      $region20: #{_lambda_.7} parent=11 // pred_fallthru
        _
      // Predicated region
      $region21: #{_lambda_.7} parent=11 // pred_check
        %p284 = pneg %p106
      $region22: #{_lambda_.7} parent=11 // pred_check_branch
        %286 = sbr.rel (%p284) target = $region24
      $region23: #{_lambda_.7} parent=11 // pred_region
        _
      $region24: #{_lambda_.7} parent=11 // pred_fallthru
        _
      // Predicated region
      $region25: #{_lambda_.7} parent=11 // pred_check
        %p287 = pneg %p127
      $region26: #{_lambda_.7} parent=11 // pred_check_branch
        %289 = sbr.rel (%p287) target = $region28
      $region27: #{_lambda_.7} parent=11 // pred_region
        _
      $region28: #{_lambda_.7} parent=11 // pred_fallthru
        _
      // Predicated region
      $region29: #{_lambda_.7} parent=11 // pred_check
        %p290 = pneg %p148
      $region30: #{_lambda_.7} parent=11 // pred_check_branch
        %292 = sbr.rel (%p290) target = $region32
      $region31: #{_lambda_.7} parent=11 // pred_region
        _
      $region32: #{_lambda_.7} parent=11 // pred_fallthru
        _
      // Predicated region
      $region33: #{_lambda_.7} parent=11 // pred_check
        %p293 = pneg %p169
      $region34: #{_lambda_.7} parent=11 // pred_check_branch
        %295 = sbr.rel (%p293) target = $region36
      $region35: #{_lambda_.7} parent=11 // pred_region
        _
      $region36: #{_lambda_.7} parent=11 // pred_fallthru
        _
      // Predicated region
      $region37: #{_lambda_.7} parent=11 // pred_check
        %p296 = pneg %p190
      $region38: #{_lambda_.7} parent=11 // pred_check_branch
        %298 = sbr.rel (%p296) target = $region40
      $region39: #{_lambda_.7} parent=11 // pred_region
        _
      $region40: #{_lambda_.7} parent=11 // pred_fallthru
        _
      // Predicated region
      $region41: #{_lambda_.7} parent=11 // pred_check
        %p299 = pneg %p211
      $region42: #{_lambda_.7} parent=11 // pred_check_branch
        %301 = sbr.rel (%p299) target = $region44
      $region43: #{_lambda_.7} parent=11 // pred_region
        _
      $region44: #{_lambda_.7} parent=11 // pred_fallthru
        _
    $region12: #{_lambda_.7} parent=5 // pred_fallthru
      _
    %p302 = scmp.lt.s32.totalorder %s17, 2
    // Predicated region
    $region45: #{_lambda_.7} parent=5 // pred_check
      %p303 = pneg %p302
    $region46: #{_lambda_.7} parent=5 // pred_check_branch
      %305 = sbr.rel (%p303) target = $region48
    $region47: #{_lambda_.7} parent=5 // pred_region
      // Predicated region
      $region49: #{_lambda_.7} parent=47 // pred_check
        %p306 = pneg %p37
      $region50: #{_lambda_.7} parent=47 // pred_check_branch
        %308 = sbr.rel (%p306) target = $region52
      $region51: #{_lambda_.7} parent=47 // pred_region
        %p309 = scmp.lt.s32.totalorder %s17, 1
        %s310 = scalar_select %p309, %s17, 1
        %s311 = smul.addr %s310, 44
        %s312 = smul.addr %s311, 8
        %s313 = scalar_lea.vmem %s0, %s312
      $region52: #{_lambda_.7} parent=47 // pred_fallthru
        _
    $region48: #{_lambda_.7} parent=5 // pred_fallthru
      _
    %p314 = scmp.le.s32.totalorder 1, %s17
    %p315 = scmp.lt.s32.totalorder %s17, 3
    %p316 = pnand %p314, %p315
    %p317 = pneg %p316
    // Predicated region
    $region53: #{_lambda_.7} parent=5 // pred_check
      _
    $region54: #{_lambda_.7} parent=5 // pred_check_branch
      %319 = sbr.rel (%p316) target = $region56
    $region55: #{_lambda_.7} parent=5 // pred_region
      %s320 = ssub.s32 %s17, 1
      %p321 = scmp.lt.s32.totalorder %s22, 1
      %s322 = scalar_select %p321, %s22, 1
      %s323 = smul.addr %s322, 44
      %s324 = smul.addr %s323, 8
      %s325 = scalar_lea.vmem %s0, %s324
      %p326 = pneg %p43
      %p327 = pneg %p40
      %p328 = pneg %p64
      %p329 = pneg %p61
      %p330 = pneg %p85
      %p331 = pneg %p82
      %p332 = pneg %p106
      %p333 = pneg %p103
      %p334 = pneg %p127
      %p335 = pneg %p124
      %p336 = pneg %p148
      %p337 = pneg %p145
      %p338 = pneg %p169
      %p339 = pneg %p166
      %p340 = pneg %p190
      %p341 = pneg %p187
      %p342 = pneg %p211
      %p343 = pneg %p208
      %p344 = pneg %p237
      %p345 = pneg %p234
      %p346 = scmp.lt.s32.totalorder %s22, 1
      %s347 = scalar_select %p346, %s22, 1
      %s348 = smul.addr %s347, 9
      %s349 = smul.addr %s348, 8
      %s350 = scalar_lea.vmem %s9, %s349
      %p351 = pneg %p263
      %p352 = pneg %p260
      %p353 = scmp.lt.s32.totalorder %s22, 1
      %s354 = scalar_select %p353, %s22, 1
      %s355 = smul.addr %s354, 9
      %s356 = smul.addr %s355, 8
      %s357 = scalar_lea.vmem %s10, %s356
      %p358 = scmp.lt.s32.totalorder %s22, 1
      %s359 = scalar_select %p358, %s22, 1
      %s360 = smul.addr %s359, 44
      %s361 = smul.addr %s360, 8
      %s362 = scalar_lea.vmem %s0, %s361
      %p363 = scmp.lt.s32.totalorder %s22, 1
      %s364 = scalar_select %p363, %s22, 1
      %s365 = smul.addr %s364, 9
      %s366 = smul.addr %s365, 8
      %s367 = scalar_lea.vmem %s9, %s366
      %p368 = scmp.lt.s32.totalorder %s22, 1
      %s369 = scalar_select %p368, %s22, 1
      %s370 = smul.addr %s369, 9
      %s371 = smul.addr %s370, 8
      %s372 = scalar_lea.vmem %s10, %s371
      %v374 = vld [vmem:[%s362] sm:$0xff]
      %v375 = vld [vmem:[%s362 + $0x8] sm:$0xff]
      %v376 = vld [vmem:[%s362 + $0x10] sm:$0xff]
      %v377 = vld [vmem:[%s362 + $0x18] sm:$0xff]
      %v378 = vld [vmem:[%s362 + $0x20] sm:$0xff]
      %v379 = vld [vmem:[%s362 + $0x28] sm:$0xff]
      %v380 = vld [vmem:[%s362 + $0x30] sm:$0xff]
      %v381 = vld [vmem:[%s362 + $0x38] sm:$0xff]
      %v382 = vld [vmem:[%s362 + $0x40] sm:$0xff]
      %v383 = vpack.c.bf16 %v375, %v374
      %v384 = vpack.c.bf16 %v377, %v376
      %v385 = vpack.c.bf16 %v379, %v378
      %v386 = vpack.c.bf16 %v381, %v380
      %v387 = vpack.c.bf16 %v382, %v382
      %v388 = vld [vmem:[%s1] sm:$0xf]
      %v389 = vld [vmem:[%s1 + $0x4] sm:$0xf]
      %s390 = scalar_lea.vmem %s362, 88
      %v391 = vld [vmem:[%s390] sm:$0xff]
      %v392 = vld [vmem:[%s390 + $0x8] sm:$0xff]
      %v393 = vld [vmem:[%s390 + $0x10] sm:$0xff]
      %v394 = vld [vmem:[%s390 + $0x18] sm:$0xff]
      %v395 = vld [vmem:[%s390 + $0x20] sm:$0xff]
      %v396 = vld [vmem:[%s390 + $0x28] sm:$0xff]
      %v397 = vld [vmem:[%s390 + $0x30] sm:$0xff]
      %v398 = vld [vmem:[%s390 + $0x38] sm:$0xff]
      %v399 = vld [vmem:[%s390 + $0x40] sm:$0xff]
      %v400 = vpack.c.bf16 %v392, %v391
      %v401 = vpack.c.bf16 %v394, %v393
      %v402 = vpack.c.bf16 %v396, %v395
      %v403 = vpack.c.bf16 %v398, %v397
      %v404 = vpack.c.bf16 %v399, %v399
      %s405 = scalar_lea.vmem %s1, 8
      %v406 = vld [vmem:[%s405] sm:$0xf]
      %v407 = vld [vmem:[%s405 + $0x4] sm:$0xf]
      %v410 = vunpack.c.l.b16 %v406
      %v411 = vunpack.c.l.b16 %v407
      %v412 = vpack.c.b16 %v411, %v410
      %vm414 = vcmask 130048
      %v416 = vsel %vm414, %v400, 0
      %v419 = vsel %vm414, %v401, 0
      %v422 = vsel %vm414, %v402, 0
      %v425 = vsel %vm414, %v403, 0
      %v428 = vsel %vm414, %v404, 0
      %430 = vmatprep.subr.bf16.mxu0 0
      %431 = vmatpush1.bf16.msra.mxu0 %v412
      %432 = vmatprep.subr.bf16.mxu0 0
      %433 = vmatpush1.bf16.msra.mxu0 0
      %434 = vmatprep.subr.bf16.mxu0 0
      %435 = vmatpush1.bf16.msra.mxu0 0
      %436 = vmatprep.subr.bf16.mxu0 0
      %437 = vmatpush1.bf16.msra.mxu0 0
      %438 = vmatprep.subr.bf16.mxu0 0
      %439 = vmatpush1.bf16.msra.mxu0 0
      %440 = vmatprep.subr.bf16.mxu0 0
      %441 = vmatpush1.bf16.msra.mxu0 0
      %442 = vmatprep.subr.bf16.mxu0 0
      %443 = vmatpush1.bf16.msra.mxu0 0
      %444 = vmatprep.subr.bf16.mxu0 0
      %445 = vmatpush1.bf16.msra.mxu0 0
      %446 = vmatprep.subr.bf16.mxu0 0
      %447 = vmatpush1.bf16.msra.mxu0 0
      %448 = vmatprep.subr.bf16.mxu0 0
      %449 = vmatpush1.bf16.msra.mxu0 0
      %450 = vmatprep.subr.bf16.mxu0 0
      %451 = vmatpush1.bf16.msra.mxu0 0
      %452 = vmatprep.subr.bf16.mxu0 0
      %453 = vmatpush1.bf16.msra.mxu0 0
      %454 = vmatprep.subr.bf16.mxu0 0
      %455 = vmatpush1.bf16.msra.mxu0 0
      %456 = vmatprep.subr.bf16.mxu0 0
      %457 = vmatpush1.bf16.msra.mxu0 0
      %458 = vmatprep.subr.bf16.mxu0 0
      %459 = vmatpush1.bf16.msra.mxu0 0
      %460 = vmatprep.subr.bf16.mxu0 0
      %461 = vmatpush1.bf16.msra.mxu0 0
      %462 = vmatprep.mubr.bf16.mxu0 0
      %463 = vmatmul.mubr.bf16.gmra.mrb[0].mxu0 %v416
      %v464 = vpop.f32.mrb[0].mxu0
      %v465 = vadd.f32 0.0, %v464
      %v466 = vpop.f32.mrb[0].mxu0
      %v467 = vpop.f32.mrb[0].mxu0
      %v468 = vadd.f32 0.0, %v467
      %v469 = vpop.f32.mrb[0].mxu0
      %470 = vmatprep.mubr.bf16.mxu0 0
      %471 = vmatmul.mubr.bf16.gmra.mrb[0].mxu0 %v419
      %v472 = vpop.f32.mrb[0].mxu0
      %v473 = vadd.f32 0.0, %v472
      %v474 = vpop.f32.mrb[0].mxu0
      %v475 = vpop.f32.mrb[0].mxu0
      %v476 = vadd.f32 0.0, %v475
      %v477 = vpop.f32.mrb[0].mxu0
      %478 = vmatprep.mubr.bf16.mxu0 0
      %479 = vmatmul.mubr.bf16.gmra.mrb[0].mxu0 %v422
      %v480 = vpop.f32.mrb[0].mxu0
      %v481 = vadd.f32 0.0, %v480
      %v482 = vpop.f32.mrb[0].mxu0
      %v483 = vpop.f32.mrb[0].mxu0
      %v484 = vadd.f32 0.0, %v483
      %v485 = vpop.f32.mrb[0].mxu0
      %486 = vmatprep.mubr.bf16.mxu0 0
      %487 = vmatmul.mubr.bf16.gmra.mrb[0].mxu0 %v425
      %v488 = vpop.f32.mrb[0].mxu0
      %v489 = vadd.f32 0.0, %v488
      %v490 = vpop.f32.mrb[0].mxu0
      %v491 = vpop.f32.mrb[0].mxu0
      %v492 = vadd.f32 0.0, %v491
      %v493 = vpop.f32.mrb[0].mxu0
      %494 = vmatprep.mubr.bf16.mxu0 0
      %495 = vmatmul.mubr.bf16.gmra.mrb[0].mxu0 %v428
      %v496 = vpop.f32.mrb[0].mxu0
      %v497 = vadd.f32 0.0, %v496
      %v498 = vpop.f32.mrb[0].mxu0
      %v499 = vpop.f32.mrb[0].mxu0
      %v500 = vpop.f32.mrb[0].mxu0
      %501 = vdwg.mxu0
      %v504 = vunpack.c.l.b16 %v388
      %v505 = vunpack.c.l.b16 %v389
      %v506 = vpack.c.b16 %v505, %v504
      %v509 = vsel %vm414, %v383, 0
      %v512 = vsel %vm414, %v384, 0
      %v515 = vsel %vm414, %v385, 0
      %v518 = vsel %vm414, %v386, 0
      %v521 = vsel %vm414, %v387, 0
      %523 = vmatprep.subr.bf16.mxu0 0
      %524 = vmatpush1.bf16.msra.mxu0 %v506
      %525 = vmatprep.subr.bf16.mxu0 0
      %526 = vmatpush1.bf16.msra.mxu0 0
      %527 = vmatprep.subr.bf16.mxu0 0
      %528 = vmatpush1.bf16.msra.mxu0 0
      %529 = vmatprep.subr.bf16.mxu0 0
      %530 = vmatpush1.bf16.msra.mxu0 0
      %531 = vmatprep.subr.bf16.mxu0 0
      %532 = vmatpush1.bf16.msra.mxu0 0
      %533 = vmatprep.subr.bf16.mxu0 0
      %534 = vmatpush1.bf16.msra.mxu0 0
      %535 = vmatprep.subr.bf16.mxu0 0
      %536 = vmatpush1.bf16.msra.mxu0 0
      %537 = vmatprep.subr.bf16.mxu0 0
      %538 = vmatpush1.bf16.msra.mxu0 0
      %539 = vmatprep.subr.bf16.mxu0 0
      %540 = vmatpush1.bf16.msra.mxu0 0
      %541 = vmatprep.subr.bf16.mxu0 0
      %542 = vmatpush1.bf16.msra.mxu0 0
      %543 = vmatprep.subr.bf16.mxu0 0
      %544 = vmatpush1.bf16.msra.mxu0 0
      %545 = vmatprep.subr.bf16.mxu0 0
      %546 = vmatpush1.bf16.msra.mxu0 0
      %547 = vmatprep.subr.bf16.mxu0 0
      %548 = vmatpush1.bf16.msra.mxu0 0
      %549 = vmatprep.subr.bf16.mxu0 0
      %550 = vmatpush1.bf16.msra.mxu0 0
      %551 = vmatprep.subr.bf16.mxu0 0
      %552 = vmatpush1.bf16.msra.mxu0 0
      %553 = vmatprep.subr.bf16.mxu0 0
      %554 = vmatpush1.bf16.msra.mxu0 0
      %555 = vmatprep.mubr.bf16.mxu0 0
      %556 = vmatmul.mubr.bf16.gmra.mrb[0].mxu0 %v509
      %v557 = vpop.f32.mrb[0].mxu0
      %v558 = vadd.f32 %v465, %v557
      %v559 = vpop.f32.mrb[0].mxu0
      %v560 = vpop.f32.mrb[0].mxu0
      %v561 = vadd.f32 %v468, %v560
      %v562 = vpop.f32.mrb[0].mxu0
      %563 = vmatprep.mubr.bf16.mxu0 0
      %564 = vmatmul.mubr.bf16.gmra.mrb[0].mxu0 %v512
      %v565 = vpop.f32.mrb[0].mxu0
      %v566 = vadd.f32 %v473, %v565
      %v567 = vpop.f32.mrb[0].mxu0
      %v568 = vpop.f32.mrb[0].mxu0
      %v569 = vadd.f32 %v476, %v568
      %v570 = vpop.f32.mrb[0].mxu0
      %571 = vmatprep.mubr.bf16.mxu0 0
      %572 = vmatmul.mubr.bf16.gmra.mrb[0].mxu0 %v515
      %v573 = vpop.f32.mrb[0].mxu0
      %v574 = vadd.f32 %v481, %v573
      %v575 = vpop.f32.mrb[0].mxu0
      %v576 = vpop.f32.mrb[0].mxu0
      %v577 = vadd.f32 %v484, %v576
      %v578 = vpop.f32.mrb[0].mxu0
      %579 = vmatprep.mubr.bf16.mxu0 0
      %580 = vmatmul.mubr.bf16.gmra.mrb[0].mxu0 %v518
      %v581 = vpop.f32.mrb[0].mxu0
      %v582 = vadd.f32 %v489, %v581
      %v583 = vpop.f32.mrb[0].mxu0
      %v584 = vpop.f32.mrb[0].mxu0
      %v585 = vadd.f32 %v492, %v584
      %v586 = vpop.f32.mrb[0].mxu0
      %587 = vmatprep.mubr.bf16.mxu0 0
      %588 = vmatmul.mubr.bf16.gmra.mrb[0].mxu0 %v521
      %v589 = vpop.f32.mrb[0].mxu0
      %v590 = vadd.f32 %v497, %v589
      %v591 = vpop.f32.mrb[0].mxu0
      %v592 = vpop.f32.mrb[0].mxu0
      %v593 = vpop.f32.mrb[0].mxu0
      %594 = vdwg.mxu0
      %v595 = vld [vmem:[%s362 + $0x1] sm:$0xff]
      %v596 = vld [vmem:[%s362 + $0x9] sm:$0xff]
      %v597 = vld [vmem:[%s362 + $0x11] sm:$0xff]
      %v598 = vld [vmem:[%s362 + $0x19] sm:$0xff]
      %v599 = vld [vmem:[%s362 + $0x21] sm:$0xff]
      %v600 = vld [vmem:[%s362 + $0x29] sm:$0xff]
      %v601 = vld [vmem:[%s362 + $0x31] sm:$0xff]
      %v602 = vld [vmem:[%s362 + $0x39] sm:$0xff]
      %v603 = vld [vmem:[%s362 + $0x41] sm:$0xff]
      %v604 = vpack.c.bf16 %v596, %v595
      %v605 = vpack.c.bf16 %v598, %v597
      %v606 = vpack.c.bf16 %v600, %v599
      %v607 = vpack.c.bf16 %v602, %v601
      %v608 = vpack.c.bf16 %v603, %v603
      %s609 = scalar_lea.vmem %s1, 16
      %v610 = vld [vmem:[%s609] sm:$0xf]
      %v611 = vld [vmem:[%s609 + $0x4] sm:$0xf]
      %v614 = vunpack.c.l.b16 %v610
      %v615 = vunpack.c.l.b16 %v611
      %v616 = vpack.c.b16 %v615, %v614
      %v619 = vsel %vm414, %v604, 0
      %v622 = vsel %vm414, %v605, 0
      %v625 = vsel %vm414, %v606, 0
      %v628 = vsel %vm414, %v607, 0
      %v631 = vsel %vm414, %v608, 0
      %633 = vmatprep.subr.bf16.mxu0 0
      %634 = vmatpush1.bf16.msra.mxu0 %v616
      %635 = vmatprep.subr.bf16.mxu0 0
      %636 = vmatpush1.bf16.msra.mxu0 0
      %637 = vmatprep.subr.bf16.mxu0 0
      %638 = vmatpush1.bf16.msra.mxu0 0
      %639 = vmatprep.subr.bf16.mxu0 0
      %640 = vmatpush1.bf16.msra.mxu0 0
      %641 = vmatprep.subr.bf16.mxu0 0
      %642 = vmatpush1.bf16.msra.mxu0 0
      %643 = vmatprep.subr.bf16.mxu0 0
      %644 = vmatpush1.bf16.msra.mxu0 0
      %645 = vmatprep.subr.bf16.mxu0 0
      %646 = vmatpush1.bf16.msra.mxu0 0
      %647 = vmatprep.subr.bf16.mxu0 0
      %648 = vmatpush1.bf16.msra.mxu0 0
      %649 = vmatprep.subr.bf16.mxu0 0
      %650 = vmatpush1.bf16.msra.mxu0 0
      %651 = vmatprep.subr.bf16.mxu0 0
      %652 = vmatpush1.bf16.msra.mxu0 0
      %653 = vmatprep.subr.bf16.mxu0 0
      %654 = vmatpush1.bf16.msra.mxu0 0
      %655 = vmatprep.subr.bf16.mxu0 0
      %656 = vmatpush1.bf16.msra.mxu0 0
      %657 = vmatprep.subr.bf16.mxu0 0
      %658 = vmatpush1.bf16.msra.mxu0 0
      %659 = vmatprep.subr.bf16.mxu0 0
      %660 = vmatpush1.bf16.msra.mxu0 0
      %661 = vmatprep.subr.bf16.mxu0 0
      %662 = vmatpush1.bf16.msra.mxu0 0
      %663 = vmatprep.subr.bf16.mxu0 0
      %664 = vmatpush1.bf16.msra.mxu0 0
      %665 = vmatprep.mubr.bf16.mxu0 0
      %666 = vmatmul.mubr.bf16.gmra.mrb[0].mxu0 %v619
      %v667 = vpop.f32.mrb[0].mxu0
      %v668 = vadd.f32 0.0, %v667
      %v669 = vpop.f32.mrb[0].mxu0
      %v670 = vpop.f32.mrb[0].mxu0
      %v671 = vadd.f32 0.0, %v670
      %v672 = vpop.f32.mrb[0].mxu0
      %673 = vmatprep.mubr.bf16.mxu0 0
      %674 = vmatmul.mubr.bf16.gmra.mrb[0].mxu0 %v622
      %v675 = vpop.f32.mrb[0].mxu0
      %v676 = vadd.f32 0.0, %v675
      %v677 = vpop.f32.mrb[0].mxu0
      %v678 = vpop.f32.mrb[0].mxu0
      %v679 = vadd.f32 0.0, %v678
      %v680 = vpop.f32.mrb[0].mxu0
      %681 = vmatprep.mubr.bf16.mxu0 0
      %682 = vmatmul.mubr.bf16.gmra.mrb[0].mxu0 %v625
      %v683 = vpop.f32.mrb[0].mxu0
      %v684 = vadd.f32 0.0, %v683
      %v685 = vpop.f32.mrb[0].mxu0
      %v686 = vpop.f32.mrb[0].mxu0
      %v687 = vadd.f32 0.0, %v686
      %v688 = vpop.f32.mrb[0].mxu0
      %689 = vmatprep.mubr.bf16.mxu0 0
      %690 = vmatmul.mubr.bf16.gmra.mrb[0].mxu0 %v628
      %v691 = vpop.f32.mrb[0].mxu0
      %v692 = vadd.f32 0.0, %v691
      %v693 = vpop.f32.mrb[0].mxu0
      %v694 = vpop.f32.mrb[0].mxu0
      %v695 = vadd.f32 0.0, %v694
      %v696 = vpop.f32.mrb[0].mxu0
      %697 = vmatprep.mubr.bf16.mxu0 0
      %698 = vmatmul.mubr.bf16.gmra.mrb[0].mxu0 %v631
      %v699 = vpop.f32.mrb[0].mxu0
      %v700 = vadd.f32 0.0, %v699
      %v701 = vpop.f32.mrb[0].mxu0
      %v702 = vpop.f32.mrb[0].mxu0
      %v703 = vpop.f32.mrb[0].mxu0
      %704 = vdwg.mxu0
      %v705 = vadd.f32 %v558, %v668
      %v706 = vadd.f32 %v561, %v671
      %v707 = vadd.f32 %v566, %v676
      %v708 = vadd.f32 %v569, %v679
      %v709 = vadd.f32 %v574, %v684
      %v710 = vadd.f32 %v577, %v687
      %v711 = vadd.f32 %v582, %v692
      %v712 = vadd.f32 %v585, %v695
      %v713 = vadd.f32 %v590, %v700
      %s714 = scalar_lea.vmem %s362, 176
      %v715 = vld [vmem:[%s714] sm:$0xff]
      %v716 = vld [vmem:[%s714 + $0x8] sm:$0xff]
      %v717 = vld [vmem:[%s714 + $0x10] sm:$0xff]
      %v718 = vld [vmem:[%s714 + $0x18] sm:$0xff]
      %v719 = vld [vmem:[%s714 + $0x20] sm:$0xff]
      %v720 = vld [vmem:[%s714 + $0x28] sm:$0xff]
      %v721 = vld [vmem:[%s714 + $0x30] sm:$0xff]
      %v722 = vld [vmem:[%s714 + $0x38] sm:$0xff]
      %v723 = vld [vmem:[%s714 + $0x40] sm:$0xff]
      %v724 = vpack.c.bf16 %v716, %v715
      %v725 = vpack.c.bf16 %v718, %v717
      %v726 = vpack.c.bf16 %v720, %v719
      %v727 = vpack.c.bf16 %v722, %v721
      %v728 = vpack.c.bf16 %v723, %v723
      %s729 = scalar_lea.vmem %s1, 24
      %v730 = vld [vmem:[%s729] sm:$0xf]
      %v731 = vld [vmem:[%s729 + $0x4] sm:$0xf]
      %v734 = vunpack.c.l.b16 %v730
      %v735 = vunpack.c.l.b16 %v731
      %v736 = vpack.c.b16 %v735, %v734
      %v739 = vsel %vm414, %v724, 0
      %v742 = vsel %vm414, %v725, 0
      %v745 = vsel %vm414, %v726, 0
      %v748 = vsel %vm414, %v727, 0
      %v751 = vsel %vm414, %v728, 0
      %753 = vmatprep.subr.bf16.mxu0 0
      %754 = vmatpush1.bf16.msra.mxu0 %v736
      %755 = vmatprep.subr.bf16.mxu0 0
      %756 = vmatpush1.bf16.msra.mxu0 0
      %757 = vmatprep.subr.bf16.mxu0 0
      %758 = vmatpush1.bf16.msra.mxu0 0
      %759 = vmatprep.subr.bf16.mxu0 0
      %760 = vmatpush1.bf16.msra.mxu0 0
      %761 = vmatprep.subr.bf16.mxu0 0
      %762 = vmatpush1.bf16.msra.mxu0 0
      %763 = vmatprep.subr.bf16.mxu0 0
      %764 = vmatpush1.bf16.msra.mxu0 0
      %765 = vmatprep.subr.bf16.mxu0 0
      %766 = vmatpush1.bf16.msra.mxu0 0
      %767 = vmatprep.subr.bf16.mxu0 0
      %768 = vmatpush1.bf16.msra.mxu0 0
      %769 = vmatprep.subr.bf16.mxu0 0
      %770 = vmatpush1.bf16.msra.mxu0 0
      %771 = vmatprep.subr.bf16.mxu0 0
      %772 = vmatpush1.bf16.msra.mxu0 0
      %773 = vmatprep.subr.bf16.mxu0 0
      %774 = vmatpush1.bf16.msra.mxu0 0
      %775 = vmatprep.subr.bf16.mxu0 0
      %776 = vmatpush1.bf16.msra.mxu0 0
      %777 = vmatprep.subr.bf16.mxu0 0
      %778 = vmatpush1.bf16.msra.mxu0 0
      %779 = vmatprep.subr.bf16.mxu0 0
      %780 = vmatpush1.bf16.msra.mxu0 0
      %781 = vmatprep.subr.bf16.mxu0 0
      %782 = vmatpush1.bf16.msra.mxu0 0
      %783 = vmatprep.subr.bf16.mxu0 0
      %784 = vmatpush1.bf16.msra.mxu0 0
      %785 = vmatprep.mubr.bf16.mxu0 0
      %786 = vmatmul.mubr.bf16.gmra.mrb[0].mxu0 %v739
      %v787 = vpop.f32.mrb[0].mxu0
      %v788 = vadd.f32 0.0, %v787
      %v789 = vpop.f32.mrb[0].mxu0
      %v790 = vpop.f32.mrb[0].mxu0
      %v791 = vadd.f32 0.0, %v790
      %v792 = vpop.f32.mrb[0].mxu0
      %793 = vmatprep.mubr.bf16.mxu0 0
      %794 = vmatmul.mubr.bf16.gmra.mrb[0].mxu0 %v742
      %v795 = vpop.f32.mrb[0].mxu0
      %v796 = vadd.f32 0.0, %v795
      %v797 = vpop.f32.mrb[0].mxu0
      %v798 = vpop.f32.mrb[0].mxu0
      %v799 = vadd.f32 0.0, %v798
      %v800 = vpop.f32.mrb[0].mxu0
      %801 = vmatprep.mubr.bf16.mxu0 0
      %802 = vmatmul.mubr.bf16.gmra.mrb[0].mxu0 %v745
      %v803 = vpop.f32.mrb[0].mxu0
      %v804 = vadd.f32 0.0, %v803
      %v805 = vpop.f32.mrb[0].mxu0
      %v806 = vpop.f32.mrb[0].mxu0
      %v807 = vadd.f32 0.0, %v806
      %v808 = vpop.f32.mrb[0].mxu0
      %809 = vmatprep.mubr.bf16.mxu0 0
      %810 = vmatmul.mubr.bf16.gmra.mrb[0].mxu0 %v748
      %v811 = vpop.f32.mrb[0].mxu0
      %v812 = vadd.f32 0.0, %v811
      %v813 = vpop.f32.mrb[0].mxu0
      %v814 = vpop.f32.mrb[0].mxu0
      %v815 = vadd.f32 0.0, %v814
      %v816 = vpop.f32.mrb[0].mxu0
      %817 = vmatprep.mubr.bf16.mxu0 0
      %818 = vmatmul.mubr.bf16.gmra.mrb[0].mxu0 %v751
      %v819 = vpop.f32.mrb[0].mxu0
      %v820 = vadd.f32 0.0, %v819
      %v821 = vpop.f32.mrb[0].mxu0
      %v822 = vpop.f32.mrb[0].mxu0
      %v823 = vpop.f32.mrb[0].mxu0
      %824 = vdwg.mxu0
      %v825 = vadd.f32 %v705, %v788
      %v826 = vadd.f32 %v706, %v791
      %v827 = vadd.f32 %v707, %v796
      %v828 = vadd.f32 %v708, %v799
      %v829 = vadd.f32 %v709, %v804
      %v830 = vadd.f32 %v710, %v807
      %v831 = vadd.f32 %v711, %v812
      %v832 = vadd.f32 %v712, %v815
      %v833 = vadd.f32 %v713, %v820
      %s834 = scalar_lea.vmem %s362, 264
      %v835 = vld [vmem:[%s834] sm:$0xff]
      %v836 = vld [vmem:[%s834 + $0x8] sm:$0xff]
      %v837 = vld [vmem:[%s834 + $0x10] sm:$0xff]
      %v838 = vld [vmem:[%s834 + $0x18] sm:$0xff]
      %v839 = vld [vmem:[%s834 + $0x20] sm:$0xff]
      %v840 = vld [vmem:[%s834 + $0x28] sm:$0xff]
      %v841 = vld [vmem:[%s834 + $0x30] sm:$0xff]
      %v842 = vld [vmem:[%s834 + $0x38] sm:$0xff]
      %v843 = vld [vmem:[%s834 + $0x40] sm:$0xff]
      %v844 = vpack.c.bf16 %v836, %v835
      %v845 = vpack.c.bf16 %v838, %v837
      %v846 = vpack.c.bf16 %v840, %v839
      %v847 = vpack.c.bf16 %v842, %v841
      %v848 = vpack.c.bf16 %v843, %v843
      %s849 = scalar_lea.vmem %s1, 32
      %v850 = vld [vmem:[%s849] sm:$0xf]
      %v851 = vld [vmem:[%s849 + $0x4] sm:$0xf]
      %v854 = vunpack.c.l.b16 %v850
      %v855 = vunpack.c.l.b16 %v851
      %v856 = vpack.c.b16 %v855, %v854
      %v859 = vsel %vm414, %v844, 0
      %v862 = vsel %vm414, %v845, 0
      %v865 = vsel %vm414, %v846, 0
      %v868 = vsel %vm414, %v847, 0
      %v871 = vsel %vm414, %v848, 0
      %873 = vmatprep.subr.bf16.mxu0 0
      %874 = vmatpush1.bf16.msra.mxu0 %v856
      %875 = vmatprep.subr.bf16.mxu0 0
      %876 = vmatpush1.bf16.msra.mxu0 0
      %877 = vmatprep.subr.bf16.mxu0 0
      %878 = vmatpush1.bf16.msra.mxu0 0
      %879 = vmatprep.subr.bf16.mxu0 0
      %880 = vmatpush1.bf16.msra.mxu0 0
      %881 = vmatprep.subr.bf16.mxu0 0
      %882 = vmatpush1.bf16.msra.mxu0 0
      %883 = vmatprep.subr.bf16.mxu0 0
      %884 = vmatpush1.bf16.msra.mxu0 0
      %885 = vmatprep.subr.bf16.mxu0 0
      %886 = vmatpush1.bf16.msra.mxu0 0
      %887 = vmatprep.subr.bf16.mxu0 0
      %888 = vmatpush1.bf16.msra.mxu0 0
      %889 = vmatprep.subr.bf16.mxu0 0
      %890 = vmatpush1.bf16.msra.mxu0 0
      %891 = vmatprep.subr.bf16.mxu0 0
      %892 = vmatpush1.bf16.msra.mxu0 0
      %893 = vmatprep.subr.bf16.mxu0 0
      %894 = vmatpush1.bf16.msra.mxu0 0
      %895 = vmatprep.subr.bf16.mxu0 0
      %896 = vmatpush1.bf16.msra.mxu0 0
      %897 = vmatprep.subr.bf16.mxu0 0
      %898 = vmatpush1.bf16.msra.mxu0 0
      %899 = vmatprep.subr.bf16.mxu0 0
      %900 = vmatpush1.bf16.msra.mxu0 0
      %901 = vmatprep.subr.bf16.mxu0 0
      %902 = vmatpush1.bf16.msra.mxu0 0
      %903 = vmatprep.subr.bf16.mxu0 0
      %904 = vmatpush1.bf16.msra.mxu0 0
      %905 = vmatprep.mubr.bf16.mxu0 0
      %906 = vmatmul.mubr.bf16.gmra.mrb[0].mxu0 %v859
      %v907 = vpop.f32.mrb[0].mxu0
      %v908 = vadd.f32 0.0, %v907
      %v909 = vpop.f32.mrb[0].mxu0
      %v910 = vpop.f32.mrb[0].mxu0
      %v911 = vadd.f32 0.0, %v910
      %v912 = vpop.f32.mrb[0].mxu0
      %913 = vmatprep.mubr.bf16.mxu0 0
      %914 = vmatmul.mubr.bf16.gmra.mrb[0].mxu0 %v862
      %v915 = vpop.f32.mrb[0].mxu0
      %v916 = vadd.f32 0.0, %v915
      %v917 = vpop.f32.mrb[0].mxu0
      %v918 = vpop.f32.mrb[0].mxu0
      %v919 = vadd.f32 0.0, %v918
      %v920 = vpop.f32.mrb[0].mxu0
      %921 = vmatprep.mubr.bf16.mxu0 0
      %922 = vmatmul.mubr.bf16.gmra.mrb[0].mxu0 %v865
      %v923 = vpop.f32.mrb[0].mxu0
      %v924 = vadd.f32 0.0, %v923
      %v925 = vpop.f32.mrb[0].mxu0
      %v926 = vpop.f32.mrb[0].mxu0
      %v927 = vadd.f32 0.0, %v926
      %v928 = vpop.f32.mrb[0].mxu0
      %929 = vmatprep.mubr.bf16.mxu0 0
      %930 = vmatmul.mubr.bf16.gmra.mrb[0].mxu0 %v868
      %v931 = vpop.f32.mrb[0].mxu0
      %v932 = vadd.f32 0.0, %v931
      %v933 = vpop.f32.mrb[0].mxu0
      %v934 = vpop.f32.mrb[0].mxu0
      %v935 = vadd.f32 0.0, %v934
      %v936 = vpop.f32.mrb[0].mxu0
      %937 = vmatprep.mubr.bf16.mxu0 0
      %938 = vmatmul.mubr.bf16.gmra.mrb[0].mxu0 %v871
      %v939 = vpop.f32.mrb[0].mxu0
      %v940 = vadd.f32 0.0, %v939
      %v941 = vpop.f32.mrb[0].mxu0
      %v942 = vpop.f32.mrb[0].mxu0
      %v943 = vpop.f32.mrb[0].mxu0
      %944 = vdwg.mxu0
      %v945 = vadd.f32 %v825, %v908
      %v946 = vadd.f32 %v826, %v911
      %v947 = vadd.f32 %v827, %v916
      %v948 = vadd.f32 %v828, %v919
      %v949 = vadd.f32 %v829, %v924
      %v950 = vadd.f32 %v830, %v927
      %v951 = vadd.f32 %v831, %v932
      %v952 = vadd.f32 %v832, %v935
      %v953 = vadd.f32 %v833, %v940
      %v954 = vld [vmem:[%s714 + $0x1] sm:$0xff]
      %v955 = vld [vmem:[%s714 + $0x9] sm:$0xff]
      %v956 = vld [vmem:[%s714 + $0x11] sm:$0xff]
      %v957 = vld [vmem:[%s714 + $0x19] sm:$0xff]
      %v958 = vld [vmem:[%s714 + $0x21] sm:$0xff]
      %v959 = vld [vmem:[%s714 + $0x29] sm:$0xff]
      %v960 = vld [vmem:[%s714 + $0x31] sm:$0xff]
      %v961 = vld [vmem:[%s714 + $0x39] sm:$0xff]
      %v962 = vld [vmem:[%s714 + $0x41] sm:$0xff]
      %v963 = vpack.c.bf16 %v955, %v954
      %v964 = vpack.c.bf16 %v957, %v956
      %v965 = vpack.c.bf16 %v959, %v958
      %v966 = vpack.c.bf16 %v961, %v960
      %v967 = vpack.c.bf16 %v962, %v962
      %s968 = scalar_lea.vmem %s1, 40
      %v969 = vld [vmem:[%s968] sm:$0xf]
      %v970 = vld [vmem:[%s968 + $0x4] sm:$0xf]
      %v973 = vunpack.c.l.b16 %v969
      %v974 = vunpack.c.l.b16 %v970
      %v975 = vpack.c.b16 %v974, %v973
      %v978 = vsel %vm414, %v963, 0
      %v981 = vsel %vm414, %v964, 0
      %v984 = vsel %vm414, %v965, 0
      %v987 = vsel %vm414, %v966, 0
      %v990 = vsel %vm414, %v967, 0
      %992 = vmatprep.subr.bf16.mxu0 0
      %993 = vmatpush1.bf16.msra.mxu0 %v975
      %994 = vmatprep.subr.bf16.mxu0 0
      %995 = vmatpush1.bf16.msra.mxu0 0
      %996 = vmatprep.subr.bf16.mxu0 0
      %997 = vmatpush1.bf16.msra.mxu0 0
      %998 = vmatprep.subr.bf16.mxu0 0
      %999 = vmatpush1.bf16.msra.mxu0 0
      %1000 = vmatprep.subr.bf16.mxu0 0
      %1001 = vmatpush1.bf16.msra.mxu0 0
      %1002 = vmatprep.subr.bf16.mxu0 0
      %1003 = vmatpush1.bf16.msra.mxu0 0
      %1004 = vmatprep.subr.bf16.mxu0 0
      %1005 = vmatpush1.bf16.msra.mxu0 0
      %1006 = vmatprep.subr.bf16.mxu0 0
      %1007 = vmatpush1.bf16.msra.mxu0 0
      %1008 = vmatprep.subr.bf16.mxu0 0
      %1009 = vmatpush1.bf16.msra.mxu0 0
      %1010 = vmatprep.subr.bf16.mxu0 0
      %1011 = vmatpush1.bf16.msra.mxu0 0
      %1012 = vmatprep.subr.bf16.mxu0 0
      %1013 = vmatpush1.bf16.msra.mxu0 0
      %1014 = vmatprep.subr.bf16.mxu0 0
      %1015 = vmatpush1.bf16.msra.mxu0 0
      %1016 = vmatprep.subr.bf16.mxu0 0
      %1017 = vmatpush1.bf16.msra.mxu0 0
      %1018 = vmatprep.subr.bf16.mxu0 0
      %1019 = vmatpush1.bf16.msra.mxu0 0
      %1020 = vmatprep.subr.bf16.mxu0 0
      %1021 = vmatpush1.bf16.msra.mxu0 0
      %1022 = vmatprep.subr.bf16.mxu0 0
      %1023 = vmatpush1.bf16.msra.mxu0 0
      %1024 = vmatprep.mubr.bf16.mxu0 0
      %1025 = vmatmul.mubr.bf16.gmra.mrb[0].mxu0 %v978
      %v1026 = vpop.f32.mrb[0].mxu0
      %v1027 = vadd.f32 0.0, %v1026
      %v1028 = vpop.f32.mrb[0].mxu0
      %v1029 = vpop.f32.mrb[0].mxu0
      %v1030 = vadd.f32 0.0, %v1029
      %v1031 = vpop.f32.mrb[0].mxu0
      %1032 = vmatprep.mubr.bf16.mxu0 0
      %1033 = vmatmul.mubr.bf16.gmra.mrb[0].mxu0 %v981
      %v1034 = vpop.f32.mrb[0].mxu0
      %v1035 = vadd.f32 0.0, %v1034
      %v1036 = vpop.f32.mrb[0].mxu0
      %v1037 = vpop.f32.mrb[0].mxu0
      %v1038 = vadd.f32 0.0, %v1037
      %v1039 = vpop.f32.mrb[0].mxu0
      %1040 = vmatprep.mubr.bf16.mxu0 0
      %1041 = vmatmul.mubr.bf16.gmra.mrb[0].mxu0 %v984
      %v1042 = vpop.f32.mrb[0].mxu0
      %v1043 = vadd.f32 0.0, %v1042
      %v1044 = vpop.f32.mrb[0].mxu0
      %v1045 = vpop.f32.mrb[0].mxu0
      %v1046 = vadd.f32 0.0, %v1045
      %v1047 = vpop.f32.mrb[0].mxu0
      %1048 = vmatprep.mubr.bf16.mxu0 0
      %1049 = vmatmul.mubr.bf16.gmra.mrb[0].mxu0 %v987
      %v1050 = vpop.f32.mrb[0].mxu0
      %v1051 = vadd.f32 0.0, %v1050
      %v1052 = vpop.f32.mrb[0].mxu0
      %v1053 = vpop.f32.mrb[0].mxu0
      %v1054 = vadd.f32 0.0, %v1053
      %v1055 = vpop.f32.mrb[0].mxu0
      %1056 = vmatprep.mubr.bf16.mxu0 0
      %1057 = vmatmul.mubr.bf16.gmra.mrb[0].mxu0 %v990
      %v1058 = vpop.f32.mrb[0].mxu0
      %v1059 = vadd.f32 0.0, %v1058
      %v1060 = vpop.f32.mrb[0].mxu0
      %v1061 = vpop.f32.mrb[0].mxu0
      %v1062 = vpop.f32.mrb[0].mxu0
      %1063 = vdwg.mxu0
      %v1064 = vadd.f32 %v945, %v1027
      %v1065 = vadd.f32 %v946, %v1030
      %v1066 = vadd.f32 %v947, %v1035
      %v1067 = vadd.f32 %v948, %v1038
      %v1068 = vadd.f32 %v949, %v1043
      %v1069 = vadd.f32 %v950, %v1046
      %v1070 = vadd.f32 %v951, %v1051
      %v1071 = vadd.f32 %v952, %v1054
      %v1072 = vadd.f32 %v953, %v1059
      %v1073 = vld [vmem:[%s362 + $0x9] sm:$0xff]
      %v1074 = vld [vmem:[%s362 + $0x11] sm:$0xff]
      %v1075 = vld [vmem:[%s362 + $0x19] sm:$0xff]
      %v1076 = vld [vmem:[%s362 + $0x21] sm:$0xff]
      %v1077 = vld [vmem:[%s362 + $0x29] sm:$0xff]
      %v1078 = vld [vmem:[%s362 + $0x31] sm:$0xff]
      %v1079 = vld [vmem:[%s362 + $0x39] sm:$0xff]
      %v1080 = vld [vmem:[%s362 + $0x41] sm:$0xff]
      %v1081 = vld [vmem:[%s362 + $0x49] sm:$0xff]
      %v1082 = vpack.c.bf16 %v1074, %v1073
      %v1083 = vpack.c.bf16 %v1076, %v1075
      %v1084 = vpack.c.bf16 %v1078, %v1077
      %v1085 = vpack.c.bf16 %v1080, %v1079
      %v1086 = vpack.c.bf16 %v1081, %v1081
      %s1087 = scalar_lea.vmem %s1, 48
      %v1088 = vld [vmem:[%s1087] sm:$0xf]
      %v1089 = vld [vmem:[%s1087 + $0x4] sm:$0xf]
      %v1092 = vunpack.c.l.b16 %v1088
      %v1093 = vunpack.c.l.b16 %v1089
      %v1094 = vpack.c.b16 %v1093, %v1092
      %v1097 = vsel %vm414, %v1082, 0
      %v1100 = vsel %vm414, %v1083, 0
      %v1103 = vsel %vm414, %v1084, 0
      %v1106 = vsel %vm414, %v1085, 0
      %v1109 = vsel %vm414, %v1086, 0
      %1111 = vmatprep.subr.bf16.mxu0 0
      %1112 = vmatpush1.bf16.msra.mxu0 %v1094
      %1113 = vmatprep.subr.bf16.mxu0 0
      %1114 = vmatpush1.bf16.msra.mxu0 0
      %1115 = vmatprep.subr.bf16.mxu0 0
      %1116 = vmatpush1.bf16.msra.mxu0 0
      %1117 = vmatprep.subr.bf16.mxu0 0
      %1118 = vmatpush1.bf16.msra.mxu0 0
      %1119 = vmatprep.subr.bf16.mxu0 0
      %1120 = vmatpush1.bf16.msra.mxu0 0
      %1121 = vmatprep.subr.bf16.mxu0 0
      %1122 = vmatpush1.bf16.msra.mxu0 0
      %1123 = vmatprep.subr.bf16.mxu0 0
      %1124 = vmatpush1.bf16.msra.mxu0 0
      %1125 = vmatprep.subr.bf16.mxu0 0
      %1126 = vmatpush1.bf16.msra.mxu0 0
      %1127 = vmatprep.subr.bf16.mxu0 0
      %1128 = vmatpush1.bf16.msra.mxu0 0
      %1129 = vmatprep.subr.bf16.mxu0 0
      %1130 = vmatpush1.bf16.msra.mxu0 0
      %1131 = vmatprep.subr.bf16.mxu0 0
      %1132 = vmatpush1.bf16.msra.mxu0 0
      %1133 = vmatprep.subr.bf16.mxu0 0
      %1134 = vmatpush1.bf16.msra.mxu0 0
      %1135 = vmatprep.subr.bf16.mxu0 0
      %1136 = vmatpush1.bf16.msra.mxu0 0
      %1137 = vmatprep.subr.bf16.mxu0 0
      %1138 = vmatpush1.bf16.msra.mxu0 0
      %1139 = vmatprep.subr.bf16.mxu0 0
      %1140 = vmatpush1.bf16.msra.mxu0 0
      %1141 = vmatprep.subr.bf16.mxu0 0
      %1142 = vmatpush1.bf16.msra.mxu0 0
      %1143 = vmatprep.mubr.bf16.mxu0 0
      %1144 = vmatmul.mubr.bf16.gmra.mrb[0].mxu0 %v1097
      %v1145 = vpop.f32.mrb[0].mxu0
      %v1146 = vadd.f32 0.0, %v1145
      %v1147 = vpop.f32.mrb[0].mxu0
      %v1148 = vpop.f32.mrb[0].mxu0
      %v1149 = vadd.f32 0.0, %v1148
      %v1150 = vpop.f32.mrb[0].mxu0
      %1151 = vmatprep.mubr.bf16.mxu0 0
      %1152 = vmatmul.mubr.bf16.gmra.mrb[0].mxu0 %v1100
      %v1153 = vpop.f32.mrb[0].mxu0
      %v1154 = vadd.f32 0.0, %v1153
      %v1155 = vpop.f32.mrb[0].mxu0
      %v1156 = vpop.f32.mrb[0].mxu0
      %v1157 = vadd.f32 0.0, %v1156
      %v1158 = vpop.f32.mrb[0].mxu0
      %1159 = vmatprep.mubr.bf16.mxu0 0
      %1160 = vmatmul.mubr.bf16.gmra.mrb[0].mxu0 %v1103
      %v1161 = vpop.f32.mrb[0].mxu0
      %v1162 = vadd.f32 0.0, %v1161
      %v1163 = vpop.f32.mrb[0].mxu0
      %v1164 = vpop.f32.mrb[0].mxu0
      %v1165 = vadd.f32 0.0, %v1164
      %v1166 = vpop.f32.mrb[0].mxu0
      %1167 = vmatprep.mubr.bf16.mxu0 0
      %1168 = vmatmul.mubr.bf16.gmra.mrb[0].mxu0 %v1106
      %v1169 = vpop.f32.mrb[0].mxu0
      %v1170 = vadd.f32 0.0, %v1169
      %v1171 = vpop.f32.mrb[0].mxu0
      %v1172 = vpop.f32.mrb[0].mxu0
      %v1173 = vadd.f32 0.0, %v1172
      %v1174 = vpop.f32.mrb[0].mxu0
      %1175 = vmatprep.mubr.bf16.mxu0 0
      %1176 = vmatmul.mubr.bf16.gmra.mrb[0].mxu0 %v1109
      %v1177 = vpop.f32.mrb[0].mxu0
      %v1178 = vadd.f32 0.0, %v1177
      %v1179 = vpop.f32.mrb[0].mxu0
      %v1180 = vpop.f32.mrb[0].mxu0
      %v1181 = vpop.f32.mrb[0].mxu0
      %1182 = vdwg.mxu0
      %v1183 = vadd.f32 %v1064, %v1146
      %v1184 = vadd.f32 %v1065, %v1149
      %v1185 = vadd.f32 %v1066, %v1154
      %v1186 = vadd.f32 %v1067, %v1157
      %v1187 = vadd.f32 %v1068, %v1162
      %v1188 = vadd.f32 %v1069, %v1165
      %v1189 = vadd.f32 %v1070, %v1170
      %v1190 = vadd.f32 %v1071, %v1173
      %v1191 = vadd.f32 %v1072, %v1178
      %v1192 = vld [vmem:[%s390 + $0x9] sm:$0xff]
      %v1193 = vld [vmem:[%s390 + $0x11] sm:$0xff]
      %v1194 = vld [vmem:[%s390 + $0x19] sm:$0xff]
      %v1195 = vld [vmem:[%s390 + $0x21] sm:$0xff]
      %v1196 = vld [vmem:[%s390 + $0x29] sm:$0xff]
      %v1197 = vld [vmem:[%s390 + $0x31] sm:$0xff]
      %v1198 = vld [vmem:[%s390 + $0x39] sm:$0xff]
      %v1199 = vld [vmem:[%s390 + $0x41] sm:$0xff]
      %v1200 = vld [vmem:[%s390 + $0x49] sm:$0xff]
      %v1201 = vpack.c.bf16 %v1193, %v1192
      %v1202 = vpack.c.bf16 %v1195, %v1194
      %v1203 = vpack.c.bf16 %v1197, %v1196
      %v1204 = vpack.c.bf16 %v1199, %v1198
      %v1205 = vpack.c.bf16 %v1200, %v1200
      %s1206 = scalar_lea.vmem %s1, 56
      %v1207 = vld [vmem:[%s1206] sm:$0xf]
      %v1208 = vld [vmem:[%s1206 + $0x4] sm:$0xf]
      %v1211 = vunpack.c.l.b16 %v1207
      %v1212 = vunpack.c.l.b16 %v1208
      %v1213 = vpack.c.b16 %v1212, %v1211
      %v1216 = vsel %vm414, %v1201, 0
      %v1219 = vsel %vm414, %v1202, 0
      %v1222 = vsel %vm414, %v1203, 0
      %v1225 = vsel %vm414, %v1204, 0
      %v1228 = vsel %vm414, %v1205, 0
      %1230 = vmatprep.subr.bf16.mxu0 0
      %1231 = vmatpush1.bf16.msra.mxu0 %v1213
      %1232 = vmatprep.subr.bf16.mxu0 0
      %1233 = vmatpush1.bf16.msra.mxu0 0
      %1234 = vmatprep.subr.bf16.mxu0 0
      %1235 = vmatpush1.bf16.msra.mxu0 0
      %1236 = vmatprep.subr.bf16.mxu0 0
      %1237 = vmatpush1.bf16.msra.mxu0 0
      %1238 = vmatprep.subr.bf16.mxu0 0
      %1239 = vmatpush1.bf16.msra.mxu0 0
      %1240 = vmatprep.subr.bf16.mxu0 0
      %1241 = vmatpush1.bf16.msra.mxu0 0
      %1242 = vmatprep.subr.bf16.mxu0 0
      %1243 = vmatpush1.bf16.msra.mxu0 0
      %1244 = vmatprep.subr.bf16.mxu0 0
      %1245 = vmatpush1.bf16.msra.mxu0 0
      %1246 = vmatprep.subr.bf16.mxu0 0
      %1247 = vmatpush1.bf16.msra.mxu0 0
      %1248 = vmatprep.subr.bf16.mxu0 0
      %1249 = vmatpush1.bf16.msra.mxu0 0
      %1250 = vmatprep.subr.bf16.mxu0 0
      %1251 = vmatpush1.bf16.msra.mxu0 0
      %1252 = vmatprep.subr.bf16.mxu0 0
      %1253 = vmatpush1.bf16.msra.mxu0 0
      %1254 = vmatprep.subr.bf16.mxu0 0
      %1255 = vmatpush1.bf16.msra.mxu0 0
      %1256 = vmatprep.subr.bf16.mxu0 0
      %1257 = vmatpush1.bf16.msra.mxu0 0
      %1258 = vmatprep.subr.bf16.mxu0 0
      %1259 = vmatpush1.bf16.msra.mxu0 0
      %1260 = vmatprep.subr.bf16.mxu0 0
      %1261 = vmatpush1.bf16.msra.mxu0 0
      %1262 = vmatprep.mubr.bf16.mxu0 0
      %1263 = vmatmul.mubr.bf16.gmra.mrb[0].mxu0 %v1216
      %v1264 = vpop.f32.mrb[0].mxu0
      %v1265 = vadd.f32 0.0, %v1264
      %v1266 = vpop.f32.mrb[0].mxu0
      %v1267 = vpop.f32.mrb[0].mxu0
      %v1268 = vadd.f32 0.0, %v1267
      %v1269 = vpop.f32.mrb[0].mxu0
      %1270 = vmatprep.mubr.bf16.mxu0 0
      %1271 = vmatmul.mubr.bf16.gmra.mrb[0].mxu0 %v1219
      %v1272 = vpop.f32.mrb[0].mxu0
      %v1273 = vadd.f32 0.0, %v1272
      %v1274 = vpop.f32.mrb[0].mxu0
      %v1275 = vpop.f32.mrb[0].mxu0
      %v1276 = vadd.f32 0.0, %v1275
      %v1277 = vpop.f32.mrb[0].mxu0
      %1278 = vmatprep.mubr.bf16.mxu0 0
      %1279 = vmatmul.mubr.bf16.gmra.mrb[0].mxu0 %v1222
      %v1280 = vpop.f32.mrb[0].mxu0
      %v1281 = vadd.f32 0.0, %v1280
      %v1282 = vpop.f32.mrb[0].mxu0
      %v1283 = vpop.f32.mrb[0].mxu0
      %v1284 = vadd.f32 0.0, %v1283
      %v1285 = vpop.f32.mrb[0].mxu0
      %1286 = vmatprep.mubr.bf16.mxu0 0
      %1287 = vmatmul.mubr.bf16.gmra.mrb[0].mxu0 %v1225
      %v1288 = vpop.f32.mrb[0].mxu0
      %v1289 = vadd.f32 0.0, %v1288
      %v1290 = vpop.f32.mrb[0].mxu0
      %v1291 = vpop.f32.mrb[0].mxu0
      %v1292 = vadd.f32 0.0, %v1291
      %v1293 = vpop.f32.mrb[0].mxu0
      %1294 = vmatprep.mubr.bf16.mxu0 0
      %1295 = vmatmul.mubr.bf16.gmra.mrb[0].mxu0 %v1228
      %v1296 = vpop.f32.mrb[0].mxu0
      %v1297 = vadd.f32 0.0, %v1296
      %v1298 = vpop.f32.mrb[0].mxu0
      %v1299 = vpop.f32.mrb[0].mxu0
      %v1300 = vpop.f32.mrb[0].mxu0
      %1301 = vdwg.mxu0
      %v1302 = vadd.f32 %v1183, %v1265
      %v1303 = vadd.f32 %v1184, %v1268
      %v1304 = vadd.f32 %v1185, %v1273
      %v1305 = vadd.f32 %v1186, %v1276
      %v1306 = vadd.f32 %v1187, %v1281
      %v1307 = vadd.f32 %v1188, %v1284
      %v1308 = vadd.f32 %v1189, %v1289
      %v1309 = vadd.f32 %v1190, %v1292
      %v1310 = vadd.f32 %v1191, %v1297
      %v1311 = vld [vmem:[%s362 + $0xa] sm:$0xff]
      %v1312 = vld [vmem:[%s362 + $0x12] sm:$0xff]
      %v1313 = vld [vmem:[%s362 + $0x1a] sm:$0xff]
      %v1314 = vld [vmem:[%s362 + $0x22] sm:$0xff]
      %v1315 = vld [vmem:[%s362 + $0x2a] sm:$0xff]
      %v1316 = vld [vmem:[%s362 + $0x32] sm:$0xff]
      %v1317 = vld [vmem:[%s362 + $0x3a] sm:$0xff]
      %v1318 = vld [vmem:[%s362 + $0x42] sm:$0xff]
      %v1319 = vld [vmem:[%s362 + $0x4a] sm:$0xff]
      %v1320 = vpack.c.bf16 %v1312, %v1311
      %v1321 = vpack.c.bf16 %v1314, %v1313
      %v1322 = vpack.c.bf16 %v1316, %v1315
      %v1323 = vpack.c.bf16 %v1318, %v1317
      %v1324 = vpack.c.bf16 %v1319, %v1319
      %s1325 = scalar_lea.vmem %s1, 64
      %v1326 = vld [vmem:[%s1325] sm:$0xf]
      %v1327 = vld [vmem:[%s1325 + $0x4] sm:$0xf]
      %v1330 = vunpack.c.l.b16 %v1326
      %v1331 = vunpack.c.l.b16 %v1327
      %v1332 = vpack.c.b16 %v1331, %v1330
      %v1335 = vsel %vm414, %v1320, 0
      %v1338 = vsel %vm414, %v1321, 0
      %v1341 = vsel %vm414, %v1322, 0
      %v1344 = vsel %vm414, %v1323, 0
      %v1347 = vsel %vm414, %v1324, 0
      %1349 = vmatprep.subr.bf16.mxu0 0
      %1350 = vmatpush1.bf16.msra.mxu0 %v1332
      %1351 = vmatprep.subr.bf16.mxu0 0
      %1352 = vmatpush1.bf16.msra.mxu0 0
      %1353 = vmatprep.subr.bf16.mxu0 0
      %1354 = vmatpush1.bf16.msra.mxu0 0
      %1355 = vmatprep.subr.bf16.mxu0 0
      %1356 = vmatpush1.bf16.msra.mxu0 0
      %1357 = vmatprep.subr.bf16.mxu0 0
      %1358 = vmatpush1.bf16.msra.mxu0 0
      %1359 = vmatprep.subr.bf16.mxu0 0
      %1360 = vmatpush1.bf16.msra.mxu0 0
      %1361 = vmatprep.subr.bf16.mxu0 0
      %1362 = vmatpush1.bf16.msra.mxu0 0
      %1363 = vmatprep.subr.bf16.mxu0 0
      %1364 = vmatpush1.bf16.msra.mxu0 0
      %1365 = vmatprep.subr.bf16.mxu0 0
      %1366 = vmatpush1.bf16.msra.mxu0 0
      %1367 = vmatprep.subr.bf16.mxu0 0
      %1368 = vmatpush1.bf16.msra.mxu0 0
      %1369 = vmatprep.subr.bf16.mxu0 0
      %1370 = vmatpush1.bf16.msra.mxu0 0
      %1371 = vmatprep.subr.bf16.mxu0 0
      %1372 = vmatpush1.bf16.msra.mxu0 0
      %1373 = vmatprep.subr.bf16.mxu0 0
      %1374 = vmatpush1.bf16.msra.mxu0 0
      %1375 = vmatprep.subr.bf16.mxu0 0
      %1376 = vmatpush1.bf16.msra.mxu0 0
      %1377 = vmatprep.subr.bf16.mxu0 0
      %1378 = vmatpush1.bf16.msra.mxu0 0
      %1379 = vmatprep.subr.bf16.mxu0 0
      %1380 = vmatpush1.bf16.msra.mxu0 0
      %1381 = vmatprep.mubr.bf16.mxu0 0
      %1382 = vmatmul.mubr.bf16.gmra.mrb[0].mxu0 %v1335
      %v1383 = vpop.f32.mrb[0].mxu0
      %v1384 = vadd.f32 0.0, %v1383
      %v1385 = vpop.f32.mrb[0].mxu0
      %v1386 = vpop.f32.mrb[0].mxu0
      %v1387 = vadd.f32 0.0, %v1386
      %v1388 = vpop.f32.mrb[0].mxu0
      %1389 = vmatprep.mubr.bf16.mxu0 0
      %1390 = vmatmul.mubr.bf16.gmra.mrb[0].mxu0 %v1338
      %v1391 = vpop.f32.mrb[0].mxu0
      %v1392 = vadd.f32 0.0, %v1391
      %v1393 = vpop.f32.mrb[0].mxu0
      %v1394 = vpop.f32.mrb[0].mxu0
      %v1395 = vadd.f32 0.0, %v1394
      %v1396 = vpop.f32.mrb[0].mxu0
      %1397 = vmatprep.mubr.bf16.mxu0 0
      %1398 = vmatmul.mubr.bf16.gmra.mrb[0].mxu0 %v1341
      %v1399 = vpop.f32.mrb[0].mxu0
      %v1400 = vadd.f32 0.0, %v1399
      %v1401 = vpop.f32.mrb[0].mxu0
      %v1402 = vpop.f32.mrb[0].mxu0
      %v1403 = vadd.f32 0.0, %v1402
      %v1404 = vpop.f32.mrb[0].mxu0
      %1405 = vmatprep.mubr.bf16.mxu0 0
      %1406 = vmatmul.mubr.bf16.gmra.mrb[0].mxu0 %v1344
      %v1407 = vpop.f32.mrb[0].mxu0
      %v1408 = vadd.f32 0.0, %v1407
      %v1409 = vpop.f32.mrb[0].mxu0
      %v1410 = vpop.f32.mrb[0].mxu0
      %v1411 = vadd.f32 0.0, %v1410
      %v1412 = vpop.f32.mrb[0].mxu0
      %1413 = vmatprep.mubr.bf16.mxu0 0
      %1414 = vmatmul.mubr.bf16.gmra.mrb[0].mxu0 %v1347
      %v1415 = vpop.f32.mrb[0].mxu0
      %v1416 = vadd.f32 0.0, %v1415
      %v1417 = vpop.f32.mrb[0].mxu0
      %v1418 = vpop.f32.mrb[0].mxu0
      %v1419 = vpop.f32.mrb[0].mxu0
      %1420 = vdwg.mxu0
      %v1421 = vadd.f32 %v1302, %v1384
      %v1422 = vadd.f32 %v1303, %v1387
      %v1423 = vadd.f32 %v1304, %v1392
      %v1424 = vadd.f32 %v1305, %v1395
      %v1425 = vadd.f32 %v1306, %v1400
      %v1426 = vadd.f32 %v1307, %v1403
      %v1427 = vadd.f32 %v1308, %v1408
      %v1428 = vadd.f32 %v1309, %v1411
      %v1429 = vadd.f32 %v1310, %v1416
      %v1430 = vld [vmem:[%s2] sm:$0xff]
      %v1431 = vld [vmem:[%s2 + $0x8] sm:$0xff]
      %v1432 = vld [vmem:[%s2 + $0x10] sm:$0xff]
      %v1433 = vld [vmem:[%s2 + $0x18] sm:$0xff]
      %v1434 = vld [vmem:[%s2 + $0x20] sm:$0xff]
      %v1435 = vld [vmem:[%s2 + $0x28] sm:$0xff]
      %v1436 = vld [vmem:[%s2 + $0x30] sm:$0xff]
      %v1437 = vld [vmem:[%s2 + $0x38] sm:$0xff]
      %v1438 = vld [vmem:[%s2 + $0x40] sm:$0xff]
      %1440 = vset.pattern.permute.xlu0 0
      %1441 = vperm.xlu0 %1440, %v1430
      %v1442 = vpop.permute.xlu0 %1441
      %1445 = vset.pattern.permute.xlu0 0
      %1446 = vperm.xlu0 %1445, %v1431
      %v1447 = vpop.permute.xlu0 %1446
      %1450 = vset.pattern.permute.xlu0 0
      %1451 = vperm.xlu0 %1450, %v1432
      %v1452 = vpop.permute.xlu0 %1451
      %1455 = vset.pattern.permute.xlu0 0
      %1456 = vperm.xlu0 %1455, %v1433
      %v1457 = vpop.permute.xlu0 %1456
      %1460 = vset.pattern.permute.xlu0 0
      %1461 = vperm.xlu0 %1460, %v1434
      %v1462 = vpop.permute.xlu0 %1461
      %1465 = vset.pattern.permute.xlu0 0
      %1466 = vperm.xlu0 %1465, %v1435
      %v1467 = vpop.permute.xlu0 %1466
      %1470 = vset.pattern.permute.xlu0 0
      %1471 = vperm.xlu0 %1470, %v1436
      %v1472 = vpop.permute.xlu0 %1471
      %1475 = vset.pattern.permute.xlu0 0
      %1476 = vperm.xlu0 %1475, %v1437
      %v1477 = vpop.permute.xlu0 %1476
      %1480 = vset.pattern.permute.xlu0 0
      %1481 = vperm.xlu0 %1480, %v1438
      %v1482 = vpop.permute.xlu0 %1481
      %v1484 = vmul.f32 %v1421, %v1442
      %v1485 = vmul.f32 %v1422, %v1447
      %v1486 = vmul.f32 %v1423, %v1452
      %v1487 = vmul.f32 %v1424, %v1457
      %v1488 = vmul.f32 %v1425, %v1462
      %v1489 = vmul.f32 %v1426, %v1467
      %v1490 = vmul.f32 %v1427, %v1472
      %v1491 = vmul.f32 %v1428, %v1477
      %v1492 = vmul.f32 %v1429, %v1482
      %vm1493 = vcmask 261120
      %v1494 = vsel %vm1493, %v1484, 0.0
      %v1495 = vsel %vm1493, %v1485, 0.0
      %v1496 = vadd.f32 %v1494, %v1495
      %v1497 = vsel %vm1493, %v1486, 0.0
      %v1498 = vadd.f32 %v1496, %v1497
      %v1499 = vsel %vm1493, %v1487, 0.0
      %v1500 = vadd.f32 %v1498, %v1499
      %v1501 = vsel %vm1493, %v1488, 0.0
      %v1502 = vadd.f32 %v1500, %v1501
      %v1503 = vsel %vm1493, %v1489, 0.0
      %v1504 = vadd.f32 %v1502, %v1503
      %v1505 = vsel %vm1493, %v1490, 0.0
      %v1506 = vadd.f32 %v1504, %v1505
      %v1507 = vsel %vm1493, %v1491, 0.0
      %v1508 = vadd.f32 %v1506, %v1507
      %v1509 = vsel %vm1493, %v1492, 0.0
      %v1510 = vadd.f32 %v1508, %v1509
      %v1511 = vrot.slane %v1510, 4
      %v1512 = vadd.f32 %v1510, %v1511
      %v1513 = vrot.slane %v1512, 2
      %v1514 = vadd.f32 %v1512, %v1513
      %v1515 = vrot.slane %v1514, 1
      %v1516 = vadd.f32 %v1514, %v1515
      %v1517 = vmul.f32 %v1516, 0.015625
      %v1518 = vsub.f32 %v1421, %v1517
      %v1519 = vsub.f32 %v1422, %v1517
      %v1520 = vsub.f32 %v1423, %v1517
      %v1521 = vsub.f32 %v1424, %v1517
      %v1522 = vsub.f32 %v1425, %v1517
      %v1523 = vsub.f32 %v1426, %v1517
      %v1524 = vsub.f32 %v1427, %v1517
      %v1525 = vsub.f32 %v1428, %v1517
      %v1526 = vsub.f32 %v1429, %v1517
      %v1527 = vmul.f32 %v1518, %v1518
      %v1528 = vmul.f32 %v1519, %v1519
      %v1529 = vmul.f32 %v1520, %v1520
      %v1530 = vmul.f32 %v1521, %v1521
      %v1531 = vmul.f32 %v1522, %v1522
      %v1532 = vmul.f32 %v1523, %v1523
      %v1533 = vmul.f32 %v1524, %v1524
      %v1534 = vmul.f32 %v1525, %v1525
      %v1535 = vmul.f32 %v1526, %v1526
      %v1536 = vmul.f32 %v1527, %v1442
      %v1537 = vmul.f32 %v1528, %v1447
      %v1538 = vmul.f32 %v1529, %v1452
      %v1539 = vmul.f32 %v1530, %v1457
      %v1540 = vmul.f32 %v1531, %v1462
      %v1541 = vmul.f32 %v1532, %v1467
      %v1542 = vmul.f32 %v1533, %v1472
      %v1543 = vmul.f32 %v1534, %v1477
      %v1544 = vmul.f32 %v1535, %v1482
      %v1545 = vsel %vm1493, %v1536, 0.0
      %v1546 = vsel %vm1493, %v1537, 0.0
      %v1547 = vadd.f32 %v1545, %v1546
      %v1548 = vsel %vm1493, %v1538, 0.0
      %v1549 = vadd.f32 %v1547, %v1548
      %v1550 = vsel %vm1493, %v1539, 0.0
      %v1551 = vadd.f32 %v1549, %v1550
      %v1552 = vsel %vm1493, %v1540, 0.0
      %v1553 = vadd.f32 %v1551, %v1552
      %v1554 = vsel %vm1493, %v1541, 0.0
      %v1555 = vadd.f32 %v1553, %v1554
      %v1556 = vsel %vm1493, %v1542, 0.0
      %v1557 = vadd.f32 %v1555, %v1556
      %v1558 = vsel %vm1493, %v1543, 0.0
      %v1559 = vadd.f32 %v1557, %v1558
      %v1560 = vsel %vm1493, %v1544, 0.0
      %v1561 = vadd.f32 %v1559, %v1560
      %v1562 = vrot.slane %v1561, 4
      %v1563 = vadd.f32 %v1561, %v1562
      %v1564 = vrot.slane %v1563, 2
      %v1565 = vadd.f32 %v1563, %v1564
      %v1566 = vrot.slane %v1565, 1
      %v1567 = vadd.f32 %v1565, %v1566
      %v1568 = vmul.f32 %v1567, 0.015625
      %v1569 = vld [vmem:[%s3] sm:$0x1]
      %v1570 = vadd.f32 %v1568, 1e-05
      %v1571 = vrsqrt.pop %v1570
      %v1572 = vmul.f32 %v1569, %v1571
      %v1573 = vld [vmem:[%s4] sm:$0x1]
      %v1574 = vmul.f32 %v1517, %v1572
      %v1575 = vsub.f32 %v1573, %v1574
      %v1576 = vld [vmem:[%s5] sm:$0x1]
      %vm1577 = vcmp.gt.f32.partialorder %v1576, 0.0
      %v1578 = vld [vmem:[%s6] sm:$0x1]
      %v1579 = vsel %vm1577, %v1572, %v1578
      %v1580 = vld [vmem:[%s7] sm:$0x1]
      %v1581 = vsel %vm1577, %v1575, %v1580
      %v1583 = vlaneseq
      %v1584 = vshrl.u32 %v1583, 7
      %v1585 = vsub.s32 0, %v1584
      %v1586 = vrot.slane %v1579, %v1585
      %v1588 = vmul.f32 %v1421, %v1586
      %v1589 = vmul.f32 %v1422, %v1586
      %v1590 = vmul.f32 %v1423, %v1586
      %v1591 = vmul.f32 %v1424, %v1586
      %v1592 = vmul.f32 %v1425, %v1586
      %v1593 = vmul.f32 %v1426, %v1586
      %v1594 = vmul.f32 %v1427, %v1586
      %v1595 = vmul.f32 %v1428, %v1586
      %v1596 = vmul.f32 %v1429, %v1586
      %v1598 = vlaneseq
      %v1599 = vshrl.u32 %v1598, 7
      %v1600 = vsub.s32 0, %v1599
      %v1601 = vrot.slane %v1581, %v1600
      %v1603 = vadd.f32 %v1588, %v1601
      %v1604 = vadd.f32 %v1589, %v1601
      %v1605 = vadd.f32 %v1590, %v1601
      %v1606 = vadd.f32 %v1591, %v1601
      %v1607 = vadd.f32 %v1592, %v1601
      %v1608 = vadd.f32 %v1593, %v1601
      %v1609 = vadd.f32 %v1594, %v1601
      %v1610 = vadd.f32 %v1595, %v1601
      %v1611 = vadd.f32 %v1596, %v1601
      %vm1612 = vcmp.gt.f32.partialorder %v1603, 0.0
      %vm1613 = vcmp.gt.f32.partialorder %v1604, 0.0
      %vm1614 = vcmp.gt.f32.partialorder %v1605, 0.0
      %vm1615 = vcmp.gt.f32.partialorder %v1606, 0.0
      %vm1616 = vcmp.gt.f32.partialorder %v1607, 0.0
      %vm1617 = vcmp.gt.f32.partialorder %v1608, 0.0
      %vm1618 = vcmp.gt.f32.partialorder %v1609, 0.0
      %vm1619 = vcmp.gt.f32.partialorder %v1610, 0.0
      %vm1620 = vcmp.gt.f32.partialorder %v1611, 0.0
      %v1621 = vmul.f32 %v1603, 0.1
      %v1622 = vmul.f32 %v1604, 0.1
      %v1623 = vmul.f32 %v1605, 0.1
      %v1624 = vmul.f32 %v1606, 0.1
      %v1625 = vmul.f32 %v1607, 0.1
      %v1626 = vmul.f32 %v1608, 0.1
      %v1627 = vmul.f32 %v1609, 0.1
      %v1628 = vmul.f32 %v1610, 0.1
      %v1629 = vmul.f32 %v1611, 0.1
      %v1630 = vsel %vm1612, %v1603, %v1621
      %v1631 = vsel %vm1613, %v1604, %v1622
      %v1632 = vsel %vm1614, %v1605, %v1623
      %v1633 = vsel %vm1615, %v1606, %v1624
      %v1634 = vsel %vm1616, %v1607, %v1625
      %v1635 = vsel %vm1617, %v1608, %v1626
      %v1636 = vsel %vm1618, %v1609, %v1627
      %v1637 = vsel %vm1619, %v1610, %v1628
      %v1638 = vsel %vm1620, %v1611, %v1629
      %1639 = vst.msk [vmem:[%s367] sm:$0xff] %vm1493, %v1630
      %1640 = vst.msk [vmem:[%s367 + $0x8] sm:$0xff] %vm1493, %v1631
      %1641 = vst.msk [vmem:[%s367 + $0x10] sm:$0xff] %vm1493, %v1632
      %1642 = vst.msk [vmem:[%s367 + $0x18] sm:$0xff] %vm1493, %v1633
      %1643 = vst.msk [vmem:[%s367 + $0x20] sm:$0xff] %vm1493, %v1634
      %1644 = vst.msk [vmem:[%s367 + $0x28] sm:$0xff] %vm1493, %v1635
      %1645 = vst.msk [vmem:[%s367 + $0x30] sm:$0xff] %vm1493, %v1636
      %1646 = vst.msk [vmem:[%s367 + $0x38] sm:$0xff] %vm1493, %v1637
      %1647 = vst.msk [vmem:[%s367 + $0x40] sm:$0xff] %vm1493, %v1638
      %v1648 = vld [vmem:[%s834] sm:$0xff]
      %v1649 = vld [vmem:[%s834 + $0x8] sm:$0xff]
      %v1650 = vld [vmem:[%s834 + $0x10] sm:$0xff]
      %v1651 = vld [vmem:[%s834 + $0x18] sm:$0xff]
      %v1652 = vld [vmem:[%s834 + $0x20] sm:$0xff]
      %v1653 = vld [vmem:[%s834 + $0x28] sm:$0xff]
      %v1654 = vld [vmem:[%s834 + $0x30] sm:$0xff]
      %v1655 = vld [vmem:[%s834 + $0x38] sm:$0xff]
      %v1656 = vld [vmem:[%s834 + $0x40] sm:$0xff]
      %v1657 = vpack.c.bf16 %v1649, %v1648
      %v1658 = vpack.c.bf16 %v1651, %v1650
      %v1659 = vpack.c.bf16 %v1653, %v1652
      %v1660 = vpack.c.bf16 %v1655, %v1654
      %v1661 = vpack.c.bf16 %v1656, %v1656
      %v1662 = vld [vmem:[%s8] sm:$0xf]
      %v1663 = vld [vmem:[%s8 + $0x4] sm:$0xf]
      %v1666 = vunpack.c.l.b16 %v1662
      %v1667 = vunpack.c.l.b16 %v1663
      %v1668 = vpack.c.b16 %v1667, %v1666
      %v1671 = vsel %vm414, %v1657, 0
      %v1674 = vsel %vm414, %v1658, 0
      %v1677 = vsel %vm414, %v1659, 0
      %v1680 = vsel %vm414, %v1660, 0
      %v1683 = vsel %vm414, %v1661, 0
      %1685 = vmatprep.subr.bf16.mxu0 0
      %1686 = vmatpush1.bf16.msra.mxu0 %v1668
      %1687 = vmatprep.subr.bf16.mxu0 0
      %1688 = vmatpush1.bf16.msra.mxu0 0
      %1689 = vmatprep.subr.bf16.mxu0 0
      %1690 = vmatpush1.bf16.msra.mxu0 0
      %1691 = vmatprep.subr.bf16.mxu0 0
      %1692 = vmatpush1.bf16.msra.mxu0 0
      %1693 = vmatprep.subr.bf16.mxu0 0
      %1694 = vmatpush1.bf16.msra.mxu0 0
      %1695 = vmatprep.subr.bf16.mxu0 0
      %1696 = vmatpush1.bf16.msra.mxu0 0
      %1697 = vmatprep.subr.bf16.mxu0 0
      %1698 = vmatpush1.bf16.msra.mxu0 0
      %1699 = vmatprep.subr.bf16.mxu0 0
      %1700 = vmatpush1.bf16.msra.mxu0 0
      %1701 = vmatprep.subr.bf16.mxu0 0
      %1702 = vmatpush1.bf16.msra.mxu0 0
      %1703 = vmatprep.subr.bf16.mxu0 0
      %1704 = vmatpush1.bf16.msra.mxu0 0
      %1705 = vmatprep.subr.bf16.mxu0 0
      %1706 = vmatpush1.bf16.msra.mxu0 0
      %1707 = vmatprep.subr.bf16.mxu0 0
      %1708 = vmatpush1.bf16.msra.mxu0 0
      %1709 = vmatprep.subr.bf16.mxu0 0
      %1710 = vmatpush1.bf16.msra.mxu0 0
      %1711 = vmatprep.subr.bf16.mxu0 0
      %1712 = vmatpush1.bf16.msra.mxu0 0
      %1713 = vmatprep.subr.bf16.mxu0 0
      %1714 = vmatpush1.bf16.msra.mxu0 0
      %1715 = vmatprep.subr.bf16.mxu0 0
      %1716 = vmatpush1.bf16.msra.mxu0 0
      %1717 = vmatprep.mubr.bf16.mxu0 0
      %1718 = vmatmul.mubr.bf16.gmra.mrb[0].mxu0 %v1671
      %v1719 = vpop.f32.mrb[0].mxu0
      %v1720 = vadd.f32 0.0, %v1719
      %v1721 = vpop.f32.mrb[0].mxu0
      %v1722 = vpop.f32.mrb[0].mxu0
      %v1723 = vadd.f32 0.0, %v1722
      %v1724 = vpop.f32.mrb[0].mxu0
      %1725 = vmatprep.mubr.bf16.mxu0 0
      %1726 = vmatmul.mubr.bf16.gmra.mrb[0].mxu0 %v1674
      %v1727 = vpop.f32.mrb[0].mxu0
      %v1728 = vadd.f32 0.0, %v1727
      %v1729 = vpop.f32.mrb[0].mxu0
      %v1730 = vpop.f32.mrb[0].mxu0
      %v1731 = vadd.f32 0.0, %v1730
      %v1732 = vpop.f32.mrb[0].mxu0
      %1733 = vmatprep.mubr.bf16.mxu0 0
      %1734 = vmatmul.mubr.bf16.gmra.mrb[0].mxu0 %v1677
      %v1735 = vpop.f32.mrb[0].mxu0
      %v1736 = vadd.f32 0.0, %v1735
      %v1737 = vpop.f32.mrb[0].mxu0
      %v1738 = vpop.f32.mrb[0].mxu0
      %v1739 = vadd.f32 0.0, %v1738
      %v1740 = vpop.f32.mrb[0].mxu0
      %1741 = vmatprep.mubr.bf16.mxu0 0
      %1742 = vmatmul.mubr.bf16.gmra.mrb[0].mxu0 %v1680
      %v1743 = vpop.f32.mrb[0].mxu0
      %v1744 = vadd.f32 0.0, %v1743
      %v1745 = vpop.f32.mrb[0].mxu0
      %v1746 = vpop.f32.mrb[0].mxu0
      %v1747 = vadd.f32 0.0, %v1746
      %v1748 = vpop.f32.mrb[0].mxu0
      %1749 = vmatprep.mubr.bf16.mxu0 0
      %1750 = vmatmul.mubr.bf16.gmra.mrb[0].mxu0 %v1683
      %v1751 = vpop.f32.mrb[0].mxu0
      %v1752 = vadd.f32 0.0, %v1751
      %v1753 = vpop.f32.mrb[0].mxu0
      %v1754 = vpop.f32.mrb[0].mxu0
      %v1755 = vpop.f32.mrb[0].mxu0
      %1756 = vdwg.mxu0
      %1757 = vst.msk [vmem:[%s372] sm:$0xff] %vm1493, %v1720
      %1758 = vst.msk [vmem:[%s372 + $0x8] sm:$0xff] %vm1493, %v1723
      %1759 = vst.msk [vmem:[%s372 + $0x10] sm:$0xff] %vm1493, %v1728
      %1760 = vst.msk [vmem:[%s372 + $0x18] sm:$0xff] %vm1493, %v1731
      %1761 = vst.msk [vmem:[%s372 + $0x20] sm:$0xff] %vm1493, %v1736
      %1762 = vst.msk [vmem:[%s372 + $0x28] sm:$0xff] %vm1493, %v1739
      %1763 = vst.msk [vmem:[%s372 + $0x30] sm:$0xff] %vm1493, %v1744
      %1764 = vst.msk [vmem:[%s372 + $0x38] sm:$0xff] %vm1493, %v1747
      %1765 = vst.msk [vmem:[%s372 + $0x40] sm:$0xff] %vm1493, %v1752
      %p1766 = scmp.lt.s32.totalorder %s22, 1
      %s1767 = scalar_select %p1766, %s22, 1
      %s1768 = smul.addr %s1767, 9
      %s1769 = smul.addr %s1768, 8
      %s1770 = scalar_lea.vmem %s9, %s1769
      %p1771 = scmp.lt.s32.totalorder %s22, 1
      %s1772 = scalar_select %p1771, %s22, 1
      %s1773 = smul.addr %s1772, 9
      %s1774 = smul.addr %s1773, 8
      %s1775 = scalar_lea.vmem %s10, %s1774
      // Predicated region
      $region57: #{_lambda_.7} parent=55 // pred_check
        %p1776 = pneg %p234
      $region58: #{_lambda_.7} parent=55 // pred_check_branch
        %1778 = sbr.rel (%p1776) target = $region60
      $region59: #{_lambda_.7} parent=55 // pred_region
        _
      $region60: #{_lambda_.7} parent=55 // pred_fallthru
        _
      // Predicated region
      $region61: #{_lambda_.7} parent=55 // pred_check
        %p1779 = pneg %p260
      $region62: #{_lambda_.7} parent=55 // pred_check_branch
        %1781 = sbr.rel (%p1779) target = $region64
      $region63: #{_lambda_.7} parent=55 // pred_region
        _
      $region64: #{_lambda_.7} parent=55 // pred_fallthru
        _
    $region56: #{_lambda_.7} parent=5 // pred_fallthru
      _
    %p1782 = scmp.le.s32.totalorder 2, %s17
    // Predicated region
    $region65: #{_lambda_.7} parent=5 // pred_check
      %p1783 = pneg %p1782
    $region66: #{_lambda_.7} parent=5 // pred_check_branch
      %1785 = sbr.rel (%p1783) target = $region68
    $region67: #{_lambda_.7} parent=5 // pred_region
      %s1786 = ssub.s32 %s17, 2
      // Predicated region
      $region69: #{_lambda_.7} parent=67 // pred_check
        %p1787 = pneg %p240
      $region70: #{_lambda_.7} parent=67 // pred_check_branch
        %1789 = sbr.rel (%p1787) target = $region72
      $region71: #{_lambda_.7} parent=67 // pred_region
        %p1790 = scmp.lt.s32.totalorder %s23, 1
        %s1791 = scalar_select %p1790, %s23, 1
        %s1792 = smul.addr %s1791, 9
        %s1793 = smul.addr %s1792, 8
        %s1794 = scalar_lea.vmem %s9, %s1793
      $region72: #{_lambda_.7} parent=67 // pred_fallthru
        _
      // Predicated region
      $region73: #{_lambda_.7} parent=67 // pred_check
        %p1795 = pneg %p266
      $region74: #{_lambda_.7} parent=67 // pred_check_branch
        %1797 = sbr.rel (%p1795) target = $region76
      $region75: #{_lambda_.7} parent=67 // pred_region
        %p1798 = scmp.lt.s32.totalorder %s23, 1
        %s1799 = scalar_select %p1798, %s23, 1
        %s1800 = smul.addr %s1799, 9
        %s1801 = smul.addr %s1800, 8
        %s1802 = scalar_lea.vmem %s10, %s1801
      $region76: #{_lambda_.7} parent=67 // pred_fallthru
        _
    $region68: #{_lambda_.7} parent=5 // pred_fallthru
      _
  $region6: #{_lambda_.7} parent=0 // loop_footer
    %s21 = sadd.s32 1, %s17
  $region7: #{_lambda_.7} parent=0 // loop_footer_branch
    %16 = sbr.rel target = $region3
  $region8: #{_lambda_.7} parent=0 // loop_exit
    _

// kernel: _lambda_.8
$region0: #{_lambda_.8}
  #allocation0 [shape = 'u32[]', space=smem, size = 0x4, offset = 0x4, fixed_abs, tag = 'smem constant byte address 0x4 - core index']
  #allocation1 [shape = 'u32[144,128]{1,0:T(1,128)}', space=vmem, size = 0x12000, scoped, tag = 'internal scratch']
  %s0 = inlined_call_operand.vmem [shape: f32[2,1,102,32], index: 0, kind: input, shape index: {}]
  %s1 = inlined_call_operand.vmem [shape: bf16[9,32,32], index: 1, kind: input, shape index: {}]
  %s2 = inlined_call_operand.vmem [shape: f32[2,80,32], index: 2, kind: input, shape index: {}]
  %s3 = inlined_call_operand.vmem [shape: f32[2,80,32], index: 3, kind: output, shape index: {}]
  %s4 = sld [smem:[#allocation0]]
  $region45: #{_lambda_.8} parent=0
    _
  %s6 = ssub.s32 1, %s4
  %s7 = scalar_select 0, %s6, %s4
  loop: start=0, step=1, limit=4
  $region2: #{_lambda_.8} parent=0 // loop_pre_header
    _
  $region3: #{_lambda_.8} parent=0 // loop_header
    %s9 = sphi 0, %s13
    %p10 = scmp.ge.s32.totalorder %s9, 4
    %s19 = sphi 0, %s21
    %s22 = sphi 0, %s19
    %s23 = sphi 0, %s22
    %s39 = sphi 0, %s23
    %s43 = sphi 0, %s43
    %s45 = sphi 0, %s43
    %s46 = sphi 0, %s45
    %s60 = sphi 0, %s46
    %s66 = sphi 0, %s68
    %s69 = sphi 0, %s66
    %s70 = sphi 0, %s69
    %s86 = sphi 0, %s70
    %s92 = sphi 0, %s94
    %s95 = sphi 0, %s92
    %s96 = sphi 0, %s95
    %s112 = sphi 0, %s96
  $region4: #{_lambda_.8} parent=0 // loop_header_branch
    %12 = sbr.rel (%p10) target = $region8
  $region5: #{_lambda_.8} parent=0 // loop_body
    %s14 = ssub.s32 %s9, 1
    %s15 = ssub.s32 %s9, 2
    %s16 = sadd.s32 %s9, 1
    %s17 = ssub.s32 %s9, %s16
    %p18 = scmp.eq.s32.totalorder %s17, 0
    %s20 = sadd.s32 %s19, 1
    %s21 = scalar_select %p18, %s19, %s20
    %p24 = pneg %p18
    %p25 = scmp.eq.s32.totalorder %s9, 1
    %p26 = por %p24, %p25
    %p27 = scmp.ne.s32.totalorder %s19, %s22
    %p28 = scmp.eq.s32.totalorder %s9, 0
    %p29 = por %p27, %p28
    %p30 = scmp.ne.s32.totalorder %s19, %s22
    %p31 = scmp.eq.s32.totalorder %s14, 1
    %p32 = por %p30, %p31
    %p33 = scmp.ne.s32.totalorder %s22, %s23
    %p34 = scmp.eq.s32.totalorder %s14, 0
    %p35 = por %p33, %p34
    %p36 = scmp.ne.s32.totalorder %s22, %s23
    %p37 = scmp.eq.s32.totalorder %s15, 1
    %p38 = por %p36, %p37
    %p40 = scmp.ne.s32.totalorder %s23, %s39
    %p41 = scmp.eq.s32.totalorder %s15, 0
    %p42 = por %p40, %p41
    %s44 = sadd.s32 %s43, 1
    %p47 = scmp.eq.s32.totalorder %s9, 1
    %p48 = scmp.ne.s32.totalorder %s43, %s45
    %p49 = scmp.eq.s32.totalorder %s9, 0
    %p50 = por %p48, %p49
    %p51 = scmp.ne.s32.totalorder %s43, %s45
    %p52 = scmp.eq.s32.totalorder %s14, 1
    %p53 = por %p51, %p52
    %p54 = scmp.ne.s32.totalorder %s45, %s46
    %p55 = scmp.eq.s32.totalorder %s14, 0
    %p56 = por %p54, %p55
    %p57 = scmp.ne.s32.totalorder %s45, %s46
    %p58 = scmp.eq.s32.totalorder %s15, 1
    %p59 = por %p57, %p58
    %p61 = scmp.ne.s32.totalorder %s46, %s60
    %p62 = scmp.eq.s32.totalorder %s15, 0
    %p63 = por %p61, %p62
    %s64 = ssub.s32 %s9, %s16
    %p65 = scmp.eq.s32.totalorder %s64, 0
    %s67 = sadd.s32 %s66, 1
    %s68 = scalar_select %p65, %s66, %s67
    %p71 = pneg %p65
    %p72 = scmp.eq.s32.totalorder %s9, 1
    %p73 = por %p71, %p72
    %p74 = scmp.ne.s32.totalorder %s66, %s69
    %p75 = scmp.eq.s32.totalorder %s9, 0
    %p76 = por %p74, %p75
    %p77 = scmp.ne.s32.totalorder %s66, %s69
    %p78 = scmp.eq.s32.totalorder %s14, 1
    %p79 = por %p77, %p78
    %p80 = scmp.ne.s32.totalorder %s69, %s70
    %p81 = scmp.eq.s32.totalorder %s14, 0
    %p82 = por %p80, %p81
    %p83 = scmp.ne.s32.totalorder %s69, %s70
    %p84 = scmp.eq.s32.totalorder %s15, 1
    %p85 = por %p83, %p84
    %p87 = scmp.ne.s32.totalorder %s70, %s86
    %p88 = scmp.eq.s32.totalorder %s15, 0
    %p89 = por %p87, %p88
    %s90 = ssub.s32 %s9, %s16
    %p91 = scmp.eq.s32.totalorder %s90, 0
    %s93 = sadd.s32 %s92, 1
    %s94 = scalar_select %p91, %s92, %s93
    %p97 = pneg %p91
    %p98 = scmp.eq.s32.totalorder %s9, 1
    %p99 = por %p97, %p98
    %p100 = scmp.ne.s32.totalorder %s92, %s95
    %p101 = scmp.eq.s32.totalorder %s9, 0
    %p102 = por %p100, %p101
    %p103 = scmp.ne.s32.totalorder %s92, %s95
    %p104 = scmp.eq.s32.totalorder %s14, 1
    %p105 = por %p103, %p104
    %p106 = scmp.ne.s32.totalorder %s95, %s96
    %p107 = scmp.eq.s32.totalorder %s14, 0
    %p108 = por %p106, %p107
    %p109 = scmp.ne.s32.totalorder %s95, %s96
    %p110 = scmp.eq.s32.totalorder %s15, 1
    %p111 = por %p109, %p110
    %p113 = scmp.ne.s32.totalorder %s96, %s112
    %p114 = scmp.eq.s32.totalorder %s15, 0
    %p115 = por %p113, %p114
    %p116 = scmp.le.s32.totalorder 1, %s9
    %p117 = scmp.lt.s32.totalorder %s9, 3
    %p118 = pnand %p116, %p117
    %p119 = pneg %p118
    // Predicated region
    $region9: #{_lambda_.8} parent=5 // pred_check
      _
    $region10: #{_lambda_.8} parent=5 // pred_check_branch
      %121 = sbr.rel (%p118) target = $region12
    $region11: #{_lambda_.8} parent=5 // pred_region
      %s122 = ssub.s32 %s9, 1
      // Predicated region
      $region13: #{_lambda_.8} parent=11 // pred_check
        %p123 = pneg %p56
      $region14: #{_lambda_.8} parent=11 // pred_check_branch
        %125 = sbr.rel (%p123) target = $region16
      $region15: #{_lambda_.8} parent=11 // pred_region
        _
      $region16: #{_lambda_.8} parent=11 // pred_fallthru
        _
    $region12: #{_lambda_.8} parent=5 // pred_fallthru
      _
    %p126 = scmp.lt.s32.totalorder %s9, 2
    // Predicated region
    $region17: #{_lambda_.8} parent=5 // pred_check
      %p127 = pneg %p126
    $region18: #{_lambda_.8} parent=5 // pred_check_branch
      %129 = sbr.rel (%p127) target = $region20
    $region19: #{_lambda_.8} parent=5 // pred_region
      // Predicated region
      $region21: #{_lambda_.8} parent=19 // pred_check
        %p130 = pneg %p29
      $region22: #{_lambda_.8} parent=19 // pred_check_branch
        %132 = sbr.rel (%p130) target = $region24
      $region23: #{_lambda_.8} parent=19 // pred_region
        %p133 = scmp.lt.s32.totalorder %s9, 1
        %s134 = scalar_select %p133, %s9, 1
        %s135 = smul.addr %s134, 13
        %s136 = smul.addr %s135, 8
        %s137 = scalar_lea.vmem %s0, %s136
      $region24: #{_lambda_.8} parent=19 // pred_fallthru
        _
      // Predicated region
      $region25: #{_lambda_.8} parent=19 // pred_check
        %p138 = pneg %p76
      $region26: #{_lambda_.8} parent=19 // pred_check_branch
        %140 = sbr.rel (%p138) target = $region28
      $region27: #{_lambda_.8} parent=19 // pred_region
        %p141 = scmp.lt.s32.totalorder %s9, 1
        %s142 = scalar_select %p141, %s9, 1
        %s143 = smul.addr %s142, 10
        %s144 = smul.addr %s143, 8
        %s145 = scalar_lea.vmem %s2, %s144
      $region28: #{_lambda_.8} parent=19 // pred_fallthru
        _
    $region20: #{_lambda_.8} parent=5 // pred_fallthru
      _
    %p146 = scmp.le.s32.totalorder 1, %s9
    %p147 = scmp.lt.s32.totalorder %s9, 3
    %p148 = pnand %p146, %p147
    %p149 = pneg %p148
    // Predicated region
    $region29: #{_lambda_.8} parent=5 // pred_check
      _
    $region30: #{_lambda_.8} parent=5 // pred_check_branch
      %151 = sbr.rel (%p148) target = $region32
    $region31: #{_lambda_.8} parent=5 // pred_region
      %s152 = ssub.s32 %s9, 1
      %p153 = scmp.lt.s32.totalorder %s14, 1
      %s154 = scalar_select %p153, %s14, 1
      %s155 = smul.addr %s154, 13
      %s156 = smul.addr %s155, 8
      %s157 = scalar_lea.vmem %s0, %s156
      %p158 = pneg %p35
      %p159 = pneg %p32
      %p160 = pneg %p56
      %p161 = pneg %p53
      %p162 = scmp.lt.s32.totalorder %s14, 1
      %s163 = scalar_select %p162, %s14, 1
      %s164 = smul.addr %s163, 10
      %s165 = smul.addr %s164, 8
      %s166 = scalar_lea.vmem %s2, %s165
      %p167 = pneg %p82
      %p168 = pneg %p79
      %p169 = pneg %p108
      %p170 = pneg %p105
      %p171 = scmp.lt.s32.totalorder %s14, 1
      %s172 = scalar_select %p171, %s14, 1
      %s173 = smul.addr %s172, 10
      %s174 = smul.addr %s173, 8
      %s175 = scalar_lea.vmem %s3, %s174
      %p176 = scmp.lt.s32.totalorder %s14, 1
      %s177 = scalar_select %p176, %s14, 1
      %s178 = smul.addr %s177, 13
      %s179 = smul.addr %s178, 8
      %s180 = scalar_lea.vmem %s0, %s179
      %p181 = scmp.lt.s32.totalorder %s14, 1
      %s182 = scalar_select %p181, %s14, 1
      %s183 = smul.addr %s182, 10
      %s184 = smul.addr %s183, 8
      %s185 = scalar_lea.vmem %s2, %s184
      %p186 = scmp.lt.s32.totalorder %s14, 1
      %s187 = scalar_select %p186, %s14, 1
      %s188 = smul.addr %s187, 10
      %s189 = smul.addr %s188, 8
      %s190 = scalar_lea.vmem %s3, %s189
      %v192 = vld [vmem:[%s180] sm:$0xff]
      %v193 = vld [vmem:[%s180 + $0x8] sm:$0xff]
      %v194 = vld [vmem:[%s180 + $0x10] sm:$0xff]
      %v195 = vld [vmem:[%s180 + $0x18] sm:$0xff]
      %v196 = vld [vmem:[%s180 + $0x20] sm:$0xff]
      %v197 = vld [vmem:[%s180 + $0x28] sm:$0xff]
      %v198 = vld [vmem:[%s180 + $0x30] sm:$0xff]
      %v199 = vld [vmem:[%s180 + $0x38] sm:$0xff]
      %v200 = vld [vmem:[%s180 + $0x40] sm:$0xff]
      %v201 = vld [vmem:[%s180 + $0x48] sm:$0xff]
      %v202 = vpack.c.bf16 %v193, %v192
      %v203 = vpack.c.bf16 %v195, %v194
      %v204 = vpack.c.bf16 %v197, %v196
      %v205 = vpack.c.bf16 %v199, %v198
      %v206 = vpack.c.bf16 %v201, %v200
      %v207 = vld [vmem:[%s1] sm:$0xf]
      %v208 = vld [vmem:[%s1 + $0x4] sm:$0xf]
      %v209 = vld [vmem:[%s1 + $0x8] sm:$0xf]
      %v210 = vld [vmem:[%s1 + $0xc] sm:$0xf]
      %v211 = vld [vmem:[%s180 + $0x1] sm:$0xff]
      %v212 = vld [vmem:[%s180 + $0x9] sm:$0xff]
      %v213 = vld [vmem:[%s180 + $0x11] sm:$0xff]
      %v214 = vld [vmem:[%s180 + $0x19] sm:$0xff]
      %v215 = vld [vmem:[%s180 + $0x21] sm:$0xff]
      %v216 = vld [vmem:[%s180 + $0x29] sm:$0xff]
      %v217 = vld [vmem:[%s180 + $0x31] sm:$0xff]
      %v218 = vld [vmem:[%s180 + $0x39] sm:$0xff]
      %v219 = vld [vmem:[%s180 + $0x41] sm:$0xff]
      %v220 = vld [vmem:[%s180 + $0x49] sm:$0xff]
      %v221 = vpack.c.bf16 %v212, %v211
      %v222 = vpack.c.bf16 %v214, %v213
      %v223 = vpack.c.bf16 %v216, %v215
      %v224 = vpack.c.bf16 %v218, %v217
      %v225 = vpack.c.bf16 %v220, %v219
      %s226 = scalar_lea.vmem %s1, 16
      %v227 = vld [vmem:[%s226] sm:$0xf]
      %v228 = vld [vmem:[%s226 + $0x4] sm:$0xf]
      %v229 = vld [vmem:[%s226 + $0x8] sm:$0xf]
      %v230 = vld [vmem:[%s226 + $0xc] sm:$0xf]
      %v235 = vunpack.c.l.b16 %v227
      %v236 = vunpack.c.l.b16 %v228
      %v237 = vunpack.c.l.b16 %v229
      %v238 = vunpack.c.l.b16 %v230
      %v239 = vpack.c.b16 %v236, %v235
      %v240 = vpack.c.b16 %v238, %v237
      %vm243 = vcmask 261120
      %v245 = vsel %vm243, %v221, 0
      %v248 = vsel %vm243, %v222, 0
      %v251 = vsel %vm243, %v223, 0
      %v254 = vsel %vm243, %v224, 0
      %v257 = vsel %vm243, %v225, 0
      %259 = vmatprep.subr.bf16.mxu0 0
      %260 = vmatpush1.bf16.msra.mxu0 %v239
      %261 = vmatprep.subr.bf16.mxu0 0
      %262 = vmatpush1.bf16.msra.mxu0 %v240
      %263 = vmatprep.subr.bf16.mxu0 0
      %264 = vmatpush1.bf16.msra.mxu0 0
      %265 = vmatprep.subr.bf16.mxu0 0
      %266 = vmatpush1.bf16.msra.mxu0 0
      %267 = vmatprep.subr.bf16.mxu0 0
      %268 = vmatpush1.bf16.msra.mxu0 0
      %269 = vmatprep.subr.bf16.mxu0 0
      %270 = vmatpush1.bf16.msra.mxu0 0
      %271 = vmatprep.subr.bf16.mxu0 0
      %272 = vmatpush1.bf16.msra.mxu0 0
      %273 = vmatprep.subr.bf16.mxu0 0
      %274 = vmatpush1.bf16.msra.mxu0 0
      %275 = vmatprep.subr.bf16.mxu0 0
      %276 = vmatpush1.bf16.msra.mxu0 0
      %277 = vmatprep.subr.bf16.mxu0 0
      %278 = vmatpush1.bf16.msra.mxu0 0
      %279 = vmatprep.subr.bf16.mxu0 0
      %280 = vmatpush1.bf16.msra.mxu0 0
      %281 = vmatprep.subr.bf16.mxu0 0
      %282 = vmatpush1.bf16.msra.mxu0 0
      %283 = vmatprep.subr.bf16.mxu0 0
      %284 = vmatpush1.bf16.msra.mxu0 0
      %285 = vmatprep.subr.bf16.mxu0 0
      %286 = vmatpush1.bf16.msra.mxu0 0
      %287 = vmatprep.subr.bf16.mxu0 0
      %288 = vmatpush1.bf16.msra.mxu0 0
      %289 = vmatprep.subr.bf16.mxu0 0
      %290 = vmatpush1.bf16.msra.mxu0 0
      %291 = vmatprep.mubr.bf16.mxu0 0
      %292 = vmatmul.mubr.bf16.gmra.mrb[0].mxu0 %v245
      %v293 = vpop.f32.mrb[0].mxu0
      %v294 = vadd.f32 0.0, %v293
      %v295 = vpop.f32.mrb[0].mxu0
      %v296 = vpop.f32.mrb[0].mxu0
      %v297 = vadd.f32 0.0, %v296
      %v298 = vpop.f32.mrb[0].mxu0
      %299 = vmatprep.mubr.bf16.mxu0 0
      %300 = vmatmul.mubr.bf16.gmra.mrb[0].mxu0 %v248
      %v301 = vpop.f32.mrb[0].mxu0
      %v302 = vadd.f32 0.0, %v301
      %v303 = vpop.f32.mrb[0].mxu0
      %v304 = vpop.f32.mrb[0].mxu0
      %v305 = vadd.f32 0.0, %v304
      %v306 = vpop.f32.mrb[0].mxu0
      %307 = vmatprep.mubr.bf16.mxu0 0
      %308 = vmatmul.mubr.bf16.gmra.mrb[0].mxu0 %v251
      %v309 = vpop.f32.mrb[0].mxu0
      %v310 = vadd.f32 0.0, %v309
      %v311 = vpop.f32.mrb[0].mxu0
      %v312 = vpop.f32.mrb[0].mxu0
      %v313 = vadd.f32 0.0, %v312
      %v314 = vpop.f32.mrb[0].mxu0
      %315 = vmatprep.mubr.bf16.mxu0 0
      %316 = vmatmul.mubr.bf16.gmra.mrb[0].mxu0 %v254
      %v317 = vpop.f32.mrb[0].mxu0
      %v318 = vadd.f32 0.0, %v317
      %v319 = vpop.f32.mrb[0].mxu0
      %v320 = vpop.f32.mrb[0].mxu0
      %v321 = vadd.f32 0.0, %v320
      %v322 = vpop.f32.mrb[0].mxu0
      %323 = vmatprep.mubr.bf16.mxu0 0
      %324 = vmatmul.mubr.bf16.gmra.mrb[0].mxu0 %v257
      %v325 = vpop.f32.mrb[0].mxu0
      %v326 = vadd.f32 0.0, %v325
      %v327 = vpop.f32.mrb[0].mxu0
      %v328 = vpop.f32.mrb[0].mxu0
      %v329 = vadd.f32 0.0, %v328
      %v330 = vpop.f32.mrb[0].mxu0
      %331 = vdwg.mxu0
      %v336 = vunpack.c.l.b16 %v207
      %v337 = vunpack.c.l.b16 %v208
      %v338 = vunpack.c.l.b16 %v209
      %v339 = vunpack.c.l.b16 %v210
      %v340 = vpack.c.b16 %v337, %v336
      %v341 = vpack.c.b16 %v339, %v338
      %v345 = vsel %vm243, %v202, 0
      %v348 = vsel %vm243, %v203, 0
      %v351 = vsel %vm243, %v204, 0
      %v354 = vsel %vm243, %v205, 0
      %v357 = vsel %vm243, %v206, 0
      %359 = vmatprep.subr.bf16.mxu0 0
      %360 = vmatpush1.bf16.msra.mxu0 %v340
      %361 = vmatprep.subr.bf16.mxu0 0
      %362 = vmatpush1.bf16.msra.mxu0 %v341
      %363 = vmatprep.subr.bf16.mxu0 0
      %364 = vmatpush1.bf16.msra.mxu0 0
      %365 = vmatprep.subr.bf16.mxu0 0
      %366 = vmatpush1.bf16.msra.mxu0 0
      %367 = vmatprep.subr.bf16.mxu0 0
      %368 = vmatpush1.bf16.msra.mxu0 0
      %369 = vmatprep.subr.bf16.mxu0 0
      %370 = vmatpush1.bf16.msra.mxu0 0
      %371 = vmatprep.subr.bf16.mxu0 0
      %372 = vmatpush1.bf16.msra.mxu0 0
      %373 = vmatprep.subr.bf16.mxu0 0
      %374 = vmatpush1.bf16.msra.mxu0 0
      %375 = vmatprep.subr.bf16.mxu0 0
      %376 = vmatpush1.bf16.msra.mxu0 0
      %377 = vmatprep.subr.bf16.mxu0 0
      %378 = vmatpush1.bf16.msra.mxu0 0
      %379 = vmatprep.subr.bf16.mxu0 0
      %380 = vmatpush1.bf16.msra.mxu0 0
      %381 = vmatprep.subr.bf16.mxu0 0
      %382 = vmatpush1.bf16.msra.mxu0 0
      %383 = vmatprep.subr.bf16.mxu0 0
      %384 = vmatpush1.bf16.msra.mxu0 0
      %385 = vmatprep.subr.bf16.mxu0 0
      %386 = vmatpush1.bf16.msra.mxu0 0
      %387 = vmatprep.subr.bf16.mxu0 0
      %388 = vmatpush1.bf16.msra.mxu0 0
      %389 = vmatprep.subr.bf16.mxu0 0
      %390 = vmatpush1.bf16.msra.mxu0 0
      %391 = vmatprep.mubr.bf16.mxu0 0
      %392 = vmatmul.mubr.bf16.gmra.mrb[0].mxu0 %v345
      %v393 = vpop.f32.mrb[0].mxu0
      %v394 = vadd.f32 %v294, %v393
      %v395 = vpop.f32.mrb[0].mxu0
      %v396 = vpop.f32.mrb[0].mxu0
      %v397 = vadd.f32 %v297, %v396
      %v398 = vpop.f32.mrb[0].mxu0
      %399 = vmatprep.mubr.bf16.mxu0 0
      %400 = vmatmul.mubr.bf16.gmra.mrb[0].mxu0 %v348
      %v401 = vpop.f32.mrb[0].mxu0
      %v402 = vadd.f32 %v302, %v401
      %v403 = vpop.f32.mrb[0].mxu0
      %v404 = vpop.f32.mrb[0].mxu0
      %v405 = vadd.f32 %v305, %v404
      %v406 = vpop.f32.mrb[0].mxu0
      %407 = vmatprep.mubr.bf16.mxu0 0
      %408 = vmatmul.mubr.bf16.gmra.mrb[0].mxu0 %v351
      %v409 = vpop.f32.mrb[0].mxu0
      %v410 = vadd.f32 %v310, %v409
      %v411 = vpop.f32.mrb[0].mxu0
      %v412 = vpop.f32.mrb[0].mxu0
      %v413 = vadd.f32 %v313, %v412
      %v414 = vpop.f32.mrb[0].mxu0
      %415 = vmatprep.mubr.bf16.mxu0 0
      %416 = vmatmul.mubr.bf16.gmra.mrb[0].mxu0 %v354
      %v417 = vpop.f32.mrb[0].mxu0
      %v418 = vadd.f32 %v318, %v417
      %v419 = vpop.f32.mrb[0].mxu0
      %v420 = vpop.f32.mrb[0].mxu0
      %v421 = vadd.f32 %v321, %v420
      %v422 = vpop.f32.mrb[0].mxu0
      %423 = vmatprep.mubr.bf16.mxu0 0
      %424 = vmatmul.mubr.bf16.gmra.mrb[0].mxu0 %v357
      %v425 = vpop.f32.mrb[0].mxu0
      %v426 = vadd.f32 %v326, %v425
      %v427 = vpop.f32.mrb[0].mxu0
      %v428 = vpop.f32.mrb[0].mxu0
      %v429 = vadd.f32 %v329, %v428
      %v430 = vpop.f32.mrb[0].mxu0
      %431 = vdwg.mxu0
      %v432 = vld [vmem:[%s180 + $0x2] sm:$0xff]
      %v433 = vld [vmem:[%s180 + $0xa] sm:$0xff]
      %v434 = vld [vmem:[%s180 + $0x12] sm:$0xff]
      %v435 = vld [vmem:[%s180 + $0x1a] sm:$0xff]
      %v436 = vld [vmem:[%s180 + $0x22] sm:$0xff]
      %v437 = vld [vmem:[%s180 + $0x2a] sm:$0xff]
      %v438 = vld [vmem:[%s180 + $0x32] sm:$0xff]
      %v439 = vld [vmem:[%s180 + $0x3a] sm:$0xff]
      %v440 = vld [vmem:[%s180 + $0x42] sm:$0xff]
      %v441 = vld [vmem:[%s180 + $0x4a] sm:$0xff]
      %v442 = vpack.c.bf16 %v433, %v432
      %v443 = vpack.c.bf16 %v435, %v434
      %v444 = vpack.c.bf16 %v437, %v436
      %v445 = vpack.c.bf16 %v439, %v438
      %v446 = vpack.c.bf16 %v441, %v440
      %s447 = scalar_lea.vmem %s1, 32
      %v448 = vld [vmem:[%s447] sm:$0xf]
      %v449 = vld [vmem:[%s447 + $0x4] sm:$0xf]
      %v450 = vld [vmem:[%s447 + $0x8] sm:$0xf]
      %v451 = vld [vmem:[%s447 + $0xc] sm:$0xf]
      %v456 = vunpack.c.l.b16 %v448
      %v457 = vunpack.c.l.b16 %v449
      %v458 = vunpack.c.l.b16 %v450
      %v459 = vunpack.c.l.b16 %v451
      %v460 = vpack.c.b16 %v457, %v456
      %v461 = vpack.c.b16 %v459, %v458
      %v465 = vsel %vm243, %v442, 0
      %v468 = vsel %vm243, %v443, 0
      %v471 = vsel %vm243, %v444, 0
      %v474 = vsel %vm243, %v445, 0
      %v477 = vsel %vm243, %v446, 0
      %479 = vmatprep.subr.bf16.mxu0 0
      %480 = vmatpush1.bf16.msra.mxu0 %v460
      %481 = vmatprep.subr.bf16.mxu0 0
      %482 = vmatpush1.bf16.msra.mxu0 %v461
      %483 = vmatprep.subr.bf16.mxu0 0
      %484 = vmatpush1.bf16.msra.mxu0 0
      %485 = vmatprep.subr.bf16.mxu0 0
      %486 = vmatpush1.bf16.msra.mxu0 0
      %487 = vmatprep.subr.bf16.mxu0 0
      %488 = vmatpush1.bf16.msra.mxu0 0
      %489 = vmatprep.subr.bf16.mxu0 0
      %490 = vmatpush1.bf16.msra.mxu0 0
      %491 = vmatprep.subr.bf16.mxu0 0
      %492 = vmatpush1.bf16.msra.mxu0 0
      %493 = vmatprep.subr.bf16.mxu0 0
      %494 = vmatpush1.bf16.msra.mxu0 0
      %495 = vmatprep.subr.bf16.mxu0 0
      %496 = vmatpush1.bf16.msra.mxu0 0
      %497 = vmatprep.subr.bf16.mxu0 0
      %498 = vmatpush1.bf16.msra.mxu0 0
      %499 = vmatprep.subr.bf16.mxu0 0
      %500 = vmatpush1.bf16.msra.mxu0 0
      %501 = vmatprep.subr.bf16.mxu0 0
      %502 = vmatpush1.bf16.msra.mxu0 0
      %503 = vmatprep.subr.bf16.mxu0 0
      %504 = vmatpush1.bf16.msra.mxu0 0
      %505 = vmatprep.subr.bf16.mxu0 0
      %506 = vmatpush1.bf16.msra.mxu0 0
      %507 = vmatprep.subr.bf16.mxu0 0
      %508 = vmatpush1.bf16.msra.mxu0 0
      %509 = vmatprep.subr.bf16.mxu0 0
      %510 = vmatpush1.bf16.msra.mxu0 0
      %511 = vmatprep.mubr.bf16.mxu0 0
      %512 = vmatmul.mubr.bf16.gmra.mrb[0].mxu0 %v465
      %v513 = vpop.f32.mrb[0].mxu0
      %v514 = vadd.f32 0.0, %v513
      %v515 = vpop.f32.mrb[0].mxu0
      %v516 = vpop.f32.mrb[0].mxu0
      %v517 = vadd.f32 0.0, %v516
      %v518 = vpop.f32.mrb[0].mxu0
      %519 = vmatprep.mubr.bf16.mxu0 0
      %520 = vmatmul.mubr.bf16.gmra.mrb[0].mxu0 %v468
      %v521 = vpop.f32.mrb[0].mxu0
      %v522 = vadd.f32 0.0, %v521
      %v523 = vpop.f32.mrb[0].mxu0
      %v524 = vpop.f32.mrb[0].mxu0
      %v525 = vadd.f32 0.0, %v524
      %v526 = vpop.f32.mrb[0].mxu0
      %527 = vmatprep.mubr.bf16.mxu0 0
      %528 = vmatmul.mubr.bf16.gmra.mrb[0].mxu0 %v471
      %v529 = vpop.f32.mrb[0].mxu0
      %v530 = vadd.f32 0.0, %v529
      %v531 = vpop.f32.mrb[0].mxu0
      %v532 = vpop.f32.mrb[0].mxu0
      %v533 = vadd.f32 0.0, %v532
      %v534 = vpop.f32.mrb[0].mxu0
      %535 = vmatprep.mubr.bf16.mxu0 0
      %536 = vmatmul.mubr.bf16.gmra.mrb[0].mxu0 %v474
      %v537 = vpop.f32.mrb[0].mxu0
      %v538 = vadd.f32 0.0, %v537
      %v539 = vpop.f32.mrb[0].mxu0
      %v540 = vpop.f32.mrb[0].mxu0
      %v541 = vadd.f32 0.0, %v540
      %v542 = vpop.f32.mrb[0].mxu0
      %543 = vmatprep.mubr.bf16.mxu0 0
      %544 = vmatmul.mubr.bf16.gmra.mrb[0].mxu0 %v477
      %v545 = vpop.f32.mrb[0].mxu0
      %v546 = vadd.f32 0.0, %v545
      %v547 = vpop.f32.mrb[0].mxu0
      %v548 = vpop.f32.mrb[0].mxu0
      %v549 = vadd.f32 0.0, %v548
      %v550 = vpop.f32.mrb[0].mxu0
      %551 = vdwg.mxu0
      %v552 = vadd.f32 %v394, %v514
      %v553 = vadd.f32 %v397, %v517
      %v554 = vadd.f32 %v402, %v522
      %v555 = vadd.f32 %v405, %v525
      %v556 = vadd.f32 %v410, %v530
      %v557 = vadd.f32 %v413, %v533
      %v558 = vadd.f32 %v418, %v538
      %v559 = vadd.f32 %v421, %v541
      %v560 = vadd.f32 %v426, %v546
      %v561 = vadd.f32 %v429, %v549
      %v562 = vld [vmem:[%s180 + $0xa] sm:$0xff]
      %v563 = vld [vmem:[%s180 + $0x12] sm:$0xff]
      %v564 = vld [vmem:[%s180 + $0x1a] sm:$0xff]
      %v565 = vld [vmem:[%s180 + $0x22] sm:$0xff]
      %v566 = vld [vmem:[%s180 + $0x2a] sm:$0xff]
      %v567 = vld [vmem:[%s180 + $0x32] sm:$0xff]
      %v568 = vld [vmem:[%s180 + $0x3a] sm:$0xff]
      %v569 = vld [vmem:[%s180 + $0x42] sm:$0xff]
      %v570 = vld [vmem:[%s180 + $0x4a] sm:$0xff]
      %v571 = vld [vmem:[%s180 + $0x52] sm:$0xff]
      %v572 = vpack.c.bf16 %v563, %v562
      %v573 = vpack.c.bf16 %v565, %v564
      %v574 = vpack.c.bf16 %v567, %v566
      %v575 = vpack.c.bf16 %v569, %v568
      %v576 = vpack.c.bf16 %v571, %v570
      %s577 = scalar_lea.vmem %s1, 48
      %v578 = vld [vmem:[%s577] sm:$0xf]
      %v579 = vld [vmem:[%s577 + $0x4] sm:$0xf]
      %v580 = vld [vmem:[%s577 + $0x8] sm:$0xf]
      %v581 = vld [vmem:[%s577 + $0xc] sm:$0xf]
      %v586 = vunpack.c.l.b16 %v578
      %v587 = vunpack.c.l.b16 %v579
      %v588 = vunpack.c.l.b16 %v580
      %v589 = vunpack.c.l.b16 %v581
      %v590 = vpack.c.b16 %v587, %v586
      %v591 = vpack.c.b16 %v589, %v588
      %v595 = vsel %vm243, %v572, 0
      %v598 = vsel %vm243, %v573, 0
      %v601 = vsel %vm243, %v574, 0
      %v604 = vsel %vm243, %v575, 0
      %v607 = vsel %vm243, %v576, 0
      %609 = vmatprep.subr.bf16.mxu0 0
      %610 = vmatpush1.bf16.msra.mxu0 %v590
      %611 = vmatprep.subr.bf16.mxu0 0
      %612 = vmatpush1.bf16.msra.mxu0 %v591
      %613 = vmatprep.subr.bf16.mxu0 0
      %614 = vmatpush1.bf16.msra.mxu0 0
      %615 = vmatprep.subr.bf16.mxu0 0
      %616 = vmatpush1.bf16.msra.mxu0 0
      %617 = vmatprep.subr.bf16.mxu0 0
      %618 = vmatpush1.bf16.msra.mxu0 0
      %619 = vmatprep.subr.bf16.mxu0 0
      %620 = vmatpush1.bf16.msra.mxu0 0
      %621 = vmatprep.subr.bf16.mxu0 0
      %622 = vmatpush1.bf16.msra.mxu0 0
      %623 = vmatprep.subr.bf16.mxu0 0
      %624 = vmatpush1.bf16.msra.mxu0 0
      %625 = vmatprep.subr.bf16.mxu0 0
      %626 = vmatpush1.bf16.msra.mxu0 0
      %627 = vmatprep.subr.bf16.mxu0 0
      %628 = vmatpush1.bf16.msra.mxu0 0
      %629 = vmatprep.subr.bf16.mxu0 0
      %630 = vmatpush1.bf16.msra.mxu0 0
      %631 = vmatprep.subr.bf16.mxu0 0
      %632 = vmatpush1.bf16.msra.mxu0 0
      %633 = vmatprep.subr.bf16.mxu0 0
      %634 = vmatpush1.bf16.msra.mxu0 0
      %635 = vmatprep.subr.bf16.mxu0 0
      %636 = vmatpush1.bf16.msra.mxu0 0
      %637 = vmatprep.subr.bf16.mxu0 0
      %638 = vmatpush1.bf16.msra.mxu0 0
      %639 = vmatprep.subr.bf16.mxu0 0
      %640 = vmatpush1.bf16.msra.mxu0 0
      %641 = vmatprep.mubr.bf16.mxu0 0
      %642 = vmatmul.mubr.bf16.gmra.mrb[0].mxu0 %v595
      %v643 = vpop.f32.mrb[0].mxu0
      %v644 = vadd.f32 0.0, %v643
      %v645 = vpop.f32.mrb[0].mxu0
      %v646 = vpop.f32.mrb[0].mxu0
      %v647 = vadd.f32 0.0, %v646
      %v648 = vpop.f32.mrb[0].mxu0
      %649 = vmatprep.mubr.bf16.mxu0 0
      %650 = vmatmul.mubr.bf16.gmra.mrb[0].mxu0 %v598
      %v651 = vpop.f32.mrb[0].mxu0
      %v652 = vadd.f32 0.0, %v651
      %v653 = vpop.f32.mrb[0].mxu0
      %v654 = vpop.f32.mrb[0].mxu0
      %v655 = vadd.f32 0.0, %v654
      %v656 = vpop.f32.mrb[0].mxu0
      %657 = vmatprep.mubr.bf16.mxu0 0
      %658 = vmatmul.mubr.bf16.gmra.mrb[0].mxu0 %v601
      %v659 = vpop.f32.mrb[0].mxu0
      %v660 = vadd.f32 0.0, %v659
      %v661 = vpop.f32.mrb[0].mxu0
      %v662 = vpop.f32.mrb[0].mxu0
      %v663 = vadd.f32 0.0, %v662
      %v664 = vpop.f32.mrb[0].mxu0
      %665 = vmatprep.mubr.bf16.mxu0 0
      %666 = vmatmul.mubr.bf16.gmra.mrb[0].mxu0 %v604
      %v667 = vpop.f32.mrb[0].mxu0
      %v668 = vadd.f32 0.0, %v667
      %v669 = vpop.f32.mrb[0].mxu0
      %v670 = vpop.f32.mrb[0].mxu0
      %v671 = vadd.f32 0.0, %v670
      %v672 = vpop.f32.mrb[0].mxu0
      %673 = vmatprep.mubr.bf16.mxu0 0
      %674 = vmatmul.mubr.bf16.gmra.mrb[0].mxu0 %v607
      %v675 = vpop.f32.mrb[0].mxu0
      %v676 = vadd.f32 0.0, %v675
      %v677 = vpop.f32.mrb[0].mxu0
      %v678 = vpop.f32.mrb[0].mxu0
      %v679 = vadd.f32 0.0, %v678
      %v680 = vpop.f32.mrb[0].mxu0
      %681 = vdwg.mxu0
      %v682 = vadd.f32 %v552, %v644
      %v683 = vadd.f32 %v553, %v647
      %v684 = vadd.f32 %v554, %v652
      %v685 = vadd.f32 %v555, %v655
      %v686 = vadd.f32 %v556, %v660
      %v687 = vadd.f32 %v557, %v663
      %v688 = vadd.f32 %v558, %v668
      %v689 = vadd.f32 %v559, %v671
      %v690 = vadd.f32 %v560, %v676
      %v691 = vadd.f32 %v561, %v679
      %v692 = vld [vmem:[%s180 + $0xb] sm:$0xff]
      %v693 = vld [vmem:[%s180 + $0x13] sm:$0xff]
      %v694 = vld [vmem:[%s180 + $0x1b] sm:$0xff]
      %v695 = vld [vmem:[%s180 + $0x23] sm:$0xff]
      %v696 = vld [vmem:[%s180 + $0x2b] sm:$0xff]
      %v697 = vld [vmem:[%s180 + $0x33] sm:$0xff]
      %v698 = vld [vmem:[%s180 + $0x3b] sm:$0xff]
      %v699 = vld [vmem:[%s180 + $0x43] sm:$0xff]
      %v700 = vld [vmem:[%s180 + $0x4b] sm:$0xff]
      %v701 = vld [vmem:[%s180 + $0x53] sm:$0xff]
      %v702 = vpack.c.bf16 %v693, %v692
      %v703 = vpack.c.bf16 %v695, %v694
      %v704 = vpack.c.bf16 %v697, %v696
      %v705 = vpack.c.bf16 %v699, %v698
      %v706 = vpack.c.bf16 %v701, %v700
      %s707 = scalar_lea.vmem %s1, 64
      %v708 = vld [vmem:[%s707] sm:$0xf]
      %v709 = vld [vmem:[%s707 + $0x4] sm:$0xf]
      %v710 = vld [vmem:[%s707 + $0x8] sm:$0xf]
      %v711 = vld [vmem:[%s707 + $0xc] sm:$0xf]
      %v716 = vunpack.c.l.b16 %v708
      %v717 = vunpack.c.l.b16 %v709
      %v718 = vunpack.c.l.b16 %v710
      %v719 = vunpack.c.l.b16 %v711
      %v720 = vpack.c.b16 %v717, %v716
      %v721 = vpack.c.b16 %v719, %v718
      %v725 = vsel %vm243, %v702, 0
      %v728 = vsel %vm243, %v703, 0
      %v731 = vsel %vm243, %v704, 0
      %v734 = vsel %vm243, %v705, 0
      %v737 = vsel %vm243, %v706, 0
      %739 = vmatprep.subr.bf16.mxu0 0
      %740 = vmatpush1.bf16.msra.mxu0 %v720
      %741 = vmatprep.subr.bf16.mxu0 0
      %742 = vmatpush1.bf16.msra.mxu0 %v721
      %743 = vmatprep.subr.bf16.mxu0 0
      %744 = vmatpush1.bf16.msra.mxu0 0
      %745 = vmatprep.subr.bf16.mxu0 0
      %746 = vmatpush1.bf16.msra.mxu0 0
      %747 = vmatprep.subr.bf16.mxu0 0
      %748 = vmatpush1.bf16.msra.mxu0 0
      %749 = vmatprep.subr.bf16.mxu0 0
      %750 = vmatpush1.bf16.msra.mxu0 0
      %751 = vmatprep.subr.bf16.mxu0 0
      %752 = vmatpush1.bf16.msra.mxu0 0
      %753 = vmatprep.subr.bf16.mxu0 0
      %754 = vmatpush1.bf16.msra.mxu0 0
      %755 = vmatprep.subr.bf16.mxu0 0
      %756 = vmatpush1.bf16.msra.mxu0 0
      %757 = vmatprep.subr.bf16.mxu0 0
      %758 = vmatpush1.bf16.msra.mxu0 0
      %759 = vmatprep.subr.bf16.mxu0 0
      %760 = vmatpush1.bf16.msra.mxu0 0
      %761 = vmatprep.subr.bf16.mxu0 0
      %762 = vmatpush1.bf16.msra.mxu0 0
      %763 = vmatprep.subr.bf16.mxu0 0
      %764 = vmatpush1.bf16.msra.mxu0 0
      %765 = vmatprep.subr.bf16.mxu0 0
      %766 = vmatpush1.bf16.msra.mxu0 0
      %767 = vmatprep.subr.bf16.mxu0 0
      %768 = vmatpush1.bf16.msra.mxu0 0
      %769 = vmatprep.subr.bf16.mxu0 0
      %770 = vmatpush1.bf16.msra.mxu0 0
      %771 = vmatprep.mubr.bf16.mxu0 0
      %772 = vmatmul.mubr.bf16.gmra.mrb[0].mxu0 %v725
      %v773 = vpop.f32.mrb[0].mxu0
      %v774 = vadd.f32 0.0, %v773
      %v775 = vpop.f32.mrb[0].mxu0
      %v776 = vpop.f32.mrb[0].mxu0
      %v777 = vadd.f32 0.0, %v776
      %v778 = vpop.f32.mrb[0].mxu0
      %779 = vmatprep.mubr.bf16.mxu0 0
      %780 = vmatmul.mubr.bf16.gmra.mrb[0].mxu0 %v728
      %v781 = vpop.f32.mrb[0].mxu0
      %v782 = vadd.f32 0.0, %v781
      %v783 = vpop.f32.mrb[0].mxu0
      %v784 = vpop.f32.mrb[0].mxu0
      %v785 = vadd.f32 0.0, %v784
      %v786 = vpop.f32.mrb[0].mxu0
      %787 = vmatprep.mubr.bf16.mxu0 0
      %788 = vmatmul.mubr.bf16.gmra.mrb[0].mxu0 %v731
      %v789 = vpop.f32.mrb[0].mxu0
      %v790 = vadd.f32 0.0, %v789
      %v791 = vpop.f32.mrb[0].mxu0
      %v792 = vpop.f32.mrb[0].mxu0
      %v793 = vadd.f32 0.0, %v792
      %v794 = vpop.f32.mrb[0].mxu0
      %795 = vmatprep.mubr.bf16.mxu0 0
      %796 = vmatmul.mubr.bf16.gmra.mrb[0].mxu0 %v734
      %v797 = vpop.f32.mrb[0].mxu0
      %v798 = vadd.f32 0.0, %v797
      %v799 = vpop.f32.mrb[0].mxu0
      %v800 = vpop.f32.mrb[0].mxu0
      %v801 = vadd.f32 0.0, %v800
      %v802 = vpop.f32.mrb[0].mxu0
      %803 = vmatprep.mubr.bf16.mxu0 0
      %804 = vmatmul.mubr.bf16.gmra.mrb[0].mxu0 %v737
      %v805 = vpop.f32.mrb[0].mxu0
      %v806 = vadd.f32 0.0, %v805
      %v807 = vpop.f32.mrb[0].mxu0
      %v808 = vpop.f32.mrb[0].mxu0
      %v809 = vadd.f32 0.0, %v808
      %v810 = vpop.f32.mrb[0].mxu0
      %811 = vdwg.mxu0
      %v812 = vadd.f32 %v682, %v774
      %v813 = vadd.f32 %v683, %v777
      %v814 = vadd.f32 %v684, %v782
      %v815 = vadd.f32 %v685, %v785
      %v816 = vadd.f32 %v686, %v790
      %v817 = vadd.f32 %v687, %v793
      %v818 = vadd.f32 %v688, %v798
      %v819 = vadd.f32 %v689, %v801
      %v820 = vadd.f32 %v690, %v806
      %v821 = vadd.f32 %v691, %v809
      %v822 = vld [vmem:[%s180 + $0xc] sm:$0xff]
      %v823 = vld [vmem:[%s180 + $0x14] sm:$0xff]
      %v824 = vld [vmem:[%s180 + $0x1c] sm:$0xff]
      %v825 = vld [vmem:[%s180 + $0x24] sm:$0xff]
      %v826 = vld [vmem:[%s180 + $0x2c] sm:$0xff]
      %v827 = vld [vmem:[%s180 + $0x34] sm:$0xff]
      %v828 = vld [vmem:[%s180 + $0x3c] sm:$0xff]
      %v829 = vld [vmem:[%s180 + $0x44] sm:$0xff]
      %v830 = vld [vmem:[%s180 + $0x4c] sm:$0xff]
      %v831 = vld [vmem:[%s180 + $0x54] sm:$0xff]
      %v832 = vpack.c.bf16 %v823, %v822
      %v833 = vpack.c.bf16 %v825, %v824
      %v834 = vpack.c.bf16 %v827, %v826
      %v835 = vpack.c.bf16 %v829, %v828
      %v836 = vpack.c.bf16 %v831, %v830
      %s837 = scalar_lea.vmem %s1, 80
      %v838 = vld [vmem:[%s837] sm:$0xf]
      %v839 = vld [vmem:[%s837 + $0x4] sm:$0xf]
      %v840 = vld [vmem:[%s837 + $0x8] sm:$0xf]
      %v841 = vld [vmem:[%s837 + $0xc] sm:$0xf]
      %v846 = vunpack.c.l.b16 %v838
      %v847 = vunpack.c.l.b16 %v839
      %v848 = vunpack.c.l.b16 %v840
      %v849 = vunpack.c.l.b16 %v841
      %v850 = vpack.c.b16 %v847, %v846
      %v851 = vpack.c.b16 %v849, %v848
      %v855 = vsel %vm243, %v832, 0
      %v858 = vsel %vm243, %v833, 0
      %v861 = vsel %vm243, %v834, 0
      %v864 = vsel %vm243, %v835, 0
      %v867 = vsel %vm243, %v836, 0
      %869 = vmatprep.subr.bf16.mxu0 0
      %870 = vmatpush1.bf16.msra.mxu0 %v850
      %871 = vmatprep.subr.bf16.mxu0 0
      %872 = vmatpush1.bf16.msra.mxu0 %v851
      %873 = vmatprep.subr.bf16.mxu0 0
      %874 = vmatpush1.bf16.msra.mxu0 0
      %875 = vmatprep.subr.bf16.mxu0 0
      %876 = vmatpush1.bf16.msra.mxu0 0
      %877 = vmatprep.subr.bf16.mxu0 0
      %878 = vmatpush1.bf16.msra.mxu0 0
      %879 = vmatprep.subr.bf16.mxu0 0
      %880 = vmatpush1.bf16.msra.mxu0 0
      %881 = vmatprep.subr.bf16.mxu0 0
      %882 = vmatpush1.bf16.msra.mxu0 0
      %883 = vmatprep.subr.bf16.mxu0 0
      %884 = vmatpush1.bf16.msra.mxu0 0
      %885 = vmatprep.subr.bf16.mxu0 0
      %886 = vmatpush1.bf16.msra.mxu0 0
      %887 = vmatprep.subr.bf16.mxu0 0
      %888 = vmatpush1.bf16.msra.mxu0 0
      %889 = vmatprep.subr.bf16.mxu0 0
      %890 = vmatpush1.bf16.msra.mxu0 0
      %891 = vmatprep.subr.bf16.mxu0 0
      %892 = vmatpush1.bf16.msra.mxu0 0
      %893 = vmatprep.subr.bf16.mxu0 0
      %894 = vmatpush1.bf16.msra.mxu0 0
      %895 = vmatprep.subr.bf16.mxu0 0
      %896 = vmatpush1.bf16.msra.mxu0 0
      %897 = vmatprep.subr.bf16.mxu0 0
      %898 = vmatpush1.bf16.msra.mxu0 0
      %899 = vmatprep.subr.bf16.mxu0 0
      %900 = vmatpush1.bf16.msra.mxu0 0
      %901 = vmatprep.mubr.bf16.mxu0 0
      %902 = vmatmul.mubr.bf16.gmra.mrb[0].mxu0 %v855
      %v903 = vpop.f32.mrb[0].mxu0
      %v904 = vadd.f32 0.0, %v903
      %v905 = vpop.f32.mrb[0].mxu0
      %v906 = vpop.f32.mrb[0].mxu0
      %v907 = vadd.f32 0.0, %v906
      %v908 = vpop.f32.mrb[0].mxu0
      %909 = vmatprep.mubr.bf16.mxu0 0
      %910 = vmatmul.mubr.bf16.gmra.mrb[0].mxu0 %v858
      %v911 = vpop.f32.mrb[0].mxu0
      %v912 = vadd.f32 0.0, %v911
      %v913 = vpop.f32.mrb[0].mxu0
      %v914 = vpop.f32.mrb[0].mxu0
      %v915 = vadd.f32 0.0, %v914
      %v916 = vpop.f32.mrb[0].mxu0
      %917 = vmatprep.mubr.bf16.mxu0 0
      %918 = vmatmul.mubr.bf16.gmra.mrb[0].mxu0 %v861
      %v919 = vpop.f32.mrb[0].mxu0
      %v920 = vadd.f32 0.0, %v919
      %v921 = vpop.f32.mrb[0].mxu0
      %v922 = vpop.f32.mrb[0].mxu0
      %v923 = vadd.f32 0.0, %v922
      %v924 = vpop.f32.mrb[0].mxu0
      %925 = vmatprep.mubr.bf16.mxu0 0
      %926 = vmatmul.mubr.bf16.gmra.mrb[0].mxu0 %v864
      %v927 = vpop.f32.mrb[0].mxu0
      %v928 = vadd.f32 0.0, %v927
      %v929 = vpop.f32.mrb[0].mxu0
      %v930 = vpop.f32.mrb[0].mxu0
      %v931 = vadd.f32 0.0, %v930
      %v932 = vpop.f32.mrb[0].mxu0
      %933 = vmatprep.mubr.bf16.mxu0 0
      %934 = vmatmul.mubr.bf16.gmra.mrb[0].mxu0 %v867
      %v935 = vpop.f32.mrb[0].mxu0
      %v936 = vadd.f32 0.0, %v935
      %v937 = vpop.f32.mrb[0].mxu0
      %v938 = vpop.f32.mrb[0].mxu0
      %v939 = vadd.f32 0.0, %v938
      %v940 = vpop.f32.mrb[0].mxu0
      %941 = vdwg.mxu0
      %v942 = vadd.f32 %v812, %v904
      %v943 = vadd.f32 %v813, %v907
      %v944 = vadd.f32 %v814, %v912
      %v945 = vadd.f32 %v815, %v915
      %v946 = vadd.f32 %v816, %v920
      %v947 = vadd.f32 %v817, %v923
      %v948 = vadd.f32 %v818, %v928
      %v949 = vadd.f32 %v819, %v931
      %v950 = vadd.f32 %v820, %v936
      %v951 = vadd.f32 %v821, %v939
      %v952 = vld [vmem:[%s180 + $0x14] sm:$0xff]
      %v953 = vld [vmem:[%s180 + $0x1c] sm:$0xff]
      %v954 = vld [vmem:[%s180 + $0x24] sm:$0xff]
      %v955 = vld [vmem:[%s180 + $0x2c] sm:$0xff]
      %v956 = vld [vmem:[%s180 + $0x34] sm:$0xff]
      %v957 = vld [vmem:[%s180 + $0x3c] sm:$0xff]
      %v958 = vld [vmem:[%s180 + $0x44] sm:$0xff]
      %v959 = vld [vmem:[%s180 + $0x4c] sm:$0xff]
      %v960 = vld [vmem:[%s180 + $0x54] sm:$0xff]
      %v961 = vld [vmem:[%s180 + $0x5c] sm:$0xff]
      %v962 = vpack.c.bf16 %v953, %v952
      %v963 = vpack.c.bf16 %v955, %v954
      %v964 = vpack.c.bf16 %v957, %v956
      %v965 = vpack.c.bf16 %v959, %v958
      %v966 = vpack.c.bf16 %v961, %v960
      %s967 = scalar_lea.vmem %s1, 96
      %v968 = vld [vmem:[%s967] sm:$0xf]
      %v969 = vld [vmem:[%s967 + $0x4] sm:$0xf]
      %v970 = vld [vmem:[%s967 + $0x8] sm:$0xf]
      %v971 = vld [vmem:[%s967 + $0xc] sm:$0xf]
      %v976 = vunpack.c.l.b16 %v968
      %v977 = vunpack.c.l.b16 %v969
      %v978 = vunpack.c.l.b16 %v970
      %v979 = vunpack.c.l.b16 %v971
      %v980 = vpack.c.b16 %v977, %v976
      %v981 = vpack.c.b16 %v979, %v978
      %v985 = vsel %vm243, %v962, 0
      %v988 = vsel %vm243, %v963, 0
      %v991 = vsel %vm243, %v964, 0
      %v994 = vsel %vm243, %v965, 0
      %v997 = vsel %vm243, %v966, 0
      %999 = vmatprep.subr.bf16.mxu0 0
      %1000 = vmatpush1.bf16.msra.mxu0 %v980
      %1001 = vmatprep.subr.bf16.mxu0 0
      %1002 = vmatpush1.bf16.msra.mxu0 %v981
      %1003 = vmatprep.subr.bf16.mxu0 0
      %1004 = vmatpush1.bf16.msra.mxu0 0
      %1005 = vmatprep.subr.bf16.mxu0 0
      %1006 = vmatpush1.bf16.msra.mxu0 0
      %1007 = vmatprep.subr.bf16.mxu0 0
      %1008 = vmatpush1.bf16.msra.mxu0 0
      %1009 = vmatprep.subr.bf16.mxu0 0
      %1010 = vmatpush1.bf16.msra.mxu0 0
      %1011 = vmatprep.subr.bf16.mxu0 0
      %1012 = vmatpush1.bf16.msra.mxu0 0
      %1013 = vmatprep.subr.bf16.mxu0 0
      %1014 = vmatpush1.bf16.msra.mxu0 0
      %1015 = vmatprep.subr.bf16.mxu0 0
      %1016 = vmatpush1.bf16.msra.mxu0 0
      %1017 = vmatprep.subr.bf16.mxu0 0
      %1018 = vmatpush1.bf16.msra.mxu0 0
      %1019 = vmatprep.subr.bf16.mxu0 0
      %1020 = vmatpush1.bf16.msra.mxu0 0
      %1021 = vmatprep.subr.bf16.mxu0 0
      %1022 = vmatpush1.bf16.msra.mxu0 0
      %1023 = vmatprep.subr.bf16.mxu0 0
      %1024 = vmatpush1.bf16.msra.mxu0 0
      %1025 = vmatprep.subr.bf16.mxu0 0
      %1026 = vmatpush1.bf16.msra.mxu0 0
      %1027 = vmatprep.subr.bf16.mxu0 0
      %1028 = vmatpush1.bf16.msra.mxu0 0
      %1029 = vmatprep.subr.bf16.mxu0 0
      %1030 = vmatpush1.bf16.msra.mxu0 0
      %1031 = vmatprep.mubr.bf16.mxu0 0
      %1032 = vmatmul.mubr.bf16.gmra.mrb[0].mxu0 %v985
      %v1033 = vpop.f32.mrb[0].mxu0
      %v1034 = vadd.f32 0.0, %v1033
      %v1035 = vpop.f32.mrb[0].mxu0
      %v1036 = vpop.f32.mrb[0].mxu0
      %v1037 = vadd.f32 0.0, %v1036
      %v1038 = vpop.f32.mrb[0].mxu0
      %1039 = vmatprep.mubr.bf16.mxu0 0
      %1040 = vmatmul.mubr.bf16.gmra.mrb[0].mxu0 %v988
      %v1041 = vpop.f32.mrb[0].mxu0
      %v1042 = vadd.f32 0.0, %v1041
      %v1043 = vpop.f32.mrb[0].mxu0
      %v1044 = vpop.f32.mrb[0].mxu0
      %v1045 = vadd.f32 0.0, %v1044
      %v1046 = vpop.f32.mrb[0].mxu0
      %1047 = vmatprep.mubr.bf16.mxu0 0
      %1048 = vmatmul.mubr.bf16.gmra.mrb[0].mxu0 %v991
      %v1049 = vpop.f32.mrb[0].mxu0
      %v1050 = vadd.f32 0.0, %v1049
      %v1051 = vpop.f32.mrb[0].mxu0
      %v1052 = vpop.f32.mrb[0].mxu0
      %v1053 = vadd.f32 0.0, %v1052
      %v1054 = vpop.f32.mrb[0].mxu0
      %1055 = vmatprep.mubr.bf16.mxu0 0
      %1056 = vmatmul.mubr.bf16.gmra.mrb[0].mxu0 %v994
      %v1057 = vpop.f32.mrb[0].mxu0
      %v1058 = vadd.f32 0.0, %v1057
      %v1059 = vpop.f32.mrb[0].mxu0
      %v1060 = vpop.f32.mrb[0].mxu0
      %v1061 = vadd.f32 0.0, %v1060
      %v1062 = vpop.f32.mrb[0].mxu0
      %1063 = vmatprep.mubr.bf16.mxu0 0
      %1064 = vmatmul.mubr.bf16.gmra.mrb[0].mxu0 %v997
      %v1065 = vpop.f32.mrb[0].mxu0
      %v1066 = vadd.f32 0.0, %v1065
      %v1067 = vpop.f32.mrb[0].mxu0
      %v1068 = vpop.f32.mrb[0].mxu0
      %v1069 = vadd.f32 0.0, %v1068
      %v1070 = vpop.f32.mrb[0].mxu0
      %1071 = vdwg.mxu0
      %v1072 = vadd.f32 %v942, %v1034
      %v1073 = vadd.f32 %v943, %v1037
      %v1074 = vadd.f32 %v944, %v1042
      %v1075 = vadd.f32 %v945, %v1045
      %v1076 = vadd.f32 %v946, %v1050
      %v1077 = vadd.f32 %v947, %v1053
      %v1078 = vadd.f32 %v948, %v1058
      %v1079 = vadd.f32 %v949, %v1061
      %v1080 = vadd.f32 %v950, %v1066
      %v1081 = vadd.f32 %v951, %v1069
      %v1082 = vld [vmem:[%s180 + $0x15] sm:$0xff]
      %v1083 = vld [vmem:[%s180 + $0x1d] sm:$0xff]
      %v1084 = vld [vmem:[%s180 + $0x25] sm:$0xff]
      %v1085 = vld [vmem:[%s180 + $0x2d] sm:$0xff]
      %v1086 = vld [vmem:[%s180 + $0x35] sm:$0xff]
      %v1087 = vld [vmem:[%s180 + $0x3d] sm:$0xff]
      %v1088 = vld [vmem:[%s180 + $0x45] sm:$0xff]
      %v1089 = vld [vmem:[%s180 + $0x4d] sm:$0xff]
      %v1090 = vld [vmem:[%s180 + $0x55] sm:$0xff]
      %v1091 = vld [vmem:[%s180 + $0x5d] sm:$0xff]
      %v1092 = vpack.c.bf16 %v1083, %v1082
      %v1093 = vpack.c.bf16 %v1085, %v1084
      %v1094 = vpack.c.bf16 %v1087, %v1086
      %v1095 = vpack.c.bf16 %v1089, %v1088
      %v1096 = vpack.c.bf16 %v1091, %v1090
      %s1097 = scalar_lea.vmem %s1, 112
      %v1098 = vld [vmem:[%s1097] sm:$0xf]
      %v1099 = vld [vmem:[%s1097 + $0x4] sm:$0xf]
      %v1100 = vld [vmem:[%s1097 + $0x8] sm:$0xf]
      %v1101 = vld [vmem:[%s1097 + $0xc] sm:$0xf]
      %v1106 = vunpack.c.l.b16 %v1098
      %v1107 = vunpack.c.l.b16 %v1099
      %v1108 = vunpack.c.l.b16 %v1100
      %v1109 = vunpack.c.l.b16 %v1101
      %v1110 = vpack.c.b16 %v1107, %v1106
      %v1111 = vpack.c.b16 %v1109, %v1108
      %v1115 = vsel %vm243, %v1092, 0
      %v1118 = vsel %vm243, %v1093, 0
      %v1121 = vsel %vm243, %v1094, 0
      %v1124 = vsel %vm243, %v1095, 0
      %v1127 = vsel %vm243, %v1096, 0
      %1129 = vmatprep.subr.bf16.mxu0 0
      %1130 = vmatpush1.bf16.msra.mxu0 %v1110
      %1131 = vmatprep.subr.bf16.mxu0 0
      %1132 = vmatpush1.bf16.msra.mxu0 %v1111
      %1133 = vmatprep.subr.bf16.mxu0 0
      %1134 = vmatpush1.bf16.msra.mxu0 0
      %1135 = vmatprep.subr.bf16.mxu0 0
      %1136 = vmatpush1.bf16.msra.mxu0 0
      %1137 = vmatprep.subr.bf16.mxu0 0
      %1138 = vmatpush1.bf16.msra.mxu0 0
      %1139 = vmatprep.subr.bf16.mxu0 0
      %1140 = vmatpush1.bf16.msra.mxu0 0
      %1141 = vmatprep.subr.bf16.mxu0 0
      %1142 = vmatpush1.bf16.msra.mxu0 0
      %1143 = vmatprep.subr.bf16.mxu0 0
      %1144 = vmatpush1.bf16.msra.mxu0 0
      %1145 = vmatprep.subr.bf16.mxu0 0
      %1146 = vmatpush1.bf16.msra.mxu0 0
      %1147 = vmatprep.subr.bf16.mxu0 0
      %1148 = vmatpush1.bf16.msra.mxu0 0
      %1149 = vmatprep.subr.bf16.mxu0 0
      %1150 = vmatpush1.bf16.msra.mxu0 0
      %1151 = vmatprep.subr.bf16.mxu0 0
      %1152 = vmatpush1.bf16.msra.mxu0 0
      %1153 = vmatprep.subr.bf16.mxu0 0
      %1154 = vmatpush1.bf16.msra.mxu0 0
      %1155 = vmatprep.subr.bf16.mxu0 0
      %1156 = vmatpush1.bf16.msra.mxu0 0
      %1157 = vmatprep.subr.bf16.mxu0 0
      %1158 = vmatpush1.bf16.msra.mxu0 0
      %1159 = vmatprep.subr.bf16.mxu0 0
      %1160 = vmatpush1.bf16.msra.mxu0 0
      %1161 = vmatprep.mubr.bf16.mxu0 0
      %1162 = vmatmul.mubr.bf16.gmra.mrb[0].mxu0 %v1115
      %v1163 = vpop.f32.mrb[0].mxu0
      %v1164 = vadd.f32 0.0, %v1163
      %v1165 = vpop.f32.mrb[0].mxu0
      %v1166 = vpop.f32.mrb[0].mxu0
      %v1167 = vadd.f32 0.0, %v1166
      %v1168 = vpop.f32.mrb[0].mxu0
      %1169 = vmatprep.mubr.bf16.mxu0 0
      %1170 = vmatmul.mubr.bf16.gmra.mrb[0].mxu0 %v1118
      %v1171 = vpop.f32.mrb[0].mxu0
      %v1172 = vadd.f32 0.0, %v1171
      %v1173 = vpop.f32.mrb[0].mxu0
      %v1174 = vpop.f32.mrb[0].mxu0
      %v1175 = vadd.f32 0.0, %v1174
      %v1176 = vpop.f32.mrb[0].mxu0
      %1177 = vmatprep.mubr.bf16.mxu0 0
      %1178 = vmatmul.mubr.bf16.gmra.mrb[0].mxu0 %v1121
      %v1179 = vpop.f32.mrb[0].mxu0
      %v1180 = vadd.f32 0.0, %v1179
      %v1181 = vpop.f32.mrb[0].mxu0
      %v1182 = vpop.f32.mrb[0].mxu0
      %v1183 = vadd.f32 0.0, %v1182
      %v1184 = vpop.f32.mrb[0].mxu0
      %1185 = vmatprep.mubr.bf16.mxu0 0
      %1186 = vmatmul.mubr.bf16.gmra.mrb[0].mxu0 %v1124
      %v1187 = vpop.f32.mrb[0].mxu0
      %v1188 = vadd.f32 0.0, %v1187
      %v1189 = vpop.f32.mrb[0].mxu0
      %v1190 = vpop.f32.mrb[0].mxu0
      %v1191 = vadd.f32 0.0, %v1190
      %v1192 = vpop.f32.mrb[0].mxu0
      %1193 = vmatprep.mubr.bf16.mxu0 0
      %1194 = vmatmul.mubr.bf16.gmra.mrb[0].mxu0 %v1127
      %v1195 = vpop.f32.mrb[0].mxu0
      %v1196 = vadd.f32 0.0, %v1195
      %v1197 = vpop.f32.mrb[0].mxu0
      %v1198 = vpop.f32.mrb[0].mxu0
      %v1199 = vadd.f32 0.0, %v1198
      %v1200 = vpop.f32.mrb[0].mxu0
      %1201 = vdwg.mxu0
      %v1202 = vadd.f32 %v1072, %v1164
      %v1203 = vadd.f32 %v1073, %v1167
      %v1204 = vadd.f32 %v1074, %v1172
      %v1205 = vadd.f32 %v1075, %v1175
      %v1206 = vadd.f32 %v1076, %v1180
      %v1207 = vadd.f32 %v1077, %v1183
      %v1208 = vadd.f32 %v1078, %v1188
      %v1209 = vadd.f32 %v1079, %v1191
      %v1210 = vadd.f32 %v1080, %v1196
      %v1211 = vadd.f32 %v1081, %v1199
      %v1212 = vld [vmem:[%s180 + $0x16] sm:$0xff]
      %v1213 = vld [vmem:[%s180 + $0x1e] sm:$0xff]
      %v1214 = vld [vmem:[%s180 + $0x26] sm:$0xff]
      %v1215 = vld [vmem:[%s180 + $0x2e] sm:$0xff]
      %v1216 = vld [vmem:[%s180 + $0x36] sm:$0xff]
      %v1217 = vld [vmem:[%s180 + $0x3e] sm:$0xff]
      %v1218 = vld [vmem:[%s180 + $0x46] sm:$0xff]
      %v1219 = vld [vmem:[%s180 + $0x4e] sm:$0xff]
      %v1220 = vld [vmem:[%s180 + $0x56] sm:$0xff]
      %v1221 = vld [vmem:[%s180 + $0x5e] sm:$0xff]
      %v1222 = vpack.c.bf16 %v1213, %v1212
      %v1223 = vpack.c.bf16 %v1215, %v1214
      %v1224 = vpack.c.bf16 %v1217, %v1216
      %v1225 = vpack.c.bf16 %v1219, %v1218
      %v1226 = vpack.c.bf16 %v1221, %v1220
      %s1227 = scalar_lea.vmem %s1, 128
      %v1228 = vld [vmem:[%s1227] sm:$0xf]
      %v1229 = vld [vmem:[%s1227 + $0x4] sm:$0xf]
      %v1230 = vld [vmem:[%s1227 + $0x8] sm:$0xf]
      %v1231 = vld [vmem:[%s1227 + $0xc] sm:$0xf]
      %v1236 = vunpack.c.l.b16 %v1228
      %v1237 = vunpack.c.l.b16 %v1229
      %v1238 = vunpack.c.l.b16 %v1230
      %v1239 = vunpack.c.l.b16 %v1231
      %v1240 = vpack.c.b16 %v1237, %v1236
      %v1241 = vpack.c.b16 %v1239, %v1238
      %v1245 = vsel %vm243, %v1222, 0
      %v1248 = vsel %vm243, %v1223, 0
      %v1251 = vsel %vm243, %v1224, 0
      %v1254 = vsel %vm243, %v1225, 0
      %v1257 = vsel %vm243, %v1226, 0
      %1259 = vmatprep.subr.bf16.mxu0 0
      %1260 = vmatpush1.bf16.msra.mxu0 %v1240
      %1261 = vmatprep.subr.bf16.mxu0 0
      %1262 = vmatpush1.bf16.msra.mxu0 %v1241
      %1263 = vmatprep.subr.bf16.mxu0 0
      %1264 = vmatpush1.bf16.msra.mxu0 0
      %1265 = vmatprep.subr.bf16.mxu0 0
      %1266 = vmatpush1.bf16.msra.mxu0 0
      %1267 = vmatprep.subr.bf16.mxu0 0
      %1268 = vmatpush1.bf16.msra.mxu0 0
      %1269 = vmatprep.subr.bf16.mxu0 0
      %1270 = vmatpush1.bf16.msra.mxu0 0
      %1271 = vmatprep.subr.bf16.mxu0 0
      %1272 = vmatpush1.bf16.msra.mxu0 0
      %1273 = vmatprep.subr.bf16.mxu0 0
      %1274 = vmatpush1.bf16.msra.mxu0 0
      %1275 = vmatprep.subr.bf16.mxu0 0
      %1276 = vmatpush1.bf16.msra.mxu0 0
      %1277 = vmatprep.subr.bf16.mxu0 0
      %1278 = vmatpush1.bf16.msra.mxu0 0
      %1279 = vmatprep.subr.bf16.mxu0 0
      %1280 = vmatpush1.bf16.msra.mxu0 0
      %1281 = vmatprep.subr.bf16.mxu0 0
      %1282 = vmatpush1.bf16.msra.mxu0 0
      %1283 = vmatprep.subr.bf16.mxu0 0
      %1284 = vmatpush1.bf16.msra.mxu0 0
      %1285 = vmatprep.subr.bf16.mxu0 0
      %1286 = vmatpush1.bf16.msra.mxu0 0
      %1287 = vmatprep.subr.bf16.mxu0 0
      %1288 = vmatpush1.bf16.msra.mxu0 0
      %1289 = vmatprep.subr.bf16.mxu0 0
      %1290 = vmatpush1.bf16.msra.mxu0 0
      %1291 = vmatprep.mubr.bf16.mxu0 0
      %1292 = vmatmul.mubr.bf16.gmra.mrb[0].mxu0 %v1245
      %v1293 = vpop.f32.mrb[0].mxu0
      %v1294 = vadd.f32 0.0, %v1293
      %v1295 = vpop.f32.mrb[0].mxu0
      %v1296 = vpop.f32.mrb[0].mxu0
      %v1297 = vadd.f32 0.0, %v1296
      %v1298 = vpop.f32.mrb[0].mxu0
      %1299 = vmatprep.mubr.bf16.mxu0 0
      %1300 = vmatmul.mubr.bf16.gmra.mrb[0].mxu0 %v1248
      %v1301 = vpop.f32.mrb[0].mxu0
      %v1302 = vadd.f32 0.0, %v1301
      %v1303 = vpop.f32.mrb[0].mxu0
      %v1304 = vpop.f32.mrb[0].mxu0
      %v1305 = vadd.f32 0.0, %v1304
      %v1306 = vpop.f32.mrb[0].mxu0
      %1307 = vmatprep.mubr.bf16.mxu0 0
      %1308 = vmatmul.mubr.bf16.gmra.mrb[0].mxu0 %v1251
      %v1309 = vpop.f32.mrb[0].mxu0
      %v1310 = vadd.f32 0.0, %v1309
      %v1311 = vpop.f32.mrb[0].mxu0
      %v1312 = vpop.f32.mrb[0].mxu0
      %v1313 = vadd.f32 0.0, %v1312
      %v1314 = vpop.f32.mrb[0].mxu0
      %1315 = vmatprep.mubr.bf16.mxu0 0
      %1316 = vmatmul.mubr.bf16.gmra.mrb[0].mxu0 %v1254
      %v1317 = vpop.f32.mrb[0].mxu0
      %v1318 = vadd.f32 0.0, %v1317
      %v1319 = vpop.f32.mrb[0].mxu0
      %v1320 = vpop.f32.mrb[0].mxu0
      %v1321 = vadd.f32 0.0, %v1320
      %v1322 = vpop.f32.mrb[0].mxu0
      %1323 = vmatprep.mubr.bf16.mxu0 0
      %1324 = vmatmul.mubr.bf16.gmra.mrb[0].mxu0 %v1257
      %v1325 = vpop.f32.mrb[0].mxu0
      %v1326 = vadd.f32 0.0, %v1325
      %v1327 = vpop.f32.mrb[0].mxu0
      %v1328 = vpop.f32.mrb[0].mxu0
      %v1329 = vadd.f32 0.0, %v1328
      %v1330 = vpop.f32.mrb[0].mxu0
      %1331 = vdwg.mxu0
      %v1332 = vadd.f32 %v1202, %v1294
      %v1333 = vadd.f32 %v1203, %v1297
      %v1334 = vadd.f32 %v1204, %v1302
      %v1335 = vadd.f32 %v1205, %v1305
      %v1336 = vadd.f32 %v1206, %v1310
      %v1337 = vadd.f32 %v1207, %v1313
      %v1338 = vadd.f32 %v1208, %v1318
      %v1339 = vadd.f32 %v1209, %v1321
      %v1340 = vadd.f32 %v1210, %v1326
      %v1341 = vadd.f32 %v1211, %v1329
      %v1342 = vld [vmem:[%s185] sm:$0xff]
      %v1343 = vld [vmem:[%s185 + $0x8] sm:$0xff]
      %v1344 = vld [vmem:[%s185 + $0x10] sm:$0xff]
      %v1345 = vld [vmem:[%s185 + $0x18] sm:$0xff]
      %v1346 = vld [vmem:[%s185 + $0x20] sm:$0xff]
      %v1347 = vld [vmem:[%s185 + $0x28] sm:$0xff]
      %v1348 = vld [vmem:[%s185 + $0x30] sm:$0xff]
      %v1349 = vld [vmem:[%s185 + $0x38] sm:$0xff]
      %v1350 = vld [vmem:[%s185 + $0x40] sm:$0xff]
      %v1351 = vld [vmem:[%s185 + $0x48] sm:$0xff]
      %v1352 = vadd.f32 %v1332, %v1342
      %v1353 = vadd.f32 %v1333, %v1343
      %v1354 = vadd.f32 %v1334, %v1344
      %v1355 = vadd.f32 %v1335, %v1345
      %v1356 = vadd.f32 %v1336, %v1346
      %v1357 = vadd.f32 %v1337, %v1347
      %v1358 = vadd.f32 %v1338, %v1348
      %v1359 = vadd.f32 %v1339, %v1349
      %v1360 = vadd.f32 %v1340, %v1350
      %v1361 = vadd.f32 %v1341, %v1351
      %1362 = vst.msk [vmem:[%s190] sm:$0xff] %vm243, %v1352
      %1363 = vst.msk [vmem:[%s190 + $0x8] sm:$0xff] %vm243, %v1353
      %1364 = vst.msk [vmem:[%s190 + $0x10] sm:$0xff] %vm243, %v1354
      %1365 = vst.msk [vmem:[%s190 + $0x18] sm:$0xff] %vm243, %v1355
      %1366 = vst.msk [vmem:[%s190 + $0x20] sm:$0xff] %vm243, %v1356
      %1367 = vst.msk [vmem:[%s190 + $0x28] sm:$0xff] %vm243, %v1357
      %1368 = vst.msk [vmem:[%s190 + $0x30] sm:$0xff] %vm243, %v1358
      %1369 = vst.msk [vmem:[%s190 + $0x38] sm:$0xff] %vm243, %v1359
      %1370 = vst.msk [vmem:[%s190 + $0x40] sm:$0xff] %vm243, %v1360
      %1371 = vst.msk [vmem:[%s190 + $0x48] sm:$0xff] %vm243, %v1361
      %p1372 = scmp.lt.s32.totalorder %s14, 1
      %s1373 = scalar_select %p1372, %s14, 1
      %s1374 = smul.addr %s1373, 10
      %s1375 = smul.addr %s1374, 8
      %s1376 = scalar_lea.vmem %s3, %s1375
      // Predicated region
      $region33: #{_lambda_.8} parent=31 // pred_check
        %p1377 = pneg %p105
      $region34: #{_lambda_.8} parent=31 // pred_check_branch
        %1379 = sbr.rel (%p1377) target = $region36
      $region35: #{_lambda_.8} parent=31 // pred_region
        _
      $region36: #{_lambda_.8} parent=31 // pred_fallthru
        _
    $region32: #{_lambda_.8} parent=5 // pred_fallthru
      _
    %p1380 = scmp.le.s32.totalorder 2, %s9
    // Predicated region
    $region37: #{_lambda_.8} parent=5 // pred_check
      %p1381 = pneg %p1380
    $region38: #{_lambda_.8} parent=5 // pred_check_branch
      %1383 = sbr.rel (%p1381) target = $region40
    $region39: #{_lambda_.8} parent=5 // pred_region
      %s1384 = ssub.s32 %s9, 2
      // Predicated region
      $region41: #{_lambda_.8} parent=39 // pred_check
        %p1385 = pneg %p111
      $region42: #{_lambda_.8} parent=39 // pred_check_branch
        %1387 = sbr.rel (%p1385) target = $region44
      $region43: #{_lambda_.8} parent=39 // pred_region
        %p1388 = scmp.lt.s32.totalorder %s15, 1
        %s1389 = scalar_select %p1388, %s15, 1
        %s1390 = smul.addr %s1389, 10
        %s1391 = smul.addr %s1390, 8
        %s1392 = scalar_lea.vmem %s3, %s1391
      $region44: #{_lambda_.8} parent=39 // pred_fallthru
        _
    $region40: #{_lambda_.8} parent=5 // pred_fallthru
      _
  $region6: #{_lambda_.8} parent=0 // loop_footer
    %s13 = sadd.s32 1, %s9
  $region7: #{_lambda_.8} parent=0 // loop_footer_branch
    %8 = sbr.rel target = $region3
  $region8: #{_lambda_.8} parent=0 // loop_exit
    _

// kernel: _lambda_.10
$region0: #{_lambda_.10}
  #allocation0 [shape = 'u32[]', space=smem, size = 0x4, offset = 0x4, fixed_abs, tag = 'smem constant byte address 0x4 - core index']
  #allocation1 [shape = 'u32[144,128]{1,0:T(1,128)}', space=vmem, size = 0x12000, scoped, tag = 'internal scratch']
  %s0 = inlined_call_operand.vmem [shape: f32[2,1,38,64], index: 0, kind: input, shape index: {}]
  %s1 = inlined_call_operand.vmem [shape: bf16[9,64,64], index: 1, kind: input, shape index: {}]
  %s2 = inlined_call_operand.vmem [shape: f32[2,24,64], index: 2, kind: input, shape index: {}]
  %s3 = inlined_call_operand.vmem [shape: f32[2,24,64], index: 3, kind: output, shape index: {}]
  %s4 = sld [smem:[#allocation0]]
  $region45: #{_lambda_.10} parent=0
    _
  %s6 = ssub.s32 1, %s4
  %s7 = scalar_select 0, %s6, %s4
  loop: start=0, step=1, limit=4
  $region2: #{_lambda_.10} parent=0 // loop_pre_header
    _
  $region3: #{_lambda_.10} parent=0 // loop_header
    %s9 = sphi 0, %s13
    %p10 = scmp.ge.s32.totalorder %s9, 4
    %s19 = sphi 0, %s21
    %s22 = sphi 0, %s19
    %s23 = sphi 0, %s22
    %s39 = sphi 0, %s23
    %s43 = sphi 0, %s43
    %s45 = sphi 0, %s43
    %s46 = sphi 0, %s45
    %s60 = sphi 0, %s46
    %s66 = sphi 0, %s68
    %s69 = sphi 0, %s66
    %s70 = sphi 0, %s69
    %s86 = sphi 0, %s70
    %s92 = sphi 0, %s94
    %s95 = sphi 0, %s92
    %s96 = sphi 0, %s95
    %s112 = sphi 0, %s96
  $region4: #{_lambda_.10} parent=0 // loop_header_branch
    %12 = sbr.rel (%p10) target = $region8
  $region5: #{_lambda_.10} parent=0 // loop_body
    %s14 = ssub.s32 %s9, 1
    %s15 = ssub.s32 %s9, 2
    %s16 = sadd.s32 %s9, 1
    %s17 = ssub.s32 %s9, %s16
    %p18 = scmp.eq.s32.totalorder %s17, 0
    %s20 = sadd.s32 %s19, 1
    %s21 = scalar_select %p18, %s19, %s20
    %p24 = pneg %p18
    %p25 = scmp.eq.s32.totalorder %s9, 1
    %p26 = por %p24, %p25
    %p27 = scmp.ne.s32.totalorder %s19, %s22
    %p28 = scmp.eq.s32.totalorder %s9, 0
    %p29 = por %p27, %p28
    %p30 = scmp.ne.s32.totalorder %s19, %s22
    %p31 = scmp.eq.s32.totalorder %s14, 1
    %p32 = por %p30, %p31
    %p33 = scmp.ne.s32.totalorder %s22, %s23
    %p34 = scmp.eq.s32.totalorder %s14, 0
    %p35 = por %p33, %p34
    %p36 = scmp.ne.s32.totalorder %s22, %s23
    %p37 = scmp.eq.s32.totalorder %s15, 1
    %p38 = por %p36, %p37
    %p40 = scmp.ne.s32.totalorder %s23, %s39
    %p41 = scmp.eq.s32.totalorder %s15, 0
    %p42 = por %p40, %p41
    %s44 = sadd.s32 %s43, 1
    %p47 = scmp.eq.s32.totalorder %s9, 1
    %p48 = scmp.ne.s32.totalorder %s43, %s45
    %p49 = scmp.eq.s32.totalorder %s9, 0
    %p50 = por %p48, %p49
    %p51 = scmp.ne.s32.totalorder %s43, %s45
    %p52 = scmp.eq.s32.totalorder %s14, 1
    %p53 = por %p51, %p52
    %p54 = scmp.ne.s32.totalorder %s45, %s46
    %p55 = scmp.eq.s32.totalorder %s14, 0
    %p56 = por %p54, %p55
    %p57 = scmp.ne.s32.totalorder %s45, %s46
    %p58 = scmp.eq.s32.totalorder %s15, 1
    %p59 = por %p57, %p58
    %p61 = scmp.ne.s32.totalorder %s46, %s60
    %p62 = scmp.eq.s32.totalorder %s15, 0
    %p63 = por %p61, %p62
    %s64 = ssub.s32 %s9, %s16
    %p65 = scmp.eq.s32.totalorder %s64, 0
    %s67 = sadd.s32 %s66, 1
    %s68 = scalar_select %p65, %s66, %s67
    %p71 = pneg %p65
    %p72 = scmp.eq.s32.totalorder %s9, 1
    %p73 = por %p71, %p72
    %p74 = scmp.ne.s32.totalorder %s66, %s69
    %p75 = scmp.eq.s32.totalorder %s9, 0
    %p76 = por %p74, %p75
    %p77 = scmp.ne.s32.totalorder %s66, %s69
    %p78 = scmp.eq.s32.totalorder %s14, 1
    %p79 = por %p77, %p78
    %p80 = scmp.ne.s32.totalorder %s69, %s70
    %p81 = scmp.eq.s32.totalorder %s14, 0
    %p82 = por %p80, %p81
    %p83 = scmp.ne.s32.totalorder %s69, %s70
    %p84 = scmp.eq.s32.totalorder %s15, 1
    %p85 = por %p83, %p84
    %p87 = scmp.ne.s32.totalorder %s70, %s86
    %p88 = scmp.eq.s32.totalorder %s15, 0
    %p89 = por %p87, %p88
    %s90 = ssub.s32 %s9, %s16
    %p91 = scmp.eq.s32.totalorder %s90, 0
    %s93 = sadd.s32 %s92, 1
    %s94 = scalar_select %p91, %s92, %s93
    %p97 = pneg %p91
    %p98 = scmp.eq.s32.totalorder %s9, 1
    %p99 = por %p97, %p98
    %p100 = scmp.ne.s32.totalorder %s92, %s95
    %p101 = scmp.eq.s32.totalorder %s9, 0
    %p102 = por %p100, %p101
    %p103 = scmp.ne.s32.totalorder %s92, %s95
    %p104 = scmp.eq.s32.totalorder %s14, 1
    %p105 = por %p103, %p104
    %p106 = scmp.ne.s32.totalorder %s95, %s96
    %p107 = scmp.eq.s32.totalorder %s14, 0
    %p108 = por %p106, %p107
    %p109 = scmp.ne.s32.totalorder %s95, %s96
    %p110 = scmp.eq.s32.totalorder %s15, 1
    %p111 = por %p109, %p110
    %p113 = scmp.ne.s32.totalorder %s96, %s112
    %p114 = scmp.eq.s32.totalorder %s15, 0
    %p115 = por %p113, %p114
    %p116 = scmp.le.s32.totalorder 1, %s9
    %p117 = scmp.lt.s32.totalorder %s9, 3
    %p118 = pnand %p116, %p117
    %p119 = pneg %p118
    // Predicated region
    $region9: #{_lambda_.10} parent=5 // pred_check
      _
    $region10: #{_lambda_.10} parent=5 // pred_check_branch
      %121 = sbr.rel (%p118) target = $region12
    $region11: #{_lambda_.10} parent=5 // pred_region
      %s122 = ssub.s32 %s9, 1
      // Predicated region
      $region13: #{_lambda_.10} parent=11 // pred_check
        %p123 = pneg %p56
      $region14: #{_lambda_.10} parent=11 // pred_check_branch
        %125 = sbr.rel (%p123) target = $region16
      $region15: #{_lambda_.10} parent=11 // pred_region
        _
      $region16: #{_lambda_.10} parent=11 // pred_fallthru
        _
    $region12: #{_lambda_.10} parent=5 // pred_fallthru
      _
    %p126 = scmp.lt.s32.totalorder %s9, 2
    // Predicated region
    $region17: #{_lambda_.10} parent=5 // pred_check
      %p127 = pneg %p126
    $region18: #{_lambda_.10} parent=5 // pred_check_branch
      %129 = sbr.rel (%p127) target = $region20
    $region19: #{_lambda_.10} parent=5 // pred_region
      // Predicated region
      $region21: #{_lambda_.10} parent=19 // pred_check
        %p130 = pneg %p29
      $region22: #{_lambda_.10} parent=19 // pred_check_branch
        %132 = sbr.rel (%p130) target = $region24
      $region23: #{_lambda_.10} parent=19 // pred_region
        %p133 = scmp.lt.s32.totalorder %s9, 1
        %s134 = scalar_select %p133, %s9, 1
        %s135 = smul.addr %s134, 5
        %s136 = smul.addr %s135, 8
        %s137 = scalar_lea.vmem %s0, %s136
      $region24: #{_lambda_.10} parent=19 // pred_fallthru
        _
      // Predicated region
      $region25: #{_lambda_.10} parent=19 // pred_check
        %p138 = pneg %p76
      $region26: #{_lambda_.10} parent=19 // pred_check_branch
        %140 = sbr.rel (%p138) target = $region28
      $region27: #{_lambda_.10} parent=19 // pred_region
        %p141 = scmp.lt.s32.totalorder %s9, 1
        %s142 = scalar_select %p141, %s9, 1
        %s143 = smul.addr %s142, 3
        %s144 = smul.addr %s143, 8
        %s145 = scalar_lea.vmem %s2, %s144
      $region28: #{_lambda_.10} parent=19 // pred_fallthru
        _
    $region20: #{_lambda_.10} parent=5 // pred_fallthru
      _
    %p146 = scmp.le.s32.totalorder 1, %s9
    %p147 = scmp.lt.s32.totalorder %s9, 3
    %p148 = pnand %p146, %p147
    %p149 = pneg %p148
    // Predicated region
    $region29: #{_lambda_.10} parent=5 // pred_check
      _
    $region30: #{_lambda_.10} parent=5 // pred_check_branch
      %151 = sbr.rel (%p148) target = $region32
    $region31: #{_lambda_.10} parent=5 // pred_region
      %s152 = ssub.s32 %s9, 1
      %p153 = scmp.lt.s32.totalorder %s14, 1
      %s154 = scalar_select %p153, %s14, 1
      %s155 = smul.addr %s154, 5
      %s156 = smul.addr %s155, 8
      %s157 = scalar_lea.vmem %s0, %s156
      %p158 = pneg %p35
      %p159 = pneg %p32
      %p160 = pneg %p56
      %p161 = pneg %p53
      %p162 = scmp.lt.s32.totalorder %s14, 1
      %s163 = scalar_select %p162, %s14, 1
      %s164 = smul.addr %s163, 3
      %s165 = smul.addr %s164, 8
      %s166 = scalar_lea.vmem %s2, %s165
      %p167 = pneg %p82
      %p168 = pneg %p79
      %p169 = pneg %p108
      %p170 = pneg %p105
      %p171 = scmp.lt.s32.totalorder %s14, 1
      %s172 = scalar_select %p171, %s14, 1
      %s173 = smul.addr %s172, 3
      %s174 = smul.addr %s173, 8
      %s175 = scalar_lea.vmem %s3, %s174
      %p176 = scmp.lt.s32.totalorder %s14, 1
      %s177 = scalar_select %p176, %s14, 1
      %s178 = smul.addr %s177, 5
      %s179 = smul.addr %s178, 8
      %s180 = scalar_lea.vmem %s0, %s179
      %p181 = scmp.lt.s32.totalorder %s14, 1
      %s182 = scalar_select %p181, %s14, 1
      %s183 = smul.addr %s182, 3
      %s184 = smul.addr %s183, 8
      %s185 = scalar_lea.vmem %s2, %s184
      %p186 = scmp.lt.s32.totalorder %s14, 1
      %s187 = scalar_select %p186, %s14, 1
      %s188 = smul.addr %s187, 3
      %s189 = smul.addr %s188, 8
      %s190 = scalar_lea.vmem %s3, %s189
      %v192 = vld [vmem:[%s180] sm:$0xff]
      %v193 = vld [vmem:[%s180 + $0x8] sm:$0xff]
      %v194 = vld [vmem:[%s180 + $0x10] sm:$0xff]
      %v195 = vpack.c.bf16 %v193, %v192
      %v196 = vpack.c.bf16 %v194, %v194
      %v197 = vld [vmem:[%s1] sm:$0xf]
      %v198 = vld [vmem:[%s1 + $0x4] sm:$0xf]
      %v199 = vld [vmem:[%s1 + $0x8] sm:$0xf]
      %v200 = vld [vmem:[%s1 + $0xc] sm:$0xf]
      %v201 = vld [vmem:[%s1 + $0x10] sm:$0xf]
      %v202 = vld [vmem:[%s1 + $0x14] sm:$0xf]
      %v203 = vld [vmem:[%s1 + $0x18] sm:$0xf]
      %v204 = vld [vmem:[%s1 + $0x1c] sm:$0xf]
      %v205 = vld [vmem:[%s180 + $0x1] sm:$0xff]
      %v206 = vld [vmem:[%s180 + $0x9] sm:$0xff]
      %v207 = vld [vmem:[%s180 + $0x11] sm:$0xff]
      %v208 = vpack.c.bf16 %v206, %v205
      %v209 = vpack.c.bf16 %v207, %v207
      %s210 = scalar_lea.vmem %s1, 32
      %v211 = vld [vmem:[%s210] sm:$0xf]
      %v212 = vld [vmem:[%s210 + $0x4] sm:$0xf]
      %v213 = vld [vmem:[%s210 + $0x8] sm:$0xf]
      %v214 = vld [vmem:[%s210 + $0xc] sm:$0xf]
      %v215 = vld [vmem:[%s210 + $0x10] sm:$0xf]
      %v216 = vld [vmem:[%s210 + $0x14] sm:$0xf]
      %v217 = vld [vmem:[%s210 + $0x18] sm:$0xf]
      %v218 = vld [vmem:[%s210 + $0x1c] sm:$0xf]
      %v227 = vunpack.c.l.b16 %v211
      %v228 = vunpack.c.l.b16 %v212
      %v229 = vunpack.c.l.b16 %v213
      %v230 = vunpack.c.l.b16 %v214
      %v231 = vunpack.c.l.b16 %v215
      %v232 = vunpack.c.l.b16 %v216
      %v233 = vunpack.c.l.b16 %v217
      %v234 = vunpack.c.l.b16 %v218
      %v235 = vpack.c.b16 %v228, %v227
      %v236 = vpack.c.b16 %v230, %v229
      %v237 = vpack.c.b16 %v232, %v231
      %v238 = vpack.c.b16 %v234, %v233
      %vm243 = vcmask 523264
      %v245 = vsel %vm243, %v208, 0
      %v248 = vsel %vm243, %v209, 0
      %250 = vmatprep.subr.bf16.mxu0 0
      %251 = vmatpush1.bf16.msra.mxu0 %v235
      %252 = vmatprep.subr.bf16.mxu0 0
      %253 = vmatpush1.bf16.msra.mxu0 %v236
      %254 = vmatprep.subr.bf16.mxu0 0
      %255 = vmatpush1.bf16.msra.mxu0 %v237
      %256 = vmatprep.subr.bf16.mxu0 0
      %257 = vmatpush1.bf16.msra.mxu0 %v238
      %258 = vmatprep.subr.bf16.mxu0 0
      %259 = vmatpush1.bf16.msra.mxu0 0
      %260 = vmatprep.subr.bf16.mxu0 0
      %261 = vmatpush1.bf16.msra.mxu0 0
      %262 = vmatprep.subr.bf16.mxu0 0
      %263 = vmatpush1.bf16.msra.mxu0 0
      %264 = vmatprep.subr.bf16.mxu0 0
      %265 = vmatpush1.bf16.msra.mxu0 0
      %266 = vmatprep.subr.bf16.mxu0 0
      %267 = vmatpush1.bf16.msra.mxu0 0
      %268 = vmatprep.subr.bf16.mxu0 0
      %269 = vmatpush1.bf16.msra.mxu0 0
      %270 = vmatprep.subr.bf16.mxu0 0
      %271 = vmatpush1.bf16.msra.mxu0 0
      %272 = vmatprep.subr.bf16.mxu0 0
      %273 = vmatpush1.bf16.msra.mxu0 0
      %274 = vmatprep.subr.bf16.mxu0 0
      %275 = vmatpush1.bf16.msra.mxu0 0
      %276 = vmatprep.subr.bf16.mxu0 0
      %277 = vmatpush1.bf16.msra.mxu0 0
      %278 = vmatprep.subr.bf16.mxu0 0
      %279 = vmatpush1.bf16.msra.mxu0 0
      %280 = vmatprep.subr.bf16.mxu0 0
      %281 = vmatpush1.bf16.msra.mxu0 0
      %282 = vmatprep.mubr.bf16.mxu0 0
      %283 = vmatmul.mubr.bf16.gmra.mrb[0].mxu0 %v245
      %v284 = vpop.f32.mrb[0].mxu0
      %v285 = vadd.f32 0.0, %v284
      %v286 = vpop.f32.mrb[0].mxu0
      %v287 = vpop.f32.mrb[0].mxu0
      %v288 = vadd.f32 0.0, %v287
      %v289 = vpop.f32.mrb[0].mxu0
      %290 = vmatprep.mubr.bf16.mxu0 0
      %291 = vmatmul.mubr.bf16.gmra.mrb[0].mxu0 %v248
      %v292 = vpop.f32.mrb[0].mxu0
      %v293 = vadd.f32 0.0, %v292
      %v294 = vpop.f32.mrb[0].mxu0
      %v295 = vpop.f32.mrb[0].mxu0
      %v296 = vpop.f32.mrb[0].mxu0
      %297 = vdwg.mxu0
      %v306 = vunpack.c.l.b16 %v197
      %v307 = vunpack.c.l.b16 %v198
      %v308 = vunpack.c.l.b16 %v199
      %v309 = vunpack.c.l.b16 %v200
      %v310 = vunpack.c.l.b16 %v201
      %v311 = vunpack.c.l.b16 %v202
      %v312 = vunpack.c.l.b16 %v203
      %v313 = vunpack.c.l.b16 %v204
      %v314 = vpack.c.b16 %v307, %v306
      %v315 = vpack.c.b16 %v309, %v308
      %v316 = vpack.c.b16 %v311, %v310
      %v317 = vpack.c.b16 %v313, %v312
      %v323 = vsel %vm243, %v195, 0
      %v326 = vsel %vm243, %v196, 0
      %328 = vmatprep.subr.bf16.mxu0 0
      %329 = vmatpush1.bf16.msra.mxu0 %v314
      %330 = vmatprep.subr.bf16.mxu0 0
      %331 = vmatpush1.bf16.msra.mxu0 %v315
      %332 = vmatprep.subr.bf16.mxu0 0
      %333 = vmatpush1.bf16.msra.mxu0 %v316
      %334 = vmatprep.subr.bf16.mxu0 0
      %335 = vmatpush1.bf16.msra.mxu0 %v317
      %336 = vmatprep.subr.bf16.mxu0 0
      %337 = vmatpush1.bf16.msra.mxu0 0
      %338 = vmatprep.subr.bf16.mxu0 0
      %339 = vmatpush1.bf16.msra.mxu0 0
      %340 = vmatprep.subr.bf16.mxu0 0
      %341 = vmatpush1.bf16.msra.mxu0 0
      %342 = vmatprep.subr.bf16.mxu0 0
      %343 = vmatpush1.bf16.msra.mxu0 0
      %344 = vmatprep.subr.bf16.mxu0 0
      %345 = vmatpush1.bf16.msra.mxu0 0
      %346 = vmatprep.subr.bf16.mxu0 0
      %347 = vmatpush1.bf16.msra.mxu0 0
      %348 = vmatprep.subr.bf16.mxu0 0
      %349 = vmatpush1.bf16.msra.mxu0 0
      %350 = vmatprep.subr.bf16.mxu0 0
      %351 = vmatpush1.bf16.msra.mxu0 0
      %352 = vmatprep.subr.bf16.mxu0 0
      %353 = vmatpush1.bf16.msra.mxu0 0
      %354 = vmatprep.subr.bf16.mxu0 0
      %355 = vmatpush1.bf16.msra.mxu0 0
      %356 = vmatprep.subr.bf16.mxu0 0
      %357 = vmatpush1.bf16.msra.mxu0 0
      %358 = vmatprep.subr.bf16.mxu0 0
      %359 = vmatpush1.bf16.msra.mxu0 0
      %360 = vmatprep.mubr.bf16.mxu0 0
      %361 = vmatmul.mubr.bf16.gmra.mrb[0].mxu0 %v323
      %v362 = vpop.f32.mrb[0].mxu0
      %v363 = vadd.f32 %v285, %v362
      %v364 = vpop.f32.mrb[0].mxu0
      %v365 = vpop.f32.mrb[0].mxu0
      %v366 = vadd.f32 %v288, %v365
      %v367 = vpop.f32.mrb[0].mxu0
      %368 = vmatprep.mubr.bf16.mxu0 0
      %369 = vmatmul.mubr.bf16.gmra.mrb[0].mxu0 %v326
      %v370 = vpop.f32.mrb[0].mxu0
      %v371 = vadd.f32 %v293, %v370
      %v372 = vpop.f32.mrb[0].mxu0
      %v373 = vpop.f32.mrb[0].mxu0
      %v374 = vpop.f32.mrb[0].mxu0
      %375 = vdwg.mxu0
      %v376 = vld [vmem:[%s180 + $0x2] sm:$0xff]
      %v377 = vld [vmem:[%s180 + $0xa] sm:$0xff]
      %v378 = vld [vmem:[%s180 + $0x12] sm:$0xff]
      %v379 = vpack.c.bf16 %v377, %v376
      %v380 = vpack.c.bf16 %v378, %v378
      %s381 = scalar_lea.vmem %s1, 64
      %v382 = vld [vmem:[%s381] sm:$0xf]
      %v383 = vld [vmem:[%s381 + $0x4] sm:$0xf]
      %v384 = vld [vmem:[%s381 + $0x8] sm:$0xf]
      %v385 = vld [vmem:[%s381 + $0xc] sm:$0xf]
      %v386 = vld [vmem:[%s381 + $0x10] sm:$0xf]
      %v387 = vld [vmem:[%s381 + $0x14] sm:$0xf]
      %v388 = vld [vmem:[%s381 + $0x18] sm:$0xf]
      %v389 = vld [vmem:[%s381 + $0x1c] sm:$0xf]
      %v398 = vunpack.c.l.b16 %v382
      %v399 = vunpack.c.l.b16 %v383
      %v400 = vunpack.c.l.b16 %v384
      %v401 = vunpack.c.l.b16 %v385
      %v402 = vunpack.c.l.b16 %v386
      %v403 = vunpack.c.l.b16 %v387
      %v404 = vunpack.c.l.b16 %v388
      %v405 = vunpack.c.l.b16 %v389
      %v406 = vpack.c.b16 %v399, %v398
      %v407 = vpack.c.b16 %v401, %v400
      %v408 = vpack.c.b16 %v403, %v402
      %v409 = vpack.c.b16 %v405, %v404
      %v415 = vsel %vm243, %v379, 0
      %v418 = vsel %vm243, %v380, 0
      %420 = vmatprep.subr.bf16.mxu0 0
      %421 = vmatpush1.bf16.msra.mxu0 %v406
      %422 = vmatprep.subr.bf16.mxu0 0
      %423 = vmatpush1.bf16.msra.mxu0 %v407
      %424 = vmatprep.subr.bf16.mxu0 0
      %425 = vmatpush1.bf16.msra.mxu0 %v408
      %426 = vmatprep.subr.bf16.mxu0 0
      %427 = vmatpush1.bf16.msra.mxu0 %v409
      %428 = vmatprep.subr.bf16.mxu0 0
      %429 = vmatpush1.bf16.msra.mxu0 0
      %430 = vmatprep.subr.bf16.mxu0 0
      %431 = vmatpush1.bf16.msra.mxu0 0
      %432 = vmatprep.subr.bf16.mxu0 0
      %433 = vmatpush1.bf16.msra.mxu0 0
      %434 = vmatprep.subr.bf16.mxu0 0
      %435 = vmatpush1.bf16.msra.mxu0 0
      %436 = vmatprep.subr.bf16.mxu0 0
      %437 = vmatpush1.bf16.msra.mxu0 0
      %438 = vmatprep.subr.bf16.mxu0 0
      %439 = vmatpush1.bf16.msra.mxu0 0
      %440 = vmatprep.subr.bf16.mxu0 0
      %441 = vmatpush1.bf16.msra.mxu0 0
      %442 = vmatprep.subr.bf16.mxu0 0
      %443 = vmatpush1.bf16.msra.mxu0 0
      %444 = vmatprep.subr.bf16.mxu0 0
      %445 = vmatpush1.bf16.msra.mxu0 0
      %446 = vmatprep.subr.bf16.mxu0 0
      %447 = vmatpush1.bf16.msra.mxu0 0
      %448 = vmatprep.subr.bf16.mxu0 0
      %449 = vmatpush1.bf16.msra.mxu0 0
      %450 = vmatprep.subr.bf16.mxu0 0
      %451 = vmatpush1.bf16.msra.mxu0 0
      %452 = vmatprep.mubr.bf16.mxu0 0
      %453 = vmatmul.mubr.bf16.gmra.mrb[0].mxu0 %v415
      %v454 = vpop.f32.mrb[0].mxu0
      %v455 = vadd.f32 0.0, %v454
      %v456 = vpop.f32.mrb[0].mxu0
      %v457 = vpop.f32.mrb[0].mxu0
      %v458 = vadd.f32 0.0, %v457
      %v459 = vpop.f32.mrb[0].mxu0
      %460 = vmatprep.mubr.bf16.mxu0 0
      %461 = vmatmul.mubr.bf16.gmra.mrb[0].mxu0 %v418
      %v462 = vpop.f32.mrb[0].mxu0
      %v463 = vadd.f32 0.0, %v462
      %v464 = vpop.f32.mrb[0].mxu0
      %v465 = vpop.f32.mrb[0].mxu0
      %v466 = vpop.f32.mrb[0].mxu0
      %467 = vdwg.mxu0
      %v468 = vadd.f32 %v363, %v455
      %v469 = vadd.f32 %v366, %v458
      %v470 = vadd.f32 %v371, %v463
      %v471 = vld [vmem:[%s180 + $0x6] sm:$0xff]
      %v472 = vld [vmem:[%s180 + $0xe] sm:$0xff]
      %v473 = vld [vmem:[%s180 + $0x16] sm:$0xff]
      %v474 = vpack.c.bf16 %v472, %v471
      %v475 = vpack.c.bf16 %v473, %v473
      %s476 = scalar_lea.vmem %s1, 96
      %v477 = vld [vmem:[%s476] sm:$0xf]
      %v478 = vld [vmem:[%s476 + $0x4] sm:$0xf]
      %v479 = vld [vmem:[%s476 + $0x8] sm:$0xf]
      %v480 = vld [vmem:[%s476 + $0xc] sm:$0xf]
      %v481 = vld [vmem:[%s476 + $0x10] sm:$0xf]
      %v482 = vld [vmem:[%s476 + $0x14] sm:$0xf]
      %v483 = vld [vmem:[%s476 + $0x18] sm:$0xf]
      %v484 = vld [vmem:[%s476 + $0x1c] sm:$0xf]
      %v493 = vunpack.c.l.b16 %v477
      %v494 = vunpack.c.l.b16 %v478
      %v495 = vunpack.c.l.b16 %v479
      %v496 = vunpack.c.l.b16 %v480
      %v497 = vunpack.c.l.b16 %v481
      %v498 = vunpack.c.l.b16 %v482
      %v499 = vunpack.c.l.b16 %v483
      %v500 = vunpack.c.l.b16 %v484
      %v501 = vpack.c.b16 %v494, %v493
      %v502 = vpack.c.b16 %v496, %v495
      %v503 = vpack.c.b16 %v498, %v497
      %v504 = vpack.c.b16 %v500, %v499
      %v510 = vsel %vm243, %v474, 0
      %v513 = vsel %vm243, %v475, 0
      %515 = vmatprep.subr.bf16.mxu0 0
      %516 = vmatpush1.bf16.msra.mxu0 %v501
      %517 = vmatprep.subr.bf16.mxu0 0
      %518 = vmatpush1.bf16.msra.mxu0 %v502
      %519 = vmatprep.subr.bf16.mxu0 0
      %520 = vmatpush1.bf16.msra.mxu0 %v503
      %521 = vmatprep.subr.bf16.mxu0 0
      %522 = vmatpush1.bf16.msra.mxu0 %v504
      %523 = vmatprep.subr.bf16.mxu0 0
      %524 = vmatpush1.bf16.msra.mxu0 0
      %525 = vmatprep.subr.bf16.mxu0 0
      %526 = vmatpush1.bf16.msra.mxu0 0
      %527 = vmatprep.subr.bf16.mxu0 0
      %528 = vmatpush1.bf16.msra.mxu0 0
      %529 = vmatprep.subr.bf16.mxu0 0
      %530 = vmatpush1.bf16.msra.mxu0 0
      %531 = vmatprep.subr.bf16.mxu0 0
      %532 = vmatpush1.bf16.msra.mxu0 0
      %533 = vmatprep.subr.bf16.mxu0 0
      %534 = vmatpush1.bf16.msra.mxu0 0
      %535 = vmatprep.subr.bf16.mxu0 0
      %536 = vmatpush1.bf16.msra.mxu0 0
      %537 = vmatprep.subr.bf16.mxu0 0
      %538 = vmatpush1.bf16.msra.mxu0 0
      %539 = vmatprep.subr.bf16.mxu0 0
      %540 = vmatpush1.bf16.msra.mxu0 0
      %541 = vmatprep.subr.bf16.mxu0 0
      %542 = vmatpush1.bf16.msra.mxu0 0
      %543 = vmatprep.subr.bf16.mxu0 0
      %544 = vmatpush1.bf16.msra.mxu0 0
      %545 = vmatprep.subr.bf16.mxu0 0
      %546 = vmatpush1.bf16.msra.mxu0 0
      %547 = vmatprep.mubr.bf16.mxu0 0
      %548 = vmatmul.mubr.bf16.gmra.mrb[0].mxu0 %v510
      %v549 = vpop.f32.mrb[0].mxu0
      %v550 = vadd.f32 0.0, %v549
      %v551 = vpop.f32.mrb[0].mxu0
      %v552 = vpop.f32.mrb[0].mxu0
      %v553 = vadd.f32 0.0, %v552
      %v554 = vpop.f32.mrb[0].mxu0
      %555 = vmatprep.mubr.bf16.mxu0 0
      %556 = vmatmul.mubr.bf16.gmra.mrb[0].mxu0 %v513
      %v557 = vpop.f32.mrb[0].mxu0
      %v558 = vadd.f32 0.0, %v557
      %v559 = vpop.f32.mrb[0].mxu0
      %v560 = vpop.f32.mrb[0].mxu0
      %v561 = vpop.f32.mrb[0].mxu0
      %562 = vdwg.mxu0
      %v563 = vadd.f32 %v468, %v550
      %v564 = vadd.f32 %v469, %v553
      %v565 = vadd.f32 %v470, %v558
      %v566 = vld [vmem:[%s180 + $0x7] sm:$0xff]
      %v567 = vld [vmem:[%s180 + $0xf] sm:$0xff]
      %v568 = vld [vmem:[%s180 + $0x17] sm:$0xff]
      %v569 = vpack.c.bf16 %v567, %v566
      %v570 = vpack.c.bf16 %v568, %v568
      %s571 = scalar_lea.vmem %s1, 128
      %v572 = vld [vmem:[%s571] sm:$0xf]
      %v573 = vld [vmem:[%s571 + $0x4] sm:$0xf]
      %v574 = vld [vmem:[%s571 + $0x8] sm:$0xf]
      %v575 = vld [vmem:[%s571 + $0xc] sm:$0xf]
      %v576 = vld [vmem:[%s571 + $0x10] sm:$0xf]
      %v577 = vld [vmem:[%s571 + $0x14] sm:$0xf]
      %v578 = vld [vmem:[%s571 + $0x18] sm:$0xf]
      %v579 = vld [vmem:[%s571 + $0x1c] sm:$0xf]
      %v588 = vunpack.c.l.b16 %v572
      %v589 = vunpack.c.l.b16 %v573
      %v590 = vunpack.c.l.b16 %v574
      %v591 = vunpack.c.l.b16 %v575
      %v592 = vunpack.c.l.b16 %v576
      %v593 = vunpack.c.l.b16 %v577
      %v594 = vunpack.c.l.b16 %v578
      %v595 = vunpack.c.l.b16 %v579
      %v596 = vpack.c.b16 %v589, %v588
      %v597 = vpack.c.b16 %v591, %v590
      %v598 = vpack.c.b16 %v593, %v592
      %v599 = vpack.c.b16 %v595, %v594
      %v605 = vsel %vm243, %v569, 0
      %v608 = vsel %vm243, %v570, 0
      %610 = vmatprep.subr.bf16.mxu0 0
      %611 = vmatpush1.bf16.msra.mxu0 %v596
      %612 = vmatprep.subr.bf16.mxu0 0
      %613 = vmatpush1.bf16.msra.mxu0 %v597
      %614 = vmatprep.subr.bf16.mxu0 0
      %615 = vmatpush1.bf16.msra.mxu0 %v598
      %616 = vmatprep.subr.bf16.mxu0 0
      %617 = vmatpush1.bf16.msra.mxu0 %v599
      %618 = vmatprep.subr.bf16.mxu0 0
      %619 = vmatpush1.bf16.msra.mxu0 0
      %620 = vmatprep.subr.bf16.mxu0 0
      %621 = vmatpush1.bf16.msra.mxu0 0
      %622 = vmatprep.subr.bf16.mxu0 0
      %623 = vmatpush1.bf16.msra.mxu0 0
      %624 = vmatprep.subr.bf16.mxu0 0
      %625 = vmatpush1.bf16.msra.mxu0 0
      %626 = vmatprep.subr.bf16.mxu0 0
      %627 = vmatpush1.bf16.msra.mxu0 0
      %628 = vmatprep.subr.bf16.mxu0 0
      %629 = vmatpush1.bf16.msra.mxu0 0
      %630 = vmatprep.subr.bf16.mxu0 0
      %631 = vmatpush1.bf16.msra.mxu0 0
      %632 = vmatprep.subr.bf16.mxu0 0
      %633 = vmatpush1.bf16.msra.mxu0 0
      %634 = vmatprep.subr.bf16.mxu0 0
      %635 = vmatpush1.bf16.msra.mxu0 0
      %636 = vmatprep.subr.bf16.mxu0 0
      %637 = vmatpush1.bf16.msra.mxu0 0
      %638 = vmatprep.subr.bf16.mxu0 0
      %639 = vmatpush1.bf16.msra.mxu0 0
      %640 = vmatprep.subr.bf16.mxu0 0
      %641 = vmatpush1.bf16.msra.mxu0 0
      %642 = vmatprep.mubr.bf16.mxu0 0
      %643 = vmatmul.mubr.bf16.gmra.mrb[0].mxu0 %v605
      %v644 = vpop.f32.mrb[0].mxu0
      %v645 = vadd.f32 0.0, %v644
      %v646 = vpop.f32.mrb[0].mxu0
      %v647 = vpop.f32.mrb[0].mxu0
      %v648 = vadd.f32 0.0, %v647
      %v649 = vpop.f32.mrb[0].mxu0
      %650 = vmatprep.mubr.bf16.mxu0 0
      %651 = vmatmul.mubr.bf16.gmra.mrb[0].mxu0 %v608
      %v652 = vpop.f32.mrb[0].mxu0
      %v653 = vadd.f32 0.0, %v652
      %v654 = vpop.f32.mrb[0].mxu0
      %v655 = vpop.f32.mrb[0].mxu0
      %v656 = vpop.f32.mrb[0].mxu0
      %657 = vdwg.mxu0
      %v658 = vadd.f32 %v563, %v645
      %v659 = vadd.f32 %v564, %v648
      %v660 = vadd.f32 %v565, %v653
      %v661 = vld [vmem:[%s180 + $0x8] sm:$0xff]
      %v662 = vld [vmem:[%s180 + $0x10] sm:$0xff]
      %v663 = vld [vmem:[%s180 + $0x18] sm:$0xff]
      %v664 = vpack.c.bf16 %v662, %v661
      %v665 = vpack.c.bf16 %v663, %v663
      %s666 = scalar_lea.vmem %s1, 160
      %v667 = vld [vmem:[%s666] sm:$0xf]
      %v668 = vld [vmem:[%s666 + $0x4] sm:$0xf]
      %v669 = vld [vmem:[%s666 + $0x8] sm:$0xf]
      %v670 = vld [vmem:[%s666 + $0xc] sm:$0xf]
      %v671 = vld [vmem:[%s666 + $0x10] sm:$0xf]
      %v672 = vld [vmem:[%s666 + $0x14] sm:$0xf]
      %v673 = vld [vmem:[%s666 + $0x18] sm:$0xf]
      %v674 = vld [vmem:[%s666 + $0x1c] sm:$0xf]
      %v683 = vunpack.c.l.b16 %v667
      %v684 = vunpack.c.l.b16 %v668
      %v685 = vunpack.c.l.b16 %v669
      %v686 = vunpack.c.l.b16 %v670
      %v687 = vunpack.c.l.b16 %v671
      %v688 = vunpack.c.l.b16 %v672
      %v689 = vunpack.c.l.b16 %v673
      %v690 = vunpack.c.l.b16 %v674
      %v691 = vpack.c.b16 %v684, %v683
      %v692 = vpack.c.b16 %v686, %v685
      %v693 = vpack.c.b16 %v688, %v687
      %v694 = vpack.c.b16 %v690, %v689
      %v700 = vsel %vm243, %v664, 0
      %v703 = vsel %vm243, %v665, 0
      %705 = vmatprep.subr.bf16.mxu0 0
      %706 = vmatpush1.bf16.msra.mxu0 %v691
      %707 = vmatprep.subr.bf16.mxu0 0
      %708 = vmatpush1.bf16.msra.mxu0 %v692
      %709 = vmatprep.subr.bf16.mxu0 0
      %710 = vmatpush1.bf16.msra.mxu0 %v693
      %711 = vmatprep.subr.bf16.mxu0 0
      %712 = vmatpush1.bf16.msra.mxu0 %v694
      %713 = vmatprep.subr.bf16.mxu0 0
      %714 = vmatpush1.bf16.msra.mxu0 0
      %715 = vmatprep.subr.bf16.mxu0 0
      %716 = vmatpush1.bf16.msra.mxu0 0
      %717 = vmatprep.subr.bf16.mxu0 0
      %718 = vmatpush1.bf16.msra.mxu0 0
      %719 = vmatprep.subr.bf16.mxu0 0
      %720 = vmatpush1.bf16.msra.mxu0 0
      %721 = vmatprep.subr.bf16.mxu0 0
      %722 = vmatpush1.bf16.msra.mxu0 0
      %723 = vmatprep.subr.bf16.mxu0 0
      %724 = vmatpush1.bf16.msra.mxu0 0
      %725 = vmatprep.subr.bf16.mxu0 0
      %726 = vmatpush1.bf16.msra.mxu0 0
      %727 = vmatprep.subr.bf16.mxu0 0
      %728 = vmatpush1.bf16.msra.mxu0 0
      %729 = vmatprep.subr.bf16.mxu0 0
      %730 = vmatpush1.bf16.msra.mxu0 0
      %731 = vmatprep.subr.bf16.mxu0 0
      %732 = vmatpush1.bf16.msra.mxu0 0
      %733 = vmatprep.subr.bf16.mxu0 0
      %734 = vmatpush1.bf16.msra.mxu0 0
      %735 = vmatprep.subr.bf16.mxu0 0
      %736 = vmatpush1.bf16.msra.mxu0 0
      %737 = vmatprep.mubr.bf16.mxu0 0
      %738 = vmatmul.mubr.bf16.gmra.mrb[0].mxu0 %v700
      %v739 = vpop.f32.mrb[0].mxu0
      %v740 = vadd.f32 0.0, %v739
      %v741 = vpop.f32.mrb[0].mxu0
      %v742 = vpop.f32.mrb[0].mxu0
      %v743 = vadd.f32 0.0, %v742
      %v744 = vpop.f32.mrb[0].mxu0
      %745 = vmatprep.mubr.bf16.mxu0 0
      %746 = vmatmul.mubr.bf16.gmra.mrb[0].mxu0 %v703
      %v747 = vpop.f32.mrb[0].mxu0
      %v748 = vadd.f32 0.0, %v747
      %v749 = vpop.f32.mrb[0].mxu0
      %v750 = vpop.f32.mrb[0].mxu0
      %v751 = vpop.f32.mrb[0].mxu0
      %752 = vdwg.mxu0
      %v753 = vadd.f32 %v658, %v740
      %v754 = vadd.f32 %v659, %v743
      %v755 = vadd.f32 %v660, %v748
      %v756 = vld [vmem:[%s180 + $0xc] sm:$0xff]
      %v757 = vld [vmem:[%s180 + $0x14] sm:$0xff]
      %v758 = vld [vmem:[%s180 + $0x1c] sm:$0xff]
      %v759 = vpack.c.bf16 %v757, %v756
      %v760 = vpack.c.bf16 %v758, %v758
      %s761 = scalar_lea.vmem %s1, 192
      %v762 = vld [vmem:[%s761] sm:$0xf]
      %v763 = vld [vmem:[%s761 + $0x4] sm:$0xf]
      %v764 = vld [vmem:[%s761 + $0x8] sm:$0xf]
      %v765 = vld [vmem:[%s761 + $0xc] sm:$0xf]
      %v766 = vld [vmem:[%s761 + $0x10] sm:$0xf]
      %v767 = vld [vmem:[%s761 + $0x14] sm:$0xf]
      %v768 = vld [vmem:[%s761 + $0x18] sm:$0xf]
      %v769 = vld [vmem:[%s761 + $0x1c] sm:$0xf]
      %v778 = vunpack.c.l.b16 %v762
      %v779 = vunpack.c.l.b16 %v763
      %v780 = vunpack.c.l.b16 %v764
      %v781 = vunpack.c.l.b16 %v765
      %v782 = vunpack.c.l.b16 %v766
      %v783 = vunpack.c.l.b16 %v767
      %v784 = vunpack.c.l.b16 %v768
      %v785 = vunpack.c.l.b16 %v769
      %v786 = vpack.c.b16 %v779, %v778
      %v787 = vpack.c.b16 %v781, %v780
      %v788 = vpack.c.b16 %v783, %v782
      %v789 = vpack.c.b16 %v785, %v784
      %v795 = vsel %vm243, %v759, 0
      %v798 = vsel %vm243, %v760, 0
      %800 = vmatprep.subr.bf16.mxu0 0
      %801 = vmatpush1.bf16.msra.mxu0 %v786
      %802 = vmatprep.subr.bf16.mxu0 0
      %803 = vmatpush1.bf16.msra.mxu0 %v787
      %804 = vmatprep.subr.bf16.mxu0 0
      %805 = vmatpush1.bf16.msra.mxu0 %v788
      %806 = vmatprep.subr.bf16.mxu0 0
      %807 = vmatpush1.bf16.msra.mxu0 %v789
      %808 = vmatprep.subr.bf16.mxu0 0
      %809 = vmatpush1.bf16.msra.mxu0 0
      %810 = vmatprep.subr.bf16.mxu0 0
      %811 = vmatpush1.bf16.msra.mxu0 0
      %812 = vmatprep.subr.bf16.mxu0 0
      %813 = vmatpush1.bf16.msra.mxu0 0
      %814 = vmatprep.subr.bf16.mxu0 0
      %815 = vmatpush1.bf16.msra.mxu0 0
      %816 = vmatprep.subr.bf16.mxu0 0
      %817 = vmatpush1.bf16.msra.mxu0 0
      %818 = vmatprep.subr.bf16.mxu0 0
      %819 = vmatpush1.bf16.msra.mxu0 0
      %820 = vmatprep.subr.bf16.mxu0 0
      %821 = vmatpush1.bf16.msra.mxu0 0
      %822 = vmatprep.subr.bf16.mxu0 0
      %823 = vmatpush1.bf16.msra.mxu0 0
      %824 = vmatprep.subr.bf16.mxu0 0
      %825 = vmatpush1.bf16.msra.mxu0 0
      %826 = vmatprep.subr.bf16.mxu0 0
      %827 = vmatpush1.bf16.msra.mxu0 0
      %828 = vmatprep.subr.bf16.mxu0 0
      %829 = vmatpush1.bf16.msra.mxu0 0
      %830 = vmatprep.subr.bf16.mxu0 0
      %831 = vmatpush1.bf16.msra.mxu0 0
      %832 = vmatprep.mubr.bf16.mxu0 0
      %833 = vmatmul.mubr.bf16.gmra.mrb[0].mxu0 %v795
      %v834 = vpop.f32.mrb[0].mxu0
      %v835 = vadd.f32 0.0, %v834
      %v836 = vpop.f32.mrb[0].mxu0
      %v837 = vpop.f32.mrb[0].mxu0
      %v838 = vadd.f32 0.0, %v837
      %v839 = vpop.f32.mrb[0].mxu0
      %840 = vmatprep.mubr.bf16.mxu0 0
      %841 = vmatmul.mubr.bf16.gmra.mrb[0].mxu0 %v798
      %v842 = vpop.f32.mrb[0].mxu0
      %v843 = vadd.f32 0.0, %v842
      %v844 = vpop.f32.mrb[0].mxu0
      %v845 = vpop.f32.mrb[0].mxu0
      %v846 = vpop.f32.mrb[0].mxu0
      %847 = vdwg.mxu0
      %v848 = vadd.f32 %v753, %v835
      %v849 = vadd.f32 %v754, %v838
      %v850 = vadd.f32 %v755, %v843
      %v851 = vld [vmem:[%s180 + $0xd] sm:$0xff]
      %v852 = vld [vmem:[%s180 + $0x15] sm:$0xff]
      %v853 = vld [vmem:[%s180 + $0x1d] sm:$0xff]
      %v854 = vpack.c.bf16 %v852, %v851
      %v855 = vpack.c.bf16 %v853, %v853
      %s856 = scalar_lea.vmem %s1, 224
      %v857 = vld [vmem:[%s856] sm:$0xf]
      %v858 = vld [vmem:[%s856 + $0x4] sm:$0xf]
      %v859 = vld [vmem:[%s856 + $0x8] sm:$0xf]
      %v860 = vld [vmem:[%s856 + $0xc] sm:$0xf]
      %v861 = vld [vmem:[%s856 + $0x10] sm:$0xf]
      %v862 = vld [vmem:[%s856 + $0x14] sm:$0xf]
      %v863 = vld [vmem:[%s856 + $0x18] sm:$0xf]
      %v864 = vld [vmem:[%s856 + $0x1c] sm:$0xf]
      %v873 = vunpack.c.l.b16 %v857
      %v874 = vunpack.c.l.b16 %v858
      %v875 = vunpack.c.l.b16 %v859
      %v876 = vunpack.c.l.b16 %v860
      %v877 = vunpack.c.l.b16 %v861
      %v878 = vunpack.c.l.b16 %v862
      %v879 = vunpack.c.l.b16 %v863
      %v880 = vunpack.c.l.b16 %v864
      %v881 = vpack.c.b16 %v874, %v873
      %v882 = vpack.c.b16 %v876, %v875
      %v883 = vpack.c.b16 %v878, %v877
      %v884 = vpack.c.b16 %v880, %v879
      %v890 = vsel %vm243, %v854, 0
      %v893 = vsel %vm243, %v855, 0
      %895 = vmatprep.subr.bf16.mxu0 0
      %896 = vmatpush1.bf16.msra.mxu0 %v881
      %897 = vmatprep.subr.bf16.mxu0 0
      %898 = vmatpush1.bf16.msra.mxu0 %v882
      %899 = vmatprep.subr.bf16.mxu0 0
      %900 = vmatpush1.bf16.msra.mxu0 %v883
      %901 = vmatprep.subr.bf16.mxu0 0
      %902 = vmatpush1.bf16.msra.mxu0 %v884
      %903 = vmatprep.subr.bf16.mxu0 0
      %904 = vmatpush1.bf16.msra.mxu0 0
      %905 = vmatprep.subr.bf16.mxu0 0
      %906 = vmatpush1.bf16.msra.mxu0 0
      %907 = vmatprep.subr.bf16.mxu0 0
      %908 = vmatpush1.bf16.msra.mxu0 0
      %909 = vmatprep.subr.bf16.mxu0 0
      %910 = vmatpush1.bf16.msra.mxu0 0
      %911 = vmatprep.subr.bf16.mxu0 0
      %912 = vmatpush1.bf16.msra.mxu0 0
      %913 = vmatprep.subr.bf16.mxu0 0
      %914 = vmatpush1.bf16.msra.mxu0 0
      %915 = vmatprep.subr.bf16.mxu0 0
      %916 = vmatpush1.bf16.msra.mxu0 0
      %917 = vmatprep.subr.bf16.mxu0 0
      %918 = vmatpush1.bf16.msra.mxu0 0
      %919 = vmatprep.subr.bf16.mxu0 0
      %920 = vmatpush1.bf16.msra.mxu0 0
      %921 = vmatprep.subr.bf16.mxu0 0
      %922 = vmatpush1.bf16.msra.mxu0 0
      %923 = vmatprep.subr.bf16.mxu0 0
      %924 = vmatpush1.bf16.msra.mxu0 0
      %925 = vmatprep.subr.bf16.mxu0 0
      %926 = vmatpush1.bf16.msra.mxu0 0
      %927 = vmatprep.mubr.bf16.mxu0 0
      %928 = vmatmul.mubr.bf16.gmra.mrb[0].mxu0 %v890
      %v929 = vpop.f32.mrb[0].mxu0
      %v930 = vadd.f32 0.0, %v929
      %v931 = vpop.f32.mrb[0].mxu0
      %v932 = vpop.f32.mrb[0].mxu0
      %v933 = vadd.f32 0.0, %v932
      %v934 = vpop.f32.mrb[0].mxu0
      %935 = vmatprep.mubr.bf16.mxu0 0
      %936 = vmatmul.mubr.bf16.gmra.mrb[0].mxu0 %v893
      %v937 = vpop.f32.mrb[0].mxu0
      %v938 = vadd.f32 0.0, %v937
      %v939 = vpop.f32.mrb[0].mxu0
      %v940 = vpop.f32.mrb[0].mxu0
      %v941 = vpop.f32.mrb[0].mxu0
      %942 = vdwg.mxu0
      %v943 = vadd.f32 %v848, %v930
      %v944 = vadd.f32 %v849, %v933
      %v945 = vadd.f32 %v850, %v938
      %v946 = vld [vmem:[%s180 + $0xe] sm:$0xff]
      %v947 = vld [vmem:[%s180 + $0x16] sm:$0xff]
      %v948 = vld [vmem:[%s180 + $0x1e] sm:$0xff]
      %v949 = vpack.c.bf16 %v947, %v946
      %v950 = vpack.c.bf16 %v948, %v948
      %s951 = scalar_lea.vmem %s1, 256
      %v952 = vld [vmem:[%s951] sm:$0xf]
      %v953 = vld [vmem:[%s951 + $0x4] sm:$0xf]
      %v954 = vld [vmem:[%s951 + $0x8] sm:$0xf]
      %v955 = vld [vmem:[%s951 + $0xc] sm:$0xf]
      %v956 = vld [vmem:[%s951 + $0x10] sm:$0xf]
      %v957 = vld [vmem:[%s951 + $0x14] sm:$0xf]
      %v958 = vld [vmem:[%s951 + $0x18] sm:$0xf]
      %v959 = vld [vmem:[%s951 + $0x1c] sm:$0xf]
      %v968 = vunpack.c.l.b16 %v952
      %v969 = vunpack.c.l.b16 %v953
      %v970 = vunpack.c.l.b16 %v954
      %v971 = vunpack.c.l.b16 %v955
      %v972 = vunpack.c.l.b16 %v956
      %v973 = vunpack.c.l.b16 %v957
      %v974 = vunpack.c.l.b16 %v958
      %v975 = vunpack.c.l.b16 %v959
      %v976 = vpack.c.b16 %v969, %v968
      %v977 = vpack.c.b16 %v971, %v970
      %v978 = vpack.c.b16 %v973, %v972
      %v979 = vpack.c.b16 %v975, %v974
      %v985 = vsel %vm243, %v949, 0
      %v988 = vsel %vm243, %v950, 0
      %990 = vmatprep.subr.bf16.mxu0 0
      %991 = vmatpush1.bf16.msra.mxu0 %v976
      %992 = vmatprep.subr.bf16.mxu0 0
      %993 = vmatpush1.bf16.msra.mxu0 %v977
      %994 = vmatprep.subr.bf16.mxu0 0
      %995 = vmatpush1.bf16.msra.mxu0 %v978
      %996 = vmatprep.subr.bf16.mxu0 0
      %997 = vmatpush1.bf16.msra.mxu0 %v979
      %998 = vmatprep.subr.bf16.mxu0 0
      %999 = vmatpush1.bf16.msra.mxu0 0
      %1000 = vmatprep.subr.bf16.mxu0 0
      %1001 = vmatpush1.bf16.msra.mxu0 0
      %1002 = vmatprep.subr.bf16.mxu0 0
      %1003 = vmatpush1.bf16.msra.mxu0 0
      %1004 = vmatprep.subr.bf16.mxu0 0
      %1005 = vmatpush1.bf16.msra.mxu0 0
      %1006 = vmatprep.subr.bf16.mxu0 0
      %1007 = vmatpush1.bf16.msra.mxu0 0
      %1008 = vmatprep.subr.bf16.mxu0 0
      %1009 = vmatpush1.bf16.msra.mxu0 0
      %1010 = vmatprep.subr.bf16.mxu0 0
      %1011 = vmatpush1.bf16.msra.mxu0 0
      %1012 = vmatprep.subr.bf16.mxu0 0
      %1013 = vmatpush1.bf16.msra.mxu0 0
      %1014 = vmatprep.subr.bf16.mxu0 0
      %1015 = vmatpush1.bf16.msra.mxu0 0
      %1016 = vmatprep.subr.bf16.mxu0 0
      %1017 = vmatpush1.bf16.msra.mxu0 0
      %1018 = vmatprep.subr.bf16.mxu0 0
      %1019 = vmatpush1.bf16.msra.mxu0 0
      %1020 = vmatprep.subr.bf16.mxu0 0
      %1021 = vmatpush1.bf16.msra.mxu0 0
      %1022 = vmatprep.mubr.bf16.mxu0 0
      %1023 = vmatmul.mubr.bf16.gmra.mrb[0].mxu0 %v985
      %v1024 = vpop.f32.mrb[0].mxu0
      %v1025 = vadd.f32 0.0, %v1024
      %v1026 = vpop.f32.mrb[0].mxu0
      %v1027 = vpop.f32.mrb[0].mxu0
      %v1028 = vadd.f32 0.0, %v1027
      %v1029 = vpop.f32.mrb[0].mxu0
      %1030 = vmatprep.mubr.bf16.mxu0 0
      %1031 = vmatmul.mubr.bf16.gmra.mrb[0].mxu0 %v988
      %v1032 = vpop.f32.mrb[0].mxu0
      %v1033 = vadd.f32 0.0, %v1032
      %v1034 = vpop.f32.mrb[0].mxu0
      %v1035 = vpop.f32.mrb[0].mxu0
      %v1036 = vpop.f32.mrb[0].mxu0
      %1037 = vdwg.mxu0
      %v1038 = vadd.f32 %v943, %v1025
      %v1039 = vadd.f32 %v944, %v1028
      %v1040 = vadd.f32 %v945, %v1033
      %v1041 = vld [vmem:[%s185] sm:$0xff]
      %v1042 = vld [vmem:[%s185 + $0x8] sm:$0xff]
      %v1043 = vld [vmem:[%s185 + $0x10] sm:$0xff]
      %v1044 = vadd.f32 %v1038, %v1041
      %v1045 = vadd.f32 %v1039, %v1042
      %v1046 = vadd.f32 %v1040, %v1043
      %1047 = vst.msk [vmem:[%s190] sm:$0xff] %vm243, %v1044
      %1048 = vst.msk [vmem:[%s190 + $0x8] sm:$0xff] %vm243, %v1045
      %1049 = vst.msk [vmem:[%s190 + $0x10] sm:$0xff] %vm243, %v1046
      %p1050 = scmp.lt.s32.totalorder %s14, 1
      %s1051 = scalar_select %p1050, %s14, 1
      %s1052 = smul.addr %s1051, 3
      %s1053 = smul.addr %s1052, 8
      %s1054 = scalar_lea.vmem %s3, %s1053
      // Predicated region
      $region33: #{_lambda_.10} parent=31 // pred_check
        %p1055 = pneg %p105
      $region34: #{_lambda_.10} parent=31 // pred_check_branch
        %1057 = sbr.rel (%p1055) target = $region36
      $region35: #{_lambda_.10} parent=31 // pred_region
        _
      $region36: #{_lambda_.10} parent=31 // pred_fallthru
        _
    $region32: #{_lambda_.10} parent=5 // pred_fallthru
      _
    %p1058 = scmp.le.s32.totalorder 2, %s9
    // Predicated region
    $region37: #{_lambda_.10} parent=5 // pred_check
      %p1059 = pneg %p1058
    $region38: #{_lambda_.10} parent=5 // pred_check_branch
      %1061 = sbr.rel (%p1059) target = $region40
    $region39: #{_lambda_.10} parent=5 // pred_region
      %s1062 = ssub.s32 %s9, 2
      // Predicated region
      $region41: #{_lambda_.10} parent=39 // pred_check
        %p1063 = pneg %p111
      $region42: #{_lambda_.10} parent=39 // pred_check_branch
        %1065 = sbr.rel (%p1063) target = $region44
      $region43: #{_lambda_.10} parent=39 // pred_region
        %p1066 = scmp.lt.s32.totalorder %s15, 1
        %s1067 = scalar_select %p1066, %s15, 1
        %s1068 = smul.addr %s1067, 3
        %s1069 = smul.addr %s1068, 8
        %s1070 = scalar_lea.vmem %s3, %s1069
      $region44: #{_lambda_.10} parent=39 // pred_fallthru
        _
    $region40: #{_lambda_.10} parent=5 // pred_fallthru
      _
  $region6: #{_lambda_.10} parent=0 // loop_footer
    %s13 = sadd.s32 1, %s9
  $region7: #{_lambda_.10} parent=0 // loop_footer_branch
    %8 = sbr.rel target = $region3
  $region8: #{_lambda_.10} parent=0 // loop_exit
    _

// kernel: _lambda_.11
$region0: #{_lambda_.11}
  #allocation0 [shape = 'u32[]', space=smem, size = 0x4, offset = 0x4, fixed_abs, tag = 'smem constant byte address 0x4 - core index']
  #allocation1 [shape = 'u32[144,128]{1,0:T(1,128)}', space=vmem, size = 0x12000, scoped, tag = 'internal scratch']
  %s0 = inlined_call_operand.vmem [shape: f32[2,16,64], index: 0, kind: input, shape index: {}]
  %s1 = inlined_call_operand.vmem [shape: f32[1,1,64], index: 1, kind: input, shape index: {}]
  %s2 = inlined_call_operand.vmem [shape: f32[1,1,64], index: 2, kind: input, shape index: {}]
  %s3 = inlined_call_operand.vmem [shape: bf16[64,64], index: 3, kind: input, shape index: {}]
  %s4 = inlined_call_operand.vmem [shape: f32[1,64], index: 4, kind: input, shape index: {}]
  %s5 = inlined_call_operand.vmem [shape: f32[2,64], index: 5, kind: output, shape index: {}]
  %s6 = sld [smem:[#allocation0]]
  $region30: #{_lambda_.11} parent=0
    _
  %s8 = ssub.s32 1, %s6
  %s9 = scalar_select 0, %s8, %s6
  // Predicated region
  $region2: #{_lambda_.11} parent=0 // pred_check
    _
  $region3: #{_lambda_.11} parent=0 // pred_check_branch
    %11 = sbr.rel (0) target = $region5
  $region4: #{_lambda_.11} parent=0 // pred_region
    _
  $region5: #{_lambda_.11} parent=0 // pred_fallthru
    _
  // Predicated region
  $region6: #{_lambda_.11} parent=0 // pred_check
    _
  $region7: #{_lambda_.11} parent=0 // pred_check_branch
    %13 = sbr.rel (0) target = $region9
  $region8: #{_lambda_.11} parent=0 // pred_region
    _
  $region9: #{_lambda_.11} parent=0 // pred_fallthru
    _
  // Predicated region
  $region10: #{_lambda_.11} parent=0 // pred_check
    _
  $region11: #{_lambda_.11} parent=0 // pred_check_branch
    %15 = sbr.rel (0) target = $region13
  $region12: #{_lambda_.11} parent=0 // pred_region
    _
  $region13: #{_lambda_.11} parent=0 // pred_fallthru
    _
  // Predicated region
  $region14: #{_lambda_.11} parent=0 // pred_check
    _
  $region15: #{_lambda_.11} parent=0 // pred_check_branch
    %17 = sbr.rel (0) target = $region17
  $region16: #{_lambda_.11} parent=0 // pred_region
    _
  $region17: #{_lambda_.11} parent=0 // pred_fallthru
    _
  // Predicated region
  $region18: #{_lambda_.11} parent=0 // pred_check
    _
  $region19: #{_lambda_.11} parent=0 // pred_check_branch
    %19 = sbr.rel (0) target = $region21
  $region20: #{_lambda_.11} parent=0 // pred_region
    _
  $region21: #{_lambda_.11} parent=0 // pred_fallthru
    _
  %v21 = vld [vmem:[%s0] sm:$0xff]
  %v22 = vld [vmem:[%s0 + $0x8] sm:$0xff]
  %v23 = vld [vmem:[%s0 + $0x10] sm:$0xff]
  %v24 = vld [vmem:[%s0 + $0x18] sm:$0xff]
  %v25 = vld [vmem:[%s1] sm:$0x1]
  %v27 = vlaneseq
  %v28 = vshrl.u32 %v27, 7
  %v29 = vsub.s32 0, %v28
  %v30 = vrot.slane %v25, %v29
  %v32 = vmul.f32 %v21, %v30
  %v33 = vmul.f32 %v22, %v30
  %v34 = vmul.f32 %v23, %v30
  %v35 = vmul.f32 %v24, %v30
  %v36 = vld [vmem:[%s2] sm:$0x1]
  %v38 = vlaneseq
  %v39 = vshrl.u32 %v38, 7
  %v40 = vsub.s32 0, %v39
  %v41 = vrot.slane %v36, %v40
  %v43 = vadd.f32 %v32, %v41
  %v44 = vadd.f32 %v33, %v41
  %v45 = vadd.f32 %v34, %v41
  %v46 = vadd.f32 %v35, %v41
  %vm47 = vcmp.gt.f32.partialorder %v43, 0.0
  %vm48 = vcmp.gt.f32.partialorder %v44, 0.0
  %vm49 = vcmp.gt.f32.partialorder %v45, 0.0
  %vm50 = vcmp.gt.f32.partialorder %v46, 0.0
  %v51 = vmul.f32 %v43, 0.1
  %v52 = vmul.f32 %v44, 0.1
  %v53 = vmul.f32 %v45, 0.1
  %v54 = vmul.f32 %v46, 0.1
  %v55 = vsel %vm47, %v43, %v51
  %v56 = vsel %vm48, %v44, %v52
  %v57 = vsel %vm49, %v45, %v53
  %v58 = vsel %vm50, %v46, %v54
  %v59 = vmax.f32 %v55, 1e-06
  %v60 = vmax.f32 %v56, 1e-06
  %v61 = vmax.f32 %v57, 1e-06
  %v62 = vmax.f32 %v58, 1e-06
  %v63 = vmul.f32 %v59, %v59
  %v64 = vmul.f32 %v60, %v60
  %v65 = vmul.f32 %v61, %v61
  %v66 = vmul.f32 %v62, %v62
  %v67 = vmul.f32 %v63, %v59
  %v68 = vmul.f32 %v64, %v60
  %v69 = vmul.f32 %v65, %v61
  %v70 = vmul.f32 %v66, %v62
  %vm71 = vcmask 523264
  %v72 = vsel %vm71, %v67, 0.0
  %v73 = vsel %vm71, %v68, 0.0
  %v74 = vadd.f32 %v72, %v73
  %v75 = vrot.slane %v74, 4
  %v76 = vadd.f32 %v74, %v75
  %v77 = vrot.slane %v76, 2
  %v78 = vadd.f32 %v76, %v77
  %v79 = vrot.slane %v78, 1
  %v80 = vadd.f32 %v78, %v79
  %v81 = vsel %vm71, %v69, 0.0
  %v82 = vsel %vm71, %v70, 0.0
  %v83 = vadd.f32 %v81, %v82
  %v84 = vrot.slane %v83, 4
  %v85 = vadd.f32 %v83, %v84
  %v86 = vrot.slane %v85, 2
  %v87 = vadd.f32 %v85, %v86
  %v88 = vrot.slane %v87, 1
  %v89 = vadd.f32 %v87, %v88
  %v90 = vmul.f32 %v80, 0.0625
  %v91 = vmul.f32 %v89, 0.0625
  %v92 = vlog2.pop %v90
  %v93 = vmul.f32 %v92, 0.6931472
  %v94 = vlog2.pop %v91
  %v95 = vmul.f32 %v94, 0.6931472
  %v96 = vmul.f32 %v93, 0.33333334
  %v97 = vmul.f32 %v95, 0.33333334
  %v98 = vmul.f32 %v96, 1.442695
  %v99 = vpow.pop %v98
  %v100 = vmul.f32 %v97, 1.442695
  %v101 = vpow.pop %v100
  %v102 = vpack.c.bf16 %v99, %v99
  %v103 = vpack.c.bf16 %v101, %v101
  %v104 = vld [vmem:[%s3] sm:$0xf]
  %v105 = vld [vmem:[%s3 + $0x4] sm:$0xf]
  %v106 = vld [vmem:[%s3 + $0x8] sm:$0xf]
  %v107 = vld [vmem:[%s3 + $0xc] sm:$0xf]
  %v108 = vld [vmem:[%s3 + $0x10] sm:$0xf]
  %v109 = vld [vmem:[%s3 + $0x14] sm:$0xf]
  %v110 = vld [vmem:[%s3 + $0x18] sm:$0xf]
  %v111 = vld [vmem:[%s3 + $0x1c] sm:$0xf]
  %v112 = vld [vmem:[%s4] sm:$0x1]
  %v114 = vlaneseq
  %v115 = vshrl.u32 %v114, 7
  %v116 = vsub.s32 0, %v115
  %v117 = vrot.slane %v112, %v116
  %v121 = vunpack.c.l.b16 %v102
  %v122 = vunpack.c.l.b16 %v103
  %vm123 = vcmask 1041409
  %v124 = vsel %vm123, %v122, %v121
  %v125 = vpack.c.b16 %v124, %v124
  %v134 = vunpack.c.l.b16 %v104
  %v135 = vunpack.c.l.b16 %v105
  %v136 = vunpack.c.l.b16 %v106
  %v137 = vunpack.c.l.b16 %v107
  %v138 = vunpack.c.l.b16 %v108
  %v139 = vunpack.c.l.b16 %v109
  %v140 = vunpack.c.l.b16 %v110
  %v141 = vunpack.c.l.b16 %v111
  %v142 = vpack.c.b16 %v135, %v134
  %v143 = vpack.c.b16 %v137, %v136
  %v144 = vpack.c.b16 %v139, %v138
  %v145 = vpack.c.b16 %v141, %v140
  %v151 = vsel %vm71, %v125, 0
  %153 = vmatprep.subr.bf16.mxu0 0
  %154 = vmatpush1.bf16.msra.mxu0 %v142
  %155 = vmatprep.subr.bf16.mxu0 0
  %156 = vmatpush1.bf16.msra.mxu0 %v143
  %157 = vmatprep.subr.bf16.mxu0 0
  %158 = vmatpush1.bf16.msra.mxu0 %v144
  %159 = vmatprep.subr.bf16.mxu0 0
  %160 = vmatpush1.bf16.msra.mxu0 %v145
  %161 = vmatprep.subr.bf16.mxu0 0
  %162 = vmatpush1.bf16.msra.mxu0 0
  %163 = vmatprep.subr.bf16.mxu0 0
  %164 = vmatpush1.bf16.msra.mxu0 0
  %165 = vmatprep.subr.bf16.mxu0 0
  %166 = vmatpush1.bf16.msra.mxu0 0
  %167 = vmatprep.subr.bf16.mxu0 0
  %168 = vmatpush1.bf16.msra.mxu0 0
  %169 = vmatprep.subr.bf16.mxu0 0
  %170 = vmatpush1.bf16.msra.mxu0 0
  %171 = vmatprep.subr.bf16.mxu0 0
  %172 = vmatpush1.bf16.msra.mxu0 0
  %173 = vmatprep.subr.bf16.mxu0 0
  %174 = vmatpush1.bf16.msra.mxu0 0
  %175 = vmatprep.subr.bf16.mxu0 0
  %176 = vmatpush1.bf16.msra.mxu0 0
  %177 = vmatprep.subr.bf16.mxu0 0
  %178 = vmatpush1.bf16.msra.mxu0 0
  %179 = vmatprep.subr.bf16.mxu0 0
  %180 = vmatpush1.bf16.msra.mxu0 0
  %181 = vmatprep.subr.bf16.mxu0 0
  %182 = vmatpush1.bf16.msra.mxu0 0
  %183 = vmatprep.subr.bf16.mxu0 0
  %184 = vmatpush1.bf16.msra.mxu0 0
  %185 = vmatprep.mubr.bf16.mxu0 0
  %186 = vmatmul.mubr.bf16.gmra.mrb[0].mxu0 %v151
  %v187 = vpop.f32.mrb[0].mxu0
  %v188 = vadd.f32 %v117, %v187
  %v189 = vpop.f32.mrb[0].mxu0
  %v190 = vpop.f32.mrb[0].mxu0
  %v191 = vpop.f32.mrb[0].mxu0
  %192 = vdwg.mxu0
  %vm193 = vcmask 517120
  %194 = vst.msk [vmem:[%s5] sm:$0x3] %vm193, %v188
  // Predicated region
  $region22: #{_lambda_.11} parent=0 // pred_check
    _
  $region23: #{_lambda_.11} parent=0 // pred_check_branch
    %196 = sbr.rel (0) target = $region25
  $region24: #{_lambda_.11} parent=0 // pred_region
    _
  $region25: #{_lambda_.11} parent=0 // pred_fallthru
    _
  // Predicated region
  $region26: #{_lambda_.11} parent=0 // pred_check
    _
  $region27: #{_lambda_.11} parent=0 // pred_check_branch
    %198 = sbr.rel (0) target = $region29
  $region28: #{_lambda_.11} parent=0 // pred_region
    _
  $region29: #{_lambda_.11} parent=0 // pred_fallthru
    _

// kernel: _lambda_.9
$region0: #{_lambda_.9}
  #allocation0 [shape = 'u32[]', space=smem, size = 0x4, offset = 0x4, fixed_abs, tag = 'smem constant byte address 0x4 - core index']
  #allocation1 [shape = 'u32[144,128]{1,0:T(1,128)}', space=vmem, size = 0x12000, scoped, tag = 'internal scratch']
  %s0 = inlined_call_operand.vmem [shape: f32[2,4,26,32], index: 0, kind: input, shape index: {}]
  %s1 = inlined_call_operand.vmem [shape: bf16[9,32,64], index: 1, kind: input, shape index: {}]
  %s2 = inlined_call_operand.vmem [shape: f32[20,1], index: 2, kind: input, shape index: {}]
  %s3 = inlined_call_operand.vmem [shape: f32[1,64], index: 3, kind: input, shape index: {}]
  %s4 = inlined_call_operand.vmem [shape: f32[1,64], index: 4, kind: input, shape index: {}, may-alias: {4,7}]
  %s5 = inlined_call_operand.vmem [shape: f32[1,64], index: 5, kind: input, shape index: {}]
  %s6 = inlined_call_operand.vmem [shape: f32[1,64], index: 6, kind: input, shape index: {}]
  %s7 = inlined_call_operand.vmem [shape: f32[1,64], index: 7, kind: input, shape index: {}, may-alias: {4,7}]
  %s8 = inlined_call_operand.vmem [shape: bf16[32,64], index: 8, kind: input, shape index: {}]
  %s9 = inlined_call_operand.vmem [shape: f32[2,20,64], index: 9, kind: output, shape index: {0}]
  %s10 = inlined_call_operand.vmem [shape: f32[2,20,64], index: 10, kind: output, shape index: {1}]
  %11 = xla_tuple %s9, %s10
  %s12 = sld [smem:[#allocation0]]
  $region77: #{_lambda_.9} parent=0
    _
  %s14 = ssub.s32 1, %s12
  %s15 = scalar_select 0, %s14, %s12
  loop: start=0, step=1, limit=4
  $region2: #{_lambda_.9} parent=0 // loop_pre_header
    _
  $region3: #{_lambda_.9} parent=0 // loop_header
    %s17 = sphi 0, %s21
    %p18 = scmp.ge.s32.totalorder %s17, 4
    %s27 = sphi 0, %s29
    %s30 = sphi 0, %s27
    %s31 = sphi 0, %s30
    %s47 = sphi 0, %s31
    %s51 = sphi 0, %s51
    %s53 = sphi 0, %s51
    %s54 = sphi 0, %s53
    %s68 = sphi 0, %s54
    %s72 = sphi 0, %s72
    %s74 = sphi 0, %s72
    %s75 = sphi 0, %s74
    %s89 = sphi 0, %s75
    %s93 = sphi 0, %s93
    %s95 = sphi 0, %s93
    %s96 = sphi 0, %s95
    %s110 = sphi 0, %s96
    %s114 = sphi 0, %s114
    %s116 = sphi 0, %s114
    %s117 = sphi 0, %s116
    %s131 = sphi 0, %s117
    %s135 = sphi 0, %s135
    %s137 = sphi 0, %s135
    %s138 = sphi 0, %s137
    %s152 = sphi 0, %s138
    %s156 = sphi 0, %s156
    %s158 = sphi 0, %s156
    %s159 = sphi 0, %s158
    %s173 = sphi 0, %s159
    %s177 = sphi 0, %s177
    %s179 = sphi 0, %s177
    %s180 = sphi 0, %s179
    %s194 = sphi 0, %s180
    %s198 = sphi 0, %s198
    %s200 = sphi 0, %s198
    %s201 = sphi 0, %s200
    %s215 = sphi 0, %s201
    %s221 = sphi 0, %s223
    %s224 = sphi 0, %s221
    %s225 = sphi 0, %s224
    %s241 = sphi 0, %s225
    %s247 = sphi 0, %s249
    %s250 = sphi 0, %s247
    %s251 = sphi 0, %s250
    %s267 = sphi 0, %s251
  $region4: #{_lambda_.9} parent=0 // loop_header_branch
    %20 = sbr.rel (%p18) target = $region8
  $region5: #{_lambda_.9} parent=0 // loop_body
    %s22 = ssub.s32 %s17, 1
    %s23 = ssub.s32 %s17, 2
    %s24 = sadd.s32 %s17, 1
    %s25 = ssub.s32 %s17, %s24
    %p26 = scmp.eq.s32.totalorder %s25, 0
    %s28 = sadd.s32 %s27, 1
    %s29 = scalar_select %p26, %s27, %s28
    %p32 = pneg %p26
    %p33 = scmp.eq.s32.totalorder %s17, 1
    %p34 = por %p32, %p33
    %p35 = scmp.ne.s32.totalorder %s27, %s30
    %p36 = scmp.eq.s32.totalorder %s17, 0
    %p37 = por %p35, %p36
    %p38 = scmp.ne.s32.totalorder %s27, %s30
    %p39 = scmp.eq.s32.totalorder %s22, 1
    %p40 = por %p38, %p39
    %p41 = scmp.ne.s32.totalorder %s30, %s31
    %p42 = scmp.eq.s32.totalorder %s22, 0
    %p43 = por %p41, %p42
    %p44 = scmp.ne.s32.totalorder %s30, %s31
    %p45 = scmp.eq.s32.totalorder %s23, 1
    %p46 = por %p44, %p45
    %p48 = scmp.ne.s32.totalorder %s31, %s47
    %p49 = scmp.eq.s32.totalorder %s23, 0
    %p50 = por %p48, %p49
    %s52 = sadd.s32 %s51, 1
    %p55 = scmp.eq.s32.totalorder %s17, 1
    %p56 = scmp.ne.s32.totalorder %s51, %s53
    %p57 = scmp.eq.s32.totalorder %s17, 0
    %p58 = por %p56, %p57
    %p59 = scmp.ne.s32.totalorder %s51, %s53
    %p60 = scmp.eq.s32.totalorder %s22, 1
    %p61 = por %p59, %p60
    %p62 = scmp.ne.s32.totalorder %s53, %s54
    %p63 = scmp.eq.s32.totalorder %s22, 0
    %p64 = por %p62, %p63
    %p65 = scmp.ne.s32.totalorder %s53, %s54
    %p66 = scmp.eq.s32.totalorder %s23, 1
    %p67 = por %p65, %p66
    %p69 = scmp.ne.s32.totalorder %s54, %s68
    %p70 = scmp.eq.s32.totalorder %s23, 0
    %p71 = por %p69, %p70
    %s73 = sadd.s32 %s72, 1
    %p76 = scmp.eq.s32.totalorder %s17, 1
    %p77 = scmp.ne.s32.totalorder %s72, %s74
    %p78 = scmp.eq.s32.totalorder %s17, 0
    %p79 = por %p77, %p78
    %p80 = scmp.ne.s32.totalorder %s72, %s74
    %p81 = scmp.eq.s32.totalorder %s22, 1
    %p82 = por %p80, %p81
    %p83 = scmp.ne.s32.totalorder %s74, %s75
    %p84 = scmp.eq.s32.totalorder %s22, 0
    %p85 = por %p83, %p84
    %p86 = scmp.ne.s32.totalorder %s74, %s75
    %p87 = scmp.eq.s32.totalorder %s23, 1
    %p88 = por %p86, %p87
    %p90 = scmp.ne.s32.totalorder %s75, %s89
    %p91 = scmp.eq.s32.totalorder %s23, 0
    %p92 = por %p90, %p91
    %s94 = sadd.s32 %s93, 1
    %p97 = scmp.eq.s32.totalorder %s17, 1
    %p98 = scmp.ne.s32.totalorder %s93, %s95
    %p99 = scmp.eq.s32.totalorder %s17, 0
    %p100 = por %p98, %p99
    %p101 = scmp.ne.s32.totalorder %s93, %s95
    %p102 = scmp.eq.s32.totalorder %s22, 1
    %p103 = por %p101, %p102
    %p104 = scmp.ne.s32.totalorder %s95, %s96
    %p105 = scmp.eq.s32.totalorder %s22, 0
    %p106 = por %p104, %p105
    %p107 = scmp.ne.s32.totalorder %s95, %s96
    %p108 = scmp.eq.s32.totalorder %s23, 1
    %p109 = por %p107, %p108
    %p111 = scmp.ne.s32.totalorder %s96, %s110
    %p112 = scmp.eq.s32.totalorder %s23, 0
    %p113 = por %p111, %p112
    %s115 = sadd.s32 %s114, 1
    %p118 = scmp.eq.s32.totalorder %s17, 1
    %p119 = scmp.ne.s32.totalorder %s114, %s116
    %p120 = scmp.eq.s32.totalorder %s17, 0
    %p121 = por %p119, %p120
    %p122 = scmp.ne.s32.totalorder %s114, %s116
    %p123 = scmp.eq.s32.totalorder %s22, 1
    %p124 = por %p122, %p123
    %p125 = scmp.ne.s32.totalorder %s116, %s117
    %p126 = scmp.eq.s32.totalorder %s22, 0
    %p127 = por %p125, %p126
    %p128 = scmp.ne.s32.totalorder %s116, %s117
    %p129 = scmp.eq.s32.totalorder %s23, 1
    %p130 = por %p128, %p129
    %p132 = scmp.ne.s32.totalorder %s117, %s131
    %p133 = scmp.eq.s32.totalorder %s23, 0
    %p134 = por %p132, %p133
    %s136 = sadd.s32 %s135, 1
    %p139 = scmp.eq.s32.totalorder %s17, 1
    %p140 = scmp.ne.s32.totalorder %s135, %s137
    %p141 = scmp.eq.s32.totalorder %s17, 0
    %p142 = por %p140, %p141
    %p143 = scmp.ne.s32.totalorder %s135, %s137
    %p144 = scmp.eq.s32.totalorder %s22, 1
    %p145 = por %p143, %p144
    %p146 = scmp.ne.s32.totalorder %s137, %s138
    %p147 = scmp.eq.s32.totalorder %s22, 0
    %p148 = por %p146, %p147
    %p149 = scmp.ne.s32.totalorder %s137, %s138
    %p150 = scmp.eq.s32.totalorder %s23, 1
    %p151 = por %p149, %p150
    %p153 = scmp.ne.s32.totalorder %s138, %s152
    %p154 = scmp.eq.s32.totalorder %s23, 0
    %p155 = por %p153, %p154
    %s157 = sadd.s32 %s156, 1
    %p160 = scmp.eq.s32.totalorder %s17, 1
    %p161 = scmp.ne.s32.totalorder %s156, %s158
    %p162 = scmp.eq.s32.totalorder %s17, 0
    %p163 = por %p161, %p162
    %p164 = scmp.ne.s32.totalorder %s156, %s158
    %p165 = scmp.eq.s32.totalorder %s22, 1
    %p166 = por %p164, %p165
    %p167 = scmp.ne.s32.totalorder %s158, %s159
    %p168 = scmp.eq.s32.totalorder %s22, 0
    %p169 = por %p167, %p168
    %p170 = scmp.ne.s32.totalorder %s158, %s159
    %p171 = scmp.eq.s32.totalorder %s23, 1
    %p172 = por %p170, %p171
    %p174 = scmp.ne.s32.totalorder %s159, %s173
    %p175 = scmp.eq.s32.totalorder %s23, 0
    %p176 = por %p174, %p175
    %s178 = sadd.s32 %s177, 1
    %p181 = scmp.eq.s32.totalorder %s17, 1
    %p182 = scmp.ne.s32.totalorder %s177, %s179
    %p183 = scmp.eq.s32.totalorder %s17, 0
    %p184 = por %p182, %p183
    %p185 = scmp.ne.s32.totalorder %s177, %s179
    %p186 = scmp.eq.s32.totalorder %s22, 1
    %p187 = por %p185, %p186
    %p188 = scmp.ne.s32.totalorder %s179, %s180
    %p189 = scmp.eq.s32.totalorder %s22, 0
    %p190 = por %p188, %p189
    %p191 = scmp.ne.s32.totalorder %s179, %s180
    %p192 = scmp.eq.s32.totalorder %s23, 1
    %p193 = por %p191, %p192
    %p195 = scmp.ne.s32.totalorder %s180, %s194
    %p196 = scmp.eq.s32.totalorder %s23, 0
    %p197 = por %p195, %p196
    %s199 = sadd.s32 %s198, 1
    %p202 = scmp.eq.s32.totalorder %s17, 1
    %p203 = scmp.ne.s32.totalorder %s198, %s200
    %p204 = scmp.eq.s32.totalorder %s17, 0
    %p205 = por %p203, %p204
    %p206 = scmp.ne.s32.totalorder %s198, %s200
    %p207 = scmp.eq.s32.totalorder %s22, 1
    %p208 = por %p206, %p207
    %p209 = scmp.ne.s32.totalorder %s200, %s201
    %p210 = scmp.eq.s32.totalorder %s22, 0
    %p211 = por %p209, %p210
    %p212 = scmp.ne.s32.totalorder %s200, %s201
    %p213 = scmp.eq.s32.totalorder %s23, 1
    %p214 = por %p212, %p213
    %p216 = scmp.ne.s32.totalorder %s201, %s215
    %p217 = scmp.eq.s32.totalorder %s23, 0
    %p218 = por %p216, %p217
    %s219 = ssub.s32 %s17, %s24
    %p220 = scmp.eq.s32.totalorder %s219, 0
    %s222 = sadd.s32 %s221, 1
    %s223 = scalar_select %p220, %s221, %s222
    %p226 = pneg %p220
    %p227 = scmp.eq.s32.totalorder %s17, 1
    %p228 = por %p226, %p227
    %p229 = scmp.ne.s32.totalorder %s221, %s224
    %p230 = scmp.eq.s32.totalorder %s17, 0
    %p231 = por %p229, %p230
    %p232 = scmp.ne.s32.totalorder %s221, %s224
    %p233 = scmp.eq.s32.totalorder %s22, 1
    %p234 = por %p232, %p233
    %p235 = scmp.ne.s32.totalorder %s224, %s225
    %p236 = scmp.eq.s32.totalorder %s22, 0
    %p237 = por %p235, %p236
    %p238 = scmp.ne.s32.totalorder %s224, %s225
    %p239 = scmp.eq.s32.totalorder %s23, 1
    %p240 = por %p238, %p239
    %p242 = scmp.ne.s32.totalorder %s225, %s241
    %p243 = scmp.eq.s32.totalorder %s23, 0
    %p244 = por %p242, %p243
    %s245 = ssub.s32 %s17, %s24
    %p246 = scmp.eq.s32.totalorder %s245, 0
    %s248 = sadd.s32 %s247, 1
    %s249 = scalar_select %p246, %s247, %s248
    %p252 = pneg %p246
    %p253 = scmp.eq.s32.totalorder %s17, 1
    %p254 = por %p252, %p253
    %p255 = scmp.ne.s32.totalorder %s247, %s250
    %p256 = scmp.eq.s32.totalorder %s17, 0
    %p257 = por %p255, %p256
    %p258 = scmp.ne.s32.totalorder %s247, %s250
    %p259 = scmp.eq.s32.totalorder %s22, 1
    %p260 = por %p258, %p259
    %p261 = scmp.ne.s32.totalorder %s250, %s251
    %p262 = scmp.eq.s32.totalorder %s22, 0
    %p263 = por %p261, %p262
    %p264 = scmp.ne.s32.totalorder %s250, %s251
    %p265 = scmp.eq.s32.totalorder %s23, 1
    %p266 = por %p264, %p265
    %p268 = scmp.ne.s32.totalorder %s251, %s267
    %p269 = scmp.eq.s32.totalorder %s23, 0
    %p270 = por %p268, %p269
    %p271 = scmp.le.s32.totalorder 1, %s17
    %p272 = scmp.lt.s32.totalorder %s17, 3
    %p273 = pnand %p271, %p272
    %p274 = pneg %p273
    // Predicated region
    $region9: #{_lambda_.9} parent=5 // pred_check
      _
    $region10: #{_lambda_.9} parent=5 // pred_check_branch
      %276 = sbr.rel (%p273) target = $region12
    $region11: #{_lambda_.9} parent=5 // pred_region
      %s277 = ssub.s32 %s17, 1
      // Predicated region
      $region13: #{_lambda_.9} parent=11 // pred_check
        %p278 = pneg %p64
      $region14: #{_lambda_.9} parent=11 // pred_check_branch
        %280 = sbr.rel (%p278) target = $region16
      $region15: #{_lambda_.9} parent=11 // pred_region
        _
      $region16: #{_lambda_.9} parent=11 // pred_fallthru
        _
      // Predicated region
      $region17: #{_lambda_.9} parent=11 // pred_check
        %p281 = pneg %p85
      $region18: #{_lambda_.9} parent=11 // pred_check_branch
        %283 = sbr.rel (%p281) target = $region20
      $region19: #{_lambda_.9} parent=11 // pred_region
        _
      $region20: #{_lambda_.9} parent=11 // pred_fallthru
        _
      // Predicated region
      $region21: #{_lambda_.9} parent=11 // pred_check
        %p284 = pneg %p106
      $region22: #{_lambda_.9} parent=11 // pred_check_branch
        %286 = sbr.rel (%p284) target = $region24
      $region23: #{_lambda_.9} parent=11 // pred_region
        _
      $region24: #{_lambda_.9} parent=11 // pred_fallthru
        _
      // Predicated region
      $region25: #{_lambda_.9} parent=11 // pred_check
        %p287 = pneg %p127
      $region26: #{_lambda_.9} parent=11 // pred_check_branch
        %289 = sbr.rel (%p287) target = $region28
      $region27: #{_lambda_.9} parent=11 // pred_region
        _
      $region28: #{_lambda_.9} parent=11 // pred_fallthru
        _
      // Predicated region
      $region29: #{_lambda_.9} parent=11 // pred_check
        %p290 = pneg %p148
      $region30: #{_lambda_.9} parent=11 // pred_check_branch
        %292 = sbr.rel (%p290) target = $region32
      $region31: #{_lambda_.9} parent=11 // pred_region
        _
      $region32: #{_lambda_.9} parent=11 // pred_fallthru
        _
      // Predicated region
      $region33: #{_lambda_.9} parent=11 // pred_check
        %p293 = pneg %p169
      $region34: #{_lambda_.9} parent=11 // pred_check_branch
        %295 = sbr.rel (%p293) target = $region36
      $region35: #{_lambda_.9} parent=11 // pred_region
        _
      $region36: #{_lambda_.9} parent=11 // pred_fallthru
        _
      // Predicated region
      $region37: #{_lambda_.9} parent=11 // pred_check
        %p296 = pneg %p190
      $region38: #{_lambda_.9} parent=11 // pred_check_branch
        %298 = sbr.rel (%p296) target = $region40
      $region39: #{_lambda_.9} parent=11 // pred_region
        _
      $region40: #{_lambda_.9} parent=11 // pred_fallthru
        _
      // Predicated region
      $region41: #{_lambda_.9} parent=11 // pred_check
        %p299 = pneg %p211
      $region42: #{_lambda_.9} parent=11 // pred_check_branch
        %301 = sbr.rel (%p299) target = $region44
      $region43: #{_lambda_.9} parent=11 // pred_region
        _
      $region44: #{_lambda_.9} parent=11 // pred_fallthru
        _
    $region12: #{_lambda_.9} parent=5 // pred_fallthru
      _
    %p302 = scmp.lt.s32.totalorder %s17, 2
    // Predicated region
    $region45: #{_lambda_.9} parent=5 // pred_check
      %p303 = pneg %p302
    $region46: #{_lambda_.9} parent=5 // pred_check_branch
      %305 = sbr.rel (%p303) target = $region48
    $region47: #{_lambda_.9} parent=5 // pred_region
      // Predicated region
      $region49: #{_lambda_.9} parent=47 // pred_check
        %p306 = pneg %p37
      $region50: #{_lambda_.9} parent=47 // pred_check_branch
        %308 = sbr.rel (%p306) target = $region52
      $region51: #{_lambda_.9} parent=47 // pred_region
        %p309 = scmp.lt.s32.totalorder %s17, 1
        %s310 = scalar_select %p309, %s17, 1
        %s311 = smul.addr %s310, 16
        %s312 = smul.addr %s311, 8
        %s313 = scalar_lea.vmem %s0, %s312
      $region52: #{_lambda_.9} parent=47 // pred_fallthru
        _
    $region48: #{_lambda_.9} parent=5 // pred_fallthru
      _
    %p314 = scmp.le.s32.totalorder 1, %s17
    %p315 = scmp.lt.s32.totalorder %s17, 3
    %p316 = pnand %p314, %p315
    %p317 = pneg %p316
    // Predicated region
    $region53: #{_lambda_.9} parent=5 // pred_check
      _
    $region54: #{_lambda_.9} parent=5 // pred_check_branch
      %319 = sbr.rel (%p316) target = $region56
    $region55: #{_lambda_.9} parent=5 // pred_region
      %s320 = ssub.s32 %s17, 1
      %p321 = scmp.lt.s32.totalorder %s22, 1
      %s322 = scalar_select %p321, %s22, 1
      %s323 = smul.addr %s322, 16
      %s324 = smul.addr %s323, 8
      %s325 = scalar_lea.vmem %s0, %s324
      %p326 = pneg %p43
      %p327 = pneg %p40
      %p328 = pneg %p64
      %p329 = pneg %p61
      %p330 = pneg %p85
      %p331 = pneg %p82
      %p332 = pneg %p106
      %p333 = pneg %p103
      %p334 = pneg %p127
      %p335 = pneg %p124
      %p336 = pneg %p148
      %p337 = pneg %p145
      %p338 = pneg %p169
      %p339 = pneg %p166
      %p340 = pneg %p190
      %p341 = pneg %p187
      %p342 = pneg %p211
      %p343 = pneg %p208
      %p344 = pneg %p237
      %p345 = pneg %p234
      %p346 = scmp.lt.s32.totalorder %s22, 1
      %s347 = scalar_select %p346, %s22, 1
      %s348 = smul.addr %s347, 3
      %s349 = smul.addr %s348, 8
      %s350 = scalar_lea.vmem %s9, %s349
      %p351 = pneg %p263
      %p352 = pneg %p260
      %p353 = scmp.lt.s32.totalorder %s22, 1
      %s354 = scalar_select %p353, %s22, 1
      %s355 = smul.addr %s354, 3
      %s356 = smul.addr %s355, 8
      %s357 = scalar_lea.vmem %s10, %s356
      %p358 = scmp.lt.s32.totalorder %s22, 1
      %s359 = scalar_select %p358, %s22, 1
      %s360 = smul.addr %s359, 16
      %s361 = smul.addr %s360, 8
      %s362 = scalar_lea.vmem %s0, %s361
      %p363 = scmp.lt.s32.totalorder %s22, 1
      %s364 = scalar_select %p363, %s22, 1
      %s365 = smul.addr %s364, 3
      %s366 = smul.addr %s365, 8
      %s367 = scalar_lea.vmem %s9, %s366
      %p368 = scmp.lt.s32.totalorder %s22, 1
      %s369 = scalar_select %p368, %s22, 1
      %s370 = smul.addr %s369, 3
      %s371 = smul.addr %s370, 8
      %s372 = scalar_lea.vmem %s10, %s371
      %v374 = vld [vmem:[%s362] sm:$0xff]
      %v375 = vld [vmem:[%s362 + $0x8] sm:$0xff]
      %v376 = vld [vmem:[%s362 + $0x10] sm:$0xf]
      %v377 = vpack.c.bf16 %v375, %v374
      %v378 = vpack.c.bf16 %v376, %v376
      %v379 = vld [vmem:[%s1] sm:$0xf]
      %v380 = vld [vmem:[%s1 + $0x4] sm:$0xf]
      %v381 = vld [vmem:[%s1 + $0x8] sm:$0xf]
      %v382 = vld [vmem:[%s1 + $0xc] sm:$0xf]
      %s383 = scalar_lea.vmem %s362, 32
      %v384 = vld [vmem:[%s383] sm:$0xff]
      %v385 = vld [vmem:[%s383 + $0x8] sm:$0xff]
      %v386 = vld [vmem:[%s383 + $0x10] sm:$0xf]
      %v387 = vpack.c.bf16 %v385, %v384
      %v388 = vpack.c.bf16 %v386, %v386
      %s389 = scalar_lea.vmem %s1, 16
      %v390 = vld [vmem:[%s389] sm:$0xf]
      %v391 = vld [vmem:[%s389 + $0x4] sm:$0xf]
      %v392 = vld [vmem:[%s389 + $0x8] sm:$0xf]
      %v393 = vld [vmem:[%s389 + $0xc] sm:$0xf]
      %v398 = vunpack.c.l.b16 %v390
      %v399 = vunpack.c.l.b16 %v391
      %v400 = vunpack.c.l.b16 %v392
      %v401 = vunpack.c.l.b16 %v393
      %v402 = vpack.c.b16 %v399, %v398
      %v403 = vpack.c.b16 %v401, %v400
      %vm406 = vcmask 261120
      %v408 = vsel %vm406, %v387, 0
      %v411 = vsel %vm406, %v388, 0
      %413 = vmatprep.subr.bf16.mxu0 0
      %414 = vmatpush1.bf16.msra.mxu0 %v402
      %415 = vmatprep.subr.bf16.mxu0 0
      %416 = vmatpush1.bf16.msra.mxu0 %v403
      %417 = vmatprep.subr.bf16.mxu0 0
      %418 = vmatpush1.bf16.msra.mxu0 0
      %419 = vmatprep.subr.bf16.mxu0 0
      %420 = vmatpush1.bf16.msra.mxu0 0
      %421 = vmatprep.subr.bf16.mxu0 0
      %422 = vmatpush1.bf16.msra.mxu0 0
      %423 = vmatprep.subr.bf16.mxu0 0
      %424 = vmatpush1.bf16.msra.mxu0 0
      %425 = vmatprep.subr.bf16.mxu0 0
      %426 = vmatpush1.bf16.msra.mxu0 0
      %427 = vmatprep.subr.bf16.mxu0 0
      %428 = vmatpush1.bf16.msra.mxu0 0
      %429 = vmatprep.subr.bf16.mxu0 0
      %430 = vmatpush1.bf16.msra.mxu0 0
      %431 = vmatprep.subr.bf16.mxu0 0
      %432 = vmatpush1.bf16.msra.mxu0 0
      %433 = vmatprep.subr.bf16.mxu0 0
      %434 = vmatpush1.bf16.msra.mxu0 0
      %435 = vmatprep.subr.bf16.mxu0 0
      %436 = vmatpush1.bf16.msra.mxu0 0
      %437 = vmatprep.subr.bf16.mxu0 0
      %438 = vmatpush1.bf16.msra.mxu0 0
      %439 = vmatprep.subr.bf16.mxu0 0
      %440 = vmatpush1.bf16.msra.mxu0 0
      %441 = vmatprep.subr.bf16.mxu0 0
      %442 = vmatpush1.bf16.msra.mxu0 0
      %443 = vmatprep.subr.bf16.mxu0 0
      %444 = vmatpush1.bf16.msra.mxu0 0
      %445 = vmatprep.mubr.bf16.mxu0 0
      %446 = vmatmul.mubr.bf16.gmra.mrb[0].mxu0 %v408
      %v447 = vpop.f32.mrb[0].mxu0
      %v448 = vadd.f32 0.0, %v447
      %v449 = vpop.f32.mrb[0].mxu0
      %v450 = vpop.f32.mrb[0].mxu0
      %v451 = vadd.f32 0.0, %v450
      %v452 = vpop.f32.mrb[0].mxu0
      %453 = vmatprep.mubr.bf16.mxu0 0
      %454 = vmatmul.mubr.bf16.gmra.mrb[0].mxu0 %v411
      %v455 = vpop.f32.mrb[0].mxu0
      %v456 = vadd.f32 0.0, %v455
      %v457 = vpop.f32.mrb[0].mxu0
      %v458 = vpop.f32.mrb[0].mxu0
      %v459 = vpop.f32.mrb[0].mxu0
      %460 = vdwg.mxu0
      %v465 = vunpack.c.l.b16 %v379
      %v466 = vunpack.c.l.b16 %v380
      %v467 = vunpack.c.l.b16 %v381
      %v468 = vunpack.c.l.b16 %v382
      %v469 = vpack.c.b16 %v466, %v465
      %v470 = vpack.c.b16 %v468, %v467
      %v474 = vsel %vm406, %v377, 0
      %v477 = vsel %vm406, %v378, 0
      %479 = vmatprep.subr.bf16.mxu0 0
      %480 = vmatpush1.bf16.msra.mxu0 %v469
      %481 = vmatprep.subr.bf16.mxu0 0
      %482 = vmatpush1.bf16.msra.mxu0 %v470
      %483 = vmatprep.subr.bf16.mxu0 0
      %484 = vmatpush1.bf16.msra.mxu0 0
      %485 = vmatprep.subr.bf16.mxu0 0
      %486 = vmatpush1.bf16.msra.mxu0 0
      %487 = vmatprep.subr.bf16.mxu0 0
      %488 = vmatpush1.bf16.msra.mxu0 0
      %489 = vmatprep.subr.bf16.mxu0 0
      %490 = vmatpush1.bf16.msra.mxu0 0
      %491 = vmatprep.subr.bf16.mxu0 0
      %492 = vmatpush1.bf16.msra.mxu0 0
      %493 = vmatprep.subr.bf16.mxu0 0
      %494 = vmatpush1.bf16.msra.mxu0 0
      %495 = vmatprep.subr.bf16.mxu0 0
      %496 = vmatpush1.bf16.msra.mxu0 0
      %497 = vmatprep.subr.bf16.mxu0 0
      %498 = vmatpush1.bf16.msra.mxu0 0
      %499 = vmatprep.subr.bf16.mxu0 0
      %500 = vmatpush1.bf16.msra.mxu0 0
      %501 = vmatprep.subr.bf16.mxu0 0
      %502 = vmatpush1.bf16.msra.mxu0 0
      %503 = vmatprep.subr.bf16.mxu0 0
      %504 = vmatpush1.bf16.msra.mxu0 0
      %505 = vmatprep.subr.bf16.mxu0 0
      %506 = vmatpush1.bf16.msra.mxu0 0
      %507 = vmatprep.subr.bf16.mxu0 0
      %508 = vmatpush1.bf16.msra.mxu0 0
      %509 = vmatprep.subr.bf16.mxu0 0
      %510 = vmatpush1.bf16.msra.mxu0 0
      %511 = vmatprep.mubr.bf16.mxu0 0
      %512 = vmatmul.mubr.bf16.gmra.mrb[0].mxu0 %v474
      %v513 = vpop.f32.mrb[0].mxu0
      %v514 = vadd.f32 %v448, %v513
      %v515 = vpop.f32.mrb[0].mxu0
      %v516 = vpop.f32.mrb[0].mxu0
      %v517 = vadd.f32 %v451, %v516
      %v518 = vpop.f32.mrb[0].mxu0
      %519 = vmatprep.mubr.bf16.mxu0 0
      %520 = vmatmul.mubr.bf16.gmra.mrb[0].mxu0 %v477
      %v521 = vpop.f32.mrb[0].mxu0
      %v522 = vadd.f32 %v456, %v521
      %v523 = vpop.f32.mrb[0].mxu0
      %v524 = vpop.f32.mrb[0].mxu0
      %v525 = vpop.f32.mrb[0].mxu0
      %526 = vdwg.mxu0
      %v527 = vld [vmem:[%s362 + $0x1] sm:$0xff]
      %v528 = vld [vmem:[%s362 + $0x9] sm:$0xff]
      %v529 = vld [vmem:[%s362 + $0x11] sm:$0xf]
      %v530 = vpack.c.bf16 %v528, %v527
      %v531 = vpack.c.bf16 %v529, %v529
      %s532 = scalar_lea.vmem %s1, 32
      %v533 = vld [vmem:[%s532] sm:$0xf]
      %v534 = vld [vmem:[%s532 + $0x4] sm:$0xf]
      %v535 = vld [vmem:[%s532 + $0x8] sm:$0xf]
      %v536 = vld [vmem:[%s532 + $0xc] sm:$0xf]
      %v541 = vunpack.c.l.b16 %v533
      %v542 = vunpack.c.l.b16 %v534
      %v543 = vunpack.c.l.b16 %v535
      %v544 = vunpack.c.l.b16 %v536
      %v545 = vpack.c.b16 %v542, %v541
      %v546 = vpack.c.b16 %v544, %v543
      %v550 = vsel %vm406, %v530, 0
      %v553 = vsel %vm406, %v531, 0
      %555 = vmatprep.subr.bf16.mxu0 0
      %556 = vmatpush1.bf16.msra.mxu0 %v545
      %557 = vmatprep.subr.bf16.mxu0 0
      %558 = vmatpush1.bf16.msra.mxu0 %v546
      %559 = vmatprep.subr.bf16.mxu0 0
      %560 = vmatpush1.bf16.msra.mxu0 0
      %561 = vmatprep.subr.bf16.mxu0 0
      %562 = vmatpush1.bf16.msra.mxu0 0
      %563 = vmatprep.subr.bf16.mxu0 0
      %564 = vmatpush1.bf16.msra.mxu0 0
      %565 = vmatprep.subr.bf16.mxu0 0
      %566 = vmatpush1.bf16.msra.mxu0 0
      %567 = vmatprep.subr.bf16.mxu0 0
      %568 = vmatpush1.bf16.msra.mxu0 0
      %569 = vmatprep.subr.bf16.mxu0 0
      %570 = vmatpush1.bf16.msra.mxu0 0
      %571 = vmatprep.subr.bf16.mxu0 0
      %572 = vmatpush1.bf16.msra.mxu0 0
      %573 = vmatprep.subr.bf16.mxu0 0
      %574 = vmatpush1.bf16.msra.mxu0 0
      %575 = vmatprep.subr.bf16.mxu0 0
      %576 = vmatpush1.bf16.msra.mxu0 0
      %577 = vmatprep.subr.bf16.mxu0 0
      %578 = vmatpush1.bf16.msra.mxu0 0
      %579 = vmatprep.subr.bf16.mxu0 0
      %580 = vmatpush1.bf16.msra.mxu0 0
      %581 = vmatprep.subr.bf16.mxu0 0
      %582 = vmatpush1.bf16.msra.mxu0 0
      %583 = vmatprep.subr.bf16.mxu0 0
      %584 = vmatpush1.bf16.msra.mxu0 0
      %585 = vmatprep.subr.bf16.mxu0 0
      %586 = vmatpush1.bf16.msra.mxu0 0
      %587 = vmatprep.mubr.bf16.mxu0 0
      %588 = vmatmul.mubr.bf16.gmra.mrb[0].mxu0 %v550
      %v589 = vpop.f32.mrb[0].mxu0
      %v590 = vadd.f32 0.0, %v589
      %v591 = vpop.f32.mrb[0].mxu0
      %v592 = vpop.f32.mrb[0].mxu0
      %v593 = vadd.f32 0.0, %v592
      %v594 = vpop.f32.mrb[0].mxu0
      %595 = vmatprep.mubr.bf16.mxu0 0
      %596 = vmatmul.mubr.bf16.gmra.mrb[0].mxu0 %v553
      %v597 = vpop.f32.mrb[0].mxu0
      %v598 = vadd.f32 0.0, %v597
      %v599 = vpop.f32.mrb[0].mxu0
      %v600 = vpop.f32.mrb[0].mxu0
      %v601 = vpop.f32.mrb[0].mxu0
      %602 = vdwg.mxu0
      %v603 = vadd.f32 %v514, %v590
      %v604 = vadd.f32 %v517, %v593
      %v605 = vadd.f32 %v522, %v598
      %s606 = scalar_lea.vmem %s362, 64
      %v607 = vld [vmem:[%s606] sm:$0xff]
      %v608 = vld [vmem:[%s606 + $0x8] sm:$0xff]
      %v609 = vld [vmem:[%s606 + $0x10] sm:$0xf]
      %v610 = vpack.c.bf16 %v608, %v607
      %v611 = vpack.c.bf16 %v609, %v609
      %s612 = scalar_lea.vmem %s1, 48
      %v613 = vld [vmem:[%s612] sm:$0xf]
      %v614 = vld [vmem:[%s612 + $0x4] sm:$0xf]
      %v615 = vld [vmem:[%s612 + $0x8] sm:$0xf]
      %v616 = vld [vmem:[%s612 + $0xc] sm:$0xf]
      %v621 = vunpack.c.l.b16 %v613
      %v622 = vunpack.c.l.b16 %v614
      %v623 = vunpack.c.l.b16 %v615
      %v624 = vunpack.c.l.b16 %v616
      %v625 = vpack.c.b16 %v622, %v621
      %v626 = vpack.c.b16 %v624, %v623
      %v630 = vsel %vm406, %v610, 0
      %v633 = vsel %vm406, %v611, 0
      %635 = vmatprep.subr.bf16.mxu0 0
      %636 = vmatpush1.bf16.msra.mxu0 %v625
      %637 = vmatprep.subr.bf16.mxu0 0
      %638 = vmatpush1.bf16.msra.mxu0 %v626
      %639 = vmatprep.subr.bf16.mxu0 0
      %640 = vmatpush1.bf16.msra.mxu0 0
      %641 = vmatprep.subr.bf16.mxu0 0
      %642 = vmatpush1.bf16.msra.mxu0 0
      %643 = vmatprep.subr.bf16.mxu0 0
      %644 = vmatpush1.bf16.msra.mxu0 0
      %645 = vmatprep.subr.bf16.mxu0 0
      %646 = vmatpush1.bf16.msra.mxu0 0
      %647 = vmatprep.subr.bf16.mxu0 0
      %648 = vmatpush1.bf16.msra.mxu0 0
      %649 = vmatprep.subr.bf16.mxu0 0
      %650 = vmatpush1.bf16.msra.mxu0 0
      %651 = vmatprep.subr.bf16.mxu0 0
      %652 = vmatpush1.bf16.msra.mxu0 0
      %653 = vmatprep.subr.bf16.mxu0 0
      %654 = vmatpush1.bf16.msra.mxu0 0
      %655 = vmatprep.subr.bf16.mxu0 0
      %656 = vmatpush1.bf16.msra.mxu0 0
      %657 = vmatprep.subr.bf16.mxu0 0
      %658 = vmatpush1.bf16.msra.mxu0 0
      %659 = vmatprep.subr.bf16.mxu0 0
      %660 = vmatpush1.bf16.msra.mxu0 0
      %661 = vmatprep.subr.bf16.mxu0 0
      %662 = vmatpush1.bf16.msra.mxu0 0
      %663 = vmatprep.subr.bf16.mxu0 0
      %664 = vmatpush1.bf16.msra.mxu0 0
      %665 = vmatprep.subr.bf16.mxu0 0
      %666 = vmatpush1.bf16.msra.mxu0 0
      %667 = vmatprep.mubr.bf16.mxu0 0
      %668 = vmatmul.mubr.bf16.gmra.mrb[0].mxu0 %v630
      %v669 = vpop.f32.mrb[0].mxu0
      %v670 = vadd.f32 0.0, %v669
      %v671 = vpop.f32.mrb[0].mxu0
      %v672 = vpop.f32.mrb[0].mxu0
      %v673 = vadd.f32 0.0, %v672
      %v674 = vpop.f32.mrb[0].mxu0
      %675 = vmatprep.mubr.bf16.mxu0 0
      %676 = vmatmul.mubr.bf16.gmra.mrb[0].mxu0 %v633
      %v677 = vpop.f32.mrb[0].mxu0
      %v678 = vadd.f32 0.0, %v677
      %v679 = vpop.f32.mrb[0].mxu0
      %v680 = vpop.f32.mrb[0].mxu0
      %v681 = vpop.f32.mrb[0].mxu0
      %682 = vdwg.mxu0
      %v683 = vadd.f32 %v603, %v670
      %v684 = vadd.f32 %v604, %v673
      %v685 = vadd.f32 %v605, %v678
      %s686 = scalar_lea.vmem %s362, 96
      %v687 = vld [vmem:[%s686] sm:$0xff]
      %v688 = vld [vmem:[%s686 + $0x8] sm:$0xff]
      %v689 = vld [vmem:[%s686 + $0x10] sm:$0xf]
      %v690 = vpack.c.bf16 %v688, %v687
      %v691 = vpack.c.bf16 %v689, %v689
      %s692 = scalar_lea.vmem %s1, 64
      %v693 = vld [vmem:[%s692] sm:$0xf]
      %v694 = vld [vmem:[%s692 + $0x4] sm:$0xf]
      %v695 = vld [vmem:[%s692 + $0x8] sm:$0xf]
      %v696 = vld [vmem:[%s692 + $0xc] sm:$0xf]
      %v701 = vunpack.c.l.b16 %v693
      %v702 = vunpack.c.l.b16 %v694
      %v703 = vunpack.c.l.b16 %v695
      %v704 = vunpack.c.l.b16 %v696
      %v705 = vpack.c.b16 %v702, %v701
      %v706 = vpack.c.b16 %v704, %v703
      %v710 = vsel %vm406, %v690, 0
      %v713 = vsel %vm406, %v691, 0
      %715 = vmatprep.subr.bf16.mxu0 0
      %716 = vmatpush1.bf16.msra.mxu0 %v705
      %717 = vmatprep.subr.bf16.mxu0 0
      %718 = vmatpush1.bf16.msra.mxu0 %v706
      %719 = vmatprep.subr.bf16.mxu0 0
      %720 = vmatpush1.bf16.msra.mxu0 0
      %721 = vmatprep.subr.bf16.mxu0 0
      %722 = vmatpush1.bf16.msra.mxu0 0
      %723 = vmatprep.subr.bf16.mxu0 0
      %724 = vmatpush1.bf16.msra.mxu0 0
      %725 = vmatprep.subr.bf16.mxu0 0
      %726 = vmatpush1.bf16.msra.mxu0 0
      %727 = vmatprep.subr.bf16.mxu0 0
      %728 = vmatpush1.bf16.msra.mxu0 0
      %729 = vmatprep.subr.bf16.mxu0 0
      %730 = vmatpush1.bf16.msra.mxu0 0
      %731 = vmatprep.subr.bf16.mxu0 0
      %732 = vmatpush1.bf16.msra.mxu0 0
      %733 = vmatprep.subr.bf16.mxu0 0
      %734 = vmatpush1.bf16.msra.mxu0 0
      %735 = vmatprep.subr.bf16.mxu0 0
      %736 = vmatpush1.bf16.msra.mxu0 0
      %737 = vmatprep.subr.bf16.mxu0 0
      %738 = vmatpush1.bf16.msra.mxu0 0
      %739 = vmatprep.subr.bf16.mxu0 0
      %740 = vmatpush1.bf16.msra.mxu0 0
      %741 = vmatprep.subr.bf16.mxu0 0
      %742 = vmatpush1.bf16.msra.mxu0 0
      %743 = vmatprep.subr.bf16.mxu0 0
      %744 = vmatpush1.bf16.msra.mxu0 0
      %745 = vmatprep.subr.bf16.mxu0 0
      %746 = vmatpush1.bf16.msra.mxu0 0
      %747 = vmatprep.mubr.bf16.mxu0 0
      %748 = vmatmul.mubr.bf16.gmra.mrb[0].mxu0 %v710
      %v749 = vpop.f32.mrb[0].mxu0
      %v750 = vadd.f32 0.0, %v749
      %v751 = vpop.f32.mrb[0].mxu0
      %v752 = vpop.f32.mrb[0].mxu0
      %v753 = vadd.f32 0.0, %v752
      %v754 = vpop.f32.mrb[0].mxu0
      %755 = vmatprep.mubr.bf16.mxu0 0
      %756 = vmatmul.mubr.bf16.gmra.mrb[0].mxu0 %v713
      %v757 = vpop.f32.mrb[0].mxu0
      %v758 = vadd.f32 0.0, %v757
      %v759 = vpop.f32.mrb[0].mxu0
      %v760 = vpop.f32.mrb[0].mxu0
      %v761 = vpop.f32.mrb[0].mxu0
      %762 = vdwg.mxu0
      %v763 = vadd.f32 %v683, %v750
      %v764 = vadd.f32 %v684, %v753
      %v765 = vadd.f32 %v685, %v758
      %v766 = vld [vmem:[%s606 + $0x1] sm:$0xff]
      %v767 = vld [vmem:[%s606 + $0x9] sm:$0xff]
      %v768 = vld [vmem:[%s606 + $0x11] sm:$0xf]
      %v769 = vpack.c.bf16 %v767, %v766
      %v770 = vpack.c.bf16 %v768, %v768
      %s771 = scalar_lea.vmem %s1, 80
      %v772 = vld [vmem:[%s771] sm:$0xf]
      %v773 = vld [vmem:[%s771 + $0x4] sm:$0xf]
      %v774 = vld [vmem:[%s771 + $0x8] sm:$0xf]
      %v775 = vld [vmem:[%s771 + $0xc] sm:$0xf]
      %v780 = vunpack.c.l.b16 %v772
      %v781 = vunpack.c.l.b16 %v773
      %v782 = vunpack.c.l.b16 %v774
      %v783 = vunpack.c.l.b16 %v775
      %v784 = vpack.c.b16 %v781, %v780
      %v785 = vpack.c.b16 %v783, %v782
      %v789 = vsel %vm406, %v769, 0
      %v792 = vsel %vm406, %v770, 0
      %794 = vmatprep.subr.bf16.mxu0 0
      %795 = vmatpush1.bf16.msra.mxu0 %v784
      %796 = vmatprep.subr.bf16.mxu0 0
      %797 = vmatpush1.bf16.msra.mxu0 %v785
      %798 = vmatprep.subr.bf16.mxu0 0
      %799 = vmatpush1.bf16.msra.mxu0 0
      %800 = vmatprep.subr.bf16.mxu0 0
      %801 = vmatpush1.bf16.msra.mxu0 0
      %802 = vmatprep.subr.bf16.mxu0 0
      %803 = vmatpush1.bf16.msra.mxu0 0
      %804 = vmatprep.subr.bf16.mxu0 0
      %805 = vmatpush1.bf16.msra.mxu0 0
      %806 = vmatprep.subr.bf16.mxu0 0
      %807 = vmatpush1.bf16.msra.mxu0 0
      %808 = vmatprep.subr.bf16.mxu0 0
      %809 = vmatpush1.bf16.msra.mxu0 0
      %810 = vmatprep.subr.bf16.mxu0 0
      %811 = vmatpush1.bf16.msra.mxu0 0
      %812 = vmatprep.subr.bf16.mxu0 0
      %813 = vmatpush1.bf16.msra.mxu0 0
      %814 = vmatprep.subr.bf16.mxu0 0
      %815 = vmatpush1.bf16.msra.mxu0 0
      %816 = vmatprep.subr.bf16.mxu0 0
      %817 = vmatpush1.bf16.msra.mxu0 0
      %818 = vmatprep.subr.bf16.mxu0 0
      %819 = vmatpush1.bf16.msra.mxu0 0
      %820 = vmatprep.subr.bf16.mxu0 0
      %821 = vmatpush1.bf16.msra.mxu0 0
      %822 = vmatprep.subr.bf16.mxu0 0
      %823 = vmatpush1.bf16.msra.mxu0 0
      %824 = vmatprep.subr.bf16.mxu0 0
      %825 = vmatpush1.bf16.msra.mxu0 0
      %826 = vmatprep.mubr.bf16.mxu0 0
      %827 = vmatmul.mubr.bf16.gmra.mrb[0].mxu0 %v789
      %v828 = vpop.f32.mrb[0].mxu0
      %v829 = vadd.f32 0.0, %v828
      %v830 = vpop.f32.mrb[0].mxu0
      %v831 = vpop.f32.mrb[0].mxu0
      %v832 = vadd.f32 0.0, %v831
      %v833 = vpop.f32.mrb[0].mxu0
      %834 = vmatprep.mubr.bf16.mxu0 0
      %835 = vmatmul.mubr.bf16.gmra.mrb[0].mxu0 %v792
      %v836 = vpop.f32.mrb[0].mxu0
      %v837 = vadd.f32 0.0, %v836
      %v838 = vpop.f32.mrb[0].mxu0
      %v839 = vpop.f32.mrb[0].mxu0
      %v840 = vpop.f32.mrb[0].mxu0
      %841 = vdwg.mxu0
      %v842 = vadd.f32 %v763, %v829
      %v843 = vadd.f32 %v764, %v832
      %v844 = vadd.f32 %v765, %v837
      %v845 = vld [vmem:[%s362 + $0x5] sm:$0xff]
      %v846 = vld [vmem:[%s362 + $0xd] sm:$0xff]
      %v847 = vld [vmem:[%s362 + $0x15] sm:$0xf]
      %v848 = vpack.c.bf16 %v846, %v845
      %v849 = vpack.c.bf16 %v847, %v847
      %s850 = scalar_lea.vmem %s1, 96
      %v851 = vld [vmem:[%s850] sm:$0xf]
      %v852 = vld [vmem:[%s850 + $0x4] sm:$0xf]
      %v853 = vld [vmem:[%s850 + $0x8] sm:$0xf]
      %v854 = vld [vmem:[%s850 + $0xc] sm:$0xf]
      %v859 = vunpack.c.l.b16 %v851
      %v860 = vunpack.c.l.b16 %v852
      %v861 = vunpack.c.l.b16 %v853
      %v862 = vunpack.c.l.b16 %v854
      %v863 = vpack.c.b16 %v860, %v859
      %v864 = vpack.c.b16 %v862, %v861
      %v868 = vsel %vm406, %v848, 0
      %v871 = vsel %vm406, %v849, 0
      %873 = vmatprep.subr.bf16.mxu0 0
      %874 = vmatpush1.bf16.msra.mxu0 %v863
      %875 = vmatprep.subr.bf16.mxu0 0
      %876 = vmatpush1.bf16.msra.mxu0 %v864
      %877 = vmatprep.subr.bf16.mxu0 0
      %878 = vmatpush1.bf16.msra.mxu0 0
      %879 = vmatprep.subr.bf16.mxu0 0
      %880 = vmatpush1.bf16.msra.mxu0 0
      %881 = vmatprep.subr.bf16.mxu0 0
      %882 = vmatpush1.bf16.msra.mxu0 0
      %883 = vmatprep.subr.bf16.mxu0 0
      %884 = vmatpush1.bf16.msra.mxu0 0
      %885 = vmatprep.subr.bf16.mxu0 0
      %886 = vmatpush1.bf16.msra.mxu0 0
      %887 = vmatprep.subr.bf16.mxu0 0
      %888 = vmatpush1.bf16.msra.mxu0 0
      %889 = vmatprep.subr.bf16.mxu0 0
      %890 = vmatpush1.bf16.msra.mxu0 0
      %891 = vmatprep.subr.bf16.mxu0 0
      %892 = vmatpush1.bf16.msra.mxu0 0
      %893 = vmatprep.subr.bf16.mxu0 0
      %894 = vmatpush1.bf16.msra.mxu0 0
      %895 = vmatprep.subr.bf16.mxu0 0
      %896 = vmatpush1.bf16.msra.mxu0 0
      %897 = vmatprep.subr.bf16.mxu0 0
      %898 = vmatpush1.bf16.msra.mxu0 0
      %899 = vmatprep.subr.bf16.mxu0 0
      %900 = vmatpush1.bf16.msra.mxu0 0
      %901 = vmatprep.subr.bf16.mxu0 0
      %902 = vmatpush1.bf16.msra.mxu0 0
      %903 = vmatprep.subr.bf16.mxu0 0
      %904 = vmatpush1.bf16.msra.mxu0 0
      %905 = vmatprep.mubr.bf16.mxu0 0
      %906 = vmatmul.mubr.bf16.gmra.mrb[0].mxu0 %v868
      %v907 = vpop.f32.mrb[0].mxu0
      %v908 = vadd.f32 0.0, %v907
      %v909 = vpop.f32.mrb[0].mxu0
      %v910 = vpop.f32.mrb[0].mxu0
      %v911 = vadd.f32 0.0, %v910
      %v912 = vpop.f32.mrb[0].mxu0
      %913 = vmatprep.mubr.bf16.mxu0 0
      %914 = vmatmul.mubr.bf16.gmra.mrb[0].mxu0 %v871
      %v915 = vpop.f32.mrb[0].mxu0
      %v916 = vadd.f32 0.0, %v915
      %v917 = vpop.f32.mrb[0].mxu0
      %v918 = vpop.f32.mrb[0].mxu0
      %v919 = vpop.f32.mrb[0].mxu0
      %920 = vdwg.mxu0
      %v921 = vadd.f32 %v842, %v908
      %v922 = vadd.f32 %v843, %v911
      %v923 = vadd.f32 %v844, %v916
      %v924 = vld [vmem:[%s383 + $0x5] sm:$0xff]
      %v925 = vld [vmem:[%s383 + $0xd] sm:$0xff]
      %v926 = vld [vmem:[%s383 + $0x15] sm:$0xf]
      %v927 = vpack.c.bf16 %v925, %v924
      %v928 = vpack.c.bf16 %v926, %v926
      %s929 = scalar_lea.vmem %s1, 112
      %v930 = vld [vmem:[%s929] sm:$0xf]
      %v931 = vld [vmem:[%s929 + $0x4] sm:$0xf]
      %v932 = vld [vmem:[%s929 + $0x8] sm:$0xf]
      %v933 = vld [vmem:[%s929 + $0xc] sm:$0xf]
      %v938 = vunpack.c.l.b16 %v930
      %v939 = vunpack.c.l.b16 %v931
      %v940 = vunpack.c.l.b16 %v932
      %v941 = vunpack.c.l.b16 %v933
      %v942 = vpack.c.b16 %v939, %v938
      %v943 = vpack.c.b16 %v941, %v940
      %v947 = vsel %vm406, %v927, 0
      %v950 = vsel %vm406, %v928, 0
      %952 = vmatprep.subr.bf16.mxu0 0
      %953 = vmatpush1.bf16.msra.mxu0 %v942
      %954 = vmatprep.subr.bf16.mxu0 0
      %955 = vmatpush1.bf16.msra.mxu0 %v943
      %956 = vmatprep.subr.bf16.mxu0 0
      %957 = vmatpush1.bf16.msra.mxu0 0
      %958 = vmatprep.subr.bf16.mxu0 0
      %959 = vmatpush1.bf16.msra.mxu0 0
      %960 = vmatprep.subr.bf16.mxu0 0
      %961 = vmatpush1.bf16.msra.mxu0 0
      %962 = vmatprep.subr.bf16.mxu0 0
      %963 = vmatpush1.bf16.msra.mxu0 0
      %964 = vmatprep.subr.bf16.mxu0 0
      %965 = vmatpush1.bf16.msra.mxu0 0
      %966 = vmatprep.subr.bf16.mxu0 0
      %967 = vmatpush1.bf16.msra.mxu0 0
      %968 = vmatprep.subr.bf16.mxu0 0
      %969 = vmatpush1.bf16.msra.mxu0 0
      %970 = vmatprep.subr.bf16.mxu0 0
      %971 = vmatpush1.bf16.msra.mxu0 0
      %972 = vmatprep.subr.bf16.mxu0 0
      %973 = vmatpush1.bf16.msra.mxu0 0
      %974 = vmatprep.subr.bf16.mxu0 0
      %975 = vmatpush1.bf16.msra.mxu0 0
      %976 = vmatprep.subr.bf16.mxu0 0
      %977 = vmatpush1.bf16.msra.mxu0 0
      %978 = vmatprep.subr.bf16.mxu0 0
      %979 = vmatpush1.bf16.msra.mxu0 0
      %980 = vmatprep.subr.bf16.mxu0 0
      %981 = vmatpush1.bf16.msra.mxu0 0
      %982 = vmatprep.subr.bf16.mxu0 0
      %983 = vmatpush1.bf16.msra.mxu0 0
      %984 = vmatprep.mubr.bf16.mxu0 0
      %985 = vmatmul.mubr.bf16.gmra.mrb[0].mxu0 %v947
      %v986 = vpop.f32.mrb[0].mxu0
      %v987 = vadd.f32 0.0, %v986
      %v988 = vpop.f32.mrb[0].mxu0
      %v989 = vpop.f32.mrb[0].mxu0
      %v990 = vadd.f32 0.0, %v989
      %v991 = vpop.f32.mrb[0].mxu0
      %992 = vmatprep.mubr.bf16.mxu0 0
      %993 = vmatmul.mubr.bf16.gmra.mrb[0].mxu0 %v950
      %v994 = vpop.f32.mrb[0].mxu0
      %v995 = vadd.f32 0.0, %v994
      %v996 = vpop.f32.mrb[0].mxu0
      %v997 = vpop.f32.mrb[0].mxu0
      %v998 = vpop.f32.mrb[0].mxu0
      %999 = vdwg.mxu0
      %v1000 = vadd.f32 %v921, %v987
      %v1001 = vadd.f32 %v922, %v990
      %v1002 = vadd.f32 %v923, %v995
      %v1003 = vld [vmem:[%s362 + $0x6] sm:$0xff]
      %v1004 = vld [vmem:[%s362 + $0xe] sm:$0xff]
      %v1005 = vld [vmem:[%s362 + $0x16] sm:$0xf]
      %v1006 = vpack.c.bf16 %v1004, %v1003
      %v1007 = vpack.c.bf16 %v1005, %v1005
      %s1008 = scalar_lea.vmem %s1, 128
      %v1009 = vld [vmem:[%s1008] sm:$0xf]
      %v1010 = vld [vmem:[%s1008 + $0x4] sm:$0xf]
      %v1011 = vld [vmem:[%s1008 + $0x8] sm:$0xf]
      %v1012 = vld [vmem:[%s1008 + $0xc] sm:$0xf]
      %v1017 = vunpack.c.l.b16 %v1009
      %v1018 = vunpack.c.l.b16 %v1010
      %v1019 = vunpack.c.l.b16 %v1011
      %v1020 = vunpack.c.l.b16 %v1012
      %v1021 = vpack.c.b16 %v1018, %v1017
      %v1022 = vpack.c.b16 %v1020, %v1019
      %v1026 = vsel %vm406, %v1006, 0
      %v1029 = vsel %vm406, %v1007, 0
      %1031 = vmatprep.subr.bf16.mxu0 0
      %1032 = vmatpush1.bf16.msra.mxu0 %v1021
      %1033 = vmatprep.subr.bf16.mxu0 0
      %1034 = vmatpush1.bf16.msra.mxu0 %v1022
      %1035 = vmatprep.subr.bf16.mxu0 0
      %1036 = vmatpush1.bf16.msra.mxu0 0
      %1037 = vmatprep.subr.bf16.mxu0 0
      %1038 = vmatpush1.bf16.msra.mxu0 0
      %1039 = vmatprep.subr.bf16.mxu0 0
      %1040 = vmatpush1.bf16.msra.mxu0 0
      %1041 = vmatprep.subr.bf16.mxu0 0
      %1042 = vmatpush1.bf16.msra.mxu0 0
      %1043 = vmatprep.subr.bf16.mxu0 0
      %1044 = vmatpush1.bf16.msra.mxu0 0
      %1045 = vmatprep.subr.bf16.mxu0 0
      %1046 = vmatpush1.bf16.msra.mxu0 0
      %1047 = vmatprep.subr.bf16.mxu0 0
      %1048 = vmatpush1.bf16.msra.mxu0 0
      %1049 = vmatprep.subr.bf16.mxu0 0
      %1050 = vmatpush1.bf16.msra.mxu0 0
      %1051 = vmatprep.subr.bf16.mxu0 0
      %1052 = vmatpush1.bf16.msra.mxu0 0
      %1053 = vmatprep.subr.bf16.mxu0 0
      %1054 = vmatpush1.bf16.msra.mxu0 0
      %1055 = vmatprep.subr.bf16.mxu0 0
      %1056 = vmatpush1.bf16.msra.mxu0 0
      %1057 = vmatprep.subr.bf16.mxu0 0
      %1058 = vmatpush1.bf16.msra.mxu0 0
      %1059 = vmatprep.subr.bf16.mxu0 0
      %1060 = vmatpush1.bf16.msra.mxu0 0
      %1061 = vmatprep.subr.bf16.mxu0 0
      %1062 = vmatpush1.bf16.msra.mxu0 0
      %1063 = vmatprep.mubr.bf16.mxu0 0
      %1064 = vmatmul.mubr.bf16.gmra.mrb[0].mxu0 %v1026
      %v1065 = vpop.f32.mrb[0].mxu0
      %v1066 = vadd.f32 0.0, %v1065
      %v1067 = vpop.f32.mrb[0].mxu0
      %v1068 = vpop.f32.mrb[0].mxu0
      %v1069 = vadd.f32 0.0, %v1068
      %v1070 = vpop.f32.mrb[0].mxu0
      %1071 = vmatprep.mubr.bf16.mxu0 0
      %1072 = vmatmul.mubr.bf16.gmra.mrb[0].mxu0 %v1029
      %v1073 = vpop.f32.mrb[0].mxu0
      %v1074 = vadd.f32 0.0, %v1073
      %v1075 = vpop.f32.mrb[0].mxu0
      %v1076 = vpop.f32.mrb[0].mxu0
      %v1077 = vpop.f32.mrb[0].mxu0
      %1078 = vdwg.mxu0
      %v1079 = vadd.f32 %v1000, %v1066
      %v1080 = vadd.f32 %v1001, %v1069
      %v1081 = vadd.f32 %v1002, %v1074
      %v1082 = vld [vmem:[%s2] sm:$0xff]
      %v1083 = vld [vmem:[%s2 + $0x8] sm:$0xff]
      %v1084 = vld [vmem:[%s2 + $0x10] sm:$0xf]
      %1086 = vset.pattern.permute.xlu0 0
      %1087 = vperm.xlu0 %1086, %v1082
      %v1088 = vpop.permute.xlu0 %1087
      %1091 = vset.pattern.permute.xlu0 0
      %1092 = vperm.xlu0 %1091, %v1083
      %v1093 = vpop.permute.xlu0 %1092
      %1096 = vset.pattern.permute.xlu0 0
      %1097 = vperm.xlu0 %1096, %v1084
      %v1098 = vpop.permute.xlu0 %1097
      %v1100 = vmul.f32 %v1079, %v1088
      %v1101 = vmul.f32 %v1080, %v1093
      %v1102 = vmul.f32 %v1081, %v1098
      %vm1103 = vcmask 523264
      %v1104 = vsel %vm1103, %v1100, 0.0
      %v1105 = vsel %vm1103, %v1101, 0.0
      %v1106 = vadd.f32 %v1104, %v1105
      %vm1107 = vcmask 519168
      %v1108 = vsel %vm1107, %v1102, 0.0
      %v1109 = vadd.f32 %v1106, %v1108
      %v1110 = vrot.slane %v1109, 4
      %v1111 = vadd.f32 %v1109, %v1110
      %v1112 = vrot.slane %v1111, 2
      %v1113 = vadd.f32 %v1111, %v1112
      %v1114 = vrot.slane %v1113, 1
      %v1115 = vadd.f32 %v1113, %v1114
      %v1116 = vmul.f32 %v1115, 0.0625
      %v1117 = vsub.f32 %v1079, %v1116
      %v1118 = vsub.f32 %v1080, %v1116
      %v1119 = vsub.f32 %v1081, %v1116
      %v1120 = vmul.f32 %v1117, %v1117
      %v1121 = vmul.f32 %v1118, %v1118
      %v1122 = vmul.f32 %v1119, %v1119
      %v1123 = vmul.f32 %v1120, %v1088
      %v1124 = vmul.f32 %v1121, %v1093
      %v1125 = vmul.f32 %v1122, %v1098
      %v1126 = vsel %vm1103, %v1123, 0.0
      %v1127 = vsel %vm1103, %v1124, 0.0
      %v1128 = vadd.f32 %v1126, %v1127
      %v1129 = vsel %vm1107, %v1125, 0.0
      %v1130 = vadd.f32 %v1128, %v1129
      %v1131 = vrot.slane %v1130, 4
      %v1132 = vadd.f32 %v1130, %v1131
      %v1133 = vrot.slane %v1132, 2
      %v1134 = vadd.f32 %v1132, %v1133
      %v1135 = vrot.slane %v1134, 1
      %v1136 = vadd.f32 %v1134, %v1135
      %v1137 = vmul.f32 %v1136, 0.0625
      %v1138 = vld [vmem:[%s3] sm:$0x1]
      %v1139 = vadd.f32 %v1137, 1e-05
      %v1140 = vrsqrt.pop %v1139
      %v1141 = vmul.f32 %v1138, %v1140
      %v1142 = vld [vmem:[%s4] sm:$0x1]
      %v1143 = vmul.f32 %v1116, %v1141
      %v1144 = vsub.f32 %v1142, %v1143
      %v1145 = vld [vmem:[%s5] sm:$0x1]
      %vm1146 = vcmp.gt.f32.partialorder %v1145, 0.0
      %v1147 = vld [vmem:[%s6] sm:$0x1]
      %v1148 = vsel %vm1146, %v1141, %v1147
      %v1149 = vld [vmem:[%s7] sm:$0x1]
      %v1150 = vsel %vm1146, %v1144, %v1149
      %v1152 = vlaneseq
      %v1153 = vshrl.u32 %v1152, 7
      %v1154 = vsub.s32 0, %v1153
      %v1155 = vrot.slane %v1148, %v1154
      %v1157 = vmul.f32 %v1079, %v1155
      %v1158 = vmul.f32 %v1080, %v1155
      %v1159 = vmul.f32 %v1081, %v1155
      %v1161 = vlaneseq
      %v1162 = vshrl.u32 %v1161, 7
      %v1163 = vsub.s32 0, %v1162
      %v1164 = vrot.slane %v1150, %v1163
      %v1166 = vadd.f32 %v1157, %v1164
      %v1167 = vadd.f32 %v1158, %v1164
      %v1168 = vadd.f32 %v1159, %v1164
      %vm1169 = vcmp.gt.f32.partialorder %v1166, 0.0
      %vm1170 = vcmp.gt.f32.partialorder %v1167, 0.0
      %vm1171 = vcmp.gt.f32.partialorder %v1168, 0.0
      %v1172 = vmul.f32 %v1166, 0.1
      %v1173 = vmul.f32 %v1167, 0.1
      %v1174 = vmul.f32 %v1168, 0.1
      %v1175 = vsel %vm1169, %v1166, %v1172
      %v1176 = vsel %vm1170, %v1167, %v1173
      %v1177 = vsel %vm1171, %v1168, %v1174
      %1178 = vst.msk [vmem:[%s367] sm:$0xff] %vm1103, %v1175
      %1179 = vst.msk [vmem:[%s367 + $0x8] sm:$0xff] %vm1103, %v1176
      %1180 = vst.msk [vmem:[%s367 + $0x10] sm:$0xf] %vm1107, %v1177
      %v1181 = vld [vmem:[%s686] sm:$0xff]
      %v1182 = vld [vmem:[%s686 + $0x8] sm:$0xff]
      %v1183 = vld [vmem:[%s686 + $0x10] sm:$0xf]
      %v1184 = vpack.c.bf16 %v1182, %v1181
      %v1185 = vpack.c.bf16 %v1183, %v1183
      %v1186 = vld [vmem:[%s8] sm:$0xf]
      %v1187 = vld [vmem:[%s8 + $0x4] sm:$0xf]
      %v1188 = vld [vmem:[%s8 + $0x8] sm:$0xf]
      %v1189 = vld [vmem:[%s8 + $0xc] sm:$0xf]
      %v1194 = vunpack.c.l.b16 %v1186
      %v1195 = vunpack.c.l.b16 %v1187
      %v1196 = vunpack.c.l.b16 %v1188
      %v1197 = vunpack.c.l.b16 %v1189
      %v1198 = vpack.c.b16 %v1195, %v1194
      %v1199 = vpack.c.b16 %v1197, %v1196
      %v1203 = vsel %vm406, %v1184, 0
      %v1206 = vsel %vm406, %v1185, 0
      %1208 = vmatprep.subr.bf16.mxu0 0
      %1209 = vmatpush1.bf16.msra.mxu0 %v1198
      %1210 = vmatprep.subr.bf16.mxu0 0
      %1211 = vmatpush1.bf16.msra.mxu0 %v1199
      %1212 = vmatprep.subr.bf16.mxu0 0
      %1213 = vmatpush1.bf16.msra.mxu0 0
      %1214 = vmatprep.subr.bf16.mxu0 0
      %1215 = vmatpush1.bf16.msra.mxu0 0
      %1216 = vmatprep.subr.bf16.mxu0 0
      %1217 = vmatpush1.bf16.msra.mxu0 0
      %1218 = vmatprep.subr.bf16.mxu0 0
      %1219 = vmatpush1.bf16.msra.mxu0 0
      %1220 = vmatprep.subr.bf16.mxu0 0
      %1221 = vmatpush1.bf16.msra.mxu0 0
      %1222 = vmatprep.subr.bf16.mxu0 0
      %1223 = vmatpush1.bf16.msra.mxu0 0
      %1224 = vmatprep.subr.bf16.mxu0 0
      %1225 = vmatpush1.bf16.msra.mxu0 0
      %1226 = vmatprep.subr.bf16.mxu0 0
      %1227 = vmatpush1.bf16.msra.mxu0 0
      %1228 = vmatprep.subr.bf16.mxu0 0
      %1229 = vmatpush1.bf16.msra.mxu0 0
      %1230 = vmatprep.subr.bf16.mxu0 0
      %1231 = vmatpush1.bf16.msra.mxu0 0
      %1232 = vmatprep.subr.bf16.mxu0 0
      %1233 = vmatpush1.bf16.msra.mxu0 0
      %1234 = vmatprep.subr.bf16.mxu0 0
      %1235 = vmatpush1.bf16.msra.mxu0 0
      %1236 = vmatprep.subr.bf16.mxu0 0
      %1237 = vmatpush1.bf16.msra.mxu0 0
      %1238 = vmatprep.subr.bf16.mxu0 0
      %1239 = vmatpush1.bf16.msra.mxu0 0
      %1240 = vmatprep.mubr.bf16.mxu0 0
      %1241 = vmatmul.mubr.bf16.gmra.mrb[0].mxu0 %v1203
      %v1242 = vpop.f32.mrb[0].mxu0
      %v1243 = vadd.f32 0.0, %v1242
      %v1244 = vpop.f32.mrb[0].mxu0
      %v1245 = vpop.f32.mrb[0].mxu0
      %v1246 = vadd.f32 0.0, %v1245
      %v1247 = vpop.f32.mrb[0].mxu0
      %1248 = vmatprep.mubr.bf16.mxu0 0
      %1249 = vmatmul.mubr.bf16.gmra.mrb[0].mxu0 %v1206
      %v1250 = vpop.f32.mrb[0].mxu0
      %v1251 = vadd.f32 0.0, %v1250
      %v1252 = vpop.f32.mrb[0].mxu0
      %v1253 = vpop.f32.mrb[0].mxu0
      %v1254 = vpop.f32.mrb[0].mxu0
      %1255 = vdwg.mxu0
      %1256 = vst.msk [vmem:[%s372] sm:$0xff] %vm1103, %v1243
      %1257 = vst.msk [vmem:[%s372 + $0x8] sm:$0xff] %vm1103, %v1246
      %1258 = vst.msk [vmem:[%s372 + $0x10] sm:$0xf] %vm1107, %v1251
      %p1259 = scmp.lt.s32.totalorder %s22, 1
      %s1260 = scalar_select %p1259, %s22, 1
      %s1261 = smul.addr %s1260, 3
      %s1262 = smul.addr %s1261, 8
      %s1263 = scalar_lea.vmem %s9, %s1262
      %p1264 = scmp.lt.s32.totalorder %s22, 1
      %s1265 = scalar_select %p1264, %s22, 1
      %s1266 = smul.addr %s1265, 3
      %s1267 = smul.addr %s1266, 8
      %s1268 = scalar_lea.vmem %s10, %s1267
      // Predicated region
      $region57: #{_lambda_.9} parent=55 // pred_check
        %p1269 = pneg %p234
      $region58: #{_lambda_.9} parent=55 // pred_check_branch
        %1271 = sbr.rel (%p1269) target = $region60
      $region59: #{_lambda_.9} parent=55 // pred_region
        _
      $region60: #{_lambda_.9} parent=55 // pred_fallthru
        _
      // Predicated region
      $region61: #{_lambda_.9} parent=55 // pred_check
        %p1272 = pneg %p260
      $region62: #{_lambda_.9} parent=55 // pred_check_branch
        %1274 = sbr.rel (%p1272) target = $region64
      $region63: #{_lambda_.9} parent=55 // pred_region
        _
      $region64: #{_lambda_.9} parent=55 // pred_fallthru
        _
    $region56: #{_lambda_.9} parent=5 // pred_fallthru
      _
    %p1275 = scmp.le.s32.totalorder 2, %s17
    // Predicated region
    $region65: #{_lambda_.9} parent=5 // pred_check
      %p1276 = pneg %p1275
    $region66: #{_lambda_.9} parent=5 // pred_check_branch
      %1278 = sbr.rel (%p1276) target = $region68
    $region67: #{_lambda_.9} parent=5 // pred_region
      %s1279 = ssub.s32 %s17, 2
      // Predicated region
      $region69: #{_lambda_.9} parent=67 // pred_check
        %p1280 = pneg %p240
      $region70: #{_lambda_.9} parent=67 // pred_check_branch
        %1282 = sbr.rel (%p1280) target = $region72
      $region71: #{_lambda_.9} parent=67 // pred_region
        %p1283 = scmp.lt.s32.totalorder %s23, 1
        %s1284 = scalar_select %p1283, %s23, 1
        %s1285 = smul.addr %s1284, 3
        %s1286 = smul.addr %s1285, 8
        %s1287 = scalar_lea.vmem %s9, %s1286
      $region72: #{_lambda_.9} parent=67 // pred_fallthru
        _
      // Predicated region
      $region73: #{_lambda_.9} parent=67 // pred_check
        %p1288 = pneg %p266
      $region74: #{_lambda_.9} parent=67 // pred_check_branch
        %1290 = sbr.rel (%p1288) target = $region76
      $region75: #{_lambda_.9} parent=67 // pred_region
        %p1291 = scmp.lt.s32.totalorder %s23, 1
        %s1292 = scalar_select %p1291, %s23, 1
        %s1293 = smul.addr %s1292, 3
        %s1294 = smul.addr %s1293, 8
        %s1295 = scalar_lea.vmem %s10, %s1294
      $region76: #{_lambda_.9} parent=67 // pred_fallthru
        _
    $region68: #{_lambda_.9} parent=5 // pred_fallthru
      _
  $region6: #{_lambda_.9} parent=0 // loop_footer
    %s21 = sadd.s32 1, %s17
  $region7: #{_lambda_.9} parent=0 // loop_footer_branch
    %16 = sbr.rel target = $region3
  $region8: #{_lambda_.9} parent=0 // loop_exit
    _

</llo_original>
